<compile_context>
chip_gen: v7x
topology: tpu7x:2x2x1
jax: 0.10.0
libtpu: 0.0.40
codegen_flags: <defaults>
</compile_context>

<pallas_src>
import functools

import jax
import jax.numpy as jnp
import numpy as np
from jax.experimental import pallas as pl
from jax.experimental.pallas import tpu as pltpu


# ----------------------------- in-kernel math ------------------------------ #

def _erf_poly(z):
    # Abramowitz & Stegun 7.1.26 rational approximation (|error| <= 1.5e-7).
    a1, a2, a3, a4, a5 = (0.254829592, -0.284496736, 1.421413741,
                          -1.453152027, 1.061405429)
    p = 0.3275911
    za = jnp.abs(z)
    d = 1.0 + p * za
    # EUP approximate reciprocal (moves the divide off the VALU-heavy GELU
    # path) + one Newton step so the exact-GELU accuracy is preserved.
    t = pl.reciprocal(d, approx=True)
    t = t * (2.0 - d * t)
    poly = ((((a5 * t + a4) * t + a3) * t + a2) * t + a1) * t
    e = 1.0 - poly * jnp.exp(-za * za)
    return jnp.where(z >= 0.0, e, -e)


def _gelu_exact(x):
    # Matches F.gelu default (erf-based).
    return 0.5 * x * (1.0 + _erf_poly(x * 0.7071067811865476))


def _dwconv_chunk(y, w_dw_ref, b_dw_ref, mask_ref, row0, rows, W, N):
    """Depthwise 3x3 conv (padding=1) on a `rows`-channel chunk.

    y: (rows, N) f32, flattened (possibly batch-folded) spatial axis last.
    Halo handled with lane rolls over the flat axis + zero-pad masks; masks
    zero every out-of-bounds tap, which also covers cross-image taps when the
    batch is folded into the lane axis.
    """
    w = w_dw_ref[row0:row0 + rows, :]                    # (rows, 9) tap weights
    acc = y * w[:, 4:5]                                  # centre tap (all in-bounds)
    tap = 0
    for di in (-1, 0, 1):
        for dj in (-1, 0, 1):
            if di == 0 and dj == 0:
                tap += 1
                continue
            off = di * W + dj                            # flat offset of neighbour
            shifted = pltpu.roll(y, shift=(-off) % N, axis=1)   # shifted[:,n]=y[:,n+off]
            acc = acc + (shifted * mask_ref[tap:tap + 1, :]) * w[:, tap:tap + 1]
            tap += 1
    return acc + b_dw_ref[row0:row0 + rows, :]


# --------------------------------- kernel ----------------------------------- #

def _gdfn_kernel(x_ref, w_in_ref, b_in_ref, w_dw_ref, b_dw_ref, mask_ref,
                 w_out_ref, b_out_ref, o_ref, y_ref, g_ref, *, W, hidden, chunk):
    # x_ref: (C, N) bf16          w_in_ref: (2h, C) bf16   b_in_ref: (2h, 1) f32
    # w_dw_ref: (2h, 9) f32       b_dw_ref: (2h, 1) f32    mask_ref: (9, N) f32
    # w_out_ref: (dim, h) bf16    b_out_ref: (dim, 1) f32  o_ref: (dim, N) f32
    # y_ref: (2h, N) f32 scratch  g_ref: (h, N) bf16 scratch
    N = x_ref.shape[1]

    # ---- project_in: 1x1 conv == (2h, C) @ (C, N) on the MXU (bf16 in, f32 acc),
    #      streamed to a VMEM scratch so the tap loop can chunk-read it.
    y_ref[...] = jnp.dot(w_in_ref[...], x_ref[...],
                         preferred_element_type=jnp.float32) + b_in_ref[...]

    # ---- depthwise 3x3 + gelu-gate, in paired channel chunks.  Each chunk's
    #      f32 (chunk, N) arrays are chunk*N/1024 vregs; with chunk=16, N=512
    #      the peak live set (~4-5 arrays) stays well under the 64-vreg file.
    for c0 in range(0, hidden, chunk):
        d1 = _dwconv_chunk(y_ref[c0:c0 + chunk, :], w_dw_ref, b_dw_ref,
                           mask_ref, c0, chunk, W, N)
        r0 = c0 + hidden
        d2 = _dwconv_chunk(y_ref[r0:r0 + chunk, :], w_dw_ref, b_dw_ref,
                           mask_ref, r0, chunk, W, N)
        g_ref[c0:c0 + chunk, :] = (_gelu_exact(d1) * d2).astype(g_ref.dtype)

    # ---- project_out: (dim, h) @ (h, N) on the MXU (bf16 in, f32 acc) + bias.
    o_ref[...] = jnp.dot(w_out_ref[...], g_ref[...],
                         preferred_element_type=jnp.float32) + b_out_ref[...]


# --------------------------------- wrapper ---------------------------------- #

def _dw_taps_mask_np(H, W):
    """(9, H*W) float32: 1.0 where tap (di, dj) stays inside the image."""
    i = np.arange(H * W) // W
    j = np.arange(H * W) % W
    rows = []
    for di in (-1, 0, 1):
        for dj in (-1, 0, 1):
            ok = (i + di >= 0) & (i + di < H) & (j + dj >= 0) & (j + dj < W)
            rows.append(ok)
    return np.stack(rows).astype(np.float32)


def feedforward_forward(x_nchw, params):
    """Matches FeedForward.forward. x_nchw: (B, C, H, W) f32 -> (B, C, H, W)."""
    B, C, H, W = x_nchw.shape
    HW = H * W
    N = B * HW

    # Pre-cast the matmul weights once, outside the kernel.
    w_in = params["w_in"].astype(jnp.bfloat16)     # (2h, C)
    b_in = params["b_in"]                          # (2h, 1)
    w_dw = params["w_dw"]                          # (2h, 9)
    b_dw = params["b_dw"]                          # (2h, 1)
    w_out = params["w_out"].astype(jnp.bfloat16)   # (dim, h)
    b_out = params["b_out"]                        # (dim, 1)
    C2 = w_in.shape[0]
    hidden = C2 // 2

    # Boundary masks, tiled across the batch-folded lane axis.
    masks = jnp.asarray(np.tile(_dw_taps_mask_np(H, W), (1, B)))   # (9, B*HW)

    # Fold batch into the lane axis: (B, C, HW) -> (C, B*HW), bf16 for the MXU.
    x_folded = jnp.transpose(x_nchw.reshape(B, C, HW), (1, 0, 2)) \
                  .reshape(C, N).astype(jnp.bfloat16)

    chunk = 16 if hidden % 16 == 0 else (8 if hidden % 8 == 0 else hidden)

    const = lambda i: (0, 0)
    out = pl.pallas_call(
        functools.partial(_gdfn_kernel, W=W, hidden=hidden, chunk=chunk),
        out_shape=jax.ShapeDtypeStruct((C, N), jnp.float32),
        grid=(1,),
        in_specs=[
            pl.BlockSpec((C, N), const),        # x (bf16, batch-folded)
            pl.BlockSpec((C2, C), const),       # w_in (bf16)
            pl.BlockSpec((C2, 1), const),       # b_in
            pl.BlockSpec((C2, 9), const),       # w_dw
            pl.BlockSpec((C2, 1), const),       # b_dw
            pl.BlockSpec((9, N), const),        # dw boundary masks
            pl.BlockSpec((C, hidden), const),   # w_out (bf16)
            pl.BlockSpec((C, 1), const),        # b_out
        ],
        out_specs=pl.BlockSpec((C, N), const),
        scratch_shapes=[
            pltpu.VMEM((C2, N), jnp.float32),       # project_in result
            pltpu.VMEM((hidden, N), jnp.bfloat16),  # gated activations
        ],
        compiler_params=pltpu.CompilerParams(
            dimension_semantics=("arbitrary",),
            vmem_limit_bytes=32 * 1024 * 1024),
    )(x_folded, w_in, b_in, w_dw, b_dw, masks, w_out, b_out)

    # Unfold: (C, B*HW) -> (B, C, H, W).
    return jnp.transpose(out.reshape(C, B, HW), (1, 0, 2)).reshape(B, C, H, W)


# ----------------------- pure-JAX reference (check) ------------------------- #

def reference_forward(x_nchw, params):
    """Mirrors the PyTorch module; 1x1 convs use the same bf16-operand /
    f32-accumulate recipe as the kernel (TPU MXU practice)."""
    B, C, H, W = x_nchw.shape
    HW = H * W
    C2 = params["w_in"].shape[0]
    hidden = C2 // 2

    x = x_nchw.reshape(B, C, HW)
    y = jnp.einsum("oc,bcn->bon",
                   params["w_in"].astype(jnp.bfloat16),
                   x.astype(jnp.bfloat16),
                   preferred_element_type=jnp.float32) + params["b_in"][None]

    y = y.reshape(B, C2, H, W)
    yp = jnp.pad(y, ((0, 0), (0, 0), (1, 1), (1, 1)))
    w_dw = params["w_dw"].reshape(C2, 3, 3)
    acc = jnp.zeros_like(y)
    for di in range(3):
        for dj in range(3):
            acc = acc + yp[:, :, di:di + H, dj:dj + W] * w_dw[None, :, di, dj, None, None]
    acc = acc + params["b_dw"].reshape(1, C2, 1, 1)

    x1, x2 = acc[:, :hidden], acc[:, hidden:]
    g = (jax.nn.gelu(x1, approximate=False) * x2).reshape(B, hidden, HW)

    out = jnp.einsum("oc,bcn->bon",
                     params["w_out"].astype(jnp.bfloat16),
                     g.astype(jnp.bfloat16),
                     preferred_element_type=jnp.float32) + params["b_out"][None]
    return out.reshape(B, C, H, W)


# ----------------------------------- main ------------------------------------ #

def init_params(key, dim, ffn_expansion_factor):
    hidden = int(dim * ffn_expansion_factor)
    C2 = 2 * hidden
    ks = jax.random.split(key, 6)
    s = 0.1
    return {
        # project_in: torch Conv2d(dim, 2h, 1) weight (2h, dim, 1, 1) -> (2h, dim)
        "w_in": s * jax.random.normal(ks[0], (C2, dim), jnp.float32),
        "b_in": s * jax.random.normal(ks[1], (C2, 1), jnp.float32),
        # dwconv: torch Conv2d(2h, 2h, 3, groups=2h) weight (2h, 1, 3, 3) -> (2h, 9)
        "w_dw": s * jax.random.normal(ks[2], (C2, 9), jnp.float32),
        "b_dw": s * jax.random.normal(ks[3], (C2, 1), jnp.float32),
        # project_out: torch Conv2d(h, dim, 1) weight (dim, h, 1, 1) -> (dim, h)
        "w_out": s * jax.random.normal(ks[4], (dim, hidden), jnp.float32),
        "b_out": s * jax.random.normal(ks[5], (dim, 1), jnp.float32),
    }


if __name__ == "__main__":
    B, dim, H, W = 2, 32, 16, 16
    ffn_expansion_factor = 2.0   # hidden=64, 2*hidden=128, B*HW=512 (lane-friendly)

    key = jax.random.PRNGKey(0)
    kx, kp = jax.random.split(key)
    x = jax.random.normal(kx, (B, dim, H, W), jnp.float32)   # NCHW, like PyTorch
    params = init_params(kp, dim, ffn_expansion_factor)

    out = jax.block_until_ready(feedforward_forward(x, params))

    ref = reference_forward(x, params)
    assert out.shape == (B, dim, H, W)
    err = float(jnp.max(jnp.abs(out - ref)))
    assert jnp.allclose(out, ref, atol=2e-3, rtol=2e-3), err

    print("KERNEL_OK")
</pallas_src>

<mosaic_0001>
module attributes {stable_mosaic.version = 11 : i64} {
  func.func @_gdfn_kernel(%arg0: i32, %arg1: memref<32x512xbf16, #tpu.memory_space<vmem>>, %arg2: memref<128x32xbf16, #tpu.memory_space<vmem>>, %arg3: memref<128x1xf32, #tpu.memory_space<vmem>>, %arg4: memref<128x9xf32, #tpu.memory_space<vmem>>, %arg5: memref<128x1xf32, #tpu.memory_space<vmem>>, %arg6: memref<9x512xf32, #tpu.memory_space<vmem>>, %arg7: memref<32x64xbf16, #tpu.memory_space<vmem>>, %arg8: memref<32x1xf32, #tpu.memory_space<vmem>>, %arg9: memref<32x512xf32, #tpu.memory_space<vmem>>, %arg10: memref<128x512xf32, #tpu.memory_space<vmem>>, %arg11: memref<64x512xbf16, #tpu.memory_space<vmem>>) attributes {dimension_semantics = [#tpu.dimension_semantics<arbitrary>], iteration_bounds = array<i64: 1>, scalar_prefetch = 0 : i64, scratch_operands = 2 : i64, tpu.core_type = #tpu.core_type<tc>, window_params = [{pipeline_mode = #tpu.pipeline_mode<synchronous>, transform_indices = @transform_0, window_bounds = array<i64: 32, 512>}, {pipeline_mode = #tpu.pipeline_mode<synchronous>, transform_indices = @transform_1, window_bounds = array<i64: 128, 32>}, {pipeline_mode = #tpu.pipeline_mode<synchronous>, transform_indices = @transform_2, window_bounds = array<i64: 128, 1>}, {pipeline_mode = #tpu.pipeline_mode<synchronous>, transform_indices = @transform_3, window_bounds = array<i64: 128, 9>}, {pipeline_mode = #tpu.pipeline_mode<synchronous>, transform_indices = @transform_4, window_bounds = array<i64: 128, 1>}, {pipeline_mode = #tpu.pipeline_mode<synchronous>, transform_indices = @transform_5, window_bounds = array<i64: 9, 512>}, {pipeline_mode = #tpu.pipeline_mode<synchronous>, transform_indices = @transform_6, window_bounds = array<i64: 32, 64>}, {pipeline_mode = #tpu.pipeline_mode<synchronous>, transform_indices = @transform_7, window_bounds = array<i64: 32, 1>}, {pipeline_mode = #tpu.pipeline_mode<synchronous>, transform_indices = @transform_8, window_bounds = array<i64: 32, 512>}]} {
    %c0 = arith.constant 0 : index
    %c0_0 = arith.constant 0 : index
    %0 = vector.load %arg2[%c0, %c0_0] : memref<128x32xbf16, #tpu.memory_space<vmem>>, vector<128x32xbf16>
    %c0_1 = arith.constant 0 : index
    %c0_2 = arith.constant 0 : index
    %1 = vector.load %arg1[%c0_1, %c0_2] : memref<32x512xbf16, #tpu.memory_space<vmem>>, vector<32x512xbf16>
    %cst = arith.constant dense<0.000000e+00> : vector<128x512xf32>
    %2 = tpu.matmul %0, %1, %cst {dimension_numbers = #tpu.dot_dimension_numbers<[1], [0], [0], [1], [0, 0, 1, 1], [], []>} : vector<128x32xbf16>, vector<32x512xbf16>, vector<128x512xf32> -> vector<128x512xf32>
    %c0_3 = arith.constant 0 : index
    %c0_4 = arith.constant 0 : index
    %3 = vector.load %arg3[%c0_3, %c0_4] : memref<128x1xf32, #tpu.memory_space<vmem>>, vector<128x1xf32>
    %4 = vector.broadcast %3 : vector<128x1xf32> to vector<128x512xf32>
    %5 = arith.addf %2, %4 : vector<128x512xf32>
    %c0_5 = arith.constant 0 : index
    %c0_6 = arith.constant 0 : index
    %6 = vector.load %arg10[%c0_5, %c0_6] : memref<128x512xf32, #tpu.memory_space<vmem>>, vector<128x512xf32>
    tpu.vector_store %arg10[%c0_5, %c0_6], %5 {strides = array<i32>} : memref<128x512xf32, #tpu.memory_space<vmem>>, vector<128x512xf32>,
    %c0_7 = arith.constant 0 : index
    %c0_8 = arith.constant 0 : index
    %7 = vector.load %arg10[%c0_7, %c0_8] : memref<128x512xf32, #tpu.memory_space<vmem>>, vector<16x512xf32>
    %c0_9 = arith.constant 0 : index
    %c0_10 = arith.constant 0 : index
    %8 = vector.load %arg4[%c0_9, %c0_10] : memref<128x9xf32, #tpu.memory_space<vmem>>, vector<16x9xf32>
    %9 = vector.extract_strided_slice %8 {offsets = [0, 4], sizes = [16, 1], strides = [1, 1]} : vector<16x9xf32> to vector<16x1xf32>
    %10 = vector.broadcast %9 : vector<16x1xf32> to vector<16x512xf32>
    %11 = arith.mulf %7, %10 : vector<16x512xf32>
    %c17_i32 = arith.constant 17 : i32
    %12 = tpu.dynamic_rotate %7 by %c17_i32 dim 1 : vector<16x512xf32>, i32 -> vector<16x512xf32>
    %c0_11 = arith.constant 0 : index
    %c0_12 = arith.constant 0 : index
    %13 = vector.load %arg6[%c0_11, %c0_12] : memref<9x512xf32, #tpu.memory_space<vmem>>, vector<1x512xf32>
    %14 = vector.broadcast %13 : vector<1x512xf32> to vector<16x512xf32>
    %15 = arith.mulf %12, %14 : vector<16x512xf32>
    %16 = vector.extract_strided_slice %8 {offsets = [0, 0], sizes = [16, 1], strides = [1, 1]} : vector<16x9xf32> to vector<16x1xf32>
    %17 = vector.broadcast %16 : vector<16x1xf32> to vector<16x512xf32>
    %18 = arith.mulf %15, %17 : vector<16x512xf32>
    %19 = arith.addf %11, %18 : vector<16x512xf32>
    %c16_i32 = arith.constant 16 : i32
    %20 = tpu.dynamic_rotate %7 by %c16_i32 dim 1 : vector<16x512xf32>, i32 -> vector<16x512xf32>
    %c1 = arith.constant 1 : index
    %c0_13 = arith.constant 0 : index
    %21 = vector.load %arg6[%c1, %c0_13] : memref<9x512xf32, #tpu.memory_space<vmem>>, vector<1x512xf32>
    %22 = vector.broadcast %21 : vector<1x512xf32> to vector<16x512xf32>
    %23 = arith.mulf %20, %22 : vector<16x512xf32>
    %24 = vector.extract_strided_slice %8 {offsets = [0, 1], sizes = [16, 1], strides = [1, 1]} : vector<16x9xf32> to vector<16x1xf32>
    %25 = vector.broadcast %24 : vector<16x1xf32> to vector<16x512xf32>
    %26 = arith.mulf %23, %25 : vector<16x512xf32>
    %27 = arith.addf %19, %26 : vector<16x512xf32>
    %c15_i32 = arith.constant 15 : i32
    %28 = tpu.dynamic_rotate %7 by %c15_i32 dim 1 : vector<16x512xf32>, i32 -> vector<16x512xf32>
    %c2 = arith.constant 2 : index
    %c0_14 = arith.constant 0 : index
    %29 = vector.load %arg6[%c2, %c0_14] : memref<9x512xf32, #tpu.memory_space<vmem>>, vector<1x512xf32>
    %30 = vector.broadcast %29 : vector<1x512xf32> to vector<16x512xf32>
    %31 = arith.mulf %28, %30 : vector<16x512xf32>
    %32 = vector.extract_strided_slice %8 {offsets = [0, 2], sizes = [16, 1], strides = [1, 1]} : vector<16x9xf32> to vector<16x1xf32>
    %33 = vector.broadcast %32 : vector<16x1xf32> to vector<16x512xf32>
    %34 = arith.mulf %31, %33 : vector<16x512xf32>
    %35 = arith.addf %27, %34 : vector<16x512xf32>
    %c1_i32 = arith.constant 1 : i32
    %36 = tpu.dynamic_rotate %7 by %c1_i32 dim 1 : vector<16x512xf32>, i32 -> vector<16x512xf32>
    %c3 = arith.constant 3 : index
    %c0_15 = arith.constant 0 : index
    %37 = vector.load %arg6[%c3, %c0_15] : memref<9x512xf32, #tpu.memory_space<vmem>>, vector<1x512xf32>
    %38 = vector.broadcast %37 : vector<1x512xf32> to vector<16x512xf32>
    %39 = arith.mulf %36, %38 : vector<16x512xf32>
    %40 = vector.extract_strided_slice %8 {offsets = [0, 3], sizes = [16, 1], strides = [1, 1]} : vector<16x9xf32> to vector<16x1xf32>
    %41 = vector.broadcast %40 : vector<16x1xf32> to vector<16x512xf32>
    %42 = arith.mulf %39, %41 : vector<16x512xf32>
    %43 = arith.addf %35, %42 : vector<16x512xf32>
    %c511_i32 = arith.constant 511 : i32
    %44 = tpu.dynamic_rotate %7 by %c511_i32 dim 1 : vector<16x512xf32>, i32 -> vector<16x512xf32>
    %c5 = arith.constant 5 : index
    %c0_16 = arith.constant 0 : index
    %45 = vector.load %arg6[%c5, %c0_16] : memref<9x512xf32, #tpu.memory_space<vmem>>, vector<1x512xf32>
    %46 = vector.broadcast %45 : vector<1x512xf32> to vector<16x512xf32>
    %47 = arith.mulf %44, %46 : vector<16x512xf32>
    %48 = vector.extract_strided_slice %8 {offsets = [0, 5], sizes = [16, 1], strides = [1, 1]} : vector<16x9xf32> to vector<16x1xf32>
    %49 = vector.broadcast %48 : vector<16x1xf32> to vector<16x512xf32>
    %50 = arith.mulf %47, %49 : vector<16x512xf32>
    %51 = arith.addf %43, %50 : vector<16x512xf32>
    %c497_i32 = arith.constant 497 : i32
    %52 = tpu.dynamic_rotate %7 by %c497_i32 dim 1 : vector<16x512xf32>, i32 -> vector<16x512xf32>
    %c6 = arith.constant 6 : index
    %c0_17 = arith.constant 0 : index
    %53 = vector.load %arg6[%c6, %c0_17] : memref<9x512xf32, #tpu.memory_space<vmem>>, vector<1x512xf32>
    %54 = vector.broadcast %53 : vector<1x512xf32> to vector<16x512xf32>
    %55 = arith.mulf %52, %54 : vector<16x512xf32>
    %56 = vector.extract_strided_slice %8 {offsets = [0, 6], sizes = [16, 1], strides = [1, 1]} : vector<16x9xf32> to vector<16x1xf32>
    %57 = vector.broadcast %56 : vector<16x1xf32> to vector<16x512xf32>
    %58 = arith.mulf %55, %57 : vector<16x512xf32>
    %59 = arith.addf %51, %58 : vector<16x512xf32>
    %c496_i32 = arith.constant 496 : i32
    %60 = tpu.dynamic_rotate %7 by %c496_i32 dim 1 : vector<16x512xf32>, i32 -> vector<16x512xf32>
    %c7 = arith.constant 7 : index
    %c0_18 = arith.constant 0 : index
    %61 = vector.load %arg6[%c7, %c0_18] : memref<9x512xf32, #tpu.memory_space<vmem>>, vector<1x512xf32>
    %62 = vector.broadcast %61 : vector<1x512xf32> to vector<16x512xf32>
    %63 = arith.mulf %60, %62 : vector<16x512xf32>
    %64 = vector.extract_strided_slice %8 {offsets = [0, 7], sizes = [16, 1], strides = [1, 1]} : vector<16x9xf32> to vector<16x1xf32>
    %65 = vector.broadcast %64 : vector<16x1xf32> to vector<16x512xf32>
    %66 = arith.mulf %63, %65 : vector<16x512xf32>
    %67 = arith.addf %59, %66 : vector<16x512xf32>
    %c495_i32 = arith.constant 495 : i32
    %68 = tpu.dynamic_rotate %7 by %c495_i32 dim 1 : vector<16x512xf32>, i32 -> vector<16x512xf32>
    %c8 = arith.constant 8 : index
    %c0_19 = arith.constant 0 : index
    %69 = vector.load %arg6[%c8, %c0_19] : memref<9x512xf32, #tpu.memory_space<vmem>>, vector<1x512xf32>
    %70 = vector.broadcast %69 : vector<1x512xf32> to vector<16x512xf32>
    %71 = arith.mulf %68, %70 : vector<16x512xf32>
    %72 = vector.extract_strided_slice %8 {offsets = [0, 8], sizes = [16, 1], strides = [1, 1]} : vector<16x9xf32> to vector<16x1xf32>
    %73 = vector.broadcast %72 : vector<16x1xf32> to vector<16x512xf32>
    %74 = arith.mulf %71, %73 : vector<16x512xf32>
    %75 = arith.addf %67, %74 : vector<16x512xf32>
    %c0_20 = arith.constant 0 : index
    %c0_21 = arith.constant 0 : index
    %76 = vector.load %arg5[%c0_20, %c0_21] : memref<128x1xf32, #tpu.memory_space<vmem>>, vector<16x1xf32>
    %77 = vector.broadcast %76 : vector<16x1xf32> to vector<16x512xf32>
    %78 = arith.addf %75, %77 : vector<16x512xf32>
    %c64 = arith.constant 64 : index
    %c0_22 = arith.constant 0 : index
    %79 = vector.load %arg10[%c64, %c0_22] : memref<128x512xf32, #tpu.memory_space<vmem>>, vector<16x512xf32>
    %c64_23 = arith.constant 64 : index
    %c0_24 = arith.constant 0 : index
    %80 = vector.load %arg4[%c64_23, %c0_24] : memref<128x9xf32, #tpu.memory_space<vmem>>, vector<16x9xf32>
    %81 = vector.extract_strided_slice %80 {offsets = [0, 4], sizes = [16, 1], strides = [1, 1]} : vector<16x9xf32> to vector<16x1xf32>
    %82 = vector.broadcast %81 : vector<16x1xf32> to vector<16x512xf32>
    %83 = arith.mulf %79, %82 : vector<16x512xf32>
    %c17_i32_25 = arith.constant 17 : i32
    %84 = tpu.dynamic_rotate %79 by %c17_i32_25 dim 1 : vector<16x512xf32>, i32 -> vector<16x512xf32>
    %c0_26 = arith.constant 0 : index
    %c0_27 = arith.constant 0 : index
    %85 = vector.load %arg6[%c0_26, %c0_27] : memref<9x512xf32, #tpu.memory_space<vmem>>, vector<1x512xf32>
    %86 = vector.broadcast %85 : vector<1x512xf32> to vector<16x512xf32>
    %87 = arith.mulf %84, %86 : vector<16x512xf32>
    %88 = vector.extract_strided_slice %80 {offsets = [0, 0], sizes = [16, 1], strides = [1, 1]} : vector<16x9xf32> to vector<16x1xf32>
    %89 = vector.broadcast %88 : vector<16x1xf32> to vector<16x512xf32>
    %90 = arith.mulf %87, %89 : vector<16x512xf32>
    %91 = arith.addf %83, %90 : vector<16x512xf32>
    %c16_i32_28 = arith.constant 16 : i32
    %92 = tpu.dynamic_rotate %79 by %c16_i32_28 dim 1 : vector<16x512xf32>, i32 -> vector<16x512xf32>
    %c1_29 = arith.constant 1 : index
    %c0_30 = arith.constant 0 : index
    %93 = vector.load %arg6[%c1_29, %c0_30] : memref<9x512xf32, #tpu.memory_space<vmem>>, vector<1x512xf32>
    %94 = vector.broadcast %93 : vector<1x512xf32> to vector<16x512xf32>
    %95 = arith.mulf %92, %94 : vector<16x512xf32>
    %96 = vector.extract_strided_slice %80 {offsets = [0, 1], sizes = [16, 1], strides = [1, 1]} : vector<16x9xf32> to vector<16x1xf32>
    %97 = vector.broadcast %96 : vector<16x1xf32> to vector<16x512xf32>
    %98 = arith.mulf %95, %97 : vector<16x512xf32>
    %99 = arith.addf %91, %98 : vector<16x512xf32>
    %c15_i32_31 = arith.constant 15 : i32
    %100 = tpu.dynamic_rotate %79 by %c15_i32_31 dim 1 : vector<16x512xf32>, i32 -> vector<16x512xf32>
    %c2_32 = arith.constant 2 : index
    %c0_33 = arith.constant 0 : index
    %101 = vector.load %arg6[%c2_32, %c0_33] : memref<9x512xf32, #tpu.memory_space<vmem>>, vector<1x512xf32>
    %102 = vector.broadcast %101 : vector<1x512xf32> to vector<16x512xf32>
    %103 = arith.mulf %100, %102 : vector<16x512xf32>
    %104 = vector.extract_strided_slice %80 {offsets = [0, 2], sizes = [16, 1], strides = [1, 1]} : vector<16x9xf32> to vector<16x1xf32>
    %105 = vector.broadcast %104 : vector<16x1xf32> to vector<16x512xf32>
    %106 = arith.mulf %103, %105 : vector<16x512xf32>
    %107 = arith.addf %99, %106 : vector<16x512xf32>
    %c1_i32_34 = arith.constant 1 : i32
    %108 = tpu.dynamic_rotate %79 by %c1_i32_34 dim 1 : vector<16x512xf32>, i32 -> vector<16x512xf32>
    %c3_35 = arith.constant 3 : index
    %c0_36 = arith.constant 0 : index
    %109 = vector.load %arg6[%c3_35, %c0_36] : memref<9x512xf32, #tpu.memory_space<vmem>>, vector<1x512xf32>
    %110 = vector.broadcast %109 : vector<1x512xf32> to vector<16x512xf32>
    %111 = arith.mulf %108, %110 : vector<16x512xf32>
    %112 = vector.extract_strided_slice %80 {offsets = [0, 3], sizes = [16, 1], strides = [1, 1]} : vector<16x9xf32> to vector<16x1xf32>
    %113 = vector.broadcast %112 : vector<16x1xf32> to vector<16x512xf32>
    %114 = arith.mulf %111, %113 : vector<16x512xf32>
    %115 = arith.addf %107, %114 : vector<16x512xf32>
    %c511_i32_37 = arith.constant 511 : i32
    %116 = tpu.dynamic_rotate %79 by %c511_i32_37 dim 1 : vector<16x512xf32>, i32 -> vector<16x512xf32>
    %c5_38 = arith.constant 5 : index
    %c0_39 = arith.constant 0 : index
    %117 = vector.load %arg6[%c5_38, %c0_39] : memref<9x512xf32, #tpu.memory_space<vmem>>, vector<1x512xf32>
    %118 = vector.broadcast %117 : vector<1x512xf32> to vector<16x512xf32>
    %119 = arith.mulf %116, %118 : vector<16x512xf32>
    %120 = vector.extract_strided_slice %80 {offsets = [0, 5], sizes = [16, 1], strides = [1, 1]} : vector<16x9xf32> to vector<16x1xf32>
    %121 = vector.broadcast %120 : vector<16x1xf32> to vector<16x512xf32>
    %122 = arith.mulf %119, %121 : vector<16x512xf32>
    %123 = arith.addf %115, %122 : vector<16x512xf32>
    %c497_i32_40 = arith.constant 497 : i32
    %124 = tpu.dynamic_rotate %79 by %c497_i32_40 dim 1 : vector<16x512xf32>, i32 -> vector<16x512xf32>
    %c6_41 = arith.constant 6 : index
    %c0_42 = arith.constant 0 : index
    %125 = vector.load %arg6[%c6_41, %c0_42] : memref<9x512xf32, #tpu.memory_space<vmem>>, vector<1x512xf32>
    %126 = vector.broadcast %125 : vector<1x512xf32> to vector<16x512xf32>
    %127 = arith.mulf %124, %126 : vector<16x512xf32>
    %128 = vector.extract_strided_slice %80 {offsets = [0, 6], sizes = [16, 1], strides = [1, 1]} : vector<16x9xf32> to vector<16x1xf32>
    %129 = vector.broadcast %128 : vector<16x1xf32> to vector<16x512xf32>
    %130 = arith.mulf %127, %129 : vector<16x512xf32>
    %131 = arith.addf %123, %130 : vector<16x512xf32>
    %c496_i32_43 = arith.constant 496 : i32
    %132 = tpu.dynamic_rotate %79 by %c496_i32_43 dim 1 : vector<16x512xf32>, i32 -> vector<16x512xf32>
    %c7_44 = arith.constant 7 : index
    %c0_45 = arith.constant 0 : index
    %133 = vector.load %arg6[%c7_44, %c0_45] : memref<9x512xf32, #tpu.memory_space<vmem>>, vector<1x512xf32>
    %134 = vector.broadcast %133 : vector<1x512xf32> to vector<16x512xf32>
    %135 = arith.mulf %132, %134 : vector<16x512xf32>
    %136 = vector.extract_strided_slice %80 {offsets = [0, 7], sizes = [16, 1], strides = [1, 1]} : vector<16x9xf32> to vector<16x1xf32>
    %137 = vector.broadcast %136 : vector<16x1xf32> to vector<16x512xf32>
    %138 = arith.mulf %135, %137 : vector<16x512xf32>
    %139 = arith.addf %131, %138 : vector<16x512xf32>
    %c495_i32_46 = arith.constant 495 : i32
    %140 = tpu.dynamic_rotate %79 by %c495_i32_46 dim 1 : vector<16x512xf32>, i32 -> vector<16x512xf32>
    %c8_47 = arith.constant 8 : index
    %c0_48 = arith.constant 0 : index
    %141 = vector.load %arg6[%c8_47, %c0_48] : memref<9x512xf32, #tpu.memory_space<vmem>>, vector<1x512xf32>
    %142 = vector.broadcast %141 : vector<1x512xf32> to vector<16x512xf32>
    %143 = arith.mulf %140, %142 : vector<16x512xf32>
    %144 = vector.extract_strided_slice %80 {offsets = [0, 8], sizes = [16, 1], strides = [1, 1]} : vector<16x9xf32> to vector<16x1xf32>
    %145 = vector.broadcast %144 : vector<16x1xf32> to vector<16x512xf32>
    %146 = arith.mulf %143, %145 : vector<16x512xf32>
    %147 = arith.addf %139, %146 : vector<16x512xf32>
    %c64_49 = arith.constant 64 : index
    %c0_50 = arith.constant 0 : index
    %148 = vector.load %arg5[%c64_49, %c0_50] : memref<128x1xf32, #tpu.memory_space<vmem>>, vector<16x1xf32>
    %149 = vector.broadcast %148 : vector<16x1xf32> to vector<16x512xf32>
    %150 = arith.addf %147, %149 : vector<16x512xf32>
    %cst_51 = arith.constant 5.000000e-01 : f32
    %151 = vector.broadcast %cst_51 : f32 to vector<16x512xf32>
    %152 = arith.mulf %151, %78 : vector<16x512xf32>
    %cst_52 = arith.constant 0.707106769 : f32
    %153 = vector.broadcast %cst_52 : f32 to vector<16x512xf32>
    %154 = arith.mulf %78, %153 : vector<16x512xf32>
    %155 = math.absf %154 : vector<16x512xf32>
    %cst_53 = arith.constant 0.327591091 : f32
    %156 = vector.broadcast %cst_53 : f32 to vector<16x512xf32>
    %157 = arith.mulf %156, %155 : vector<16x512xf32>
    %cst_54 = arith.constant 1.000000e+00 : f32
    %158 = vector.broadcast %cst_54 : f32 to vector<16x512xf32>
    %159 = arith.addf %158, %157 : vector<16x512xf32>
    %160 = tpu.reciprocal %159 {approx = true} : vector<16x512xf32> -> vector<16x512xf32>
    %161 = arith.mulf %159, %160 : vector<16x512xf32>
    %cst_55 = arith.constant 2.000000e+00 : f32
    %162 = vector.broadcast %cst_55 : f32 to vector<16x512xf32>
    %163 = arith.subf %162, %161 : vector<16x512xf32>
    %164 = arith.mulf %160, %163 : vector<16x512xf32>
    %cst_56 = arith.constant 1.06140542 : f32
    %165 = vector.broadcast %cst_56 : f32 to vector<16x512xf32>
    %166 = arith.mulf %165, %164 : vector<16x512xf32>
    %cst_57 = arith.constant -1.45315206 : f32
    %167 = vector.broadcast %cst_57 : f32 to vector<16x512xf32>
    %168 = arith.addf %166, %167 : vector<16x512xf32>
    %169 = arith.mulf %168, %164 : vector<16x512xf32>
    %cst_58 = arith.constant 1.42141378 : f32
    %170 = vector.broadcast %cst_58 : f32 to vector<16x512xf32>
    %171 = arith.addf %169, %170 : vector<16x512xf32>
    %172 = arith.mulf %171, %164 : vector<16x512xf32>
    %cst_59 = arith.constant -0.284496725 : f32
    %173 = vector.broadcast %cst_59 : f32 to vector<16x512xf32>
    %174 = arith.addf %172, %173 : vector<16x512xf32>
    %175 = arith.mulf %174, %164 : vector<16x512xf32>
    %cst_60 = arith.constant 0.254829586 : f32
    %176 = vector.broadcast %cst_60 : f32 to vector<16x512xf32>
    %177 = arith.addf %175, %176 : vector<16x512xf32>
    %178 = arith.mulf %177, %164 : vector<16x512xf32>
    %cst_61 = arith.constant 0.000000e+00 : f32
    %179 = vector.broadcast %cst_61 : f32 to vector<16x512xf32>
    %180 = arith.subf %179, %155 : vector<16x512xf32>
    %181 = arith.mulf %180, %155 : vector<16x512xf32>
    %182 = math.exp %181 : vector<16x512xf32>
    %183 = arith.mulf %178, %182 : vector<16x512xf32>
    %cst_62 = arith.constant 1.000000e+00 : f32
    %184 = vector.broadcast %cst_62 : f32 to vector<16x512xf32>
    %185 = arith.subf %184, %183 : vector<16x512xf32>
    %cst_63 = arith.constant 0.000000e+00 : f32
    %186 = vector.broadcast %cst_63 : f32 to vector<16x512xf32>
    %187 = arith.cmpf oge, %154, %186 : vector<16x512xf32>
    %cst_64 = arith.constant 0.000000e+00 : f32
    %188 = vector.broadcast %cst_64 : f32 to vector<16x512xf32>
    %189 = arith.subf %188, %185 : vector<16x512xf32>
    %190 = arith.select %187, %185, %189 : vector<16x512xi1>, vector<16x512xf32>
    %cst_65 = arith.constant 1.000000e+00 : f32
    %191 = vector.broadcast %cst_65 : f32 to vector<16x512xf32>
    %192 = arith.addf %191, %190 : vector<16x512xf32>
    %193 = arith.mulf %152, %192 : vector<16x512xf32>
    %194 = arith.mulf %193, %150 : vector<16x512xf32>
    %195 = arith.truncf %194 : vector<16x512xf32> to vector<16x512xbf16>
    %c0_66 = arith.constant 0 : index
    %c0_67 = arith.constant 0 : index
    %196 = vector.load %arg11[%c0_66, %c0_67] : memref<64x512xbf16, #tpu.memory_space<vmem>>, vector<16x512xbf16>
    tpu.vector_store %arg11[%c0_66, %c0_67], %195 {strides = array<i32>} : memref<64x512xbf16, #tpu.memory_space<vmem>>, vector<16x512xbf16>,
    %c16 = arith.constant 16 : index
    %c0_68 = arith.constant 0 : index
    %197 = vector.load %arg10[%c16, %c0_68] : memref<128x512xf32, #tpu.memory_space<vmem>>, vector<16x512xf32>
    %c16_69 = arith.constant 16 : index
    %c0_70 = arith.constant 0 : index
    %198 = vector.load %arg4[%c16_69, %c0_70] : memref<128x9xf32, #tpu.memory_space<vmem>>, vector<16x9xf32>
    %199 = vector.extract_strided_slice %198 {offsets = [0, 4], sizes = [16, 1], strides = [1, 1]} : vector<16x9xf32> to vector<16x1xf32>
    %200 = vector.broadcast %199 : vector<16x1xf32> to vector<16x512xf32>
    %201 = arith.mulf %197, %200 : vector<16x512xf32>
    %c17_i32_71 = arith.constant 17 : i32
    %202 = tpu.dynamic_rotate %197 by %c17_i32_71 dim 1 : vector<16x512xf32>, i32 -> vector<16x512xf32>
    %c0_72 = arith.constant 0 : index
    %c0_73 = arith.constant 0 : index
    %203 = vector.load %arg6[%c0_72, %c0_73] : memref<9x512xf32, #tpu.memory_space<vmem>>, vector<1x512xf32>
    %204 = vector.broadcast %203 : vector<1x512xf32> to vector<16x512xf32>
    %205 = arith.mulf %202, %204 : vector<16x512xf32>
    %206 = vector.extract_strided_slice %198 {offsets = [0, 0], sizes = [16, 1], strides = [1, 1]} : vector<16x9xf32> to vector<16x1xf32>
    %207 = vector.broadcast %206 : vector<16x1xf32> to vector<16x512xf32>
    %208 = arith.mulf %205, %207 : vector<16x512xf32>
    %209 = arith.addf %201, %208 : vector<16x512xf32>
    %c16_i32_74 = arith.constant 16 : i32
    %210 = tpu.dynamic_rotate %197 by %c16_i32_74 dim 1 : vector<16x512xf32>, i32 -> vector<16x512xf32>
    %c1_75 = arith.constant 1 : index
    %c0_76 = arith.constant 0 : index
    %211 = vector.load %arg6[%c1_75, %c0_76] : memref<9x512xf32, #tpu.memory_space<vmem>>, vector<1x512xf32>
    %212 = vector.broadcast %211 : vector<1x512xf32> to vector<16x512xf32>
    %213 = arith.mulf %210, %212 : vector<16x512xf32>
    %214 = vector.extract_strided_slice %198 {offsets = [0, 1], sizes = [16, 1], strides = [1, 1]} : vector<16x9xf32> to vector<16x1xf32>
    %215 = vector.broadcast %214 : vector<16x1xf32> to vector<16x512xf32>
    %216 = arith.mulf %213, %215 : vector<16x512xf32>
    %217 = arith.addf %209, %216 : vector<16x512xf32>
    %c15_i32_77 = arith.constant 15 : i32
    %218 = tpu.dynamic_rotate %197 by %c15_i32_77 dim 1 : vector<16x512xf32>, i32 -> vector<16x512xf32>
    %c2_78 = arith.constant 2 : index
    %c0_79 = arith.constant 0 : index
    %219 = vector.load %arg6[%c2_78, %c0_79] : memref<9x512xf32, #tpu.memory_space<vmem>>, vector<1x512xf32>
    %220 = vector.broadcast %219 : vector<1x512xf32> to vector<16x512xf32>
    %221 = arith.mulf %218, %220 : vector<16x512xf32>
    %222 = vector.extract_strided_slice %198 {offsets = [0, 2], sizes = [16, 1], strides = [1, 1]} : vector<16x9xf32> to vector<16x1xf32>
    %223 = vector.broadcast %222 : vector<16x1xf32> to vector<16x512xf32>
    %224 = arith.mulf %221, %223 : vector<16x512xf32>
    %225 = arith.addf %217, %224 : vector<16x512xf32>
    %c1_i32_80 = arith.constant 1 : i32
    %226 = tpu.dynamic_rotate %197 by %c1_i32_80 dim 1 : vector<16x512xf32>, i32 -> vector<16x512xf32>
    %c3_81 = arith.constant 3 : index
    %c0_82 = arith.constant 0 : index
    %227 = vector.load %arg6[%c3_81, %c0_82] : memref<9x512xf32, #tpu.memory_space<vmem>>, vector<1x512xf32>
    %228 = vector.broadcast %227 : vector<1x512xf32> to vector<16x512xf32>
    %229 = arith.mulf %226, %228 : vector<16x512xf32>
    %230 = vector.extract_strided_slice %198 {offsets = [0, 3], sizes = [16, 1], strides = [1, 1]} : vector<16x9xf32> to vector<16x1xf32>
    %231 = vector.broadcast %230 : vector<16x1xf32> to vector<16x512xf32>
    %232 = arith.mulf %229, %231 : vector<16x512xf32>
    %233 = arith.addf %225, %232 : vector<16x512xf32>
    %c511_i32_83 = arith.constant 511 : i32
    %234 = tpu.dynamic_rotate %197 by %c511_i32_83 dim 1 : vector<16x512xf32>, i32 -> vector<16x512xf32>
    %c5_84 = arith.constant 5 : index
    %c0_85 = arith.constant 0 : index
    %235 = vector.load %arg6[%c5_84, %c0_85] : memref<9x512xf32, #tpu.memory_space<vmem>>, vector<1x512xf32>
    %236 = vector.broadcast %235 : vector<1x512xf32> to vector<16x512xf32>
    %237 = arith.mulf %234, %236 : vector<16x512xf32>
    %238 = vector.extract_strided_slice %198 {offsets = [0, 5], sizes = [16, 1], strides = [1, 1]} : vector<16x9xf32> to vector<16x1xf32>
    %239 = vector.broadcast %238 : vector<16x1xf32> to vector<16x512xf32>
    %240 = arith.mulf %237, %239 : vector<16x512xf32>
    %241 = arith.addf %233, %240 : vector<16x512xf32>
    %c497_i32_86 = arith.constant 497 : i32
    %242 = tpu.dynamic_rotate %197 by %c497_i32_86 dim 1 : vector<16x512xf32>, i32 -> vector<16x512xf32>
    %c6_87 = arith.constant 6 : index
    %c0_88 = arith.constant 0 : index
    %243 = vector.load %arg6[%c6_87, %c0_88] : memref<9x512xf32, #tpu.memory_space<vmem>>, vector<1x512xf32>
    %244 = vector.broadcast %243 : vector<1x512xf32> to vector<16x512xf32>
    %245 = arith.mulf %242, %244 : vector<16x512xf32>
    %246 = vector.extract_strided_slice %198 {offsets = [0, 6], sizes = [16, 1], strides = [1, 1]} : vector<16x9xf32> to vector<16x1xf32>
    %247 = vector.broadcast %246 : vector<16x1xf32> to vector<16x512xf32>
    %248 = arith.mulf %245, %247 : vector<16x512xf32>
    %249 = arith.addf %241, %248 : vector<16x512xf32>
    %c496_i32_89 = arith.constant 496 : i32
    %250 = tpu.dynamic_rotate %197 by %c496_i32_89 dim 1 : vector<16x512xf32>, i32 -> vector<16x512xf32>
    %c7_90 = arith.constant 7 : index
    %c0_91 = arith.constant 0 : index
    %251 = vector.load %arg6[%c7_90, %c0_91] : memref<9x512xf32, #tpu.memory_space<vmem>>, vector<1x512xf32>
    %252 = vector.broadcast %251 : vector<1x512xf32> to vector<16x512xf32>
    %253 = arith.mulf %250, %252 : vector<16x512xf32>
    %254 = vector.extract_strided_slice %198 {offsets = [0, 7], sizes = [16, 1], strides = [1, 1]} : vector<16x9xf32> to vector<16x1xf32>
    %255 = vector.broadcast %254 : vector<16x1xf32> to vector<16x512xf32>
    %256 = arith.mulf %253, %255 : vector<16x512xf32>
    %257 = arith.addf %249, %256 : vector<16x512xf32>
    %c495_i32_92 = arith.constant 495 : i32
    %258 = tpu.dynamic_rotate %197 by %c495_i32_92 dim 1 : vector<16x512xf32>, i32 -> vector<16x512xf32>
    %c8_93 = arith.constant 8 : index
    %c0_94 = arith.constant 0 : index
    %259 = vector.load %arg6[%c8_93, %c0_94] : memref<9x512xf32, #tpu.memory_space<vmem>>, vector<1x512xf32>
    %260 = vector.broadcast %259 : vector<1x512xf32> to vector<16x512xf32>
    %261 = arith.mulf %258, %260 : vector<16x512xf32>
    %262 = vector.extract_strided_slice %198 {offsets = [0, 8], sizes = [16, 1], strides = [1, 1]} : vector<16x9xf32> to vector<16x1xf32>
    %263 = vector.broadcast %262 : vector<16x1xf32> to vector<16x512xf32>
    %264 = arith.mulf %261, %263 : vector<16x512xf32>
    %265 = arith.addf %257, %264 : vector<16x512xf32>
    %c16_95 = arith.constant 16 : index
    %c0_96 = arith.constant 0 : index
    %266 = vector.load %arg5[%c16_95, %c0_96] : memref<128x1xf32, #tpu.memory_space<vmem>>, vector<16x1xf32>
    %267 = vector.broadcast %266 : vector<16x1xf32> to vector<16x512xf32>
    %268 = arith.addf %265, %267 : vector<16x512xf32>
    %c80 = arith.constant 80 : index
    %c0_97 = arith.constant 0 : index
    %269 = vector.load %arg10[%c80, %c0_97] : memref<128x512xf32, #tpu.memory_space<vmem>>, vector<16x512xf32>
    %c80_98 = arith.constant 80 : index
    %c0_99 = arith.constant 0 : index
    %270 = vector.load %arg4[%c80_98, %c0_99] : memref<128x9xf32, #tpu.memory_space<vmem>>, vector<16x9xf32>
    %271 = vector.extract_strided_slice %270 {offsets = [0, 4], sizes = [16, 1], strides = [1, 1]} : vector<16x9xf32> to vector<16x1xf32>
    %272 = vector.broadcast %271 : vector<16x1xf32> to vector<16x512xf32>
    %273 = arith.mulf %269, %272 : vector<16x512xf32>
    %c17_i32_100 = arith.constant 17 : i32
    %274 = tpu.dynamic_rotate %269 by %c17_i32_100 dim 1 : vector<16x512xf32>, i32 -> vector<16x512xf32>
    %c0_101 = arith.constant 0 : index
    %c0_102 = arith.constant 0 : index
    %275 = vector.load %arg6[%c0_101, %c0_102] : memref<9x512xf32, #tpu.memory_space<vmem>>, vector<1x512xf32>
    %276 = vector.broadcast %275 : vector<1x512xf32> to vector<16x512xf32>
    %277 = arith.mulf %274, %276 : vector<16x512xf32>
    %278 = vector.extract_strided_slice %270 {offsets = [0, 0], sizes = [16, 1], strides = [1, 1]} : vector<16x9xf32> to vector<16x1xf32>
    %279 = vector.broadcast %278 : vector<16x1xf32> to vector<16x512xf32>
    %280 = arith.mulf %277, %279 : vector<16x512xf32>
    %281 = arith.addf %273, %280 : vector<16x512xf32>
    %c16_i32_103 = arith.constant 16 : i32
    %282 = tpu.dynamic_rotate %269 by %c16_i32_103 dim 1 : vector<16x512xf32>, i32 -> vector<16x512xf32>
    %c1_104 = arith.constant 1 : index
    %c0_105 = arith.constant 0 : index
    %283 = vector.load %arg6[%c1_104, %c0_105] : memref<9x512xf32, #tpu.memory_space<vmem>>, vector<1x512xf32>
    %284 = vector.broadcast %283 : vector<1x512xf32> to vector<16x512xf32>
    %285 = arith.mulf %282, %284 : vector<16x512xf32>
    %286 = vector.extract_strided_slice %270 {offsets = [0, 1], sizes = [16, 1], strides = [1, 1]} : vector<16x9xf32> to vector<16x1xf32>
    %287 = vector.broadcast %286 : vector<16x1xf32> to vector<16x512xf32>
    %288 = arith.mulf %285, %287 : vector<16x512xf32>
    %289 = arith.addf %281, %288 : vector<16x512xf32>
    %c15_i32_106 = arith.constant 15 : i32
    %290 = tpu.dynamic_rotate %269 by %c15_i32_106 dim 1 : vector<16x512xf32>, i32 -> vector<16x512xf32>
    %c2_107 = arith.constant 2 : index
    %c0_108 = arith.constant 0 : index
    %291 = vector.load %arg6[%c2_107, %c0_108] : memref<9x512xf32, #tpu.memory_space<vmem>>, vector<1x512xf32>
    %292 = vector.broadcast %291 : vector<1x512xf32> to vector<16x512xf32>
    %293 = arith.mulf %290, %292 : vector<16x512xf32>
    %294 = vector.extract_strided_slice %270 {offsets = [0, 2], sizes = [16, 1], strides = [1, 1]} : vector<16x9xf32> to vector<16x1xf32>
    %295 = vector.broadcast %294 : vector<16x1xf32> to vector<16x512xf32>
    %296 = arith.mulf %293, %295 : vector<16x512xf32>
    %297 = arith.addf %289, %296 : vector<16x512xf32>
    %c1_i32_109 = arith.constant 1 : i32
    %298 = tpu.dynamic_rotate %269 by %c1_i32_109 dim 1 : vector<16x512xf32>, i32 -> vector<16x512xf32>
    %c3_110 = arith.constant 3 : index
    %c0_111 = arith.constant 0 : index
    %299 = vector.load %arg6[%c3_110, %c0_111] : memref<9x512xf32, #tpu.memory_space<vmem>>, vector<1x512xf32>
    %300 = vector.broadcast %299 : vector<1x512xf32> to vector<16x512xf32>
    %301 = arith.mulf %298, %300 : vector<16x512xf32>
    %302 = vector.extract_strided_slice %270 {offsets = [0, 3], sizes = [16, 1], strides = [1, 1]} : vector<16x9xf32> to vector<16x1xf32>
    %303 = vector.broadcast %302 : vector<16x1xf32> to vector<16x512xf32>
    %304 = arith.mulf %301, %303 : vector<16x512xf32>
    %305 = arith.addf %297, %304 : vector<16x512xf32>
    %c511_i32_112 = arith.constant 511 : i32
    %306 = tpu.dynamic_rotate %269 by %c511_i32_112 dim 1 : vector<16x512xf32>, i32 -> vector<16x512xf32>
    %c5_113 = arith.constant 5 : index
    %c0_114 = arith.constant 0 : index
    %307 = vector.load %arg6[%c5_113, %c0_114] : memref<9x512xf32, #tpu.memory_space<vmem>>, vector<1x512xf32>
    %308 = vector.broadcast %307 : vector<1x512xf32> to vector<16x512xf32>
    %309 = arith.mulf %306, %308 : vector<16x512xf32>
    %310 = vector.extract_strided_slice %270 {offsets = [0, 5], sizes = [16, 1], strides = [1, 1]} : vector<16x9xf32> to vector<16x1xf32>
    %311 = vector.broadcast %310 : vector<16x1xf32> to vector<16x512xf32>
    %312 = arith.mulf %309, %311 : vector<16x512xf32>
    %313 = arith.addf %305, %312 : vector<16x512xf32>
    %c497_i32_115 = arith.constant 497 : i32
    %314 = tpu.dynamic_rotate %269 by %c497_i32_115 dim 1 : vector<16x512xf32>, i32 -> vector<16x512xf32>
    %c6_116 = arith.constant 6 : index
    %c0_117 = arith.constant 0 : index
    %315 = vector.load %arg6[%c6_116, %c0_117] : memref<9x512xf32, #tpu.memory_space<vmem>>, vector<1x512xf32>
    %316 = vector.broadcast %315 : vector<1x512xf32> to vector<16x512xf32>
    %317 = arith.mulf %314, %316 : vector<16x512xf32>
    %318 = vector.extract_strided_slice %270 {offsets = [0, 6], sizes = [16, 1], strides = [1, 1]} : vector<16x9xf32> to vector<16x1xf32>
    %319 = vector.broadcast %318 : vector<16x1xf32> to vector<16x512xf32>
    %320 = arith.mulf %317, %319 : vector<16x512xf32>
    %321 = arith.addf %313, %320 : vector<16x512xf32>
    %c496_i32_118 = arith.constant 496 : i32
    %322 = tpu.dynamic_rotate %269 by %c496_i32_118 dim 1 : vector<16x512xf32>, i32 -> vector<16x512xf32>
    %c7_119 = arith.constant 7 : index
    %c0_120 = arith.constant 0 : index
    %323 = vector.load %arg6[%c7_119, %c0_120] : memref<9x512xf32, #tpu.memory_space<vmem>>, vector<1x512xf32>
    %324 = vector.broadcast %323 : vector<1x512xf32> to vector<16x512xf32>
    %325 = arith.mulf %322, %324 : vector<16x512xf32>
    %326 = vector.extract_strided_slice %270 {offsets = [0, 7], sizes = [16, 1], strides = [1, 1]} : vector<16x9xf32> to vector<16x1xf32>
    %327 = vector.broadcast %326 : vector<16x1xf32> to vector<16x512xf32>
    %328 = arith.mulf %325, %327 : vector<16x512xf32>
    %329 = arith.addf %321, %328 : vector<16x512xf32>
    %c495_i32_121 = arith.constant 495 : i32
    %330 = tpu.dynamic_rotate %269 by %c495_i32_121 dim 1 : vector<16x512xf32>, i32 -> vector<16x512xf32>
    %c8_122 = arith.constant 8 : index
    %c0_123 = arith.constant 0 : index
    %331 = vector.load %arg6[%c8_122, %c0_123] : memref<9x512xf32, #tpu.memory_space<vmem>>, vector<1x512xf32>
    %332 = vector.broadcast %331 : vector<1x512xf32> to vector<16x512xf32>
    %333 = arith.mulf %330, %332 : vector<16x512xf32>
    %334 = vector.extract_strided_slice %270 {offsets = [0, 8], sizes = [16, 1], strides = [1, 1]} : vector<16x9xf32> to vector<16x1xf32>
    %335 = vector.broadcast %334 : vector<16x1xf32> to vector<16x512xf32>
    %336 = arith.mulf %333, %335 : vector<16x512xf32>
    %337 = arith.addf %329, %336 : vector<16x512xf32>
    %c80_124 = arith.constant 80 : index
    %c0_125 = arith.constant 0 : index
    %338 = vector.load %arg5[%c80_124, %c0_125] : memref<128x1xf32, #tpu.memory_space<vmem>>, vector<16x1xf32>
    %339 = vector.broadcast %338 : vector<16x1xf32> to vector<16x512xf32>
    %340 = arith.addf %337, %339 : vector<16x512xf32>
    %cst_126 = arith.constant 5.000000e-01 : f32
    %341 = vector.broadcast %cst_126 : f32 to vector<16x512xf32>
    %342 = arith.mulf %341, %268 : vector<16x512xf32>
    %cst_127 = arith.constant 0.707106769 : f32
    %343 = vector.broadcast %cst_127 : f32 to vector<16x512xf32>
    %344 = arith.mulf %268, %343 : vector<16x512xf32>
    %345 = math.absf %344 : vector<16x512xf32>
    %cst_128 = arith.constant 0.327591091 : f32
    %346 = vector.broadcast %cst_128 : f32 to vector<16x512xf32>
    %347 = arith.mulf %346, %345 : vector<16x512xf32>
    %cst_129 = arith.constant 1.000000e+00 : f32
    %348 = vector.broadcast %cst_129 : f32 to vector<16x512xf32>
    %349 = arith.addf %348, %347 : vector<16x512xf32>
    %350 = tpu.reciprocal %349 {approx = true} : vector<16x512xf32> -> vector<16x512xf32>
    %351 = arith.mulf %349, %350 : vector<16x512xf32>
    %cst_130 = arith.constant 2.000000e+00 : f32
    %352 = vector.broadcast %cst_130 : f32 to vector<16x512xf32>
    %353 = arith.subf %352, %351 : vector<16x512xf32>
    %354 = arith.mulf %350, %353 : vector<16x512xf32>
    %cst_131 = arith.constant 1.06140542 : f32
    %355 = vector.broadcast %cst_131 : f32 to vector<16x512xf32>
    %356 = arith.mulf %355, %354 : vector<16x512xf32>
    %cst_132 = arith.constant -1.45315206 : f32
    %357 = vector.broadcast %cst_132 : f32 to vector<16x512xf32>
    %358 = arith.addf %356, %357 : vector<16x512xf32>
    %359 = arith.mulf %358, %354 : vector<16x512xf32>
    %cst_133 = arith.constant 1.42141378 : f32
    %360 = vector.broadcast %cst_133 : f32 to vector<16x512xf32>
    %361 = arith.addf %359, %360 : vector<16x512xf32>
    %362 = arith.mulf %361, %354 : vector<16x512xf32>
    %cst_134 = arith.constant -0.284496725 : f32
    %363 = vector.broadcast %cst_134 : f32 to vector<16x512xf32>
    %364 = arith.addf %362, %363 : vector<16x512xf32>
    %365 = arith.mulf %364, %354 : vector<16x512xf32>
    %cst_135 = arith.constant 0.254829586 : f32
    %366 = vector.broadcast %cst_135 : f32 to vector<16x512xf32>
    %367 = arith.addf %365, %366 : vector<16x512xf32>
    %368 = arith.mulf %367, %354 : vector<16x512xf32>
    %cst_136 = arith.constant 0.000000e+00 : f32
    %369 = vector.broadcast %cst_136 : f32 to vector<16x512xf32>
    %370 = arith.subf %369, %345 : vector<16x512xf32>
    %371 = arith.mulf %370, %345 : vector<16x512xf32>
    %372 = math.exp %371 : vector<16x512xf32>
    %373 = arith.mulf %368, %372 : vector<16x512xf32>
    %cst_137 = arith.constant 1.000000e+00 : f32
    %374 = vector.broadcast %cst_137 : f32 to vector<16x512xf32>
    %375 = arith.subf %374, %373 : vector<16x512xf32>
    %cst_138 = arith.constant 0.000000e+00 : f32
    %376 = vector.broadcast %cst_138 : f32 to vector<16x512xf32>
    %377 = arith.cmpf oge, %344, %376 : vector<16x512xf32>
    %cst_139 = arith.constant 0.000000e+00 : f32
    %378 = vector.broadcast %cst_139 : f32 to vector<16x512xf32>
    %379 = arith.subf %378, %375 : vector<16x512xf32>
    %380 = arith.select %377, %375, %379 : vector<16x512xi1>, vector<16x512xf32>
    %cst_140 = arith.constant 1.000000e+00 : f32
    %381 = vector.broadcast %cst_140 : f32 to vector<16x512xf32>
    %382 = arith.addf %381, %380 : vector<16x512xf32>
    %383 = arith.mulf %342, %382 : vector<16x512xf32>
    %384 = arith.mulf %383, %340 : vector<16x512xf32>
    %385 = arith.truncf %384 : vector<16x512xf32> to vector<16x512xbf16>
    %c16_141 = arith.constant 16 : index
    %c0_142 = arith.constant 0 : index
    %386 = vector.load %arg11[%c16_141, %c0_142] : memref<64x512xbf16, #tpu.memory_space<vmem>>, vector<16x512xbf16>
    tpu.vector_store %arg11[%c16_141, %c0_142], %385 {strides = array<i32>} : memref<64x512xbf16, #tpu.memory_space<vmem>>, vector<16x512xbf16>,
    %c32 = arith.constant 32 : index
    %c0_143 = arith.constant 0 : index
    %387 = vector.load %arg10[%c32, %c0_143] : memref<128x512xf32, #tpu.memory_space<vmem>>, vector<16x512xf32>
    %c32_144 = arith.constant 32 : index
    %c0_145 = arith.constant 0 : index
    %388 = vector.load %arg4[%c32_144, %c0_145] : memref<128x9xf32, #tpu.memory_space<vmem>>, vector<16x9xf32>
    %389 = vector.extract_strided_slice %388 {offsets = [0, 4], sizes = [16, 1], strides = [1, 1]} : vector<16x9xf32> to vector<16x1xf32>
    %390 = vector.broadcast %389 : vector<16x1xf32> to vector<16x512xf32>
    %391 = arith.mulf %387, %390 : vector<16x512xf32>
    %c17_i32_146 = arith.constant 17 : i32
    %392 = tpu.dynamic_rotate %387 by %c17_i32_146 dim 1 : vector<16x512xf32>, i32 -> vector<16x512xf32>
    %c0_147 = arith.constant 0 : index
    %c0_148 = arith.constant 0 : index
    %393 = vector.load %arg6[%c0_147, %c0_148] : memref<9x512xf32, #tpu.memory_space<vmem>>, vector<1x512xf32>
    %394 = vector.broadcast %393 : vector<1x512xf32> to vector<16x512xf32>
    %395 = arith.mulf %392, %394 : vector<16x512xf32>
    %396 = vector.extract_strided_slice %388 {offsets = [0, 0], sizes = [16, 1], strides = [1, 1]} : vector<16x9xf32> to vector<16x1xf32>
    %397 = vector.broadcast %396 : vector<16x1xf32> to vector<16x512xf32>
    %398 = arith.mulf %395, %397 : vector<16x512xf32>
    %399 = arith.addf %391, %398 : vector<16x512xf32>
    %c16_i32_149 = arith.constant 16 : i32
    %400 = tpu.dynamic_rotate %387 by %c16_i32_149 dim 1 : vector<16x512xf32>, i32 -> vector<16x512xf32>
    %c1_150 = arith.constant 1 : index
    %c0_151 = arith.constant 0 : index
    %401 = vector.load %arg6[%c1_150, %c0_151] : memref<9x512xf32, #tpu.memory_space<vmem>>, vector<1x512xf32>
    %402 = vector.broadcast %401 : vector<1x512xf32> to vector<16x512xf32>
    %403 = arith.mulf %400, %402 : vector<16x512xf32>
    %404 = vector.extract_strided_slice %388 {offsets = [0, 1], sizes = [16, 1], strides = [1, 1]} : vector<16x9xf32> to vector<16x1xf32>
    %405 = vector.broadcast %404 : vector<16x1xf32> to vector<16x512xf32>
    %406 = arith.mulf %403, %405 : vector<16x512xf32>
    %407 = arith.addf %399, %406 : vector<16x512xf32>
    %c15_i32_152 = arith.constant 15 : i32
    %408 = tpu.dynamic_rotate %387 by %c15_i32_152 dim 1 : vector<16x512xf32>, i32 -> vector<16x512xf32>
    %c2_153 = arith.constant 2 : index
    %c0_154 = arith.constant 0 : index
    %409 = vector.load %arg6[%c2_153, %c0_154] : memref<9x512xf32, #tpu.memory_space<vmem>>, vector<1x512xf32>
    %410 = vector.broadcast %409 : vector<1x512xf32> to vector<16x512xf32>
    %411 = arith.mulf %408, %410 : vector<16x512xf32>
    %412 = vector.extract_strided_slice %388 {offsets = [0, 2], sizes = [16, 1], strides = [1, 1]} : vector<16x9xf32> to vector<16x1xf32>
    %413 = vector.broadcast %412 : vector<16x1xf32> to vector<16x512xf32>
    %414 = arith.mulf %411, %413 : vector<16x512xf32>
    %415 = arith.addf %407, %414 : vector<16x512xf32>
    %c1_i32_155 = arith.constant 1 : i32
    %416 = tpu.dynamic_rotate %387 by %c1_i32_155 dim 1 : vector<16x512xf32>, i32 -> vector<16x512xf32>
    %c3_156 = arith.constant 3 : index
    %c0_157 = arith.constant 0 : index
    %417 = vector.load %arg6[%c3_156, %c0_157] : memref<9x512xf32, #tpu.memory_space<vmem>>, vector<1x512xf32>
    %418 = vector.broadcast %417 : vector<1x512xf32> to vector<16x512xf32>
    %419 = arith.mulf %416, %418 : vector<16x512xf32>
    %420 = vector.extract_strided_slice %388 {offsets = [0, 3], sizes = [16, 1], strides = [1, 1]} : vector<16x9xf32> to vector<16x1xf32>
    %421 = vector.broadcast %420 : vector<16x1xf32> to vector<16x512xf32>
    %422 = arith.mulf %419, %421 : vector<16x512xf32>
    %423 = arith.addf %415, %422 : vector<16x512xf32>
    %c511_i32_158 = arith.constant 511 : i32
    %424 = tpu.dynamic_rotate %387 by %c511_i32_158 dim 1 : vector<16x512xf32>, i32 -> vector<16x512xf32>
    %c5_159 = arith.constant 5 : index
    %c0_160 = arith.constant 0 : index
    %425 = vector.load %arg6[%c5_159, %c0_160] : memref<9x512xf32, #tpu.memory_space<vmem>>, vector<1x512xf32>
    %426 = vector.broadcast %425 : vector<1x512xf32> to vector<16x512xf32>
    %427 = arith.mulf %424, %426 : vector<16x512xf32>
    %428 = vector.extract_strided_slice %388 {offsets = [0, 5], sizes = [16, 1], strides = [1, 1]} : vector<16x9xf32> to vector<16x1xf32>
    %429 = vector.broadcast %428 : vector<16x1xf32> to vector<16x512xf32>
    %430 = arith.mulf %427, %429 : vector<16x512xf32>
    %431 = arith.addf %423, %430 : vector<16x512xf32>
    %c497_i32_161 = arith.constant 497 : i32
    %432 = tpu.dynamic_rotate %387 by %c497_i32_161 dim 1 : vector<16x512xf32>, i32 -> vector<16x512xf32>
    %c6_162 = arith.constant 6 : index
    %c0_163 = arith.constant 0 : index
    %433 = vector.load %arg6[%c6_162, %c0_163] : memref<9x512xf32, #tpu.memory_space<vmem>>, vector<1x512xf32>
    %434 = vector.broadcast %433 : vector<1x512xf32> to vector<16x512xf32>
    %435 = arith.mulf %432, %434 : vector<16x512xf32>
    %436 = vector.extract_strided_slice %388 {offsets = [0, 6], sizes = [16, 1], strides = [1, 1]} : vector<16x9xf32> to vector<16x1xf32>
    %437 = vector.broadcast %436 : vector<16x1xf32> to vector<16x512xf32>
    %438 = arith.mulf %435, %437 : vector<16x512xf32>
    %439 = arith.addf %431, %438 : vector<16x512xf32>
    %c496_i32_164 = arith.constant 496 : i32
    %440 = tpu.dynamic_rotate %387 by %c496_i32_164 dim 1 : vector<16x512xf32>, i32 -> vector<16x512xf32>
    %c7_165 = arith.constant 7 : index
    %c0_166 = arith.constant 0 : index
    %441 = vector.load %arg6[%c7_165, %c0_166] : memref<9x512xf32, #tpu.memory_space<vmem>>, vector<1x512xf32>
    %442 = vector.broadcast %441 : vector<1x512xf32> to vector<16x512xf32>
    %443 = arith.mulf %440, %442 : vector<16x512xf32>
    %444 = vector.extract_strided_slice %388 {offsets = [0, 7], sizes = [16, 1], strides = [1, 1]} : vector<16x9xf32> to vector<16x1xf32>
    %445 = vector.broadcast %444 : vector<16x1xf32> to vector<16x512xf32>
    %446 = arith.mulf %443, %445 : vector<16x512xf32>
    %447 = arith.addf %439, %446 : vector<16x512xf32>
    %c495_i32_167 = arith.constant 495 : i32
    %448 = tpu.dynamic_rotate %387 by %c495_i32_167 dim 1 : vector<16x512xf32>, i32 -> vector<16x512xf32>
    %c8_168 = arith.constant 8 : index
    %c0_169 = arith.constant 0 : index
    %449 = vector.load %arg6[%c8_168, %c0_169] : memref<9x512xf32, #tpu.memory_space<vmem>>, vector<1x512xf32>
    %450 = vector.broadcast %449 : vector<1x512xf32> to vector<16x512xf32>
    %451 = arith.mulf %448, %450 : vector<16x512xf32>
    %452 = vector.extract_strided_slice %388 {offsets = [0, 8], sizes = [16, 1], strides = [1, 1]} : vector<16x9xf32> to vector<16x1xf32>
    %453 = vector.broadcast %452 : vector<16x1xf32> to vector<16x512xf32>
    %454 = arith.mulf %451, %453 : vector<16x512xf32>
    %455 = arith.addf %447, %454 : vector<16x512xf32>
    %c32_170 = arith.constant 32 : index
    %c0_171 = arith.constant 0 : index
    %456 = vector.load %arg5[%c32_170, %c0_171] : memref<128x1xf32, #tpu.memory_space<vmem>>, vector<16x1xf32>
    %457 = vector.broadcast %456 : vector<16x1xf32> to vector<16x512xf32>
    %458 = arith.addf %455, %457 : vector<16x512xf32>
    %c96 = arith.constant 96 : index
    %c0_172 = arith.constant 0 : index
    %459 = vector.load %arg10[%c96, %c0_172] : memref<128x512xf32, #tpu.memory_space<vmem>>, vector<16x512xf32>
    %c96_173 = arith.constant 96 : index
    %c0_174 = arith.constant 0 : index
    %460 = vector.load %arg4[%c96_173, %c0_174] : memref<128x9xf32, #tpu.memory_space<vmem>>, vector<16x9xf32>
    %461 = vector.extract_strided_slice %460 {offsets = [0, 4], sizes = [16, 1], strides = [1, 1]} : vector<16x9xf32> to vector<16x1xf32>
    %462 = vector.broadcast %461 : vector<16x1xf32> to vector<16x512xf32>
    %463 = arith.mulf %459, %462 : vector<16x512xf32>
    %c17_i32_175 = arith.constant 17 : i32
    %464 = tpu.dynamic_rotate %459 by %c17_i32_175 dim 1 : vector<16x512xf32>, i32 -> vector<16x512xf32>
    %c0_176 = arith.constant 0 : index
    %c0_177 = arith.constant 0 : index
    %465 = vector.load %arg6[%c0_176, %c0_177] : memref<9x512xf32, #tpu.memory_space<vmem>>, vector<1x512xf32>
    %466 = vector.broadcast %465 : vector<1x512xf32> to vector<16x512xf32>
    %467 = arith.mulf %464, %466 : vector<16x512xf32>
    %468 = vector.extract_strided_slice %460 {offsets = [0, 0], sizes = [16, 1], strides = [1, 1]} : vector<16x9xf32> to vector<16x1xf32>
    %469 = vector.broadcast %468 : vector<16x1xf32> to vector<16x512xf32>
    %470 = arith.mulf %467, %469 : vector<16x512xf32>
    %471 = arith.addf %463, %470 : vector<16x512xf32>
    %c16_i32_178 = arith.constant 16 : i32
    %472 = tpu.dynamic_rotate %459 by %c16_i32_178 dim 1 : vector<16x512xf32>, i32 -> vector<16x512xf32>
    %c1_179 = arith.constant 1 : index
    %c0_180 = arith.constant 0 : index
    %473 = vector.load %arg6[%c1_179, %c0_180] : memref<9x512xf32, #tpu.memory_space<vmem>>, vector<1x512xf32>
    %474 = vector.broadcast %473 : vector<1x512xf32> to vector<16x512xf32>
    %475 = arith.mulf %472, %474 : vector<16x512xf32>
    %476 = vector.extract_strided_slice %460 {offsets = [0, 1], sizes = [16, 1], strides = [1, 1]} : vector<16x9xf32> to vector<16x1xf32>
    %477 = vector.broadcast %476 : vector<16x1xf32> to vector<16x512xf32>
    %478 = arith.mulf %475, %477 : vector<16x512xf32>
    %479 = arith.addf %471, %478 : vector<16x512xf32>
    %c15_i32_181 = arith.constant 15 : i32
    %480 = tpu.dynamic_rotate %459 by %c15_i32_181 dim 1 : vector<16x512xf32>, i32 -> vector<16x512xf32>
    %c2_182 = arith.constant 2 : index
    %c0_183 = arith.constant 0 : index
    %481 = vector.load %arg6[%c2_182, %c0_183] : memref<9x512xf32, #tpu.memory_space<vmem>>, vector<1x512xf32>
    %482 = vector.broadcast %481 : vector<1x512xf32> to vector<16x512xf32>
    %483 = arith.mulf %480, %482 : vector<16x512xf32>
    %484 = vector.extract_strided_slice %460 {offsets = [0, 2], sizes = [16, 1], strides = [1, 1]} : vector<16x9xf32> to vector<16x1xf32>
    %485 = vector.broadcast %484 : vector<16x1xf32> to vector<16x512xf32>
    %486 = arith.mulf %483, %485 : vector<16x512xf32>
    %487 = arith.addf %479, %486 : vector<16x512xf32>
    %c1_i32_184 = arith.constant 1 : i32
    %488 = tpu.dynamic_rotate %459 by %c1_i32_184 dim 1 : vector<16x512xf32>, i32 -> vector<16x512xf32>
    %c3_185 = arith.constant 3 : index
    %c0_186 = arith.constant 0 : index
    %489 = vector.load %arg6[%c3_185, %c0_186] : memref<9x512xf32, #tpu.memory_space<vmem>>, vector<1x512xf32>
    %490 = vector.broadcast %489 : vector<1x512xf32> to vector<16x512xf32>
    %491 = arith.mulf %488, %490 : vector<16x512xf32>
    %492 = vector.extract_strided_slice %460 {offsets = [0, 3], sizes = [16, 1], strides = [1, 1]} : vector<16x9xf32> to vector<16x1xf32>
    %493 = vector.broadcast %492 : vector<16x1xf32> to vector<16x512xf32>
    %494 = arith.mulf %491, %493 : vector<16x512xf32>
    %495 = arith.addf %487, %494 : vector<16x512xf32>
    %c511_i32_187 = arith.constant 511 : i32
    %496 = tpu.dynamic_rotate %459 by %c511_i32_187 dim 1 : vector<16x512xf32>, i32 -> vector<16x512xf32>
    %c5_188 = arith.constant 5 : index
    %c0_189 = arith.constant 0 : index
    %497 = vector.load %arg6[%c5_188, %c0_189] : memref<9x512xf32, #tpu.memory_space<vmem>>, vector<1x512xf32>
    %498 = vector.broadcast %497 : vector<1x512xf32> to vector<16x512xf32>
    %499 = arith.mulf %496, %498 : vector<16x512xf32>
    %500 = vector.extract_strided_slice %460 {offsets = [0, 5], sizes = [16, 1], strides = [1, 1]} : vector<16x9xf32> to vector<16x1xf32>
    %501 = vector.broadcast %500 : vector<16x1xf32> to vector<16x512xf32>
    %502 = arith.mulf %499, %501 : vector<16x512xf32>
    %503 = arith.addf %495, %502 : vector<16x512xf32>
    %c497_i32_190 = arith.constant 497 : i32
    %504 = tpu.dynamic_rotate %459 by %c497_i32_190 dim 1 : vector<16x512xf32>, i32 -> vector<16x512xf32>
    %c6_191 = arith.constant 6 : index
    %c0_192 = arith.constant 0 : index
    %505 = vector.load %arg6[%c6_191, %c0_192] : memref<9x512xf32, #tpu.memory_space<vmem>>, vector<1x512xf32>
    %506 = vector.broadcast %505 : vector<1x512xf32> to vector<16x512xf32>
    %507 = arith.mulf %504, %506 : vector<16x512xf32>
    %508 = vector.extract_strided_slice %460 {offsets = [0, 6], sizes = [16, 1], strides = [1, 1]} : vector<16x9xf32> to vector<16x1xf32>
    %509 = vector.broadcast %508 : vector<16x1xf32> to vector<16x512xf32>
    %510 = arith.mulf %507, %509 : vector<16x512xf32>
    %511 = arith.addf %503, %510 : vector<16x512xf32>
    %c496_i32_193 = arith.constant 496 : i32
    %512 = tpu.dynamic_rotate %459 by %c496_i32_193 dim 1 : vector<16x512xf32>, i32 -> vector<16x512xf32>
    %c7_194 = arith.constant 7 : index
    %c0_195 = arith.constant 0 : index
    %513 = vector.load %arg6[%c7_194, %c0_195] : memref<9x512xf32, #tpu.memory_space<vmem>>, vector<1x512xf32>
    %514 = vector.broadcast %513 : vector<1x512xf32> to vector<16x512xf32>
    %515 = arith.mulf %512, %514 : vector<16x512xf32>
    %516 = vector.extract_strided_slice %460 {offsets = [0, 7], sizes = [16, 1], strides = [1, 1]} : vector<16x9xf32> to vector<16x1xf32>
    %517 = vector.broadcast %516 : vector<16x1xf32> to vector<16x512xf32>
    %518 = arith.mulf %515, %517 : vector<16x512xf32>
    %519 = arith.addf %511, %518 : vector<16x512xf32>
    %c495_i32_196 = arith.constant 495 : i32
    %520 = tpu.dynamic_rotate %459 by %c495_i32_196 dim 1 : vector<16x512xf32>, i32 -> vector<16x512xf32>
    %c8_197 = arith.constant 8 : index
    %c0_198 = arith.constant 0 : index
    %521 = vector.load %arg6[%c8_197, %c0_198] : memref<9x512xf32, #tpu.memory_space<vmem>>, vector<1x512xf32>
    %522 = vector.broadcast %521 : vector<1x512xf32> to vector<16x512xf32>
    %523 = arith.mulf %520, %522 : vector<16x512xf32>
    %524 = vector.extract_strided_slice %460 {offsets = [0, 8], sizes = [16, 1], strides = [1, 1]} : vector<16x9xf32> to vector<16x1xf32>
    %525 = vector.broadcast %524 : vector<16x1xf32> to vector<16x512xf32>
    %526 = arith.mulf %523, %525 : vector<16x512xf32>
    %527 = arith.addf %519, %526 : vector<16x512xf32>
    %c96_199 = arith.constant 96 : index
    %c0_200 = arith.constant 0 : index
    %528 = vector.load %arg5[%c96_199, %c0_200] : memref<128x1xf32, #tpu.memory_space<vmem>>, vector<16x1xf32>
    %529 = vector.broadcast %528 : vector<16x1xf32> to vector<16x512xf32>
    %530 = arith.addf %527, %529 : vector<16x512xf32>
    %cst_201 = arith.constant 5.000000e-01 : f32
    %531 = vector.broadcast %cst_201 : f32 to vector<16x512xf32>
    %532 = arith.mulf %531, %458 : vector<16x512xf32>
    %cst_202 = arith.constant 0.707106769 : f32
    %533 = vector.broadcast %cst_202 : f32 to vector<16x512xf32>
    %534 = arith.mulf %458, %533 : vector<16x512xf32>
    %535 = math.absf %534 : vector<16x512xf32>
    %cst_203 = arith.constant 0.327591091 : f32
    %536 = vector.broadcast %cst_203 : f32 to vector<16x512xf32>
    %537 = arith.mulf %536, %535 : vector<16x512xf32>
    %cst_204 = arith.constant 1.000000e+00 : f32
    %538 = vector.broadcast %cst_204 : f32 to vector<16x512xf32>
    %539 = arith.addf %538, %537 : vector<16x512xf32>
    %540 = tpu.reciprocal %539 {approx = true} : vector<16x512xf32> -> vector<16x512xf32>
    %541 = arith.mulf %539, %540 : vector<16x512xf32>
    %cst_205 = arith.constant 2.000000e+00 : f32
    %542 = vector.broadcast %cst_205 : f32 to vector<16x512xf32>
    %543 = arith.subf %542, %541 : vector<16x512xf32>
    %544 = arith.mulf %540, %543 : vector<16x512xf32>
    %cst_206 = arith.constant 1.06140542 : f32
    %545 = vector.broadcast %cst_206 : f32 to vector<16x512xf32>
    %546 = arith.mulf %545, %544 : vector<16x512xf32>
    %cst_207 = arith.constant -1.45315206 : f32
    %547 = vector.broadcast %cst_207 : f32 to vector<16x512xf32>
    %548 = arith.addf %546, %547 : vector<16x512xf32>
    %549 = arith.mulf %548, %544 : vector<16x512xf32>
    %cst_208 = arith.constant 1.42141378 : f32
    %550 = vector.broadcast %cst_208 : f32 to vector<16x512xf32>
    %551 = arith.addf %549, %550 : vector<16x512xf32>
    %552 = arith.mulf %551, %544 : vector<16x512xf32>
    %cst_209 = arith.constant -0.284496725 : f32
    %553 = vector.broadcast %cst_209 : f32 to vector<16x512xf32>
    %554 = arith.addf %552, %553 : vector<16x512xf32>
    %555 = arith.mulf %554, %544 : vector<16x512xf32>
    %cst_210 = arith.constant 0.254829586 : f32
    %556 = vector.broadcast %cst_210 : f32 to vector<16x512xf32>
    %557 = arith.addf %555, %556 : vector<16x512xf32>
    %558 = arith.mulf %557, %544 : vector<16x512xf32>
    %cst_211 = arith.constant 0.000000e+00 : f32
    %559 = vector.broadcast %cst_211 : f32 to vector<16x512xf32>
    %560 = arith.subf %559, %535 : vector<16x512xf32>
    %561 = arith.mulf %560, %535 : vector<16x512xf32>
    %562 = math.exp %561 : vector<16x512xf32>
    %563 = arith.mulf %558, %562 : vector<16x512xf32>
    %cst_212 = arith.constant 1.000000e+00 : f32
    %564 = vector.broadcast %cst_212 : f32 to vector<16x512xf32>
    %565 = arith.subf %564, %563 : vector<16x512xf32>
    %cst_213 = arith.constant 0.000000e+00 : f32
    %566 = vector.broadcast %cst_213 : f32 to vector<16x512xf32>
    %567 = arith.cmpf oge, %534, %566 : vector<16x512xf32>
    %cst_214 = arith.constant 0.000000e+00 : f32
    %568 = vector.broadcast %cst_214 : f32 to vector<16x512xf32>
    %569 = arith.subf %568, %565 : vector<16x512xf32>
    %570 = arith.select %567, %565, %569 : vector<16x512xi1>, vector<16x512xf32>
    %cst_215 = arith.constant 1.000000e+00 : f32
    %571 = vector.broadcast %cst_215 : f32 to vector<16x512xf32>
    %572 = arith.addf %571, %570 : vector<16x512xf32>
    %573 = arith.mulf %532, %572 : vector<16x512xf32>
    %574 = arith.mulf %573, %530 : vector<16x512xf32>
    %575 = arith.truncf %574 : vector<16x512xf32> to vector<16x512xbf16>
    %c32_216 = arith.constant 32 : index
    %c0_217 = arith.constant 0 : index
    %576 = vector.load %arg11[%c32_216, %c0_217] : memref<64x512xbf16, #tpu.memory_space<vmem>>, vector<16x512xbf16>
    tpu.vector_store %arg11[%c32_216, %c0_217], %575 {strides = array<i32>} : memref<64x512xbf16, #tpu.memory_space<vmem>>, vector<16x512xbf16>,
    %c48 = arith.constant 48 : index
    %c0_218 = arith.constant 0 : index
    %577 = vector.load %arg10[%c48, %c0_218] : memref<128x512xf32, #tpu.memory_space<vmem>>, vector<16x512xf32>
    %c48_219 = arith.constant 48 : index
    %c0_220 = arith.constant 0 : index
    %578 = vector.load %arg4[%c48_219, %c0_220] : memref<128x9xf32, #tpu.memory_space<vmem>>, vector<16x9xf32>
    %579 = vector.extract_strided_slice %578 {offsets = [0, 4], sizes = [16, 1], strides = [1, 1]} : vector<16x9xf32> to vector<16x1xf32>
    %580 = vector.broadcast %579 : vector<16x1xf32> to vector<16x512xf32>
    %581 = arith.mulf %577, %580 : vector<16x512xf32>
    %c17_i32_221 = arith.constant 17 : i32
    %582 = tpu.dynamic_rotate %577 by %c17_i32_221 dim 1 : vector<16x512xf32>, i32 -> vector<16x512xf32>
    %c0_222 = arith.constant 0 : index
    %c0_223 = arith.constant 0 : index
    %583 = vector.load %arg6[%c0_222, %c0_223] : memref<9x512xf32, #tpu.memory_space<vmem>>, vector<1x512xf32>
    %584 = vector.broadcast %583 : vector<1x512xf32> to vector<16x512xf32>
    %585 = arith.mulf %582, %584 : vector<16x512xf32>
    %586 = vector.extract_strided_slice %578 {offsets = [0, 0], sizes = [16, 1], strides = [1, 1]} : vector<16x9xf32> to vector<16x1xf32>
    %587 = vector.broadcast %586 : vector<16x1xf32> to vector<16x512xf32>
    %588 = arith.mulf %585, %587 : vector<16x512xf32>
    %589 = arith.addf %581, %588 : vector<16x512xf32>
    %c16_i32_224 = arith.constant 16 : i32
    %590 = tpu.dynamic_rotate %577 by %c16_i32_224 dim 1 : vector<16x512xf32>, i32 -> vector<16x512xf32>
    %c1_225 = arith.constant 1 : index
    %c0_226 = arith.constant 0 : index
    %591 = vector.load %arg6[%c1_225, %c0_226] : memref<9x512xf32, #tpu.memory_space<vmem>>, vector<1x512xf32>
    %592 = vector.broadcast %591 : vector<1x512xf32> to vector<16x512xf32>
    %593 = arith.mulf %590, %592 : vector<16x512xf32>
    %594 = vector.extract_strided_slice %578 {offsets = [0, 1], sizes = [16, 1], strides = [1, 1]} : vector<16x9xf32> to vector<16x1xf32>
    %595 = vector.broadcast %594 : vector<16x1xf32> to vector<16x512xf32>
    %596 = arith.mulf %593, %595 : vector<16x512xf32>
    %597 = arith.addf %589, %596 : vector<16x512xf32>
    %c15_i32_227 = arith.constant 15 : i32
    %598 = tpu.dynamic_rotate %577 by %c15_i32_227 dim 1 : vector<16x512xf32>, i32 -> vector<16x512xf32>
    %c2_228 = arith.constant 2 : index
    %c0_229 = arith.constant 0 : index
    %599 = vector.load %arg6[%c2_228, %c0_229] : memref<9x512xf32, #tpu.memory_space<vmem>>, vector<1x512xf32>
    %600 = vector.broadcast %599 : vector<1x512xf32> to vector<16x512xf32>
    %601 = arith.mulf %598, %600 : vector<16x512xf32>
    %602 = vector.extract_strided_slice %578 {offsets = [0, 2], sizes = [16, 1], strides = [1, 1]} : vector<16x9xf32> to vector<16x1xf32>
    %603 = vector.broadcast %602 : vector<16x1xf32> to vector<16x512xf32>
    %604 = arith.mulf %601, %603 : vector<16x512xf32>
    %605 = arith.addf %597, %604 : vector<16x512xf32>
    %c1_i32_230 = arith.constant 1 : i32
    %606 = tpu.dynamic_rotate %577 by %c1_i32_230 dim 1 : vector<16x512xf32>, i32 -> vector<16x512xf32>
    %c3_231 = arith.constant 3 : index
    %c0_232 = arith.constant 0 : index
    %607 = vector.load %arg6[%c3_231, %c0_232] : memref<9x512xf32, #tpu.memory_space<vmem>>, vector<1x512xf32>
    %608 = vector.broadcast %607 : vector<1x512xf32> to vector<16x512xf32>
    %609 = arith.mulf %606, %608 : vector<16x512xf32>
    %610 = vector.extract_strided_slice %578 {offsets = [0, 3], sizes = [16, 1], strides = [1, 1]} : vector<16x9xf32> to vector<16x1xf32>
    %611 = vector.broadcast %610 : vector<16x1xf32> to vector<16x512xf32>
    %612 = arith.mulf %609, %611 : vector<16x512xf32>
    %613 = arith.addf %605, %612 : vector<16x512xf32>
    %c511_i32_233 = arith.constant 511 : i32
    %614 = tpu.dynamic_rotate %577 by %c511_i32_233 dim 1 : vector<16x512xf32>, i32 -> vector<16x512xf32>
    %c5_234 = arith.constant 5 : index
    %c0_235 = arith.constant 0 : index
    %615 = vector.load %arg6[%c5_234, %c0_235] : memref<9x512xf32, #tpu.memory_space<vmem>>, vector<1x512xf32>
    %616 = vector.broadcast %615 : vector<1x512xf32> to vector<16x512xf32>
    %617 = arith.mulf %614, %616 : vector<16x512xf32>
    %618 = vector.extract_strided_slice %578 {offsets = [0, 5], sizes = [16, 1], strides = [1, 1]} : vector<16x9xf32> to vector<16x1xf32>
    %619 = vector.broadcast %618 : vector<16x1xf32> to vector<16x512xf32>
    %620 = arith.mulf %617, %619 : vector<16x512xf32>
    %621 = arith.addf %613, %620 : vector<16x512xf32>
    %c497_i32_236 = arith.constant 497 : i32
    %622 = tpu.dynamic_rotate %577 by %c497_i32_236 dim 1 : vector<16x512xf32>, i32 -> vector<16x512xf32>
    %c6_237 = arith.constant 6 : index
    %c0_238 = arith.constant 0 : index
    %623 = vector.load %arg6[%c6_237, %c0_238] : memref<9x512xf32, #tpu.memory_space<vmem>>, vector<1x512xf32>
    %624 = vector.broadcast %623 : vector<1x512xf32> to vector<16x512xf32>
    %625 = arith.mulf %622, %624 : vector<16x512xf32>
    %626 = vector.extract_strided_slice %578 {offsets = [0, 6], sizes = [16, 1], strides = [1, 1]} : vector<16x9xf32> to vector<16x1xf32>
    %627 = vector.broadcast %626 : vector<16x1xf32> to vector<16x512xf32>
    %628 = arith.mulf %625, %627 : vector<16x512xf32>
    %629 = arith.addf %621, %628 : vector<16x512xf32>
    %c496_i32_239 = arith.constant 496 : i32
    %630 = tpu.dynamic_rotate %577 by %c496_i32_239 dim 1 : vector<16x512xf32>, i32 -> vector<16x512xf32>
    %c7_240 = arith.constant 7 : index
    %c0_241 = arith.constant 0 : index
    %631 = vector.load %arg6[%c7_240, %c0_241] : memref<9x512xf32, #tpu.memory_space<vmem>>, vector<1x512xf32>
    %632 = vector.broadcast %631 : vector<1x512xf32> to vector<16x512xf32>
    %633 = arith.mulf %630, %632 : vector<16x512xf32>
    %634 = vector.extract_strided_slice %578 {offsets = [0, 7], sizes = [16, 1], strides = [1, 1]} : vector<16x9xf32> to vector<16x1xf32>
    %635 = vector.broadcast %634 : vector<16x1xf32> to vector<16x512xf32>
    %636 = arith.mulf %633, %635 : vector<16x512xf32>
    %637 = arith.addf %629, %636 : vector<16x512xf32>
    %c495_i32_242 = arith.constant 495 : i32
    %638 = tpu.dynamic_rotate %577 by %c495_i32_242 dim 1 : vector<16x512xf32>, i32 -> vector<16x512xf32>
    %c8_243 = arith.constant 8 : index
    %c0_244 = arith.constant 0 : index
    %639 = vector.load %arg6[%c8_243, %c0_244] : memref<9x512xf32, #tpu.memory_space<vmem>>, vector<1x512xf32>
    %640 = vector.broadcast %639 : vector<1x512xf32> to vector<16x512xf32>
    %641 = arith.mulf %638, %640 : vector<16x512xf32>
    %642 = vector.extract_strided_slice %578 {offsets = [0, 8], sizes = [16, 1], strides = [1, 1]} : vector<16x9xf32> to vector<16x1xf32>
    %643 = vector.broadcast %642 : vector<16x1xf32> to vector<16x512xf32>
    %644 = arith.mulf %641, %643 : vector<16x512xf32>
    %645 = arith.addf %637, %644 : vector<16x512xf32>
    %c48_245 = arith.constant 48 : index
    %c0_246 = arith.constant 0 : index
    %646 = vector.load %arg5[%c48_245, %c0_246] : memref<128x1xf32, #tpu.memory_space<vmem>>, vector<16x1xf32>
    %647 = vector.broadcast %646 : vector<16x1xf32> to vector<16x512xf32>
    %648 = arith.addf %645, %647 : vector<16x512xf32>
    %c112 = arith.constant 112 : index
    %c0_247 = arith.constant 0 : index
    %649 = vector.load %arg10[%c112, %c0_247] : memref<128x512xf32, #tpu.memory_space<vmem>>, vector<16x512xf32>
    %c112_248 = arith.constant 112 : index
    %c0_249 = arith.constant 0 : index
    %650 = vector.load %arg4[%c112_248, %c0_249] : memref<128x9xf32, #tpu.memory_space<vmem>>, vector<16x9xf32>
    %651 = vector.extract_strided_slice %650 {offsets = [0, 4], sizes = [16, 1], strides = [1, 1]} : vector<16x9xf32> to vector<16x1xf32>
    %652 = vector.broadcast %651 : vector<16x1xf32> to vector<16x512xf32>
    %653 = arith.mulf %649, %652 : vector<16x512xf32>
    %c17_i32_250 = arith.constant 17 : i32
    %654 = tpu.dynamic_rotate %649 by %c17_i32_250 dim 1 : vector<16x512xf32>, i32 -> vector<16x512xf32>
    %c0_251 = arith.constant 0 : index
    %c0_252 = arith.constant 0 : index
    %655 = vector.load %arg6[%c0_251, %c0_252] : memref<9x512xf32, #tpu.memory_space<vmem>>, vector<1x512xf32>
    %656 = vector.broadcast %655 : vector<1x512xf32> to vector<16x512xf32>
    %657 = arith.mulf %654, %656 : vector<16x512xf32>
    %658 = vector.extract_strided_slice %650 {offsets = [0, 0], sizes = [16, 1], strides = [1, 1]} : vector<16x9xf32> to vector<16x1xf32>
    %659 = vector.broadcast %658 : vector<16x1xf32> to vector<16x512xf32>
    %660 = arith.mulf %657, %659 : vector<16x512xf32>
    %661 = arith.addf %653, %660 : vector<16x512xf32>
    %c16_i32_253 = arith.constant 16 : i32
    %662 = tpu.dynamic_rotate %649 by %c16_i32_253 dim 1 : vector<16x512xf32>, i32 -> vector<16x512xf32>
    %c1_254 = arith.constant 1 : index
    %c0_255 = arith.constant 0 : index
    %663 = vector.load %arg6[%c1_254, %c0_255] : memref<9x512xf32, #tpu.memory_space<vmem>>, vector<1x512xf32>
    %664 = vector.broadcast %663 : vector<1x512xf32> to vector<16x512xf32>
    %665 = arith.mulf %662, %664 : vector<16x512xf32>
    %666 = vector.extract_strided_slice %650 {offsets = [0, 1], sizes = [16, 1], strides = [1, 1]} : vector<16x9xf32> to vector<16x1xf32>
    %667 = vector.broadcast %666 : vector<16x1xf32> to vector<16x512xf32>
    %668 = arith.mulf %665, %667 : vector<16x512xf32>
    %669 = arith.addf %661, %668 : vector<16x512xf32>
    %c15_i32_256 = arith.constant 15 : i32
    %670 = tpu.dynamic_rotate %649 by %c15_i32_256 dim 1 : vector<16x512xf32>, i32 -> vector<16x512xf32>
    %c2_257 = arith.constant 2 : index
    %c0_258 = arith.constant 0 : index
    %671 = vector.load %arg6[%c2_257, %c0_258] : memref<9x512xf32, #tpu.memory_space<vmem>>, vector<1x512xf32>
    %672 = vector.broadcast %671 : vector<1x512xf32> to vector<16x512xf32>
    %673 = arith.mulf %670, %672 : vector<16x512xf32>
    %674 = vector.extract_strided_slice %650 {offsets = [0, 2], sizes = [16, 1], strides = [1, 1]} : vector<16x9xf32> to vector<16x1xf32>
    %675 = vector.broadcast %674 : vector<16x1xf32> to vector<16x512xf32>
    %676 = arith.mulf %673, %675 : vector<16x512xf32>
    %677 = arith.addf %669, %676 : vector<16x512xf32>
    %c1_i32_259 = arith.constant 1 : i32
    %678 = tpu.dynamic_rotate %649 by %c1_i32_259 dim 1 : vector<16x512xf32>, i32 -> vector<16x512xf32>
    %c3_260 = arith.constant 3 : index
    %c0_261 = arith.constant 0 : index
    %679 = vector.load %arg6[%c3_260, %c0_261] : memref<9x512xf32, #tpu.memory_space<vmem>>, vector<1x512xf32>
    %680 = vector.broadcast %679 : vector<1x512xf32> to vector<16x512xf32>
    %681 = arith.mulf %678, %680 : vector<16x512xf32>
    %682 = vector.extract_strided_slice %650 {offsets = [0, 3], sizes = [16, 1], strides = [1, 1]} : vector<16x9xf32> to vector<16x1xf32>
    %683 = vector.broadcast %682 : vector<16x1xf32> to vector<16x512xf32>
    %684 = arith.mulf %681, %683 : vector<16x512xf32>
    %685 = arith.addf %677, %684 : vector<16x512xf32>
    %c511_i32_262 = arith.constant 511 : i32
    %686 = tpu.dynamic_rotate %649 by %c511_i32_262 dim 1 : vector<16x512xf32>, i32 -> vector<16x512xf32>
    %c5_263 = arith.constant 5 : index
    %c0_264 = arith.constant 0 : index
    %687 = vector.load %arg6[%c5_263, %c0_264] : memref<9x512xf32, #tpu.memory_space<vmem>>, vector<1x512xf32>
    %688 = vector.broadcast %687 : vector<1x512xf32> to vector<16x512xf32>
    %689 = arith.mulf %686, %688 : vector<16x512xf32>
    %690 = vector.extract_strided_slice %650 {offsets = [0, 5], sizes = [16, 1], strides = [1, 1]} : vector<16x9xf32> to vector<16x1xf32>
    %691 = vector.broadcast %690 : vector<16x1xf32> to vector<16x512xf32>
    %692 = arith.mulf %689, %691 : vector<16x512xf32>
    %693 = arith.addf %685, %692 : vector<16x512xf32>
    %c497_i32_265 = arith.constant 497 : i32
    %694 = tpu.dynamic_rotate %649 by %c497_i32_265 dim 1 : vector<16x512xf32>, i32 -> vector<16x512xf32>
    %c6_266 = arith.constant 6 : index
    %c0_267 = arith.constant 0 : index
    %695 = vector.load %arg6[%c6_266, %c0_267] : memref<9x512xf32, #tpu.memory_space<vmem>>, vector<1x512xf32>
    %696 = vector.broadcast %695 : vector<1x512xf32> to vector<16x512xf32>
    %697 = arith.mulf %694, %696 : vector<16x512xf32>
    %698 = vector.extract_strided_slice %650 {offsets = [0, 6], sizes = [16, 1], strides = [1, 1]} : vector<16x9xf32> to vector<16x1xf32>
    %699 = vector.broadcast %698 : vector<16x1xf32> to vector<16x512xf32>
    %700 = arith.mulf %697, %699 : vector<16x512xf32>
    %701 = arith.addf %693, %700 : vector<16x512xf32>
    %c496_i32_268 = arith.constant 496 : i32
    %702 = tpu.dynamic_rotate %649 by %c496_i32_268 dim 1 : vector<16x512xf32>, i32 -> vector<16x512xf32>
    %c7_269 = arith.constant 7 : index
    %c0_270 = arith.constant 0 : index
    %703 = vector.load %arg6[%c7_269, %c0_270] : memref<9x512xf32, #tpu.memory_space<vmem>>, vector<1x512xf32>
    %704 = vector.broadcast %703 : vector<1x512xf32> to vector<16x512xf32>
    %705 = arith.mulf %702, %704 : vector<16x512xf32>
    %706 = vector.extract_strided_slice %650 {offsets = [0, 7], sizes = [16, 1], strides = [1, 1]} : vector<16x9xf32> to vector<16x1xf32>
    %707 = vector.broadcast %706 : vector<16x1xf32> to vector<16x512xf32>
    %708 = arith.mulf %705, %707 : vector<16x512xf32>
    %709 = arith.addf %701, %708 : vector<16x512xf32>
    %c495_i32_271 = arith.constant 495 : i32
    %710 = tpu.dynamic_rotate %649 by %c495_i32_271 dim 1 : vector<16x512xf32>, i32 -> vector<16x512xf32>
    %c8_272 = arith.constant 8 : index
    %c0_273 = arith.constant 0 : index
    %711 = vector.load %arg6[%c8_272, %c0_273] : memref<9x512xf32, #tpu.memory_space<vmem>>, vector<1x512xf32>
    %712 = vector.broadcast %711 : vector<1x512xf32> to vector<16x512xf32>
    %713 = arith.mulf %710, %712 : vector<16x512xf32>
    %714 = vector.extract_strided_slice %650 {offsets = [0, 8], sizes = [16, 1], strides = [1, 1]} : vector<16x9xf32> to vector<16x1xf32>
    %715 = vector.broadcast %714 : vector<16x1xf32> to vector<16x512xf32>
    %716 = arith.mulf %713, %715 : vector<16x512xf32>
    %717 = arith.addf %709, %716 : vector<16x512xf32>
    %c112_274 = arith.constant 112 : index
    %c0_275 = arith.constant 0 : index
    %718 = vector.load %arg5[%c112_274, %c0_275] : memref<128x1xf32, #tpu.memory_space<vmem>>, vector<16x1xf32>
    %719 = vector.broadcast %718 : vector<16x1xf32> to vector<16x512xf32>
    %720 = arith.addf %717, %719 : vector<16x512xf32>
    %cst_276 = arith.constant 5.000000e-01 : f32
    %721 = vector.broadcast %cst_276 : f32 to vector<16x512xf32>
    %722 = arith.mulf %721, %648 : vector<16x512xf32>
    %cst_277 = arith.constant 0.707106769 : f32
    %723 = vector.broadcast %cst_277 : f32 to vector<16x512xf32>
    %724 = arith.mulf %648, %723 : vector<16x512xf32>
    %725 = math.absf %724 : vector<16x512xf32>
    %cst_278 = arith.constant 0.327591091 : f32
    %726 = vector.broadcast %cst_278 : f32 to vector<16x512xf32>
    %727 = arith.mulf %726, %725 : vector<16x512xf32>
    %cst_279 = arith.constant 1.000000e+00 : f32
    %728 = vector.broadcast %cst_279 : f32 to vector<16x512xf32>
    %729 = arith.addf %728, %727 : vector<16x512xf32>
    %730 = tpu.reciprocal %729 {approx = true} : vector<16x512xf32> -> vector<16x512xf32>
    %731 = arith.mulf %729, %730 : vector<16x512xf32>
    %cst_280 = arith.constant 2.000000e+00 : f32
    %732 = vector.broadcast %cst_280 : f32 to vector<16x512xf32>
    %733 = arith.subf %732, %731 : vector<16x512xf32>
    %734 = arith.mulf %730, %733 : vector<16x512xf32>
    %cst_281 = arith.constant 1.06140542 : f32
    %735 = vector.broadcast %cst_281 : f32 to vector<16x512xf32>
    %736 = arith.mulf %735, %734 : vector<16x512xf32>
    %cst_282 = arith.constant -1.45315206 : f32
    %737 = vector.broadcast %cst_282 : f32 to vector<16x512xf32>
    %738 = arith.addf %736, %737 : vector<16x512xf32>
    %739 = arith.mulf %738, %734 : vector<16x512xf32>
    %cst_283 = arith.constant 1.42141378 : f32
    %740 = vector.broadcast %cst_283 : f32 to vector<16x512xf32>
    %741 = arith.addf %739, %740 : vector<16x512xf32>
    %742 = arith.mulf %741, %734 : vector<16x512xf32>
    %cst_284 = arith.constant -0.284496725 : f32
    %743 = vector.broadcast %cst_284 : f32 to vector<16x512xf32>
    %744 = arith.addf %742, %743 : vector<16x512xf32>
    %745 = arith.mulf %744, %734 : vector<16x512xf32>
    %cst_285 = arith.constant 0.254829586 : f32
    %746 = vector.broadcast %cst_285 : f32 to vector<16x512xf32>
    %747 = arith.addf %745, %746 : vector<16x512xf32>
    %748 = arith.mulf %747, %734 : vector<16x512xf32>
    %cst_286 = arith.constant 0.000000e+00 : f32
    %749 = vector.broadcast %cst_286 : f32 to vector<16x512xf32>
    %750 = arith.subf %749, %725 : vector<16x512xf32>
    %751 = arith.mulf %750, %725 : vector<16x512xf32>
    %752 = math.exp %751 : vector<16x512xf32>
    %753 = arith.mulf %748, %752 : vector<16x512xf32>
    %cst_287 = arith.constant 1.000000e+00 : f32
    %754 = vector.broadcast %cst_287 : f32 to vector<16x512xf32>
    %755 = arith.subf %754, %753 : vector<16x512xf32>
    %cst_288 = arith.constant 0.000000e+00 : f32
    %756 = vector.broadcast %cst_288 : f32 to vector<16x512xf32>
    %757 = arith.cmpf oge, %724, %756 : vector<16x512xf32>
    %cst_289 = arith.constant 0.000000e+00 : f32
    %758 = vector.broadcast %cst_289 : f32 to vector<16x512xf32>
    %759 = arith.subf %758, %755 : vector<16x512xf32>
    %760 = arith.select %757, %755, %759 : vector<16x512xi1>, vector<16x512xf32>
    %cst_290 = arith.constant 1.000000e+00 : f32
    %761 = vector.broadcast %cst_290 : f32 to vector<16x512xf32>
    %762 = arith.addf %761, %760 : vector<16x512xf32>
    %763 = arith.mulf %722, %762 : vector<16x512xf32>
    %764 = arith.mulf %763, %720 : vector<16x512xf32>
    %765 = arith.truncf %764 : vector<16x512xf32> to vector<16x512xbf16>
    %c48_291 = arith.constant 48 : index
    %c0_292 = arith.constant 0 : index
    %766 = vector.load %arg11[%c48_291, %c0_292] : memref<64x512xbf16, #tpu.memory_space<vmem>>, vector<16x512xbf16>
    tpu.vector_store %arg11[%c48_291, %c0_292], %765 {strides = array<i32>} : memref<64x512xbf16, #tpu.memory_space<vmem>>, vector<16x512xbf16>,
    %c0_293 = arith.constant 0 : index
    %c0_294 = arith.constant 0 : index
    %767 = vector.load %arg7[%c0_293, %c0_294] : memref<32x64xbf16, #tpu.memory_space<vmem>>, vector<32x64xbf16>
    %c0_295 = arith.constant 0 : index
    %c0_296 = arith.constant 0 : index
    %768 = vector.load %arg11[%c0_295, %c0_296] : memref<64x512xbf16, #tpu.memory_space<vmem>>, vector<64x512xbf16>
    %cst_297 = arith.constant dense<0.000000e+00> : vector<32x512xf32>
    %769 = tpu.matmul %767, %768, %cst_297 {dimension_numbers = #tpu.dot_dimension_numbers<[1], [0], [0], [1], [0, 0, 1, 1], [], []>} : vector<32x64xbf16>, vector<64x512xbf16>, vector<32x512xf32> -> vector<32x512xf32>
    %c0_298 = arith.constant 0 : index
    %c0_299 = arith.constant 0 : index
    %770 = vector.load %arg8[%c0_298, %c0_299] : memref<32x1xf32, #tpu.memory_space<vmem>>, vector<32x1xf32>
    %771 = vector.broadcast %770 : vector<32x1xf32> to vector<32x512xf32>
    %772 = arith.addf %769, %771 : vector<32x512xf32>
    %c0_300 = arith.constant 0 : index
    %c0_301 = arith.constant 0 : index
    %773 = vector.load %arg9[%c0_300, %c0_301] : memref<32x512xf32, #tpu.memory_space<vmem>>, vector<32x512xf32>
    tpu.vector_store %arg9[%c0_300, %c0_301], %772 {strides = array<i32>} : memref<32x512xf32, #tpu.memory_space<vmem>>, vector<32x512xf32>,
    return
  }
  func.func @transform_0(%arg0: i32) -> (i32, i32) {
    %c0_i32 = arith.constant 0 : i32
    %c0_i32_0 = arith.constant 0 : i32
    %c0_i32_1 = arith.constant 0 : i32
    return %c0_i32, %c0_i32_0 : i32, i32
  }
  func.func @transform_1(%arg0: i32) -> (i32, i32) {
    %c0_i32 = arith.constant 0 : i32
    %c0_i32_0 = arith.constant 0 : i32
    %c0_i32_1 = arith.constant 0 : i32
    return %c0_i32, %c0_i32_0 : i32, i32
  }
  func.func @transform_2(%arg0: i32) -> (i32, i32) {
    %c0_i32 = arith.constant 0 : i32
    %c0_i32_0 = arith.constant 0 : i32
    %c0_i32_1 = arith.constant 0 : i32
    return %c0_i32, %c0_i32_0 : i32, i32
  }
  func.func @transform_3(%arg0: i32) -> (i32, i32) {
    %c0_i32 = arith.constant 0 : i32
    %c0_i32_0 = arith.constant 0 : i32
    %c0_i32_1 = arith.constant 0 : i32
    return %c0_i32, %c0_i32_0 : i32, i32
  }
  func.func @transform_4(%arg0: i32) -> (i32, i32) {
    %c0_i32 = arith.constant 0 : i32
    %c0_i32_0 = arith.constant 0 : i32
    %c0_i32_1 = arith.constant 0 : i32
    return %c0_i32, %c0_i32_0 : i32, i32
  }
  func.func @transform_5(%arg0: i32) -> (i32, i32) {
    %c0_i32 = arith.constant 0 : i32
    %c0_i32_0 = arith.constant 0 : i32
    %c0_i32_1 = arith.constant 0 : i32
    return %c0_i32, %c0_i32_0 : i32, i32
  }
  func.func @transform_6(%arg0: i32) -> (i32, i32) {
    %c0_i32 = arith.constant 0 : i32
    %c0_i32_0 = arith.constant 0 : i32
    %c0_i32_1 = arith.constant 0 : i32
    return %c0_i32, %c0_i32_0 : i32, i32
  }
  func.func @transform_7(%arg0: i32) -> (i32, i32) {
    %c0_i32 = arith.constant 0 : i32
    %c0_i32_0 = arith.constant 0 : i32
    %c0_i32_1 = arith.constant 0 : i32
    return %c0_i32, %c0_i32_0 : i32, i32
  }
  func.func @transform_8(%arg0: i32) -> (i32, i32) {
    %c0_i32 = arith.constant 0 : i32
    %c0_i32_0 = arith.constant 0 : i32
    %c0_i32_1 = arith.constant 0 : i32
    return %c0_i32, %c0_i32_0 : i32, i32
  }
}

</mosaic_0001>

<llo_original>
// kernel: tpu_custom_call.1
$region0: #{tpu_custom_call.1}
  #allocation0 [shape = 'u32[]', space=smem, size = 0x4, offset = 0x4, fixed_abs, tag = 'smem constant byte address 0x4 - core index']
  #allocation1 [shape = 'u32[144,128]{1,0:T(1,128)}', space=vmem, size = 0x12000, scoped, tag = 'internal scratch']
  #allocation2 [shape = 'f32[128,512]{1,0:T(8,128)}', space=vmem, size = 0x40000, scoped, tag = 'scratch operand']
  #allocation3 [shape = 'bf16[64,512]{1,0:T(16,128)(2,1)}', space=vmem, size = 0x10000, scoped, tag = 'scratch operand']
  %s0 = inlined_call_operand.vmem [shape: bf16[32,512], index: 0, kind: input, shape index: {}]
  %s1 = inlined_call_operand.vmem [shape: bf16[128,32], index: 1, kind: input, shape index: {}]
  %s2 = inlined_call_operand.vmem [shape: f32[128,1], index: 2, kind: input, shape index: {}]
  %s3 = inlined_call_operand.vmem [shape: f32[128,9], index: 3, kind: input, shape index: {}]
  %s4 = inlined_call_operand.vmem [shape: f32[128,1], index: 4, kind: input, shape index: {}]
  %s5 = inlined_call_operand.vmem [shape: f32[9,512], index: 5, kind: input, shape index: {}]
  %s6 = inlined_call_operand.vmem [shape: bf16[32,64], index: 6, kind: input, shape index: {}]
  %s7 = inlined_call_operand.vmem [shape: f32[32,1], index: 7, kind: input, shape index: {}]
  %s8 = inlined_call_operand.hbm [shape: f32[32,512], index: 8, kind: output, shape index: {}]
  %s9 = sld [smem:[#allocation0]]
  $region42: #{tpu_custom_call.1} parent=0
    _
  %s11 = ssub.s32 1, %s9
  %s12 = scalar_select 0, %s11, %s9
  $region1: #{tpu_custom_call.1} parent=0
    #allocation4 [shape = 'u8[65536]{0}', space=vmem, size = 0x10000, scoped, tag = 'output window, operand 0, single buffered']
    #allocation5 [shape = 's32[1]{0}', space=sflag, size = 0x4, scoped, tag = 'scoped memory for tpu_custom_call.1']
    %13 = vsyncpa [#allocation5], 0
    // Predicated region
    $region2: #{tpu_custom_call.1} parent=1 // pred_check
      _
    $region3: #{tpu_custom_call.1} parent=1 // pred_check_branch
      %15 = sbr.rel (0) target = $region5
    $region4: #{tpu_custom_call.1} parent=1 // pred_region
      _
    $region5: #{tpu_custom_call.1} parent=1 // pred_fallthru
      _
    // Predicated region
    $region6: #{tpu_custom_call.1} parent=1 // pred_check
      _
    $region7: #{tpu_custom_call.1} parent=1 // pred_check_branch
      %17 = sbr.rel (0) target = $region9
    $region8: #{tpu_custom_call.1} parent=1 // pred_region
      _
    $region9: #{tpu_custom_call.1} parent=1 // pred_fallthru
      _
    // Predicated region
    $region10: #{tpu_custom_call.1} parent=1 // pred_check
      _
    $region11: #{tpu_custom_call.1} parent=1 // pred_check_branch
      %19 = sbr.rel (0) target = $region13
    $region12: #{tpu_custom_call.1} parent=1 // pred_region
      _
    $region13: #{tpu_custom_call.1} parent=1 // pred_fallthru
      _
    // Predicated region
    $region14: #{tpu_custom_call.1} parent=1 // pred_check
      _
    $region15: #{tpu_custom_call.1} parent=1 // pred_check_branch
      %21 = sbr.rel (0) target = $region17
    $region16: #{tpu_custom_call.1} parent=1 // pred_region
      _
    $region17: #{tpu_custom_call.1} parent=1 // pred_fallthru
      _
    // Predicated region
    $region18: #{tpu_custom_call.1} parent=1 // pred_check
      _
    $region19: #{tpu_custom_call.1} parent=1 // pred_check_branch
      %23 = sbr.rel (0) target = $region21
    $region20: #{tpu_custom_call.1} parent=1 // pred_region
      _
    $region21: #{tpu_custom_call.1} parent=1 // pred_fallthru
      _
    // Predicated region
    $region22: #{tpu_custom_call.1} parent=1 // pred_check
      _
    $region23: #{tpu_custom_call.1} parent=1 // pred_check_branch
      %25 = sbr.rel (0) target = $region25
    $region24: #{tpu_custom_call.1} parent=1 // pred_region
      _
    $region25: #{tpu_custom_call.1} parent=1 // pred_fallthru
      _
    // Predicated region
    $region26: #{tpu_custom_call.1} parent=1 // pred_check
      _
    $region27: #{tpu_custom_call.1} parent=1 // pred_check_branch
      %27 = sbr.rel (0) target = $region29
    $region28: #{tpu_custom_call.1} parent=1 // pred_region
      _
    $region29: #{tpu_custom_call.1} parent=1 // pred_fallthru
      _
    // Predicated region
    $region30: #{tpu_custom_call.1} parent=1 // pred_check
      _
    $region31: #{tpu_custom_call.1} parent=1 // pred_check_branch
      %29 = sbr.rel (0) target = $region33
    $region32: #{tpu_custom_call.1} parent=1 // pred_region
      _
    $region33: #{tpu_custom_call.1} parent=1 // pred_fallthru
      _
    %v31 = vld [vmem:[%s1] sm:$0xf]
    %v32 = vld [vmem:[%s1 + $0x4] sm:$0xf]
    %v33 = vld [vmem:[%s1 + $0x8] sm:$0xf]
    %v34 = vld [vmem:[%s1 + $0xc] sm:$0xf]
    %v35 = vld [vmem:[%s1 + $0x10] sm:$0xf]
    %v36 = vld [vmem:[%s1 + $0x14] sm:$0xf]
    %v37 = vld [vmem:[%s1 + $0x18] sm:$0xf]
    %v38 = vld [vmem:[%s1 + $0x1c] sm:$0xf]
    %v39 = vld [vmem:[%s1 + $0x20] sm:$0xf]
    %v40 = vld [vmem:[%s1 + $0x24] sm:$0xf]
    %v41 = vld [vmem:[%s1 + $0x28] sm:$0xf]
    %v42 = vld [vmem:[%s1 + $0x2c] sm:$0xf]
    %v43 = vld [vmem:[%s1 + $0x30] sm:$0xf]
    %v44 = vld [vmem:[%s1 + $0x34] sm:$0xf]
    %v45 = vld [vmem:[%s1 + $0x38] sm:$0xf]
    %v46 = vld [vmem:[%s1 + $0x3c] sm:$0xf]
    %v47 = vld [vmem:[%s0] sm:$0xff]
    %v48 = vld [vmem:[%s0 + $0x8] sm:$0xff]
    %v49 = vld [vmem:[%s0 + $0x10] sm:$0xff]
    %v50 = vld [vmem:[%s0 + $0x18] sm:$0xff]
    %v51 = vld [vmem:[%s0 + $0x20] sm:$0xff]
    %v52 = vld [vmem:[%s0 + $0x28] sm:$0xff]
    %v53 = vld [vmem:[%s0 + $0x30] sm:$0xff]
    %v54 = vld [vmem:[%s0 + $0x38] sm:$0xff]
    %v55 = vld [vmem:[%s2] sm:$0xff]
    %v56 = vld [vmem:[%s2 + $0x8] sm:$0xff]
    %v57 = vld [vmem:[%s2 + $0x10] sm:$0xff]
    %v58 = vld [vmem:[%s2 + $0x18] sm:$0xff]
    %v59 = vld [vmem:[%s2 + $0x20] sm:$0xff]
    %v60 = vld [vmem:[%s2 + $0x28] sm:$0xff]
    %v61 = vld [vmem:[%s2 + $0x30] sm:$0xff]
    %v62 = vld [vmem:[%s2 + $0x38] sm:$0xff]
    %v63 = vld [vmem:[%s2 + $0x40] sm:$0xff]
    %v64 = vld [vmem:[%s2 + $0x48] sm:$0xff]
    %v65 = vld [vmem:[%s2 + $0x50] sm:$0xff]
    %v66 = vld [vmem:[%s2 + $0x58] sm:$0xff]
    %v67 = vld [vmem:[%s2 + $0x60] sm:$0xff]
    %v68 = vld [vmem:[%s2 + $0x68] sm:$0xff]
    %v69 = vld [vmem:[%s2 + $0x70] sm:$0xff]
    %v70 = vld [vmem:[%s2 + $0x78] sm:$0xff]
    %72 = vset.pattern.permute.xlu0 0
    %73 = vperm.xlu0 %72, %v55
    %v74 = vpop.permute.xlu0 %73
    %77 = vset.pattern.permute.xlu0 0
    %78 = vperm.xlu0 %77, %v56
    %v79 = vpop.permute.xlu0 %78
    %82 = vset.pattern.permute.xlu0 0
    %83 = vperm.xlu0 %82, %v57
    %v84 = vpop.permute.xlu0 %83
    %87 = vset.pattern.permute.xlu0 0
    %88 = vperm.xlu0 %87, %v58
    %v89 = vpop.permute.xlu0 %88
    %92 = vset.pattern.permute.xlu0 0
    %93 = vperm.xlu0 %92, %v59
    %v94 = vpop.permute.xlu0 %93
    %97 = vset.pattern.permute.xlu0 0
    %98 = vperm.xlu0 %97, %v60
    %v99 = vpop.permute.xlu0 %98
    %102 = vset.pattern.permute.xlu0 0
    %103 = vperm.xlu0 %102, %v61
    %v104 = vpop.permute.xlu0 %103
    %107 = vset.pattern.permute.xlu0 0
    %108 = vperm.xlu0 %107, %v62
    %v109 = vpop.permute.xlu0 %108
    %112 = vset.pattern.permute.xlu0 0
    %113 = vperm.xlu0 %112, %v63
    %v114 = vpop.permute.xlu0 %113
    %117 = vset.pattern.permute.xlu0 0
    %118 = vperm.xlu0 %117, %v64
    %v119 = vpop.permute.xlu0 %118
    %122 = vset.pattern.permute.xlu0 0
    %123 = vperm.xlu0 %122, %v65
    %v124 = vpop.permute.xlu0 %123
    %127 = vset.pattern.permute.xlu0 0
    %128 = vperm.xlu0 %127, %v66
    %v129 = vpop.permute.xlu0 %128
    %132 = vset.pattern.permute.xlu0 0
    %133 = vperm.xlu0 %132, %v67
    %v134 = vpop.permute.xlu0 %133
    %137 = vset.pattern.permute.xlu0 0
    %138 = vperm.xlu0 %137, %v68
    %v139 = vpop.permute.xlu0 %138
    %142 = vset.pattern.permute.xlu0 0
    %143 = vperm.xlu0 %142, %v69
    %v144 = vpop.permute.xlu0 %143
    %147 = vset.pattern.permute.xlu0 0
    %148 = vperm.xlu0 %147, %v70
    %v149 = vpop.permute.xlu0 %148
    %v167 = vunpack.c.l.b16 %v31
    %v168 = vunpack.c.l.b16 %v32
    %v169 = vunpack.c.l.b16 %v33
    %v170 = vunpack.c.l.b16 %v34
    %v171 = vunpack.c.l.b16 %v35
    %v172 = vunpack.c.l.b16 %v36
    %v173 = vunpack.c.l.b16 %v37
    %v174 = vunpack.c.l.b16 %v38
    %v175 = vunpack.c.l.b16 %v39
    %v176 = vunpack.c.l.b16 %v40
    %v177 = vunpack.c.l.b16 %v41
    %v178 = vunpack.c.l.b16 %v42
    %v179 = vunpack.c.l.b16 %v43
    %v180 = vunpack.c.l.b16 %v44
    %v181 = vunpack.c.l.b16 %v45
    %v182 = vunpack.c.l.b16 %v46
    %v183 = vpack.c.b16 %v168, %v167
    %v184 = vpack.c.b16 %v170, %v169
    %v185 = vpack.c.b16 %v172, %v171
    %v186 = vpack.c.b16 %v174, %v173
    %v187 = vpack.c.b16 %v176, %v175
    %v188 = vpack.c.b16 %v178, %v177
    %v189 = vpack.c.b16 %v180, %v179
    %v190 = vpack.c.b16 %v182, %v181
    %v199 = vunpack.c.l.b16 %v47
    %v200 = vunpack.c.h.b16 %v47
    %v201 = vunpack.c.l.b16 %v48
    %v202 = vunpack.c.h.b16 %v48
    %v203 = vunpack.c.l.b16 %v49
    %v204 = vunpack.c.h.b16 %v49
    %v205 = vunpack.c.l.b16 %v50
    %v206 = vunpack.c.h.b16 %v50
    %v207 = vunpack.c.l.b16 %v51
    %v208 = vunpack.c.h.b16 %v51
    %v209 = vunpack.c.l.b16 %v52
    %v210 = vunpack.c.h.b16 %v52
    %v211 = vunpack.c.l.b16 %v53
    %v212 = vunpack.c.h.b16 %v53
    %v213 = vunpack.c.l.b16 %v54
    %v214 = vunpack.c.h.b16 %v54
    %v215 = vpack.c.b16 %v203, %v199
    %v216 = vpack.c.b16 %v204, %v200
    %v217 = vpack.c.b16 %v205, %v201
    %v218 = vpack.c.b16 %v206, %v202
    %v219 = vpack.c.b16 %v211, %v207
    %v220 = vpack.c.b16 %v212, %v208
    %v221 = vpack.c.b16 %v213, %v209
    %v222 = vpack.c.b16 %v214, %v210
    %vm231 = vcmask 261120
    %v233 = vsel %vm231, %v183, 0
    %v236 = vsel %vm231, %v184, 0
    %v239 = vsel %vm231, %v185, 0
    %v242 = vsel %vm231, %v186, 0
    %v245 = vsel %vm231, %v187, 0
    %v248 = vsel %vm231, %v188, 0
    %v251 = vsel %vm231, %v189, 0
    %v254 = vsel %vm231, %v190, 0
    %256 = vmatprep.subr.bf16.mxu0 %v216
    %257 = vmatpush1.bf16.msra.mxu0 %v215
    %258 = vmatprep.subr.bf16.mxu0 %v220
    %259 = vmatpush1.bf16.msra.mxu0 %v219
    %260 = vmatprep.subr.bf16.mxu0 0
    %261 = vmatpush1.bf16.msra.mxu0 0
    %262 = vmatprep.subr.bf16.mxu0 0
    %263 = vmatpush1.bf16.msra.mxu0 0
    %264 = vmatprep.subr.bf16.mxu0 0
    %265 = vmatpush1.bf16.msra.mxu0 0
    %266 = vmatprep.subr.bf16.mxu0 0
    %267 = vmatpush1.bf16.msra.mxu0 0
    %268 = vmatprep.subr.bf16.mxu0 0
    %269 = vmatpush1.bf16.msra.mxu0 0
    %270 = vmatprep.subr.bf16.mxu0 0
    %271 = vmatpush1.bf16.msra.mxu0 0
    %272 = vmatprep.subr.bf16.mxu0 0
    %273 = vmatpush1.bf16.msra.mxu0 0
    %274 = vmatprep.subr.bf16.mxu0 0
    %275 = vmatpush1.bf16.msra.mxu0 0
    %276 = vmatprep.subr.bf16.mxu0 0
    %277 = vmatpush1.bf16.msra.mxu0 0
    %278 = vmatprep.subr.bf16.mxu0 0
    %279 = vmatpush1.bf16.msra.mxu0 0
    %280 = vmatprep.subr.bf16.mxu0 0
    %281 = vmatpush1.bf16.msra.mxu0 0
    %282 = vmatprep.subr.bf16.mxu0 0
    %283 = vmatpush1.bf16.msra.mxu0 0
    %284 = vmatprep.subr.bf16.mxu0 0
    %285 = vmatpush1.bf16.msra.mxu0 0
    %286 = vmatprep.subr.bf16.mxu0 0
    %287 = vmatpush1.bf16.msra.mxu0 0
    %288 = vmatprep.mubr.bf16.mxu0 0
    %289 = vmatmul.mubr.bf16.gmra.mrb[0].mxu0 %v233
    %v290 = vpop.f32.mrb[0].mxu0
    %v291 = vadd.f32 %v74, %v290
    %v292 = vpop.f32.mrb[0].mxu0
    %v293 = vadd.f32 %v74, %v292
    %v294 = vpop.f32.mrb[0].mxu0
    %v295 = vadd.f32 %v79, %v294
    %v296 = vpop.f32.mrb[0].mxu0
    %v297 = vadd.f32 %v79, %v296
    %298 = vmatprep.mubr.bf16.mxu0 0
    %299 = vmatmul.mubr.bf16.gmra.mrb[0].mxu0 %v236
    %v300 = vpop.f32.mrb[0].mxu0
    %v301 = vadd.f32 %v84, %v300
    %v302 = vpop.f32.mrb[0].mxu0
    %v303 = vadd.f32 %v84, %v302
    %v304 = vpop.f32.mrb[0].mxu0
    %v305 = vadd.f32 %v89, %v304
    %v306 = vpop.f32.mrb[0].mxu0
    %v307 = vadd.f32 %v89, %v306
    %308 = vmatprep.mubr.bf16.mxu0 0
    %309 = vmatmul.mubr.bf16.gmra.mrb[0].mxu0 %v239
    %v310 = vpop.f32.mrb[0].mxu0
    %v311 = vadd.f32 %v94, %v310
    %v312 = vpop.f32.mrb[0].mxu0
    %v313 = vadd.f32 %v94, %v312
    %v314 = vpop.f32.mrb[0].mxu0
    %v315 = vadd.f32 %v99, %v314
    %v316 = vpop.f32.mrb[0].mxu0
    %v317 = vadd.f32 %v99, %v316
    %318 = vmatprep.mubr.bf16.mxu0 0
    %319 = vmatmul.mubr.bf16.gmra.mrb[0].mxu0 %v242
    %v320 = vpop.f32.mrb[0].mxu0
    %v321 = vadd.f32 %v104, %v320
    %v322 = vpop.f32.mrb[0].mxu0
    %v323 = vadd.f32 %v104, %v322
    %v324 = vpop.f32.mrb[0].mxu0
    %v325 = vadd.f32 %v109, %v324
    %v326 = vpop.f32.mrb[0].mxu0
    %v327 = vadd.f32 %v109, %v326
    %328 = vmatprep.mubr.bf16.mxu0 0
    %329 = vmatmul.mubr.bf16.gmra.mrb[0].mxu0 %v245
    %v330 = vpop.f32.mrb[0].mxu0
    %v331 = vadd.f32 %v114, %v330
    %v332 = vpop.f32.mrb[0].mxu0
    %v333 = vadd.f32 %v114, %v332
    %v334 = vpop.f32.mrb[0].mxu0
    %v335 = vadd.f32 %v119, %v334
    %v336 = vpop.f32.mrb[0].mxu0
    %v337 = vadd.f32 %v119, %v336
    %338 = vmatprep.mubr.bf16.mxu0 0
    %339 = vmatmul.mubr.bf16.gmra.mrb[0].mxu0 %v248
    %v340 = vpop.f32.mrb[0].mxu0
    %v341 = vadd.f32 %v124, %v340
    %v342 = vpop.f32.mrb[0].mxu0
    %v343 = vadd.f32 %v124, %v342
    %v344 = vpop.f32.mrb[0].mxu0
    %v345 = vadd.f32 %v129, %v344
    %v346 = vpop.f32.mrb[0].mxu0
    %v347 = vadd.f32 %v129, %v346
    %348 = vmatprep.mubr.bf16.mxu0 0
    %349 = vmatmul.mubr.bf16.gmra.mrb[0].mxu0 %v251
    %v350 = vpop.f32.mrb[0].mxu0
    %v351 = vadd.f32 %v134, %v350
    %v352 = vpop.f32.mrb[0].mxu0
    %v353 = vadd.f32 %v134, %v352
    %v354 = vpop.f32.mrb[0].mxu0
    %v355 = vadd.f32 %v139, %v354
    %v356 = vpop.f32.mrb[0].mxu0
    %v357 = vadd.f32 %v139, %v356
    %358 = vmatprep.mubr.bf16.mxu0 0
    %359 = vmatmul.mubr.bf16.gmra.mrb[0].mxu0 %v254
    %v360 = vpop.f32.mrb[0].mxu0
    %v361 = vadd.f32 %v144, %v360
    %v362 = vpop.f32.mrb[0].mxu0
    %v363 = vadd.f32 %v144, %v362
    %v364 = vpop.f32.mrb[0].mxu0
    %v365 = vadd.f32 %v149, %v364
    %v366 = vpop.f32.mrb[0].mxu0
    %v367 = vadd.f32 %v149, %v366
    %368 = vdwg.mxu0
    %369 = vmatprep.subr.bf16.mxu0 %v218
    %370 = vmatpush1.bf16.msra.mxu0 %v217
    %371 = vmatprep.subr.bf16.mxu0 %v222
    %372 = vmatpush1.bf16.msra.mxu0 %v221
    %373 = vmatprep.subr.bf16.mxu0 0
    %374 = vmatpush1.bf16.msra.mxu0 0
    %375 = vmatprep.subr.bf16.mxu0 0
    %376 = vmatpush1.bf16.msra.mxu0 0
    %377 = vmatprep.subr.bf16.mxu0 0
    %378 = vmatpush1.bf16.msra.mxu0 0
    %379 = vmatprep.subr.bf16.mxu0 0
    %380 = vmatpush1.bf16.msra.mxu0 0
    %381 = vmatprep.subr.bf16.mxu0 0
    %382 = vmatpush1.bf16.msra.mxu0 0
    %383 = vmatprep.subr.bf16.mxu0 0
    %384 = vmatpush1.bf16.msra.mxu0 0
    %385 = vmatprep.subr.bf16.mxu0 0
    %386 = vmatpush1.bf16.msra.mxu0 0
    %387 = vmatprep.subr.bf16.mxu0 0
    %388 = vmatpush1.bf16.msra.mxu0 0
    %389 = vmatprep.subr.bf16.mxu0 0
    %390 = vmatpush1.bf16.msra.mxu0 0
    %391 = vmatprep.subr.bf16.mxu0 0
    %392 = vmatpush1.bf16.msra.mxu0 0
    %393 = vmatprep.subr.bf16.mxu0 0
    %394 = vmatpush1.bf16.msra.mxu0 0
    %395 = vmatprep.subr.bf16.mxu0 0
    %396 = vmatpush1.bf16.msra.mxu0 0
    %397 = vmatprep.subr.bf16.mxu0 0
    %398 = vmatpush1.bf16.msra.mxu0 0
    %399 = vmatprep.subr.bf16.mxu0 0
    %400 = vmatpush1.bf16.msra.mxu0 0
    %401 = vmatprep.mubr.bf16.mxu0 0
    %402 = vmatmul.mubr.bf16.gmra.mrb[0].mxu0 %v233
    %v403 = vpop.f32.mrb[0].mxu0
    %v404 = vadd.f32 %v74, %v403
    %v405 = vpop.f32.mrb[0].mxu0
    %v406 = vadd.f32 %v74, %v405
    %v407 = vpop.f32.mrb[0].mxu0
    %v408 = vadd.f32 %v79, %v407
    %v409 = vpop.f32.mrb[0].mxu0
    %v410 = vadd.f32 %v79, %v409
    %411 = vmatprep.mubr.bf16.mxu0 0
    %412 = vmatmul.mubr.bf16.gmra.mrb[0].mxu0 %v236
    %v413 = vpop.f32.mrb[0].mxu0
    %v414 = vadd.f32 %v84, %v413
    %v415 = vpop.f32.mrb[0].mxu0
    %v416 = vadd.f32 %v84, %v415
    %v417 = vpop.f32.mrb[0].mxu0
    %v418 = vadd.f32 %v89, %v417
    %v419 = vpop.f32.mrb[0].mxu0
    %v420 = vadd.f32 %v89, %v419
    %421 = vmatprep.mubr.bf16.mxu0 0
    %422 = vmatmul.mubr.bf16.gmra.mrb[0].mxu0 %v239
    %v423 = vpop.f32.mrb[0].mxu0
    %v424 = vadd.f32 %v94, %v423
    %v425 = vpop.f32.mrb[0].mxu0
    %v426 = vadd.f32 %v94, %v425
    %v427 = vpop.f32.mrb[0].mxu0
    %v428 = vadd.f32 %v99, %v427
    %v429 = vpop.f32.mrb[0].mxu0
    %v430 = vadd.f32 %v99, %v429
    %431 = vmatprep.mubr.bf16.mxu0 0
    %432 = vmatmul.mubr.bf16.gmra.mrb[0].mxu0 %v242
    %v433 = vpop.f32.mrb[0].mxu0
    %v434 = vadd.f32 %v104, %v433
    %v435 = vpop.f32.mrb[0].mxu0
    %v436 = vadd.f32 %v104, %v435
    %v437 = vpop.f32.mrb[0].mxu0
    %v438 = vadd.f32 %v109, %v437
    %v439 = vpop.f32.mrb[0].mxu0
    %v440 = vadd.f32 %v109, %v439
    %441 = vmatprep.mubr.bf16.mxu0 0
    %442 = vmatmul.mubr.bf16.gmra.mrb[0].mxu0 %v245
    %v443 = vpop.f32.mrb[0].mxu0
    %v444 = vadd.f32 %v114, %v443
    %v445 = vpop.f32.mrb[0].mxu0
    %v446 = vadd.f32 %v114, %v445
    %v447 = vpop.f32.mrb[0].mxu0
    %v448 = vadd.f32 %v119, %v447
    %v449 = vpop.f32.mrb[0].mxu0
    %v450 = vadd.f32 %v119, %v449
    %451 = vmatprep.mubr.bf16.mxu0 0
    %452 = vmatmul.mubr.bf16.gmra.mrb[0].mxu0 %v248
    %v453 = vpop.f32.mrb[0].mxu0
    %v454 = vadd.f32 %v124, %v453
    %v455 = vpop.f32.mrb[0].mxu0
    %v456 = vadd.f32 %v124, %v455
    %v457 = vpop.f32.mrb[0].mxu0
    %v458 = vadd.f32 %v129, %v457
    %v459 = vpop.f32.mrb[0].mxu0
    %v460 = vadd.f32 %v129, %v459
    %461 = vmatprep.mubr.bf16.mxu0 0
    %462 = vmatmul.mubr.bf16.gmra.mrb[0].mxu0 %v251
    %v463 = vpop.f32.mrb[0].mxu0
    %v464 = vadd.f32 %v134, %v463
    %v465 = vpop.f32.mrb[0].mxu0
    %v466 = vadd.f32 %v134, %v465
    %v467 = vpop.f32.mrb[0].mxu0
    %v468 = vadd.f32 %v139, %v467
    %v469 = vpop.f32.mrb[0].mxu0
    %v470 = vadd.f32 %v139, %v469
    %471 = vmatprep.mubr.bf16.mxu0 0
    %472 = vmatmul.mubr.bf16.gmra.mrb[0].mxu0 %v254
    %v473 = vpop.f32.mrb[0].mxu0
    %v474 = vadd.f32 %v144, %v473
    %v475 = vpop.f32.mrb[0].mxu0
    %v476 = vadd.f32 %v144, %v475
    %v477 = vpop.f32.mrb[0].mxu0
    %v478 = vadd.f32 %v149, %v477
    %v479 = vpop.f32.mrb[0].mxu0
    %v480 = vadd.f32 %v149, %v479
    %481 = vdwg.mxu0
    %482 = vst [vmem:[#allocation2] sm:$0xff] %v291
    %483 = vst [vmem:[#allocation2 + $0x8] sm:$0xff] %v293
    %484 = vst [vmem:[#allocation2 + $0x10] sm:$0xff] %v404
    %485 = vst [vmem:[#allocation2 + $0x18] sm:$0xff] %v406
    %486 = vst [vmem:[#allocation2 + $0x20] sm:$0xff] %v295
    %487 = vst [vmem:[#allocation2 + $0x28] sm:$0xff] %v297
    %488 = vst [vmem:[#allocation2 + $0x30] sm:$0xff] %v408
    %489 = vst [vmem:[#allocation2 + $0x38] sm:$0xff] %v410
    %490 = vst [vmem:[#allocation2 + $0x40] sm:$0xff] %v301
    %491 = vst [vmem:[#allocation2 + $0x48] sm:$0xff] %v303
    %492 = vst [vmem:[#allocation2 + $0x50] sm:$0xff] %v414
    %493 = vst [vmem:[#allocation2 + $0x58] sm:$0xff] %v416
    %494 = vst [vmem:[#allocation2 + $0x60] sm:$0xff] %v305
    %495 = vst [vmem:[#allocation2 + $0x68] sm:$0xff] %v307
    %496 = vst [vmem:[#allocation2 + $0x70] sm:$0xff] %v418
    %497 = vst [vmem:[#allocation2 + $0x78] sm:$0xff] %v420
    %498 = vst [vmem:[#allocation2 + $0x80] sm:$0xff] %v311
    %499 = vst [vmem:[#allocation2 + $0x88] sm:$0xff] %v313
    %500 = vst [vmem:[#allocation2 + $0x90] sm:$0xff] %v424
    %501 = vst [vmem:[#allocation2 + $0x98] sm:$0xff] %v426
    %502 = vst [vmem:[#allocation2 + $0xa0] sm:$0xff] %v315
    %503 = vst [vmem:[#allocation2 + $0xa8] sm:$0xff] %v317
    %504 = vst [vmem:[#allocation2 + $0xb0] sm:$0xff] %v428
    %505 = vst [vmem:[#allocation2 + $0xb8] sm:$0xff] %v430
    %506 = vst [vmem:[#allocation2 + $0xc0] sm:$0xff] %v321
    %507 = vst [vmem:[#allocation2 + $0xc8] sm:$0xff] %v323
    %508 = vst [vmem:[#allocation2 + $0xd0] sm:$0xff] %v434
    %509 = vst [vmem:[#allocation2 + $0xd8] sm:$0xff] %v436
    %510 = vst [vmem:[#allocation2 + $0xe0] sm:$0xff] %v325
    %511 = vst [vmem:[#allocation2 + $0xe8] sm:$0xff] %v327
    %512 = vst [vmem:[#allocation2 + $0xf0] sm:$0xff] %v438
    %513 = vst [vmem:[#allocation2 + $0xf8] sm:$0xff] %v440
    %514 = vst [vmem:[#allocation2 + $0x100] sm:$0xff] %v331
    %515 = vst [vmem:[#allocation2 + $0x108] sm:$0xff] %v333
    %516 = vst [vmem:[#allocation2 + $0x110] sm:$0xff] %v444
    %517 = vst [vmem:[#allocation2 + $0x118] sm:$0xff] %v446
    %518 = vst [vmem:[#allocation2 + $0x120] sm:$0xff] %v335
    %519 = vst [vmem:[#allocation2 + $0x128] sm:$0xff] %v337
    %520 = vst [vmem:[#allocation2 + $0x130] sm:$0xff] %v448
    %521 = vst [vmem:[#allocation2 + $0x138] sm:$0xff] %v450
    %522 = vst [vmem:[#allocation2 + $0x140] sm:$0xff] %v341
    %523 = vst [vmem:[#allocation2 + $0x148] sm:$0xff] %v343
    %524 = vst [vmem:[#allocation2 + $0x150] sm:$0xff] %v454
    %525 = vst [vmem:[#allocation2 + $0x158] sm:$0xff] %v456
    %526 = vst [vmem:[#allocation2 + $0x160] sm:$0xff] %v345
    %527 = vst [vmem:[#allocation2 + $0x168] sm:$0xff] %v347
    %528 = vst [vmem:[#allocation2 + $0x170] sm:$0xff] %v458
    %529 = vst [vmem:[#allocation2 + $0x178] sm:$0xff] %v460
    %530 = vst [vmem:[#allocation2 + $0x180] sm:$0xff] %v351
    %531 = vst [vmem:[#allocation2 + $0x188] sm:$0xff] %v353
    %532 = vst [vmem:[#allocation2 + $0x190] sm:$0xff] %v464
    %533 = vst [vmem:[#allocation2 + $0x198] sm:$0xff] %v466
    %534 = vst [vmem:[#allocation2 + $0x1a0] sm:$0xff] %v355
    %535 = vst [vmem:[#allocation2 + $0x1a8] sm:$0xff] %v357
    %536 = vst [vmem:[#allocation2 + $0x1b0] sm:$0xff] %v468
    %537 = vst [vmem:[#allocation2 + $0x1b8] sm:$0xff] %v470
    %538 = vst [vmem:[#allocation2 + $0x1c0] sm:$0xff] %v361
    %539 = vst [vmem:[#allocation2 + $0x1c8] sm:$0xff] %v363
    %540 = vst [vmem:[#allocation2 + $0x1d0] sm:$0xff] %v474
    %541 = vst [vmem:[#allocation2 + $0x1d8] sm:$0xff] %v476
    %542 = vst [vmem:[#allocation2 + $0x1e0] sm:$0xff] %v365
    %543 = vst [vmem:[#allocation2 + $0x1e8] sm:$0xff] %v367
    %544 = vst [vmem:[#allocation2 + $0x1f0] sm:$0xff] %v478
    %545 = vst [vmem:[#allocation2 + $0x1f8] sm:$0xff] %v480
    %v546 = vld [vmem:[#allocation2] sm:$0xff]
    %v547 = vld [vmem:[#allocation2 + $0x8] sm:$0xff]
    %v548 = vld [vmem:[#allocation2 + $0x10] sm:$0xff]
    %v549 = vld [vmem:[#allocation2 + $0x18] sm:$0xff]
    %v550 = vld [vmem:[#allocation2 + $0x20] sm:$0xff]
    %v551 = vld [vmem:[#allocation2 + $0x28] sm:$0xff]
    %v552 = vld [vmem:[#allocation2 + $0x30] sm:$0xff]
    %v553 = vld [vmem:[#allocation2 + $0x38] sm:$0xff]
    %v554 = vld [vmem:[%s3] sm:$0xff]
    %v555 = vld [vmem:[%s3 + $0x8] sm:$0xff]
    %557 = vset.pattern.permute.xlu0 4
    %558 = vperm.xlu0 %557, %v554
    %v559 = vpop.permute.xlu0 %558
    %562 = vset.pattern.permute.xlu0 4
    %563 = vperm.xlu0 %562, %v555
    %v564 = vpop.permute.xlu0 %563
    %v566 = vmul.f32 %v546, %v559
    %v567 = vmul.f32 %v547, %v559
    %v568 = vmul.f32 %v548, %v559
    %v569 = vmul.f32 %v549, %v559
    %v570 = vmul.f32 %v550, %v564
    %v571 = vmul.f32 %v551, %v564
    %v572 = vmul.f32 %v552, %v564
    %v573 = vmul.f32 %v553, %v564
    %574 = vrot.lane.b32.xlu0 %v546, 17
    %v575 = vpop.permute.xlu0 %574
    %576 = vrot.lane.b32.xlu0 %v550, 17
    %v577 = vpop.permute.xlu0 %576
    %578 = vrot.lane.b32.xlu0 %v547, 17
    %v579 = vpop.permute.xlu0 %578
    %580 = vrot.lane.b32.xlu0 %v551, 17
    %v581 = vpop.permute.xlu0 %580
    %582 = vrot.lane.b32.xlu0 %v548, 17
    %v583 = vpop.permute.xlu0 %582
    %584 = vrot.lane.b32.xlu0 %v552, 17
    %v585 = vpop.permute.xlu0 %584
    %586 = vrot.lane.b32.xlu0 %v549, 17
    %v587 = vpop.permute.xlu0 %586
    %588 = vrot.lane.b32.xlu0 %v553, 17
    %v589 = vpop.permute.xlu0 %588
    %v590 = vlaneseq
    %v591 = vand.u32 %v590, 127
    %vm592 = vcmp.lt.s32.totalorder %v591, 17
    %v593 = vsel %vm592, %v583, %v587
    %v594 = vsel %vm592, %v585, %v589
    %v595 = vsel %vm592, %v579, %v583
    %v596 = vsel %vm592, %v581, %v585
    %v597 = vsel %vm592, %v575, %v579
    %v598 = vsel %vm592, %v577, %v581
    %v599 = vsel %vm592, %v587, %v575
    %v600 = vsel %vm592, %v589, %v577
    %v601 = vld [vmem:[%s5] ss:$8 sm:$0xf]
    %v603 = vlaneseq
    %v604 = vshrl.u32 %v603, 7
    %v605 = vsub.s32 0, %v604
    %v606 = vrot.slane %v601, %v605
    %v607 = vlaneseq
    %v608 = vshrl.u32 %v607, 7
    %v609 = vsub.s32 1, %v608
    %v610 = vrot.slane %v601, %v609
    %v611 = vlaneseq
    %v612 = vshrl.u32 %v611, 7
    %v613 = vsub.s32 2, %v612
    %v614 = vrot.slane %v601, %v613
    %v615 = vlaneseq
    %v616 = vshrl.u32 %v615, 7
    %v617 = vsub.s32 3, %v616
    %v618 = vrot.slane %v601, %v617
    %v623 = vmul.f32 %v599, %v606
    %v624 = vmul.f32 %v597, %v610
    %v625 = vmul.f32 %v595, %v614
    %v626 = vmul.f32 %v593, %v618
    %v627 = vmul.f32 %v600, %v606
    %v628 = vmul.f32 %v598, %v610
    %v629 = vmul.f32 %v596, %v614
    %v630 = vmul.f32 %v594, %v618
    %631 = vset.pattern.permute.xlu0 0
    %632 = vperm.xlu0 %631, %v554
    %v633 = vpop.permute.xlu0 %632
    %635 = vset.pattern.permute.xlu0 0
    %636 = vperm.xlu0 %635, %v555
    %v637 = vpop.permute.xlu0 %636
    %v639 = vmul.f32 %v623, %v633
    %v640 = vmul.f32 %v624, %v633
    %v641 = vmul.f32 %v625, %v633
    %v642 = vmul.f32 %v626, %v633
    %v643 = vmul.f32 %v627, %v637
    %v644 = vmul.f32 %v628, %v637
    %v645 = vmul.f32 %v629, %v637
    %v646 = vmul.f32 %v630, %v637
    %v647 = vadd.f32 %v566, %v639
    %v648 = vadd.f32 %v567, %v640
    %v649 = vadd.f32 %v568, %v641
    %v650 = vadd.f32 %v569, %v642
    %v651 = vadd.f32 %v570, %v643
    %v652 = vadd.f32 %v571, %v644
    %v653 = vadd.f32 %v572, %v645
    %v654 = vadd.f32 %v573, %v646
    %655 = vrot.lane.b32.xlu0 %v546, 16
    %v656 = vpop.permute.xlu0 %655
    %657 = vrot.lane.b32.xlu0 %v550, 16
    %v658 = vpop.permute.xlu0 %657
    %659 = vrot.lane.b32.xlu0 %v547, 16
    %v660 = vpop.permute.xlu0 %659
    %661 = vrot.lane.b32.xlu0 %v551, 16
    %v662 = vpop.permute.xlu0 %661
    %663 = vrot.lane.b32.xlu0 %v548, 16
    %v664 = vpop.permute.xlu0 %663
    %665 = vrot.lane.b32.xlu0 %v552, 16
    %v666 = vpop.permute.xlu0 %665
    %667 = vrot.lane.b32.xlu0 %v549, 16
    %v668 = vpop.permute.xlu0 %667
    %669 = vrot.lane.b32.xlu0 %v553, 16
    %v670 = vpop.permute.xlu0 %669
    %vm671 = vcmp.lt.s32.totalorder %v591, 16
    %v672 = vsel %vm671, %v664, %v668
    %v673 = vsel %vm671, %v666, %v670
    %v674 = vsel %vm671, %v660, %v664
    %v675 = vsel %vm671, %v662, %v666
    %v676 = vsel %vm671, %v656, %v660
    %v677 = vsel %vm671, %v658, %v662
    %v678 = vsel %vm671, %v668, %v656
    %v679 = vsel %vm671, %v670, %v658
    %s680 = scalar_lea.vmem %s5, 1
    %v681 = vld [vmem:[%s680] ss:$8 sm:$0xf]
    %v683 = vlaneseq
    %v684 = vshrl.u32 %v683, 7
    %v685 = vsub.s32 0, %v684
    %v686 = vrot.slane %v681, %v685
    %v687 = vlaneseq
    %v688 = vshrl.u32 %v687, 7
    %v689 = vsub.s32 1, %v688
    %v690 = vrot.slane %v681, %v689
    %v691 = vlaneseq
    %v692 = vshrl.u32 %v691, 7
    %v693 = vsub.s32 2, %v692
    %v694 = vrot.slane %v681, %v693
    %v695 = vlaneseq
    %v696 = vshrl.u32 %v695, 7
    %v697 = vsub.s32 3, %v696
    %v698 = vrot.slane %v681, %v697
    %v703 = vmul.f32 %v678, %v686
    %v704 = vmul.f32 %v676, %v690
    %v705 = vmul.f32 %v674, %v694
    %v706 = vmul.f32 %v672, %v698
    %v707 = vmul.f32 %v679, %v686
    %v708 = vmul.f32 %v677, %v690
    %v709 = vmul.f32 %v675, %v694
    %v710 = vmul.f32 %v673, %v698
    %711 = vset.pattern.permute.xlu0 1
    %712 = vperm.xlu0 %711, %v554
    %v713 = vpop.permute.xlu0 %712
    %715 = vset.pattern.permute.xlu0 1
    %716 = vperm.xlu0 %715, %v555
    %v717 = vpop.permute.xlu0 %716
    %v719 = vmul.f32 %v703, %v713
    %v720 = vmul.f32 %v704, %v713
    %v721 = vmul.f32 %v705, %v713
    %v722 = vmul.f32 %v706, %v713
    %v723 = vmul.f32 %v707, %v717
    %v724 = vmul.f32 %v708, %v717
    %v725 = vmul.f32 %v709, %v717
    %v726 = vmul.f32 %v710, %v717
    %v727 = vadd.f32 %v647, %v719
    %v728 = vadd.f32 %v648, %v720
    %v729 = vadd.f32 %v649, %v721
    %v730 = vadd.f32 %v650, %v722
    %v731 = vadd.f32 %v651, %v723
    %v732 = vadd.f32 %v652, %v724
    %v733 = vadd.f32 %v653, %v725
    %v734 = vadd.f32 %v654, %v726
    %735 = vrot.lane.b32.xlu0 %v546, 15
    %v736 = vpop.permute.xlu0 %735
    %737 = vrot.lane.b32.xlu0 %v550, 15
    %v738 = vpop.permute.xlu0 %737
    %739 = vrot.lane.b32.xlu0 %v547, 15
    %v740 = vpop.permute.xlu0 %739
    %741 = vrot.lane.b32.xlu0 %v551, 15
    %v742 = vpop.permute.xlu0 %741
    %743 = vrot.lane.b32.xlu0 %v548, 15
    %v744 = vpop.permute.xlu0 %743
    %745 = vrot.lane.b32.xlu0 %v552, 15
    %v746 = vpop.permute.xlu0 %745
    %747 = vrot.lane.b32.xlu0 %v549, 15
    %v748 = vpop.permute.xlu0 %747
    %749 = vrot.lane.b32.xlu0 %v553, 15
    %v750 = vpop.permute.xlu0 %749
    %vm751 = vcmp.lt.s32.totalorder %v591, 15
    %v752 = vsel %vm751, %v744, %v748
    %v753 = vsel %vm751, %v746, %v750
    %v754 = vsel %vm751, %v740, %v744
    %v755 = vsel %vm751, %v742, %v746
    %v756 = vsel %vm751, %v736, %v740
    %v757 = vsel %vm751, %v738, %v742
    %v758 = vsel %vm751, %v748, %v736
    %v759 = vsel %vm751, %v750, %v738
    %s760 = scalar_lea.vmem %s5, 2
    %v761 = vld [vmem:[%s760] ss:$8 sm:$0xf]
    %v763 = vlaneseq
    %v764 = vshrl.u32 %v763, 7
    %v765 = vsub.s32 0, %v764
    %v766 = vrot.slane %v761, %v765
    %v767 = vlaneseq
    %v768 = vshrl.u32 %v767, 7
    %v769 = vsub.s32 1, %v768
    %v770 = vrot.slane %v761, %v769
    %v771 = vlaneseq
    %v772 = vshrl.u32 %v771, 7
    %v773 = vsub.s32 2, %v772
    %v774 = vrot.slane %v761, %v773
    %v775 = vlaneseq
    %v776 = vshrl.u32 %v775, 7
    %v777 = vsub.s32 3, %v776
    %v778 = vrot.slane %v761, %v777
    %v783 = vmul.f32 %v758, %v766
    %v784 = vmul.f32 %v756, %v770
    %v785 = vmul.f32 %v754, %v774
    %v786 = vmul.f32 %v752, %v778
    %v787 = vmul.f32 %v759, %v766
    %v788 = vmul.f32 %v757, %v770
    %v789 = vmul.f32 %v755, %v774
    %v790 = vmul.f32 %v753, %v778
    %791 = vset.pattern.permute.xlu0 2
    %792 = vperm.xlu0 %791, %v554
    %v793 = vpop.permute.xlu0 %792
    %795 = vset.pattern.permute.xlu0 2
    %796 = vperm.xlu0 %795, %v555
    %v797 = vpop.permute.xlu0 %796
    %v799 = vmul.f32 %v783, %v793
    %v800 = vmul.f32 %v784, %v793
    %v801 = vmul.f32 %v785, %v793
    %v802 = vmul.f32 %v786, %v793
    %v803 = vmul.f32 %v787, %v797
    %v804 = vmul.f32 %v788, %v797
    %v805 = vmul.f32 %v789, %v797
    %v806 = vmul.f32 %v790, %v797
    %v807 = vadd.f32 %v727, %v799
    %v808 = vadd.f32 %v728, %v800
    %v809 = vadd.f32 %v729, %v801
    %v810 = vadd.f32 %v730, %v802
    %v811 = vadd.f32 %v731, %v803
    %v812 = vadd.f32 %v732, %v804
    %v813 = vadd.f32 %v733, %v805
    %v814 = vadd.f32 %v734, %v806
    %815 = vrot.lane.b32.xlu0 %v546, 1
    %v816 = vpop.permute.xlu0 %815
    %817 = vrot.lane.b32.xlu0 %v550, 1
    %v818 = vpop.permute.xlu0 %817
    %819 = vrot.lane.b32.xlu0 %v547, 1
    %v820 = vpop.permute.xlu0 %819
    %821 = vrot.lane.b32.xlu0 %v551, 1
    %v822 = vpop.permute.xlu0 %821
    %823 = vrot.lane.b32.xlu0 %v548, 1
    %v824 = vpop.permute.xlu0 %823
    %825 = vrot.lane.b32.xlu0 %v552, 1
    %v826 = vpop.permute.xlu0 %825
    %827 = vrot.lane.b32.xlu0 %v549, 1
    %v828 = vpop.permute.xlu0 %827
    %829 = vrot.lane.b32.xlu0 %v553, 1
    %v830 = vpop.permute.xlu0 %829
    %vm831 = vcmp.lt.s32.totalorder %v591, 1
    %v832 = vsel %vm831, %v824, %v828
    %v833 = vsel %vm831, %v826, %v830
    %v834 = vsel %vm831, %v820, %v824
    %v835 = vsel %vm831, %v822, %v826
    %v836 = vsel %vm831, %v816, %v820
    %v837 = vsel %vm831, %v818, %v822
    %v838 = vsel %vm831, %v828, %v816
    %v839 = vsel %vm831, %v830, %v818
    %s840 = scalar_lea.vmem %s5, 3
    %v841 = vld [vmem:[%s840] ss:$8 sm:$0xf]
    %v843 = vlaneseq
    %v844 = vshrl.u32 %v843, 7
    %v845 = vsub.s32 0, %v844
    %v846 = vrot.slane %v841, %v845
    %v847 = vlaneseq
    %v848 = vshrl.u32 %v847, 7
    %v849 = vsub.s32 1, %v848
    %v850 = vrot.slane %v841, %v849
    %v851 = vlaneseq
    %v852 = vshrl.u32 %v851, 7
    %v853 = vsub.s32 2, %v852
    %v854 = vrot.slane %v841, %v853
    %v855 = vlaneseq
    %v856 = vshrl.u32 %v855, 7
    %v857 = vsub.s32 3, %v856
    %v858 = vrot.slane %v841, %v857
    %v863 = vmul.f32 %v838, %v846
    %v864 = vmul.f32 %v836, %v850
    %v865 = vmul.f32 %v834, %v854
    %v866 = vmul.f32 %v832, %v858
    %v867 = vmul.f32 %v839, %v846
    %v868 = vmul.f32 %v837, %v850
    %v869 = vmul.f32 %v835, %v854
    %v870 = vmul.f32 %v833, %v858
    %871 = vset.pattern.permute.xlu0 3
    %872 = vperm.xlu0 %871, %v554
    %v873 = vpop.permute.xlu0 %872
    %875 = vset.pattern.permute.xlu0 3
    %876 = vperm.xlu0 %875, %v555
    %v877 = vpop.permute.xlu0 %876
    %v879 = vmul.f32 %v863, %v873
    %v880 = vmul.f32 %v864, %v873
    %v881 = vmul.f32 %v865, %v873
    %v882 = vmul.f32 %v866, %v873
    %v883 = vmul.f32 %v867, %v877
    %v884 = vmul.f32 %v868, %v877
    %v885 = vmul.f32 %v869, %v877
    %v886 = vmul.f32 %v870, %v877
    %v887 = vadd.f32 %v807, %v879
    %v888 = vadd.f32 %v808, %v880
    %v889 = vadd.f32 %v809, %v881
    %v890 = vadd.f32 %v810, %v882
    %v891 = vadd.f32 %v811, %v883
    %v892 = vadd.f32 %v812, %v884
    %v893 = vadd.f32 %v813, %v885
    %v894 = vadd.f32 %v814, %v886
    %895 = vrot.lane.b32.xlu0 %v546, 127
    %v896 = vpop.permute.xlu0 %895
    %897 = vrot.lane.b32.xlu0 %v550, 127
    %v898 = vpop.permute.xlu0 %897
    %899 = vrot.lane.b32.xlu0 %v547, 127
    %v900 = vpop.permute.xlu0 %899
    %901 = vrot.lane.b32.xlu0 %v551, 127
    %v902 = vpop.permute.xlu0 %901
    %903 = vrot.lane.b32.xlu0 %v548, 127
    %v904 = vpop.permute.xlu0 %903
    %905 = vrot.lane.b32.xlu0 %v552, 127
    %v906 = vpop.permute.xlu0 %905
    %907 = vrot.lane.b32.xlu0 %v549, 127
    %v908 = vpop.permute.xlu0 %907
    %909 = vrot.lane.b32.xlu0 %v553, 127
    %v910 = vpop.permute.xlu0 %909
    %vm911 = vcmp.lt.s32.totalorder %v591, 127
    %v912 = vsel %vm911, %v904, %v908
    %v913 = vsel %vm911, %v906, %v910
    %v914 = vsel %vm911, %v900, %v904
    %v915 = vsel %vm911, %v902, %v906
    %v916 = vsel %vm911, %v896, %v900
    %v917 = vsel %vm911, %v898, %v902
    %v918 = vsel %vm911, %v908, %v896
    %v919 = vsel %vm911, %v910, %v898
    %s920 = scalar_lea.vmem %s5, 5
    %v921 = vld [vmem:[%s920] ss:$8 sm:$0xf]
    %v923 = vlaneseq
    %v924 = vshrl.u32 %v923, 7
    %v925 = vsub.s32 0, %v924
    %v926 = vrot.slane %v921, %v925
    %v927 = vlaneseq
    %v928 = vshrl.u32 %v927, 7
    %v929 = vsub.s32 1, %v928
    %v930 = vrot.slane %v921, %v929
    %v931 = vlaneseq
    %v932 = vshrl.u32 %v931, 7
    %v933 = vsub.s32 2, %v932
    %v934 = vrot.slane %v921, %v933
    %v935 = vlaneseq
    %v936 = vshrl.u32 %v935, 7
    %v937 = vsub.s32 3, %v936
    %v938 = vrot.slane %v921, %v937
    %v943 = vmul.f32 %v916, %v926
    %v944 = vmul.f32 %v914, %v930
    %v945 = vmul.f32 %v912, %v934
    %v946 = vmul.f32 %v918, %v938
    %v947 = vmul.f32 %v917, %v926
    %v948 = vmul.f32 %v915, %v930
    %v949 = vmul.f32 %v913, %v934
    %v950 = vmul.f32 %v919, %v938
    %951 = vset.pattern.permute.xlu0 5
    %952 = vperm.xlu0 %951, %v554
    %v953 = vpop.permute.xlu0 %952
    %955 = vset.pattern.permute.xlu0 5
    %956 = vperm.xlu0 %955, %v555
    %v957 = vpop.permute.xlu0 %956
    %v959 = vmul.f32 %v943, %v953
    %v960 = vmul.f32 %v944, %v953
    %v961 = vmul.f32 %v945, %v953
    %v962 = vmul.f32 %v946, %v953
    %v963 = vmul.f32 %v947, %v957
    %v964 = vmul.f32 %v948, %v957
    %v965 = vmul.f32 %v949, %v957
    %v966 = vmul.f32 %v950, %v957
    %v967 = vadd.f32 %v887, %v959
    %v968 = vadd.f32 %v888, %v960
    %v969 = vadd.f32 %v889, %v961
    %v970 = vadd.f32 %v890, %v962
    %v971 = vadd.f32 %v891, %v963
    %v972 = vadd.f32 %v892, %v964
    %v973 = vadd.f32 %v893, %v965
    %v974 = vadd.f32 %v894, %v966
    %975 = vrot.lane.b32.xlu0 %v546, 113
    %v976 = vpop.permute.xlu0 %975
    %977 = vrot.lane.b32.xlu0 %v550, 113
    %v978 = vpop.permute.xlu0 %977
    %979 = vrot.lane.b32.xlu0 %v547, 113
    %v980 = vpop.permute.xlu0 %979
    %981 = vrot.lane.b32.xlu0 %v551, 113
    %v982 = vpop.permute.xlu0 %981
    %983 = vrot.lane.b32.xlu0 %v548, 113
    %v984 = vpop.permute.xlu0 %983
    %985 = vrot.lane.b32.xlu0 %v552, 113
    %v986 = vpop.permute.xlu0 %985
    %987 = vrot.lane.b32.xlu0 %v549, 113
    %v988 = vpop.permute.xlu0 %987
    %989 = vrot.lane.b32.xlu0 %v553, 113
    %v990 = vpop.permute.xlu0 %989
    %vm991 = vcmp.lt.s32.totalorder %v591, 113
    %v992 = vsel %vm991, %v984, %v988
    %v993 = vsel %vm991, %v986, %v990
    %v994 = vsel %vm991, %v980, %v984
    %v995 = vsel %vm991, %v982, %v986
    %v996 = vsel %vm991, %v976, %v980
    %v997 = vsel %vm991, %v978, %v982
    %v998 = vsel %vm991, %v988, %v976
    %v999 = vsel %vm991, %v990, %v978
    %s1000 = scalar_lea.vmem %s5, 6
    %v1001 = vld [vmem:[%s1000] ss:$8 sm:$0xf]
    %v1003 = vlaneseq
    %v1004 = vshrl.u32 %v1003, 7
    %v1005 = vsub.s32 0, %v1004
    %v1006 = vrot.slane %v1001, %v1005
    %v1007 = vlaneseq
    %v1008 = vshrl.u32 %v1007, 7
    %v1009 = vsub.s32 1, %v1008
    %v1010 = vrot.slane %v1001, %v1009
    %v1011 = vlaneseq
    %v1012 = vshrl.u32 %v1011, 7
    %v1013 = vsub.s32 2, %v1012
    %v1014 = vrot.slane %v1001, %v1013
    %v1015 = vlaneseq
    %v1016 = vshrl.u32 %v1015, 7
    %v1017 = vsub.s32 3, %v1016
    %v1018 = vrot.slane %v1001, %v1017
    %v1023 = vmul.f32 %v996, %v1006
    %v1024 = vmul.f32 %v994, %v1010
    %v1025 = vmul.f32 %v992, %v1014
    %v1026 = vmul.f32 %v998, %v1018
    %v1027 = vmul.f32 %v997, %v1006
    %v1028 = vmul.f32 %v995, %v1010
    %v1029 = vmul.f32 %v993, %v1014
    %v1030 = vmul.f32 %v999, %v1018
    %1031 = vset.pattern.permute.xlu0 6
    %1032 = vperm.xlu0 %1031, %v554
    %v1033 = vpop.permute.xlu0 %1032
    %1035 = vset.pattern.permute.xlu0 6
    %1036 = vperm.xlu0 %1035, %v555
    %v1037 = vpop.permute.xlu0 %1036
    %v1039 = vmul.f32 %v1023, %v1033
    %v1040 = vmul.f32 %v1024, %v1033
    %v1041 = vmul.f32 %v1025, %v1033
    %v1042 = vmul.f32 %v1026, %v1033
    %v1043 = vmul.f32 %v1027, %v1037
    %v1044 = vmul.f32 %v1028, %v1037
    %v1045 = vmul.f32 %v1029, %v1037
    %v1046 = vmul.f32 %v1030, %v1037
    %v1047 = vadd.f32 %v967, %v1039
    %v1048 = vadd.f32 %v968, %v1040
    %v1049 = vadd.f32 %v969, %v1041
    %v1050 = vadd.f32 %v970, %v1042
    %v1051 = vadd.f32 %v971, %v1043
    %v1052 = vadd.f32 %v972, %v1044
    %v1053 = vadd.f32 %v973, %v1045
    %v1054 = vadd.f32 %v974, %v1046
    %1055 = vrot.lane.b32.xlu0 %v546, 112
    %v1056 = vpop.permute.xlu0 %1055
    %1057 = vrot.lane.b32.xlu0 %v550, 112
    %v1058 = vpop.permute.xlu0 %1057
    %1059 = vrot.lane.b32.xlu0 %v547, 112
    %v1060 = vpop.permute.xlu0 %1059
    %1061 = vrot.lane.b32.xlu0 %v551, 112
    %v1062 = vpop.permute.xlu0 %1061
    %1063 = vrot.lane.b32.xlu0 %v548, 112
    %v1064 = vpop.permute.xlu0 %1063
    %1065 = vrot.lane.b32.xlu0 %v552, 112
    %v1066 = vpop.permute.xlu0 %1065
    %1067 = vrot.lane.b32.xlu0 %v549, 112
    %v1068 = vpop.permute.xlu0 %1067
    %1069 = vrot.lane.b32.xlu0 %v553, 112
    %v1070 = vpop.permute.xlu0 %1069
    %vm1071 = vcmp.lt.s32.totalorder %v591, 112
    %v1072 = vsel %vm1071, %v1064, %v1068
    %v1073 = vsel %vm1071, %v1066, %v1070
    %v1074 = vsel %vm1071, %v1060, %v1064
    %v1075 = vsel %vm1071, %v1062, %v1066
    %v1076 = vsel %vm1071, %v1056, %v1060
    %v1077 = vsel %vm1071, %v1058, %v1062
    %v1078 = vsel %vm1071, %v1068, %v1056
    %v1079 = vsel %vm1071, %v1070, %v1058
    %s1080 = scalar_lea.vmem %s5, 7
    %v1081 = vld [vmem:[%s1080] ss:$8 sm:$0xf]
    %v1083 = vlaneseq
    %v1084 = vshrl.u32 %v1083, 7
    %v1085 = vsub.s32 0, %v1084
    %v1086 = vrot.slane %v1081, %v1085
    %v1087 = vlaneseq
    %v1088 = vshrl.u32 %v1087, 7
    %v1089 = vsub.s32 1, %v1088
    %v1090 = vrot.slane %v1081, %v1089
    %v1091 = vlaneseq
    %v1092 = vshrl.u32 %v1091, 7
    %v1093 = vsub.s32 2, %v1092
    %v1094 = vrot.slane %v1081, %v1093
    %v1095 = vlaneseq
    %v1096 = vshrl.u32 %v1095, 7
    %v1097 = vsub.s32 3, %v1096
    %v1098 = vrot.slane %v1081, %v1097
    %v1103 = vmul.f32 %v1076, %v1086
    %v1104 = vmul.f32 %v1074, %v1090
    %v1105 = vmul.f32 %v1072, %v1094
    %v1106 = vmul.f32 %v1078, %v1098
    %v1107 = vmul.f32 %v1077, %v1086
    %v1108 = vmul.f32 %v1075, %v1090
    %v1109 = vmul.f32 %v1073, %v1094
    %v1110 = vmul.f32 %v1079, %v1098
    %1111 = vset.pattern.permute.xlu0 7
    %1112 = vperm.xlu0 %1111, %v554
    %v1113 = vpop.permute.xlu0 %1112
    %1115 = vset.pattern.permute.xlu0 7
    %1116 = vperm.xlu0 %1115, %v555
    %v1117 = vpop.permute.xlu0 %1116
    %v1119 = vmul.f32 %v1103, %v1113
    %v1120 = vmul.f32 %v1104, %v1113
    %v1121 = vmul.f32 %v1105, %v1113
    %v1122 = vmul.f32 %v1106, %v1113
    %v1123 = vmul.f32 %v1107, %v1117
    %v1124 = vmul.f32 %v1108, %v1117
    %v1125 = vmul.f32 %v1109, %v1117
    %v1126 = vmul.f32 %v1110, %v1117
    %v1127 = vadd.f32 %v1047, %v1119
    %v1128 = vadd.f32 %v1048, %v1120
    %v1129 = vadd.f32 %v1049, %v1121
    %v1130 = vadd.f32 %v1050, %v1122
    %v1131 = vadd.f32 %v1051, %v1123
    %v1132 = vadd.f32 %v1052, %v1124
    %v1133 = vadd.f32 %v1053, %v1125
    %v1134 = vadd.f32 %v1054, %v1126
    %1135 = vrot.lane.b32.xlu0 %v546, 111
    %v1136 = vpop.permute.xlu0 %1135
    %1137 = vrot.lane.b32.xlu0 %v550, 111
    %v1138 = vpop.permute.xlu0 %1137
    %1139 = vrot.lane.b32.xlu0 %v547, 111
    %v1140 = vpop.permute.xlu0 %1139
    %1141 = vrot.lane.b32.xlu0 %v551, 111
    %v1142 = vpop.permute.xlu0 %1141
    %1143 = vrot.lane.b32.xlu0 %v548, 111
    %v1144 = vpop.permute.xlu0 %1143
    %1145 = vrot.lane.b32.xlu0 %v552, 111
    %v1146 = vpop.permute.xlu0 %1145
    %1147 = vrot.lane.b32.xlu0 %v549, 111
    %v1148 = vpop.permute.xlu0 %1147
    %1149 = vrot.lane.b32.xlu0 %v553, 111
    %v1150 = vpop.permute.xlu0 %1149
    %vm1151 = vcmp.lt.s32.totalorder %v591, 111
    %v1152 = vsel %vm1151, %v1144, %v1148
    %v1153 = vsel %vm1151, %v1146, %v1150
    %v1154 = vsel %vm1151, %v1140, %v1144
    %v1155 = vsel %vm1151, %v1142, %v1146
    %v1156 = vsel %vm1151, %v1136, %v1140
    %v1157 = vsel %vm1151, %v1138, %v1142
    %v1158 = vsel %vm1151, %v1148, %v1136
    %v1159 = vsel %vm1151, %v1150, %v1138
    %s1160 = scalar_lea.vmem %s5, 32
    %v1161 = vld [vmem:[%s1160] ss:$8 sm:$0xf]
    %v1163 = vlaneseq
    %v1164 = vshrl.u32 %v1163, 7
    %v1165 = vsub.s32 0, %v1164
    %v1166 = vrot.slane %v1161, %v1165
    %v1167 = vlaneseq
    %v1168 = vshrl.u32 %v1167, 7
    %v1169 = vsub.s32 1, %v1168
    %v1170 = vrot.slane %v1161, %v1169
    %v1171 = vlaneseq
    %v1172 = vshrl.u32 %v1171, 7
    %v1173 = vsub.s32 2, %v1172
    %v1174 = vrot.slane %v1161, %v1173
    %v1175 = vlaneseq
    %v1176 = vshrl.u32 %v1175, 7
    %v1177 = vsub.s32 3, %v1176
    %v1178 = vrot.slane %v1161, %v1177
    %v1183 = vmul.f32 %v1156, %v1166
    %v1184 = vmul.f32 %v1154, %v1170
    %v1185 = vmul.f32 %v1152, %v1174
    %v1186 = vmul.f32 %v1158, %v1178
    %v1187 = vmul.f32 %v1157, %v1166
    %v1188 = vmul.f32 %v1155, %v1170
    %v1189 = vmul.f32 %v1153, %v1174
    %v1190 = vmul.f32 %v1159, %v1178
    %1191 = vset.pattern.permute.xlu0 8
    %1192 = vperm.xlu0 %1191, %v554
    %v1193 = vpop.permute.xlu0 %1192
    %1195 = vset.pattern.permute.xlu0 8
    %1196 = vperm.xlu0 %1195, %v555
    %v1197 = vpop.permute.xlu0 %1196
    %v1199 = vmul.f32 %v1183, %v1193
    %v1200 = vmul.f32 %v1184, %v1193
    %v1201 = vmul.f32 %v1185, %v1193
    %v1202 = vmul.f32 %v1186, %v1193
    %v1203 = vmul.f32 %v1187, %v1197
    %v1204 = vmul.f32 %v1188, %v1197
    %v1205 = vmul.f32 %v1189, %v1197
    %v1206 = vmul.f32 %v1190, %v1197
    %v1207 = vadd.f32 %v1127, %v1199
    %v1208 = vadd.f32 %v1128, %v1200
    %v1209 = vadd.f32 %v1129, %v1201
    %v1210 = vadd.f32 %v1130, %v1202
    %v1211 = vadd.f32 %v1131, %v1203
    %v1212 = vadd.f32 %v1132, %v1204
    %v1213 = vadd.f32 %v1133, %v1205
    %v1214 = vadd.f32 %v1134, %v1206
    %v1215 = vld [vmem:[%s4] sm:$0xff]
    %v1216 = vld [vmem:[%s4 + $0x8] sm:$0xff]
    %1218 = vset.pattern.permute.xlu0 0
    %1219 = vperm.xlu0 %1218, %v1215
    %v1220 = vpop.permute.xlu0 %1219
    %1223 = vset.pattern.permute.xlu0 0
    %1224 = vperm.xlu0 %1223, %v1216
    %v1225 = vpop.permute.xlu0 %1224
    %v1227 = vadd.f32 %v1207, %v1220
    %v1228 = vadd.f32 %v1208, %v1220
    %v1229 = vadd.f32 %v1209, %v1220
    %v1230 = vadd.f32 %v1210, %v1220
    %v1231 = vadd.f32 %v1211, %v1225
    %v1232 = vadd.f32 %v1212, %v1225
    %v1233 = vadd.f32 %v1213, %v1225
    %v1234 = vadd.f32 %v1214, %v1225
    %v1235 = vld [vmem:[#allocation2 + $0x100] sm:$0xff]
    %v1236 = vld [vmem:[#allocation2 + $0x108] sm:$0xff]
    %v1237 = vld [vmem:[#allocation2 + $0x110] sm:$0xff]
    %v1238 = vld [vmem:[#allocation2 + $0x118] sm:$0xff]
    %v1239 = vld [vmem:[#allocation2 + $0x120] sm:$0xff]
    %v1240 = vld [vmem:[#allocation2 + $0x128] sm:$0xff]
    %v1241 = vld [vmem:[#allocation2 + $0x130] sm:$0xff]
    %v1242 = vld [vmem:[#allocation2 + $0x138] sm:$0xff]
    %v1243 = vld [vmem:[%s3 + $0x40] sm:$0xff]
    %v1244 = vld [vmem:[%s3 + $0x48] sm:$0xff]
    %1246 = vset.pattern.permute.xlu0 4
    %1247 = vperm.xlu0 %1246, %v1243
    %v1248 = vpop.permute.xlu0 %1247
    %1251 = vset.pattern.permute.xlu0 4
    %1252 = vperm.xlu0 %1251, %v1244
    %v1253 = vpop.permute.xlu0 %1252
    %v1255 = vmul.f32 %v1235, %v1248
    %v1256 = vmul.f32 %v1236, %v1248
    %v1257 = vmul.f32 %v1237, %v1248
    %v1258 = vmul.f32 %v1238, %v1248
    %v1259 = vmul.f32 %v1239, %v1253
    %v1260 = vmul.f32 %v1240, %v1253
    %v1261 = vmul.f32 %v1241, %v1253
    %v1262 = vmul.f32 %v1242, %v1253
    %1263 = vrot.lane.b32.xlu0 %v1235, 17
    %v1264 = vpop.permute.xlu0 %1263
    %1265 = vrot.lane.b32.xlu0 %v1239, 17
    %v1266 = vpop.permute.xlu0 %1265
    %1267 = vrot.lane.b32.xlu0 %v1236, 17
    %v1268 = vpop.permute.xlu0 %1267
    %1269 = vrot.lane.b32.xlu0 %v1240, 17
    %v1270 = vpop.permute.xlu0 %1269
    %1271 = vrot.lane.b32.xlu0 %v1237, 17
    %v1272 = vpop.permute.xlu0 %1271
    %1273 = vrot.lane.b32.xlu0 %v1241, 17
    %v1274 = vpop.permute.xlu0 %1273
    %1275 = vrot.lane.b32.xlu0 %v1238, 17
    %v1276 = vpop.permute.xlu0 %1275
    %1277 = vrot.lane.b32.xlu0 %v1242, 17
    %v1278 = vpop.permute.xlu0 %1277
    %v1279 = vsel %vm592, %v1272, %v1276
    %v1280 = vsel %vm592, %v1274, %v1278
    %v1281 = vsel %vm592, %v1268, %v1272
    %v1282 = vsel %vm592, %v1270, %v1274
    %v1283 = vsel %vm592, %v1264, %v1268
    %v1284 = vsel %vm592, %v1266, %v1270
    %v1285 = vsel %vm592, %v1276, %v1264
    %v1286 = vsel %vm592, %v1278, %v1266
    %v1287 = vmul.f32 %v1285, %v606
    %v1288 = vmul.f32 %v1283, %v610
    %v1289 = vmul.f32 %v1281, %v614
    %v1290 = vmul.f32 %v1279, %v618
    %v1291 = vmul.f32 %v1286, %v606
    %v1292 = vmul.f32 %v1284, %v610
    %v1293 = vmul.f32 %v1282, %v614
    %v1294 = vmul.f32 %v1280, %v618
    %1295 = vset.pattern.permute.xlu0 0
    %1296 = vperm.xlu0 %1295, %v1243
    %v1297 = vpop.permute.xlu0 %1296
    %1299 = vset.pattern.permute.xlu0 0
    %1300 = vperm.xlu0 %1299, %v1244
    %v1301 = vpop.permute.xlu0 %1300
    %v1303 = vmul.f32 %v1287, %v1297
    %v1304 = vmul.f32 %v1288, %v1297
    %v1305 = vmul.f32 %v1289, %v1297
    %v1306 = vmul.f32 %v1290, %v1297
    %v1307 = vmul.f32 %v1291, %v1301
    %v1308 = vmul.f32 %v1292, %v1301
    %v1309 = vmul.f32 %v1293, %v1301
    %v1310 = vmul.f32 %v1294, %v1301
    %v1311 = vadd.f32 %v1255, %v1303
    %v1312 = vadd.f32 %v1256, %v1304
    %v1313 = vadd.f32 %v1257, %v1305
    %v1314 = vadd.f32 %v1258, %v1306
    %v1315 = vadd.f32 %v1259, %v1307
    %v1316 = vadd.f32 %v1260, %v1308
    %v1317 = vadd.f32 %v1261, %v1309
    %v1318 = vadd.f32 %v1262, %v1310
    %1319 = vrot.lane.b32.xlu0 %v1235, 16
    %v1320 = vpop.permute.xlu0 %1319
    %1321 = vrot.lane.b32.xlu0 %v1239, 16
    %v1322 = vpop.permute.xlu0 %1321
    %1323 = vrot.lane.b32.xlu0 %v1236, 16
    %v1324 = vpop.permute.xlu0 %1323
    %1325 = vrot.lane.b32.xlu0 %v1240, 16
    %v1326 = vpop.permute.xlu0 %1325
    %1327 = vrot.lane.b32.xlu0 %v1237, 16
    %v1328 = vpop.permute.xlu0 %1327
    %1329 = vrot.lane.b32.xlu0 %v1241, 16
    %v1330 = vpop.permute.xlu0 %1329
    %1331 = vrot.lane.b32.xlu0 %v1238, 16
    %v1332 = vpop.permute.xlu0 %1331
    %1333 = vrot.lane.b32.xlu0 %v1242, 16
    %v1334 = vpop.permute.xlu0 %1333
    %v1335 = vsel %vm671, %v1328, %v1332
    %v1336 = vsel %vm671, %v1330, %v1334
    %v1337 = vsel %vm671, %v1324, %v1328
    %v1338 = vsel %vm671, %v1326, %v1330
    %v1339 = vsel %vm671, %v1320, %v1324
    %v1340 = vsel %vm671, %v1322, %v1326
    %v1341 = vsel %vm671, %v1332, %v1320
    %v1342 = vsel %vm671, %v1334, %v1322
    %v1343 = vmul.f32 %v1341, %v686
    %v1344 = vmul.f32 %v1339, %v690
    %v1345 = vmul.f32 %v1337, %v694
    %v1346 = vmul.f32 %v1335, %v698
    %v1347 = vmul.f32 %v1342, %v686
    %v1348 = vmul.f32 %v1340, %v690
    %v1349 = vmul.f32 %v1338, %v694
    %v1350 = vmul.f32 %v1336, %v698
    %1351 = vset.pattern.permute.xlu0 1
    %1352 = vperm.xlu0 %1351, %v1243
    %v1353 = vpop.permute.xlu0 %1352
    %1355 = vset.pattern.permute.xlu0 1
    %1356 = vperm.xlu0 %1355, %v1244
    %v1357 = vpop.permute.xlu0 %1356
    %v1359 = vmul.f32 %v1343, %v1353
    %v1360 = vmul.f32 %v1344, %v1353
    %v1361 = vmul.f32 %v1345, %v1353
    %v1362 = vmul.f32 %v1346, %v1353
    %v1363 = vmul.f32 %v1347, %v1357
    %v1364 = vmul.f32 %v1348, %v1357
    %v1365 = vmul.f32 %v1349, %v1357
    %v1366 = vmul.f32 %v1350, %v1357
    %v1367 = vadd.f32 %v1311, %v1359
    %v1368 = vadd.f32 %v1312, %v1360
    %v1369 = vadd.f32 %v1313, %v1361
    %v1370 = vadd.f32 %v1314, %v1362
    %v1371 = vadd.f32 %v1315, %v1363
    %v1372 = vadd.f32 %v1316, %v1364
    %v1373 = vadd.f32 %v1317, %v1365
    %v1374 = vadd.f32 %v1318, %v1366
    %1375 = vrot.lane.b32.xlu0 %v1235, 15
    %v1376 = vpop.permute.xlu0 %1375
    %1377 = vrot.lane.b32.xlu0 %v1239, 15
    %v1378 = vpop.permute.xlu0 %1377
    %1379 = vrot.lane.b32.xlu0 %v1236, 15
    %v1380 = vpop.permute.xlu0 %1379
    %1381 = vrot.lane.b32.xlu0 %v1240, 15
    %v1382 = vpop.permute.xlu0 %1381
    %1383 = vrot.lane.b32.xlu0 %v1237, 15
    %v1384 = vpop.permute.xlu0 %1383
    %1385 = vrot.lane.b32.xlu0 %v1241, 15
    %v1386 = vpop.permute.xlu0 %1385
    %1387 = vrot.lane.b32.xlu0 %v1238, 15
    %v1388 = vpop.permute.xlu0 %1387
    %1389 = vrot.lane.b32.xlu0 %v1242, 15
    %v1390 = vpop.permute.xlu0 %1389
    %v1391 = vsel %vm751, %v1384, %v1388
    %v1392 = vsel %vm751, %v1386, %v1390
    %v1393 = vsel %vm751, %v1380, %v1384
    %v1394 = vsel %vm751, %v1382, %v1386
    %v1395 = vsel %vm751, %v1376, %v1380
    %v1396 = vsel %vm751, %v1378, %v1382
    %v1397 = vsel %vm751, %v1388, %v1376
    %v1398 = vsel %vm751, %v1390, %v1378
    %v1399 = vmul.f32 %v1397, %v766
    %v1400 = vmul.f32 %v1395, %v770
    %v1401 = vmul.f32 %v1393, %v774
    %v1402 = vmul.f32 %v1391, %v778
    %v1403 = vmul.f32 %v1398, %v766
    %v1404 = vmul.f32 %v1396, %v770
    %v1405 = vmul.f32 %v1394, %v774
    %v1406 = vmul.f32 %v1392, %v778
    %1407 = vset.pattern.permute.xlu0 2
    %1408 = vperm.xlu0 %1407, %v1243
    %v1409 = vpop.permute.xlu0 %1408
    %1411 = vset.pattern.permute.xlu0 2
    %1412 = vperm.xlu0 %1411, %v1244
    %v1413 = vpop.permute.xlu0 %1412
    %v1415 = vmul.f32 %v1399, %v1409
    %v1416 = vmul.f32 %v1400, %v1409
    %v1417 = vmul.f32 %v1401, %v1409
    %v1418 = vmul.f32 %v1402, %v1409
    %v1419 = vmul.f32 %v1403, %v1413
    %v1420 = vmul.f32 %v1404, %v1413
    %v1421 = vmul.f32 %v1405, %v1413
    %v1422 = vmul.f32 %v1406, %v1413
    %v1423 = vadd.f32 %v1367, %v1415
    %v1424 = vadd.f32 %v1368, %v1416
    %v1425 = vadd.f32 %v1369, %v1417
    %v1426 = vadd.f32 %v1370, %v1418
    %v1427 = vadd.f32 %v1371, %v1419
    %v1428 = vadd.f32 %v1372, %v1420
    %v1429 = vadd.f32 %v1373, %v1421
    %v1430 = vadd.f32 %v1374, %v1422
    %1431 = vrot.lane.b32.xlu0 %v1235, 1
    %v1432 = vpop.permute.xlu0 %1431
    %1433 = vrot.lane.b32.xlu0 %v1239, 1
    %v1434 = vpop.permute.xlu0 %1433
    %1435 = vrot.lane.b32.xlu0 %v1236, 1
    %v1436 = vpop.permute.xlu0 %1435
    %1437 = vrot.lane.b32.xlu0 %v1240, 1
    %v1438 = vpop.permute.xlu0 %1437
    %1439 = vrot.lane.b32.xlu0 %v1237, 1
    %v1440 = vpop.permute.xlu0 %1439
    %1441 = vrot.lane.b32.xlu0 %v1241, 1
    %v1442 = vpop.permute.xlu0 %1441
    %1443 = vrot.lane.b32.xlu0 %v1238, 1
    %v1444 = vpop.permute.xlu0 %1443
    %1445 = vrot.lane.b32.xlu0 %v1242, 1
    %v1446 = vpop.permute.xlu0 %1445
    %v1447 = vsel %vm831, %v1440, %v1444
    %v1448 = vsel %vm831, %v1442, %v1446
    %v1449 = vsel %vm831, %v1436, %v1440
    %v1450 = vsel %vm831, %v1438, %v1442
    %v1451 = vsel %vm831, %v1432, %v1436
    %v1452 = vsel %vm831, %v1434, %v1438
    %v1453 = vsel %vm831, %v1444, %v1432
    %v1454 = vsel %vm831, %v1446, %v1434
    %v1455 = vmul.f32 %v1453, %v846
    %v1456 = vmul.f32 %v1451, %v850
    %v1457 = vmul.f32 %v1449, %v854
    %v1458 = vmul.f32 %v1447, %v858
    %v1459 = vmul.f32 %v1454, %v846
    %v1460 = vmul.f32 %v1452, %v850
    %v1461 = vmul.f32 %v1450, %v854
    %v1462 = vmul.f32 %v1448, %v858
    %1463 = vset.pattern.permute.xlu0 3
    %1464 = vperm.xlu0 %1463, %v1243
    %v1465 = vpop.permute.xlu0 %1464
    %1467 = vset.pattern.permute.xlu0 3
    %1468 = vperm.xlu0 %1467, %v1244
    %v1469 = vpop.permute.xlu0 %1468
    %v1471 = vmul.f32 %v1455, %v1465
    %v1472 = vmul.f32 %v1456, %v1465
    %v1473 = vmul.f32 %v1457, %v1465
    %v1474 = vmul.f32 %v1458, %v1465
    %v1475 = vmul.f32 %v1459, %v1469
    %v1476 = vmul.f32 %v1460, %v1469
    %v1477 = vmul.f32 %v1461, %v1469
    %v1478 = vmul.f32 %v1462, %v1469
    %v1479 = vadd.f32 %v1423, %v1471
    %v1480 = vadd.f32 %v1424, %v1472
    %v1481 = vadd.f32 %v1425, %v1473
    %v1482 = vadd.f32 %v1426, %v1474
    %v1483 = vadd.f32 %v1427, %v1475
    %v1484 = vadd.f32 %v1428, %v1476
    %v1485 = vadd.f32 %v1429, %v1477
    %v1486 = vadd.f32 %v1430, %v1478
    %1487 = vrot.lane.b32.xlu0 %v1235, 127
    %v1488 = vpop.permute.xlu0 %1487
    %1489 = vrot.lane.b32.xlu0 %v1239, 127
    %v1490 = vpop.permute.xlu0 %1489
    %1491 = vrot.lane.b32.xlu0 %v1236, 127
    %v1492 = vpop.permute.xlu0 %1491
    %1493 = vrot.lane.b32.xlu0 %v1240, 127
    %v1494 = vpop.permute.xlu0 %1493
    %1495 = vrot.lane.b32.xlu0 %v1237, 127
    %v1496 = vpop.permute.xlu0 %1495
    %1497 = vrot.lane.b32.xlu0 %v1241, 127
    %v1498 = vpop.permute.xlu0 %1497
    %1499 = vrot.lane.b32.xlu0 %v1238, 127
    %v1500 = vpop.permute.xlu0 %1499
    %1501 = vrot.lane.b32.xlu0 %v1242, 127
    %v1502 = vpop.permute.xlu0 %1501
    %v1503 = vsel %vm911, %v1496, %v1500
    %v1504 = vsel %vm911, %v1498, %v1502
    %v1505 = vsel %vm911, %v1492, %v1496
    %v1506 = vsel %vm911, %v1494, %v1498
    %v1507 = vsel %vm911, %v1488, %v1492
    %v1508 = vsel %vm911, %v1490, %v1494
    %v1509 = vsel %vm911, %v1500, %v1488
    %v1510 = vsel %vm911, %v1502, %v1490
    %v1511 = vmul.f32 %v1507, %v926
    %v1512 = vmul.f32 %v1505, %v930
    %v1513 = vmul.f32 %v1503, %v934
    %v1514 = vmul.f32 %v1509, %v938
    %v1515 = vmul.f32 %v1508, %v926
    %v1516 = vmul.f32 %v1506, %v930
    %v1517 = vmul.f32 %v1504, %v934
    %v1518 = vmul.f32 %v1510, %v938
    %1519 = vset.pattern.permute.xlu0 5
    %1520 = vperm.xlu0 %1519, %v1243
    %v1521 = vpop.permute.xlu0 %1520
    %1523 = vset.pattern.permute.xlu0 5
    %1524 = vperm.xlu0 %1523, %v1244
    %v1525 = vpop.permute.xlu0 %1524
    %v1527 = vmul.f32 %v1511, %v1521
    %v1528 = vmul.f32 %v1512, %v1521
    %v1529 = vmul.f32 %v1513, %v1521
    %v1530 = vmul.f32 %v1514, %v1521
    %v1531 = vmul.f32 %v1515, %v1525
    %v1532 = vmul.f32 %v1516, %v1525
    %v1533 = vmul.f32 %v1517, %v1525
    %v1534 = vmul.f32 %v1518, %v1525
    %v1535 = vadd.f32 %v1479, %v1527
    %v1536 = vadd.f32 %v1480, %v1528
    %v1537 = vadd.f32 %v1481, %v1529
    %v1538 = vadd.f32 %v1482, %v1530
    %v1539 = vadd.f32 %v1483, %v1531
    %v1540 = vadd.f32 %v1484, %v1532
    %v1541 = vadd.f32 %v1485, %v1533
    %v1542 = vadd.f32 %v1486, %v1534
    %1543 = vrot.lane.b32.xlu0 %v1235, 113
    %v1544 = vpop.permute.xlu0 %1543
    %1545 = vrot.lane.b32.xlu0 %v1239, 113
    %v1546 = vpop.permute.xlu0 %1545
    %1547 = vrot.lane.b32.xlu0 %v1236, 113
    %v1548 = vpop.permute.xlu0 %1547
    %1549 = vrot.lane.b32.xlu0 %v1240, 113
    %v1550 = vpop.permute.xlu0 %1549
    %1551 = vrot.lane.b32.xlu0 %v1237, 113
    %v1552 = vpop.permute.xlu0 %1551
    %1553 = vrot.lane.b32.xlu0 %v1241, 113
    %v1554 = vpop.permute.xlu0 %1553
    %1555 = vrot.lane.b32.xlu0 %v1238, 113
    %v1556 = vpop.permute.xlu0 %1555
    %1557 = vrot.lane.b32.xlu0 %v1242, 113
    %v1558 = vpop.permute.xlu0 %1557
    %v1559 = vsel %vm991, %v1552, %v1556
    %v1560 = vsel %vm991, %v1554, %v1558
    %v1561 = vsel %vm991, %v1548, %v1552
    %v1562 = vsel %vm991, %v1550, %v1554
    %v1563 = vsel %vm991, %v1544, %v1548
    %v1564 = vsel %vm991, %v1546, %v1550
    %v1565 = vsel %vm991, %v1556, %v1544
    %v1566 = vsel %vm991, %v1558, %v1546
    %v1567 = vmul.f32 %v1563, %v1006
    %v1568 = vmul.f32 %v1561, %v1010
    %v1569 = vmul.f32 %v1559, %v1014
    %v1570 = vmul.f32 %v1565, %v1018
    %v1571 = vmul.f32 %v1564, %v1006
    %v1572 = vmul.f32 %v1562, %v1010
    %v1573 = vmul.f32 %v1560, %v1014
    %v1574 = vmul.f32 %v1566, %v1018
    %1575 = vset.pattern.permute.xlu0 6
    %1576 = vperm.xlu0 %1575, %v1243
    %v1577 = vpop.permute.xlu0 %1576
    %1579 = vset.pattern.permute.xlu0 6
    %1580 = vperm.xlu0 %1579, %v1244
    %v1581 = vpop.permute.xlu0 %1580
    %v1583 = vmul.f32 %v1567, %v1577
    %v1584 = vmul.f32 %v1568, %v1577
    %v1585 = vmul.f32 %v1569, %v1577
    %v1586 = vmul.f32 %v1570, %v1577
    %v1587 = vmul.f32 %v1571, %v1581
    %v1588 = vmul.f32 %v1572, %v1581
    %v1589 = vmul.f32 %v1573, %v1581
    %v1590 = vmul.f32 %v1574, %v1581
    %v1591 = vadd.f32 %v1535, %v1583
    %v1592 = vadd.f32 %v1536, %v1584
    %v1593 = vadd.f32 %v1537, %v1585
    %v1594 = vadd.f32 %v1538, %v1586
    %v1595 = vadd.f32 %v1539, %v1587
    %v1596 = vadd.f32 %v1540, %v1588
    %v1597 = vadd.f32 %v1541, %v1589
    %v1598 = vadd.f32 %v1542, %v1590
    %1599 = vrot.lane.b32.xlu0 %v1235, 112
    %v1600 = vpop.permute.xlu0 %1599
    %1601 = vrot.lane.b32.xlu0 %v1239, 112
    %v1602 = vpop.permute.xlu0 %1601
    %1603 = vrot.lane.b32.xlu0 %v1236, 112
    %v1604 = vpop.permute.xlu0 %1603
    %1605 = vrot.lane.b32.xlu0 %v1240, 112
    %v1606 = vpop.permute.xlu0 %1605
    %1607 = vrot.lane.b32.xlu0 %v1237, 112
    %v1608 = vpop.permute.xlu0 %1607
    %1609 = vrot.lane.b32.xlu0 %v1241, 112
    %v1610 = vpop.permute.xlu0 %1609
    %1611 = vrot.lane.b32.xlu0 %v1238, 112
    %v1612 = vpop.permute.xlu0 %1611
    %1613 = vrot.lane.b32.xlu0 %v1242, 112
    %v1614 = vpop.permute.xlu0 %1613
    %v1615 = vsel %vm1071, %v1608, %v1612
    %v1616 = vsel %vm1071, %v1610, %v1614
    %v1617 = vsel %vm1071, %v1604, %v1608
    %v1618 = vsel %vm1071, %v1606, %v1610
    %v1619 = vsel %vm1071, %v1600, %v1604
    %v1620 = vsel %vm1071, %v1602, %v1606
    %v1621 = vsel %vm1071, %v1612, %v1600
    %v1622 = vsel %vm1071, %v1614, %v1602
    %v1623 = vmul.f32 %v1619, %v1086
    %v1624 = vmul.f32 %v1617, %v1090
    %v1625 = vmul.f32 %v1615, %v1094
    %v1626 = vmul.f32 %v1621, %v1098
    %v1627 = vmul.f32 %v1620, %v1086
    %v1628 = vmul.f32 %v1618, %v1090
    %v1629 = vmul.f32 %v1616, %v1094
    %v1630 = vmul.f32 %v1622, %v1098
    %1631 = vset.pattern.permute.xlu0 7
    %1632 = vperm.xlu0 %1631, %v1243
    %v1633 = vpop.permute.xlu0 %1632
    %1635 = vset.pattern.permute.xlu0 7
    %1636 = vperm.xlu0 %1635, %v1244
    %v1637 = vpop.permute.xlu0 %1636
    %v1639 = vmul.f32 %v1623, %v1633
    %v1640 = vmul.f32 %v1624, %v1633
    %v1641 = vmul.f32 %v1625, %v1633
    %v1642 = vmul.f32 %v1626, %v1633
    %v1643 = vmul.f32 %v1627, %v1637
    %v1644 = vmul.f32 %v1628, %v1637
    %v1645 = vmul.f32 %v1629, %v1637
    %v1646 = vmul.f32 %v1630, %v1637
    %v1647 = vadd.f32 %v1591, %v1639
    %v1648 = vadd.f32 %v1592, %v1640
    %v1649 = vadd.f32 %v1593, %v1641
    %v1650 = vadd.f32 %v1594, %v1642
    %v1651 = vadd.f32 %v1595, %v1643
    %v1652 = vadd.f32 %v1596, %v1644
    %v1653 = vadd.f32 %v1597, %v1645
    %v1654 = vadd.f32 %v1598, %v1646
    %1655 = vrot.lane.b32.xlu0 %v1235, 111
    %v1656 = vpop.permute.xlu0 %1655
    %1657 = vrot.lane.b32.xlu0 %v1239, 111
    %v1658 = vpop.permute.xlu0 %1657
    %1659 = vrot.lane.b32.xlu0 %v1236, 111
    %v1660 = vpop.permute.xlu0 %1659
    %1661 = vrot.lane.b32.xlu0 %v1240, 111
    %v1662 = vpop.permute.xlu0 %1661
    %1663 = vrot.lane.b32.xlu0 %v1237, 111
    %v1664 = vpop.permute.xlu0 %1663
    %1665 = vrot.lane.b32.xlu0 %v1241, 111
    %v1666 = vpop.permute.xlu0 %1665
    %1667 = vrot.lane.b32.xlu0 %v1238, 111
    %v1668 = vpop.permute.xlu0 %1667
    %1669 = vrot.lane.b32.xlu0 %v1242, 111
    %v1670 = vpop.permute.xlu0 %1669
    %v1671 = vsel %vm1151, %v1664, %v1668
    %v1672 = vsel %vm1151, %v1666, %v1670
    %v1673 = vsel %vm1151, %v1660, %v1664
    %v1674 = vsel %vm1151, %v1662, %v1666
    %v1675 = vsel %vm1151, %v1656, %v1660
    %v1676 = vsel %vm1151, %v1658, %v1662
    %v1677 = vsel %vm1151, %v1668, %v1656
    %v1678 = vsel %vm1151, %v1670, %v1658
    %v1679 = vmul.f32 %v1675, %v1166
    %v1680 = vmul.f32 %v1673, %v1170
    %v1681 = vmul.f32 %v1671, %v1174
    %v1682 = vmul.f32 %v1677, %v1178
    %v1683 = vmul.f32 %v1676, %v1166
    %v1684 = vmul.f32 %v1674, %v1170
    %v1685 = vmul.f32 %v1672, %v1174
    %v1686 = vmul.f32 %v1678, %v1178
    %1687 = vset.pattern.permute.xlu0 8
    %1688 = vperm.xlu0 %1687, %v1243
    %v1689 = vpop.permute.xlu0 %1688
    %1691 = vset.pattern.permute.xlu0 8
    %1692 = vperm.xlu0 %1691, %v1244
    %v1693 = vpop.permute.xlu0 %1692
    %v1695 = vmul.f32 %v1679, %v1689
    %v1696 = vmul.f32 %v1680, %v1689
    %v1697 = vmul.f32 %v1681, %v1689
    %v1698 = vmul.f32 %v1682, %v1689
    %v1699 = vmul.f32 %v1683, %v1693
    %v1700 = vmul.f32 %v1684, %v1693
    %v1701 = vmul.f32 %v1685, %v1693
    %v1702 = vmul.f32 %v1686, %v1693
    %v1703 = vadd.f32 %v1647, %v1695
    %v1704 = vadd.f32 %v1648, %v1696
    %v1705 = vadd.f32 %v1649, %v1697
    %v1706 = vadd.f32 %v1650, %v1698
    %v1707 = vadd.f32 %v1651, %v1699
    %v1708 = vadd.f32 %v1652, %v1700
    %v1709 = vadd.f32 %v1653, %v1701
    %v1710 = vadd.f32 %v1654, %v1702
    %v1711 = vld [vmem:[%s4 + $0x40] sm:$0xff]
    %v1712 = vld [vmem:[%s4 + $0x48] sm:$0xff]
    %1714 = vset.pattern.permute.xlu0 0
    %1715 = vperm.xlu0 %1714, %v1711
    %v1716 = vpop.permute.xlu0 %1715
    %1719 = vset.pattern.permute.xlu0 0
    %1720 = vperm.xlu0 %1719, %v1712
    %v1721 = vpop.permute.xlu0 %1720
    %v1723 = vadd.f32 %v1703, %v1716
    %v1724 = vadd.f32 %v1704, %v1716
    %v1725 = vadd.f32 %v1705, %v1716
    %v1726 = vadd.f32 %v1706, %v1716
    %v1727 = vadd.f32 %v1707, %v1721
    %v1728 = vadd.f32 %v1708, %v1721
    %v1729 = vadd.f32 %v1709, %v1721
    %v1730 = vadd.f32 %v1710, %v1721
    %v1731 = vmul.f32 %v1227, 0.5
    %v1732 = vmul.f32 %v1228, 0.5
    %v1733 = vmul.f32 %v1229, 0.5
    %v1734 = vmul.f32 %v1230, 0.5
    %v1735 = vmul.f32 %v1231, 0.5
    %v1736 = vmul.f32 %v1232, 0.5
    %v1737 = vmul.f32 %v1233, 0.5
    %v1738 = vmul.f32 %v1234, 0.5
    %v1739 = vmul.f32 %v1227, 0.70710677
    %v1740 = vmul.f32 %v1228, 0.70710677
    %v1741 = vmul.f32 %v1229, 0.70710677
    %v1742 = vmul.f32 %v1230, 0.70710677
    %v1743 = vmul.f32 %v1231, 0.70710677
    %v1744 = vmul.f32 %v1232, 0.70710677
    %v1745 = vmul.f32 %v1233, 0.70710677
    %v1746 = vmul.f32 %v1234, 0.70710677
    %v1747 = vand.u32 2147483647, %v1739
    %v1748 = vand.u32 2147483647, %v1740
    %v1749 = vand.u32 2147483647, %v1741
    %v1750 = vand.u32 2147483647, %v1742
    %v1751 = vand.u32 2147483647, %v1743
    %v1752 = vand.u32 2147483647, %v1744
    %v1753 = vand.u32 2147483647, %v1745
    %v1754 = vand.u32 2147483647, %v1746
    %v1755 = vmul.f32 %v1747, 0.3275911
    %v1756 = vmul.f32 %v1748, 0.3275911
    %v1757 = vmul.f32 %v1749, 0.3275911
    %v1758 = vmul.f32 %v1750, 0.3275911
    %v1759 = vmul.f32 %v1751, 0.3275911
    %v1760 = vmul.f32 %v1752, 0.3275911
    %v1761 = vmul.f32 %v1753, 0.3275911
    %v1762 = vmul.f32 %v1754, 0.3275911
    %v1763 = vadd.f32 %v1755, 1.0
    %v1764 = vadd.f32 %v1756, 1.0
    %v1765 = vadd.f32 %v1757, 1.0
    %v1766 = vadd.f32 %v1758, 1.0
    %v1767 = vadd.f32 %v1759, 1.0
    %v1768 = vadd.f32 %v1760, 1.0
    %v1769 = vadd.f32 %v1761, 1.0
    %v1770 = vadd.f32 %v1762, 1.0
    %v1771 = vrcp.pop %v1763
    %v1772 = vrcp.pop %v1764
    %v1773 = vrcp.pop %v1765
    %v1774 = vrcp.pop %v1766
    %v1775 = vrcp.pop %v1767
    %v1776 = vrcp.pop %v1768
    %v1777 = vrcp.pop %v1769
    %v1778 = vrcp.pop %v1770
    %v1779 = vmul.f32 %v1763, %v1771
    %v1780 = vmul.f32 %v1764, %v1772
    %v1781 = vmul.f32 %v1765, %v1773
    %v1782 = vmul.f32 %v1766, %v1774
    %v1783 = vmul.f32 %v1767, %v1775
    %v1784 = vmul.f32 %v1768, %v1776
    %v1785 = vmul.f32 %v1769, %v1777
    %v1786 = vmul.f32 %v1770, %v1778
    %v1787 = vsub.f32 2.0, %v1779
    %v1788 = vsub.f32 2.0, %v1780
    %v1789 = vsub.f32 2.0, %v1781
    %v1790 = vsub.f32 2.0, %v1782
    %v1791 = vsub.f32 2.0, %v1783
    %v1792 = vsub.f32 2.0, %v1784
    %v1793 = vsub.f32 2.0, %v1785
    %v1794 = vsub.f32 2.0, %v1786
    %v1795 = vmul.f32 %v1771, %v1787
    %v1796 = vmul.f32 %v1772, %v1788
    %v1797 = vmul.f32 %v1773, %v1789
    %v1798 = vmul.f32 %v1774, %v1790
    %v1799 = vmul.f32 %v1775, %v1791
    %v1800 = vmul.f32 %v1776, %v1792
    %v1801 = vmul.f32 %v1777, %v1793
    %v1802 = vmul.f32 %v1778, %v1794
    %v1803 = vmul.f32 %v1795, 1.0614054
    %v1804 = vmul.f32 %v1796, 1.0614054
    %v1805 = vmul.f32 %v1797, 1.0614054
    %v1806 = vmul.f32 %v1798, 1.0614054
    %v1807 = vmul.f32 %v1799, 1.0614054
    %v1808 = vmul.f32 %v1800, 1.0614054
    %v1809 = vmul.f32 %v1801, 1.0614054
    %v1810 = vmul.f32 %v1802, 1.0614054
    %v1811 = vadd.f32 %v1803, -1.4531521
    %v1812 = vadd.f32 %v1804, -1.4531521
    %v1813 = vadd.f32 %v1805, -1.4531521
    %v1814 = vadd.f32 %v1806, -1.4531521
    %v1815 = vadd.f32 %v1807, -1.4531521
    %v1816 = vadd.f32 %v1808, -1.4531521
    %v1817 = vadd.f32 %v1809, -1.4531521
    %v1818 = vadd.f32 %v1810, -1.4531521
    %v1819 = vmul.f32 %v1811, %v1795
    %v1820 = vmul.f32 %v1812, %v1796
    %v1821 = vmul.f32 %v1813, %v1797
    %v1822 = vmul.f32 %v1814, %v1798
    %v1823 = vmul.f32 %v1815, %v1799
    %v1824 = vmul.f32 %v1816, %v1800
    %v1825 = vmul.f32 %v1817, %v1801
    %v1826 = vmul.f32 %v1818, %v1802
    %v1827 = vadd.f32 %v1819, 1.4214138
    %v1828 = vadd.f32 %v1820, 1.4214138
    %v1829 = vadd.f32 %v1821, 1.4214138
    %v1830 = vadd.f32 %v1822, 1.4214138
    %v1831 = vadd.f32 %v1823, 1.4214138
    %v1832 = vadd.f32 %v1824, 1.4214138
    %v1833 = vadd.f32 %v1825, 1.4214138
    %v1834 = vadd.f32 %v1826, 1.4214138
    %v1835 = vmul.f32 %v1827, %v1795
    %v1836 = vmul.f32 %v1828, %v1796
    %v1837 = vmul.f32 %v1829, %v1797
    %v1838 = vmul.f32 %v1830, %v1798
    %v1839 = vmul.f32 %v1831, %v1799
    %v1840 = vmul.f32 %v1832, %v1800
    %v1841 = vmul.f32 %v1833, %v1801
    %v1842 = vmul.f32 %v1834, %v1802
    %v1843 = vadd.f32 %v1835, -0.28449672
    %v1844 = vadd.f32 %v1836, -0.28449672
    %v1845 = vadd.f32 %v1837, -0.28449672
    %v1846 = vadd.f32 %v1838, -0.28449672
    %v1847 = vadd.f32 %v1839, -0.28449672
    %v1848 = vadd.f32 %v1840, -0.28449672
    %v1849 = vadd.f32 %v1841, -0.28449672
    %v1850 = vadd.f32 %v1842, -0.28449672
    %v1851 = vmul.f32 %v1843, %v1795
    %v1852 = vmul.f32 %v1844, %v1796
    %v1853 = vmul.f32 %v1845, %v1797
    %v1854 = vmul.f32 %v1846, %v1798
    %v1855 = vmul.f32 %v1847, %v1799
    %v1856 = vmul.f32 %v1848, %v1800
    %v1857 = vmul.f32 %v1849, %v1801
    %v1858 = vmul.f32 %v1850, %v1802
    %v1859 = vadd.f32 %v1851, 0.2548296
    %v1860 = vadd.f32 %v1852, 0.2548296
    %v1861 = vadd.f32 %v1853, 0.2548296
    %v1862 = vadd.f32 %v1854, 0.2548296
    %v1863 = vadd.f32 %v1855, 0.2548296
    %v1864 = vadd.f32 %v1856, 0.2548296
    %v1865 = vadd.f32 %v1857, 0.2548296
    %v1866 = vadd.f32 %v1858, 0.2548296
    %v1867 = vmul.f32 %v1859, %v1795
    %v1868 = vmul.f32 %v1860, %v1796
    %v1869 = vmul.f32 %v1861, %v1797
    %v1870 = vmul.f32 %v1862, %v1798
    %v1871 = vmul.f32 %v1863, %v1799
    %v1872 = vmul.f32 %v1864, %v1800
    %v1873 = vmul.f32 %v1865, %v1801
    %v1874 = vmul.f32 %v1866, %v1802
    %v1875 = vsub.f32 0.0, %v1747
    %v1876 = vsub.f32 0.0, %v1748
    %v1877 = vsub.f32 0.0, %v1749
    %v1878 = vsub.f32 0.0, %v1750
    %v1879 = vsub.f32 0.0, %v1751
    %v1880 = vsub.f32 0.0, %v1752
    %v1881 = vsub.f32 0.0, %v1753
    %v1882 = vsub.f32 0.0, %v1754
    %v1883 = vmul.f32 %v1875, %v1747
    %v1884 = vmul.f32 %v1876, %v1748
    %v1885 = vmul.f32 %v1877, %v1749
    %v1886 = vmul.f32 %v1878, %v1750
    %v1887 = vmul.f32 %v1879, %v1751
    %v1888 = vmul.f32 %v1880, %v1752
    %v1889 = vmul.f32 %v1881, %v1753
    %v1890 = vmul.f32 %v1882, %v1754
    %v1891 = vmul.f32 %v1883, 1.442695
    %v1892 = vpow.pop %v1891
    %v1893 = vmul.f32 %v1884, 1.442695
    %v1894 = vpow.pop %v1893
    %v1895 = vmul.f32 %v1885, 1.442695
    %v1896 = vpow.pop %v1895
    %v1897 = vmul.f32 %v1886, 1.442695
    %v1898 = vpow.pop %v1897
    %v1899 = vmul.f32 %v1887, 1.442695
    %v1900 = vpow.pop %v1899
    %v1901 = vmul.f32 %v1888, 1.442695
    %v1902 = vpow.pop %v1901
    %v1903 = vmul.f32 %v1889, 1.442695
    %v1904 = vpow.pop %v1903
    %v1905 = vmul.f32 %v1890, 1.442695
    %v1906 = vpow.pop %v1905
    %v1907 = vmul.f32 %v1867, %v1892
    %v1908 = vmul.f32 %v1868, %v1894
    %v1909 = vmul.f32 %v1869, %v1896
    %v1910 = vmul.f32 %v1870, %v1898
    %v1911 = vmul.f32 %v1871, %v1900
    %v1912 = vmul.f32 %v1872, %v1902
    %v1913 = vmul.f32 %v1873, %v1904
    %v1914 = vmul.f32 %v1874, %v1906
    %v1915 = vsub.f32 1.0, %v1907
    %v1916 = vsub.f32 1.0, %v1908
    %v1917 = vsub.f32 1.0, %v1909
    %v1918 = vsub.f32 1.0, %v1910
    %v1919 = vsub.f32 1.0, %v1911
    %v1920 = vsub.f32 1.0, %v1912
    %v1921 = vsub.f32 1.0, %v1913
    %v1922 = vsub.f32 1.0, %v1914
    %vm1923 = vcmp.ge.f32.partialorder %v1739, 0.0
    %vm1924 = vcmp.ge.f32.partialorder %v1740, 0.0
    %vm1925 = vcmp.ge.f32.partialorder %v1741, 0.0
    %vm1926 = vcmp.ge.f32.partialorder %v1742, 0.0
    %vm1927 = vcmp.ge.f32.partialorder %v1743, 0.0
    %vm1928 = vcmp.ge.f32.partialorder %v1744, 0.0
    %vm1929 = vcmp.ge.f32.partialorder %v1745, 0.0
    %vm1930 = vcmp.ge.f32.partialorder %v1746, 0.0
    %v1931 = vsub.f32 0.0, %v1915
    %v1932 = vsub.f32 0.0, %v1916
    %v1933 = vsub.f32 0.0, %v1917
    %v1934 = vsub.f32 0.0, %v1918
    %v1935 = vsub.f32 0.0, %v1919
    %v1936 = vsub.f32 0.0, %v1920
    %v1937 = vsub.f32 0.0, %v1921
    %v1938 = vsub.f32 0.0, %v1922
    %v1939 = vsel %vm1923, %v1915, %v1931
    %v1940 = vsel %vm1924, %v1916, %v1932
    %v1941 = vsel %vm1925, %v1917, %v1933
    %v1942 = vsel %vm1926, %v1918, %v1934
    %v1943 = vsel %vm1927, %v1919, %v1935
    %v1944 = vsel %vm1928, %v1920, %v1936
    %v1945 = vsel %vm1929, %v1921, %v1937
    %v1946 = vsel %vm1930, %v1922, %v1938
    %v1947 = vadd.f32 %v1939, 1.0
    %v1948 = vadd.f32 %v1940, 1.0
    %v1949 = vadd.f32 %v1941, 1.0
    %v1950 = vadd.f32 %v1942, 1.0
    %v1951 = vadd.f32 %v1943, 1.0
    %v1952 = vadd.f32 %v1944, 1.0
    %v1953 = vadd.f32 %v1945, 1.0
    %v1954 = vadd.f32 %v1946, 1.0
    %v1955 = vmul.f32 %v1731, %v1947
    %v1956 = vmul.f32 %v1732, %v1948
    %v1957 = vmul.f32 %v1733, %v1949
    %v1958 = vmul.f32 %v1734, %v1950
    %v1959 = vmul.f32 %v1735, %v1951
    %v1960 = vmul.f32 %v1736, %v1952
    %v1961 = vmul.f32 %v1737, %v1953
    %v1962 = vmul.f32 %v1738, %v1954
    %v1963 = vmul.f32 %v1955, %v1723
    %v1964 = vmul.f32 %v1956, %v1724
    %v1965 = vmul.f32 %v1957, %v1725
    %v1966 = vmul.f32 %v1958, %v1726
    %v1967 = vmul.f32 %v1959, %v1727
    %v1968 = vmul.f32 %v1960, %v1728
    %v1969 = vmul.f32 %v1961, %v1729
    %v1970 = vmul.f32 %v1962, %v1730
    %v1971 = vpack.c.bf16 %v1967, %v1963
    %v1972 = vpack.c.bf16 %v1968, %v1964
    %v1973 = vpack.c.bf16 %v1969, %v1965
    %v1974 = vpack.c.bf16 %v1970, %v1966
    %1975 = vst [vmem:[#allocation3] sm:$0xff] %v1971
    %1976 = vst [vmem:[#allocation3 + $0x8] sm:$0xff] %v1972
    %1977 = vst [vmem:[#allocation3 + $0x10] sm:$0xff] %v1973
    %1978 = vst [vmem:[#allocation3 + $0x18] sm:$0xff] %v1974
    %v1979 = vld [vmem:[#allocation2 + $0x40] sm:$0xff]
    %v1980 = vld [vmem:[#allocation2 + $0x48] sm:$0xff]
    %v1981 = vld [vmem:[#allocation2 + $0x50] sm:$0xff]
    %v1982 = vld [vmem:[#allocation2 + $0x58] sm:$0xff]
    %v1983 = vld [vmem:[#allocation2 + $0x60] sm:$0xff]
    %v1984 = vld [vmem:[#allocation2 + $0x68] sm:$0xff]
    %v1985 = vld [vmem:[#allocation2 + $0x70] sm:$0xff]
    %v1986 = vld [vmem:[#allocation2 + $0x78] sm:$0xff]
    %v1987 = vld [vmem:[%s3 + $0x10] sm:$0xff]
    %v1988 = vld [vmem:[%s3 + $0x18] sm:$0xff]
    %1990 = vset.pattern.permute.xlu0 4
    %1991 = vperm.xlu0 %1990, %v1987
    %v1992 = vpop.permute.xlu0 %1991
    %1995 = vset.pattern.permute.xlu0 4
    %1996 = vperm.xlu0 %1995, %v1988
    %v1997 = vpop.permute.xlu0 %1996
    %v1999 = vmul.f32 %v1979, %v1992
    %v2000 = vmul.f32 %v1980, %v1992
    %v2001 = vmul.f32 %v1981, %v1992
    %v2002 = vmul.f32 %v1982, %v1992
    %v2003 = vmul.f32 %v1983, %v1997
    %v2004 = vmul.f32 %v1984, %v1997
    %v2005 = vmul.f32 %v1985, %v1997
    %v2006 = vmul.f32 %v1986, %v1997
    %2007 = vrot.lane.b32.xlu0 %v1979, 17
    %v2008 = vpop.permute.xlu0 %2007
    %2009 = vrot.lane.b32.xlu0 %v1983, 17
    %v2010 = vpop.permute.xlu0 %2009
    %2011 = vrot.lane.b32.xlu0 %v1980, 17
    %v2012 = vpop.permute.xlu0 %2011
    %2013 = vrot.lane.b32.xlu0 %v1984, 17
    %v2014 = vpop.permute.xlu0 %2013
    %2015 = vrot.lane.b32.xlu0 %v1981, 17
    %v2016 = vpop.permute.xlu0 %2015
    %2017 = vrot.lane.b32.xlu0 %v1985, 17
    %v2018 = vpop.permute.xlu0 %2017
    %2019 = vrot.lane.b32.xlu0 %v1982, 17
    %v2020 = vpop.permute.xlu0 %2019
    %2021 = vrot.lane.b32.xlu0 %v1986, 17
    %v2022 = vpop.permute.xlu0 %2021
    %v2023 = vsel %vm592, %v2016, %v2020
    %v2024 = vsel %vm592, %v2018, %v2022
    %v2025 = vsel %vm592, %v2012, %v2016
    %v2026 = vsel %vm592, %v2014, %v2018
    %v2027 = vsel %vm592, %v2008, %v2012
    %v2028 = vsel %vm592, %v2010, %v2014
    %v2029 = vsel %vm592, %v2020, %v2008
    %v2030 = vsel %vm592, %v2022, %v2010
    %v2031 = vld [vmem:[%s5] ss:$8 sm:$0xf]
    %v2033 = vlaneseq
    %v2034 = vshrl.u32 %v2033, 7
    %v2035 = vsub.s32 0, %v2034
    %v2036 = vrot.slane %v2031, %v2035
    %v2037 = vlaneseq
    %v2038 = vshrl.u32 %v2037, 7
    %v2039 = vsub.s32 1, %v2038
    %v2040 = vrot.slane %v2031, %v2039
    %v2041 = vlaneseq
    %v2042 = vshrl.u32 %v2041, 7
    %v2043 = vsub.s32 2, %v2042
    %v2044 = vrot.slane %v2031, %v2043
    %v2045 = vlaneseq
    %v2046 = vshrl.u32 %v2045, 7
    %v2047 = vsub.s32 3, %v2046
    %v2048 = vrot.slane %v2031, %v2047
    %v2053 = vmul.f32 %v2029, %v2036
    %v2054 = vmul.f32 %v2027, %v2040
    %v2055 = vmul.f32 %v2025, %v2044
    %v2056 = vmul.f32 %v2023, %v2048
    %v2057 = vmul.f32 %v2030, %v2036
    %v2058 = vmul.f32 %v2028, %v2040
    %v2059 = vmul.f32 %v2026, %v2044
    %v2060 = vmul.f32 %v2024, %v2048
    %2061 = vset.pattern.permute.xlu0 0
    %2062 = vperm.xlu0 %2061, %v1987
    %v2063 = vpop.permute.xlu0 %2062
    %2065 = vset.pattern.permute.xlu0 0
    %2066 = vperm.xlu0 %2065, %v1988
    %v2067 = vpop.permute.xlu0 %2066
    %v2069 = vmul.f32 %v2053, %v2063
    %v2070 = vmul.f32 %v2054, %v2063
    %v2071 = vmul.f32 %v2055, %v2063
    %v2072 = vmul.f32 %v2056, %v2063
    %v2073 = vmul.f32 %v2057, %v2067
    %v2074 = vmul.f32 %v2058, %v2067
    %v2075 = vmul.f32 %v2059, %v2067
    %v2076 = vmul.f32 %v2060, %v2067
    %v2077 = vadd.f32 %v1999, %v2069
    %v2078 = vadd.f32 %v2000, %v2070
    %v2079 = vadd.f32 %v2001, %v2071
    %v2080 = vadd.f32 %v2002, %v2072
    %v2081 = vadd.f32 %v2003, %v2073
    %v2082 = vadd.f32 %v2004, %v2074
    %v2083 = vadd.f32 %v2005, %v2075
    %v2084 = vadd.f32 %v2006, %v2076
    %2085 = vrot.lane.b32.xlu0 %v1979, 16
    %v2086 = vpop.permute.xlu0 %2085
    %2087 = vrot.lane.b32.xlu0 %v1983, 16
    %v2088 = vpop.permute.xlu0 %2087
    %2089 = vrot.lane.b32.xlu0 %v1980, 16
    %v2090 = vpop.permute.xlu0 %2089
    %2091 = vrot.lane.b32.xlu0 %v1984, 16
    %v2092 = vpop.permute.xlu0 %2091
    %2093 = vrot.lane.b32.xlu0 %v1981, 16
    %v2094 = vpop.permute.xlu0 %2093
    %2095 = vrot.lane.b32.xlu0 %v1985, 16
    %v2096 = vpop.permute.xlu0 %2095
    %2097 = vrot.lane.b32.xlu0 %v1982, 16
    %v2098 = vpop.permute.xlu0 %2097
    %2099 = vrot.lane.b32.xlu0 %v1986, 16
    %v2100 = vpop.permute.xlu0 %2099
    %v2101 = vsel %vm671, %v2094, %v2098
    %v2102 = vsel %vm671, %v2096, %v2100
    %v2103 = vsel %vm671, %v2090, %v2094
    %v2104 = vsel %vm671, %v2092, %v2096
    %v2105 = vsel %vm671, %v2086, %v2090
    %v2106 = vsel %vm671, %v2088, %v2092
    %v2107 = vsel %vm671, %v2098, %v2086
    %v2108 = vsel %vm671, %v2100, %v2088
    %v2109 = vld [vmem:[%s680] ss:$8 sm:$0xf]
    %v2111 = vlaneseq
    %v2112 = vshrl.u32 %v2111, 7
    %v2113 = vsub.s32 0, %v2112
    %v2114 = vrot.slane %v2109, %v2113
    %v2115 = vlaneseq
    %v2116 = vshrl.u32 %v2115, 7
    %v2117 = vsub.s32 1, %v2116
    %v2118 = vrot.slane %v2109, %v2117
    %v2119 = vlaneseq
    %v2120 = vshrl.u32 %v2119, 7
    %v2121 = vsub.s32 2, %v2120
    %v2122 = vrot.slane %v2109, %v2121
    %v2123 = vlaneseq
    %v2124 = vshrl.u32 %v2123, 7
    %v2125 = vsub.s32 3, %v2124
    %v2126 = vrot.slane %v2109, %v2125
    %v2131 = vmul.f32 %v2107, %v2114
    %v2132 = vmul.f32 %v2105, %v2118
    %v2133 = vmul.f32 %v2103, %v2122
    %v2134 = vmul.f32 %v2101, %v2126
    %v2135 = vmul.f32 %v2108, %v2114
    %v2136 = vmul.f32 %v2106, %v2118
    %v2137 = vmul.f32 %v2104, %v2122
    %v2138 = vmul.f32 %v2102, %v2126
    %2139 = vset.pattern.permute.xlu0 1
    %2140 = vperm.xlu0 %2139, %v1987
    %v2141 = vpop.permute.xlu0 %2140
    %2143 = vset.pattern.permute.xlu0 1
    %2144 = vperm.xlu0 %2143, %v1988
    %v2145 = vpop.permute.xlu0 %2144
    %v2147 = vmul.f32 %v2131, %v2141
    %v2148 = vmul.f32 %v2132, %v2141
    %v2149 = vmul.f32 %v2133, %v2141
    %v2150 = vmul.f32 %v2134, %v2141
    %v2151 = vmul.f32 %v2135, %v2145
    %v2152 = vmul.f32 %v2136, %v2145
    %v2153 = vmul.f32 %v2137, %v2145
    %v2154 = vmul.f32 %v2138, %v2145
    %v2155 = vadd.f32 %v2077, %v2147
    %v2156 = vadd.f32 %v2078, %v2148
    %v2157 = vadd.f32 %v2079, %v2149
    %v2158 = vadd.f32 %v2080, %v2150
    %v2159 = vadd.f32 %v2081, %v2151
    %v2160 = vadd.f32 %v2082, %v2152
    %v2161 = vadd.f32 %v2083, %v2153
    %v2162 = vadd.f32 %v2084, %v2154
    %2163 = vrot.lane.b32.xlu0 %v1979, 15
    %v2164 = vpop.permute.xlu0 %2163
    %2165 = vrot.lane.b32.xlu0 %v1983, 15
    %v2166 = vpop.permute.xlu0 %2165
    %2167 = vrot.lane.b32.xlu0 %v1980, 15
    %v2168 = vpop.permute.xlu0 %2167
    %2169 = vrot.lane.b32.xlu0 %v1984, 15
    %v2170 = vpop.permute.xlu0 %2169
    %2171 = vrot.lane.b32.xlu0 %v1981, 15
    %v2172 = vpop.permute.xlu0 %2171
    %2173 = vrot.lane.b32.xlu0 %v1985, 15
    %v2174 = vpop.permute.xlu0 %2173
    %2175 = vrot.lane.b32.xlu0 %v1982, 15
    %v2176 = vpop.permute.xlu0 %2175
    %2177 = vrot.lane.b32.xlu0 %v1986, 15
    %v2178 = vpop.permute.xlu0 %2177
    %v2179 = vsel %vm751, %v2172, %v2176
    %v2180 = vsel %vm751, %v2174, %v2178
    %v2181 = vsel %vm751, %v2168, %v2172
    %v2182 = vsel %vm751, %v2170, %v2174
    %v2183 = vsel %vm751, %v2164, %v2168
    %v2184 = vsel %vm751, %v2166, %v2170
    %v2185 = vsel %vm751, %v2176, %v2164
    %v2186 = vsel %vm751, %v2178, %v2166
    %v2187 = vld [vmem:[%s760] ss:$8 sm:$0xf]
    %v2189 = vlaneseq
    %v2190 = vshrl.u32 %v2189, 7
    %v2191 = vsub.s32 0, %v2190
    %v2192 = vrot.slane %v2187, %v2191
    %v2193 = vlaneseq
    %v2194 = vshrl.u32 %v2193, 7
    %v2195 = vsub.s32 1, %v2194
    %v2196 = vrot.slane %v2187, %v2195
    %v2197 = vlaneseq
    %v2198 = vshrl.u32 %v2197, 7
    %v2199 = vsub.s32 2, %v2198
    %v2200 = vrot.slane %v2187, %v2199
    %v2201 = vlaneseq
    %v2202 = vshrl.u32 %v2201, 7
    %v2203 = vsub.s32 3, %v2202
    %v2204 = vrot.slane %v2187, %v2203
    %v2209 = vmul.f32 %v2185, %v2192
    %v2210 = vmul.f32 %v2183, %v2196
    %v2211 = vmul.f32 %v2181, %v2200
    %v2212 = vmul.f32 %v2179, %v2204
    %v2213 = vmul.f32 %v2186, %v2192
    %v2214 = vmul.f32 %v2184, %v2196
    %v2215 = vmul.f32 %v2182, %v2200
    %v2216 = vmul.f32 %v2180, %v2204
    %2217 = vset.pattern.permute.xlu0 2
    %2218 = vperm.xlu0 %2217, %v1987
    %v2219 = vpop.permute.xlu0 %2218
    %2221 = vset.pattern.permute.xlu0 2
    %2222 = vperm.xlu0 %2221, %v1988
    %v2223 = vpop.permute.xlu0 %2222
    %v2225 = vmul.f32 %v2209, %v2219
    %v2226 = vmul.f32 %v2210, %v2219
    %v2227 = vmul.f32 %v2211, %v2219
    %v2228 = vmul.f32 %v2212, %v2219
    %v2229 = vmul.f32 %v2213, %v2223
    %v2230 = vmul.f32 %v2214, %v2223
    %v2231 = vmul.f32 %v2215, %v2223
    %v2232 = vmul.f32 %v2216, %v2223
    %v2233 = vadd.f32 %v2155, %v2225
    %v2234 = vadd.f32 %v2156, %v2226
    %v2235 = vadd.f32 %v2157, %v2227
    %v2236 = vadd.f32 %v2158, %v2228
    %v2237 = vadd.f32 %v2159, %v2229
    %v2238 = vadd.f32 %v2160, %v2230
    %v2239 = vadd.f32 %v2161, %v2231
    %v2240 = vadd.f32 %v2162, %v2232
    %2241 = vrot.lane.b32.xlu0 %v1979, 1
    %v2242 = vpop.permute.xlu0 %2241
    %2243 = vrot.lane.b32.xlu0 %v1983, 1
    %v2244 = vpop.permute.xlu0 %2243
    %2245 = vrot.lane.b32.xlu0 %v1980, 1
    %v2246 = vpop.permute.xlu0 %2245
    %2247 = vrot.lane.b32.xlu0 %v1984, 1
    %v2248 = vpop.permute.xlu0 %2247
    %2249 = vrot.lane.b32.xlu0 %v1981, 1
    %v2250 = vpop.permute.xlu0 %2249
    %2251 = vrot.lane.b32.xlu0 %v1985, 1
    %v2252 = vpop.permute.xlu0 %2251
    %2253 = vrot.lane.b32.xlu0 %v1982, 1
    %v2254 = vpop.permute.xlu0 %2253
    %2255 = vrot.lane.b32.xlu0 %v1986, 1
    %v2256 = vpop.permute.xlu0 %2255
    %v2257 = vsel %vm831, %v2250, %v2254
    %v2258 = vsel %vm831, %v2252, %v2256
    %v2259 = vsel %vm831, %v2246, %v2250
    %v2260 = vsel %vm831, %v2248, %v2252
    %v2261 = vsel %vm831, %v2242, %v2246
    %v2262 = vsel %vm831, %v2244, %v2248
    %v2263 = vsel %vm831, %v2254, %v2242
    %v2264 = vsel %vm831, %v2256, %v2244
    %v2265 = vld [vmem:[%s840] ss:$8 sm:$0xf]
    %v2267 = vlaneseq
    %v2268 = vshrl.u32 %v2267, 7
    %v2269 = vsub.s32 0, %v2268
    %v2270 = vrot.slane %v2265, %v2269
    %v2271 = vlaneseq
    %v2272 = vshrl.u32 %v2271, 7
    %v2273 = vsub.s32 1, %v2272
    %v2274 = vrot.slane %v2265, %v2273
    %v2275 = vlaneseq
    %v2276 = vshrl.u32 %v2275, 7
    %v2277 = vsub.s32 2, %v2276
    %v2278 = vrot.slane %v2265, %v2277
    %v2279 = vlaneseq
    %v2280 = vshrl.u32 %v2279, 7
    %v2281 = vsub.s32 3, %v2280
    %v2282 = vrot.slane %v2265, %v2281
    %v2287 = vmul.f32 %v2263, %v2270
    %v2288 = vmul.f32 %v2261, %v2274
    %v2289 = vmul.f32 %v2259, %v2278
    %v2290 = vmul.f32 %v2257, %v2282
    %v2291 = vmul.f32 %v2264, %v2270
    %v2292 = vmul.f32 %v2262, %v2274
    %v2293 = vmul.f32 %v2260, %v2278
    %v2294 = vmul.f32 %v2258, %v2282
    %2295 = vset.pattern.permute.xlu0 3
    %2296 = vperm.xlu0 %2295, %v1987
    %v2297 = vpop.permute.xlu0 %2296
    %2299 = vset.pattern.permute.xlu0 3
    %2300 = vperm.xlu0 %2299, %v1988
    %v2301 = vpop.permute.xlu0 %2300
    %v2303 = vmul.f32 %v2287, %v2297
    %v2304 = vmul.f32 %v2288, %v2297
    %v2305 = vmul.f32 %v2289, %v2297
    %v2306 = vmul.f32 %v2290, %v2297
    %v2307 = vmul.f32 %v2291, %v2301
    %v2308 = vmul.f32 %v2292, %v2301
    %v2309 = vmul.f32 %v2293, %v2301
    %v2310 = vmul.f32 %v2294, %v2301
    %v2311 = vadd.f32 %v2233, %v2303
    %v2312 = vadd.f32 %v2234, %v2304
    %v2313 = vadd.f32 %v2235, %v2305
    %v2314 = vadd.f32 %v2236, %v2306
    %v2315 = vadd.f32 %v2237, %v2307
    %v2316 = vadd.f32 %v2238, %v2308
    %v2317 = vadd.f32 %v2239, %v2309
    %v2318 = vadd.f32 %v2240, %v2310
    %2319 = vrot.lane.b32.xlu0 %v1979, 127
    %v2320 = vpop.permute.xlu0 %2319
    %2321 = vrot.lane.b32.xlu0 %v1983, 127
    %v2322 = vpop.permute.xlu0 %2321
    %2323 = vrot.lane.b32.xlu0 %v1980, 127
    %v2324 = vpop.permute.xlu0 %2323
    %2325 = vrot.lane.b32.xlu0 %v1984, 127
    %v2326 = vpop.permute.xlu0 %2325
    %2327 = vrot.lane.b32.xlu0 %v1981, 127
    %v2328 = vpop.permute.xlu0 %2327
    %2329 = vrot.lane.b32.xlu0 %v1985, 127
    %v2330 = vpop.permute.xlu0 %2329
    %2331 = vrot.lane.b32.xlu0 %v1982, 127
    %v2332 = vpop.permute.xlu0 %2331
    %2333 = vrot.lane.b32.xlu0 %v1986, 127
    %v2334 = vpop.permute.xlu0 %2333
    %v2335 = vsel %vm911, %v2328, %v2332
    %v2336 = vsel %vm911, %v2330, %v2334
    %v2337 = vsel %vm911, %v2324, %v2328
    %v2338 = vsel %vm911, %v2326, %v2330
    %v2339 = vsel %vm911, %v2320, %v2324
    %v2340 = vsel %vm911, %v2322, %v2326
    %v2341 = vsel %vm911, %v2332, %v2320
    %v2342 = vsel %vm911, %v2334, %v2322
    %v2343 = vld [vmem:[%s920] ss:$8 sm:$0xf]
    %v2345 = vlaneseq
    %v2346 = vshrl.u32 %v2345, 7
    %v2347 = vsub.s32 0, %v2346
    %v2348 = vrot.slane %v2343, %v2347
    %v2349 = vlaneseq
    %v2350 = vshrl.u32 %v2349, 7
    %v2351 = vsub.s32 1, %v2350
    %v2352 = vrot.slane %v2343, %v2351
    %v2353 = vlaneseq
    %v2354 = vshrl.u32 %v2353, 7
    %v2355 = vsub.s32 2, %v2354
    %v2356 = vrot.slane %v2343, %v2355
    %v2357 = vlaneseq
    %v2358 = vshrl.u32 %v2357, 7
    %v2359 = vsub.s32 3, %v2358
    %v2360 = vrot.slane %v2343, %v2359
    %v2365 = vmul.f32 %v2339, %v2348
    %v2366 = vmul.f32 %v2337, %v2352
    %v2367 = vmul.f32 %v2335, %v2356
    %v2368 = vmul.f32 %v2341, %v2360
    %v2369 = vmul.f32 %v2340, %v2348
    %v2370 = vmul.f32 %v2338, %v2352
    %v2371 = vmul.f32 %v2336, %v2356
    %v2372 = vmul.f32 %v2342, %v2360
    %2373 = vset.pattern.permute.xlu0 5
    %2374 = vperm.xlu0 %2373, %v1987
    %v2375 = vpop.permute.xlu0 %2374
    %2377 = vset.pattern.permute.xlu0 5
    %2378 = vperm.xlu0 %2377, %v1988
    %v2379 = vpop.permute.xlu0 %2378
    %v2381 = vmul.f32 %v2365, %v2375
    %v2382 = vmul.f32 %v2366, %v2375
    %v2383 = vmul.f32 %v2367, %v2375
    %v2384 = vmul.f32 %v2368, %v2375
    %v2385 = vmul.f32 %v2369, %v2379
    %v2386 = vmul.f32 %v2370, %v2379
    %v2387 = vmul.f32 %v2371, %v2379
    %v2388 = vmul.f32 %v2372, %v2379
    %v2389 = vadd.f32 %v2311, %v2381
    %v2390 = vadd.f32 %v2312, %v2382
    %v2391 = vadd.f32 %v2313, %v2383
    %v2392 = vadd.f32 %v2314, %v2384
    %v2393 = vadd.f32 %v2315, %v2385
    %v2394 = vadd.f32 %v2316, %v2386
    %v2395 = vadd.f32 %v2317, %v2387
    %v2396 = vadd.f32 %v2318, %v2388
    %2397 = vrot.lane.b32.xlu0 %v1979, 113
    %v2398 = vpop.permute.xlu0 %2397
    %2399 = vrot.lane.b32.xlu0 %v1983, 113
    %v2400 = vpop.permute.xlu0 %2399
    %2401 = vrot.lane.b32.xlu0 %v1980, 113
    %v2402 = vpop.permute.xlu0 %2401
    %2403 = vrot.lane.b32.xlu0 %v1984, 113
    %v2404 = vpop.permute.xlu0 %2403
    %2405 = vrot.lane.b32.xlu0 %v1981, 113
    %v2406 = vpop.permute.xlu0 %2405
    %2407 = vrot.lane.b32.xlu0 %v1985, 113
    %v2408 = vpop.permute.xlu0 %2407
    %2409 = vrot.lane.b32.xlu0 %v1982, 113
    %v2410 = vpop.permute.xlu0 %2409
    %2411 = vrot.lane.b32.xlu0 %v1986, 113
    %v2412 = vpop.permute.xlu0 %2411
    %v2413 = vsel %vm991, %v2406, %v2410
    %v2414 = vsel %vm991, %v2408, %v2412
    %v2415 = vsel %vm991, %v2402, %v2406
    %v2416 = vsel %vm991, %v2404, %v2408
    %v2417 = vsel %vm991, %v2398, %v2402
    %v2418 = vsel %vm991, %v2400, %v2404
    %v2419 = vsel %vm991, %v2410, %v2398
    %v2420 = vsel %vm991, %v2412, %v2400
    %v2421 = vld [vmem:[%s1000] ss:$8 sm:$0xf]
    %v2423 = vlaneseq
    %v2424 = vshrl.u32 %v2423, 7
    %v2425 = vsub.s32 0, %v2424
    %v2426 = vrot.slane %v2421, %v2425
    %v2427 = vlaneseq
    %v2428 = vshrl.u32 %v2427, 7
    %v2429 = vsub.s32 1, %v2428
    %v2430 = vrot.slane %v2421, %v2429
    %v2431 = vlaneseq
    %v2432 = vshrl.u32 %v2431, 7
    %v2433 = vsub.s32 2, %v2432
    %v2434 = vrot.slane %v2421, %v2433
    %v2435 = vlaneseq
    %v2436 = vshrl.u32 %v2435, 7
    %v2437 = vsub.s32 3, %v2436
    %v2438 = vrot.slane %v2421, %v2437
    %v2443 = vmul.f32 %v2417, %v2426
    %v2444 = vmul.f32 %v2415, %v2430
    %v2445 = vmul.f32 %v2413, %v2434
    %v2446 = vmul.f32 %v2419, %v2438
    %v2447 = vmul.f32 %v2418, %v2426
    %v2448 = vmul.f32 %v2416, %v2430
    %v2449 = vmul.f32 %v2414, %v2434
    %v2450 = vmul.f32 %v2420, %v2438
    %2451 = vset.pattern.permute.xlu0 6
    %2452 = vperm.xlu0 %2451, %v1987
    %v2453 = vpop.permute.xlu0 %2452
    %2455 = vset.pattern.permute.xlu0 6
    %2456 = vperm.xlu0 %2455, %v1988
    %v2457 = vpop.permute.xlu0 %2456
    %v2459 = vmul.f32 %v2443, %v2453
    %v2460 = vmul.f32 %v2444, %v2453
    %v2461 = vmul.f32 %v2445, %v2453
    %v2462 = vmul.f32 %v2446, %v2453
    %v2463 = vmul.f32 %v2447, %v2457
    %v2464 = vmul.f32 %v2448, %v2457
    %v2465 = vmul.f32 %v2449, %v2457
    %v2466 = vmul.f32 %v2450, %v2457
    %v2467 = vadd.f32 %v2389, %v2459
    %v2468 = vadd.f32 %v2390, %v2460
    %v2469 = vadd.f32 %v2391, %v2461
    %v2470 = vadd.f32 %v2392, %v2462
    %v2471 = vadd.f32 %v2393, %v2463
    %v2472 = vadd.f32 %v2394, %v2464
    %v2473 = vadd.f32 %v2395, %v2465
    %v2474 = vadd.f32 %v2396, %v2466
    %2475 = vrot.lane.b32.xlu0 %v1979, 112
    %v2476 = vpop.permute.xlu0 %2475
    %2477 = vrot.lane.b32.xlu0 %v1983, 112
    %v2478 = vpop.permute.xlu0 %2477
    %2479 = vrot.lane.b32.xlu0 %v1980, 112
    %v2480 = vpop.permute.xlu0 %2479
    %2481 = vrot.lane.b32.xlu0 %v1984, 112
    %v2482 = vpop.permute.xlu0 %2481
    %2483 = vrot.lane.b32.xlu0 %v1981, 112
    %v2484 = vpop.permute.xlu0 %2483
    %2485 = vrot.lane.b32.xlu0 %v1985, 112
    %v2486 = vpop.permute.xlu0 %2485
    %2487 = vrot.lane.b32.xlu0 %v1982, 112
    %v2488 = vpop.permute.xlu0 %2487
    %2489 = vrot.lane.b32.xlu0 %v1986, 112
    %v2490 = vpop.permute.xlu0 %2489
    %v2491 = vsel %vm1071, %v2484, %v2488
    %v2492 = vsel %vm1071, %v2486, %v2490
    %v2493 = vsel %vm1071, %v2480, %v2484
    %v2494 = vsel %vm1071, %v2482, %v2486
    %v2495 = vsel %vm1071, %v2476, %v2480
    %v2496 = vsel %vm1071, %v2478, %v2482
    %v2497 = vsel %vm1071, %v2488, %v2476
    %v2498 = vsel %vm1071, %v2490, %v2478
    %v2499 = vld [vmem:[%s1080] ss:$8 sm:$0xf]
    %v2501 = vlaneseq
    %v2502 = vshrl.u32 %v2501, 7
    %v2503 = vsub.s32 0, %v2502
    %v2504 = vrot.slane %v2499, %v2503
    %v2505 = vlaneseq
    %v2506 = vshrl.u32 %v2505, 7
    %v2507 = vsub.s32 1, %v2506
    %v2508 = vrot.slane %v2499, %v2507
    %v2509 = vlaneseq
    %v2510 = vshrl.u32 %v2509, 7
    %v2511 = vsub.s32 2, %v2510
    %v2512 = vrot.slane %v2499, %v2511
    %v2513 = vlaneseq
    %v2514 = vshrl.u32 %v2513, 7
    %v2515 = vsub.s32 3, %v2514
    %v2516 = vrot.slane %v2499, %v2515
    %v2521 = vmul.f32 %v2495, %v2504
    %v2522 = vmul.f32 %v2493, %v2508
    %v2523 = vmul.f32 %v2491, %v2512
    %v2524 = vmul.f32 %v2497, %v2516
    %v2525 = vmul.f32 %v2496, %v2504
    %v2526 = vmul.f32 %v2494, %v2508
    %v2527 = vmul.f32 %v2492, %v2512
    %v2528 = vmul.f32 %v2498, %v2516
    %2529 = vset.pattern.permute.xlu0 7
    %2530 = vperm.xlu0 %2529, %v1987
    %v2531 = vpop.permute.xlu0 %2530
    %2533 = vset.pattern.permute.xlu0 7
    %2534 = vperm.xlu0 %2533, %v1988
    %v2535 = vpop.permute.xlu0 %2534
    %v2537 = vmul.f32 %v2521, %v2531
    %v2538 = vmul.f32 %v2522, %v2531
    %v2539 = vmul.f32 %v2523, %v2531
    %v2540 = vmul.f32 %v2524, %v2531
    %v2541 = vmul.f32 %v2525, %v2535
    %v2542 = vmul.f32 %v2526, %v2535
    %v2543 = vmul.f32 %v2527, %v2535
    %v2544 = vmul.f32 %v2528, %v2535
    %v2545 = vadd.f32 %v2467, %v2537
    %v2546 = vadd.f32 %v2468, %v2538
    %v2547 = vadd.f32 %v2469, %v2539
    %v2548 = vadd.f32 %v2470, %v2540
    %v2549 = vadd.f32 %v2471, %v2541
    %v2550 = vadd.f32 %v2472, %v2542
    %v2551 = vadd.f32 %v2473, %v2543
    %v2552 = vadd.f32 %v2474, %v2544
    %2553 = vrot.lane.b32.xlu0 %v1979, 111
    %v2554 = vpop.permute.xlu0 %2553
    %2555 = vrot.lane.b32.xlu0 %v1983, 111
    %v2556 = vpop.permute.xlu0 %2555
    %2557 = vrot.lane.b32.xlu0 %v1980, 111
    %v2558 = vpop.permute.xlu0 %2557
    %2559 = vrot.lane.b32.xlu0 %v1984, 111
    %v2560 = vpop.permute.xlu0 %2559
    %2561 = vrot.lane.b32.xlu0 %v1981, 111
    %v2562 = vpop.permute.xlu0 %2561
    %2563 = vrot.lane.b32.xlu0 %v1985, 111
    %v2564 = vpop.permute.xlu0 %2563
    %2565 = vrot.lane.b32.xlu0 %v1982, 111
    %v2566 = vpop.permute.xlu0 %2565
    %2567 = vrot.lane.b32.xlu0 %v1986, 111
    %v2568 = vpop.permute.xlu0 %2567
    %v2569 = vsel %vm1151, %v2562, %v2566
    %v2570 = vsel %vm1151, %v2564, %v2568
    %v2571 = vsel %vm1151, %v2558, %v2562
    %v2572 = vsel %vm1151, %v2560, %v2564
    %v2573 = vsel %vm1151, %v2554, %v2558
    %v2574 = vsel %vm1151, %v2556, %v2560
    %v2575 = vsel %vm1151, %v2566, %v2554
    %v2576 = vsel %vm1151, %v2568, %v2556
    %v2577 = vld [vmem:[%s1160] ss:$8 sm:$0xf]
    %v2579 = vlaneseq
    %v2580 = vshrl.u32 %v2579, 7
    %v2581 = vsub.s32 0, %v2580
    %v2582 = vrot.slane %v2577, %v2581
    %v2583 = vlaneseq
    %v2584 = vshrl.u32 %v2583, 7
    %v2585 = vsub.s32 1, %v2584
    %v2586 = vrot.slane %v2577, %v2585
    %v2587 = vlaneseq
    %v2588 = vshrl.u32 %v2587, 7
    %v2589 = vsub.s32 2, %v2588
    %v2590 = vrot.slane %v2577, %v2589
    %v2591 = vlaneseq
    %v2592 = vshrl.u32 %v2591, 7
    %v2593 = vsub.s32 3, %v2592
    %v2594 = vrot.slane %v2577, %v2593
    %v2599 = vmul.f32 %v2573, %v2582
    %v2600 = vmul.f32 %v2571, %v2586
    %v2601 = vmul.f32 %v2569, %v2590
    %v2602 = vmul.f32 %v2575, %v2594
    %v2603 = vmul.f32 %v2574, %v2582
    %v2604 = vmul.f32 %v2572, %v2586
    %v2605 = vmul.f32 %v2570, %v2590
    %v2606 = vmul.f32 %v2576, %v2594
    %2607 = vset.pattern.permute.xlu0 8
    %2608 = vperm.xlu0 %2607, %v1987
    %v2609 = vpop.permute.xlu0 %2608
    %2611 = vset.pattern.permute.xlu0 8
    %2612 = vperm.xlu0 %2611, %v1988
    %v2613 = vpop.permute.xlu0 %2612
    %v2615 = vmul.f32 %v2599, %v2609
    %v2616 = vmul.f32 %v2600, %v2609
    %v2617 = vmul.f32 %v2601, %v2609
    %v2618 = vmul.f32 %v2602, %v2609
    %v2619 = vmul.f32 %v2603, %v2613
    %v2620 = vmul.f32 %v2604, %v2613
    %v2621 = vmul.f32 %v2605, %v2613
    %v2622 = vmul.f32 %v2606, %v2613
    %v2623 = vadd.f32 %v2545, %v2615
    %v2624 = vadd.f32 %v2546, %v2616
    %v2625 = vadd.f32 %v2547, %v2617
    %v2626 = vadd.f32 %v2548, %v2618
    %v2627 = vadd.f32 %v2549, %v2619
    %v2628 = vadd.f32 %v2550, %v2620
    %v2629 = vadd.f32 %v2551, %v2621
    %v2630 = vadd.f32 %v2552, %v2622
    %v2631 = vld [vmem:[%s4 + $0x10] sm:$0xff]
    %v2632 = vld [vmem:[%s4 + $0x18] sm:$0xff]
    %2634 = vset.pattern.permute.xlu0 0
    %2635 = vperm.xlu0 %2634, %v2631
    %v2636 = vpop.permute.xlu0 %2635
    %2639 = vset.pattern.permute.xlu0 0
    %2640 = vperm.xlu0 %2639, %v2632
    %v2641 = vpop.permute.xlu0 %2640
    %v2643 = vadd.f32 %v2623, %v2636
    %v2644 = vadd.f32 %v2624, %v2636
    %v2645 = vadd.f32 %v2625, %v2636
    %v2646 = vadd.f32 %v2626, %v2636
    %v2647 = vadd.f32 %v2627, %v2641
    %v2648 = vadd.f32 %v2628, %v2641
    %v2649 = vadd.f32 %v2629, %v2641
    %v2650 = vadd.f32 %v2630, %v2641
    %v2651 = vld [vmem:[#allocation2 + $0x140] sm:$0xff]
    %v2652 = vld [vmem:[#allocation2 + $0x148] sm:$0xff]
    %v2653 = vld [vmem:[#allocation2 + $0x150] sm:$0xff]
    %v2654 = vld [vmem:[#allocation2 + $0x158] sm:$0xff]
    %v2655 = vld [vmem:[#allocation2 + $0x160] sm:$0xff]
    %v2656 = vld [vmem:[#allocation2 + $0x168] sm:$0xff]
    %v2657 = vld [vmem:[#allocation2 + $0x170] sm:$0xff]
    %v2658 = vld [vmem:[#allocation2 + $0x178] sm:$0xff]
    %v2659 = vld [vmem:[%s3 + $0x50] sm:$0xff]
    %v2660 = vld [vmem:[%s3 + $0x58] sm:$0xff]
    %2662 = vset.pattern.permute.xlu0 4
    %2663 = vperm.xlu0 %2662, %v2659
    %v2664 = vpop.permute.xlu0 %2663
    %2667 = vset.pattern.permute.xlu0 4
    %2668 = vperm.xlu0 %2667, %v2660
    %v2669 = vpop.permute.xlu0 %2668
    %v2671 = vmul.f32 %v2651, %v2664
    %v2672 = vmul.f32 %v2652, %v2664
    %v2673 = vmul.f32 %v2653, %v2664
    %v2674 = vmul.f32 %v2654, %v2664
    %v2675 = vmul.f32 %v2655, %v2669
    %v2676 = vmul.f32 %v2656, %v2669
    %v2677 = vmul.f32 %v2657, %v2669
    %v2678 = vmul.f32 %v2658, %v2669
    %2679 = vrot.lane.b32.xlu0 %v2651, 17
    %v2680 = vpop.permute.xlu0 %2679
    %2681 = vrot.lane.b32.xlu0 %v2655, 17
    %v2682 = vpop.permute.xlu0 %2681
    %2683 = vrot.lane.b32.xlu0 %v2652, 17
    %v2684 = vpop.permute.xlu0 %2683
    %2685 = vrot.lane.b32.xlu0 %v2656, 17
    %v2686 = vpop.permute.xlu0 %2685
    %2687 = vrot.lane.b32.xlu0 %v2653, 17
    %v2688 = vpop.permute.xlu0 %2687
    %2689 = vrot.lane.b32.xlu0 %v2657, 17
    %v2690 = vpop.permute.xlu0 %2689
    %2691 = vrot.lane.b32.xlu0 %v2654, 17
    %v2692 = vpop.permute.xlu0 %2691
    %2693 = vrot.lane.b32.xlu0 %v2658, 17
    %v2694 = vpop.permute.xlu0 %2693
    %v2695 = vsel %vm592, %v2688, %v2692
    %v2696 = vsel %vm592, %v2690, %v2694
    %v2697 = vsel %vm592, %v2684, %v2688
    %v2698 = vsel %vm592, %v2686, %v2690
    %v2699 = vsel %vm592, %v2680, %v2684
    %v2700 = vsel %vm592, %v2682, %v2686
    %v2701 = vsel %vm592, %v2692, %v2680
    %v2702 = vsel %vm592, %v2694, %v2682
    %v2703 = vmul.f32 %v2701, %v2036
    %v2704 = vmul.f32 %v2699, %v2040
    %v2705 = vmul.f32 %v2697, %v2044
    %v2706 = vmul.f32 %v2695, %v2048
    %v2707 = vmul.f32 %v2702, %v2036
    %v2708 = vmul.f32 %v2700, %v2040
    %v2709 = vmul.f32 %v2698, %v2044
    %v2710 = vmul.f32 %v2696, %v2048
    %2711 = vset.pattern.permute.xlu0 0
    %2712 = vperm.xlu0 %2711, %v2659
    %v2713 = vpop.permute.xlu0 %2712
    %2715 = vset.pattern.permute.xlu0 0
    %2716 = vperm.xlu0 %2715, %v2660
    %v2717 = vpop.permute.xlu0 %2716
    %v2719 = vmul.f32 %v2703, %v2713
    %v2720 = vmul.f32 %v2704, %v2713
    %v2721 = vmul.f32 %v2705, %v2713
    %v2722 = vmul.f32 %v2706, %v2713
    %v2723 = vmul.f32 %v2707, %v2717
    %v2724 = vmul.f32 %v2708, %v2717
    %v2725 = vmul.f32 %v2709, %v2717
    %v2726 = vmul.f32 %v2710, %v2717
    %v2727 = vadd.f32 %v2671, %v2719
    %v2728 = vadd.f32 %v2672, %v2720
    %v2729 = vadd.f32 %v2673, %v2721
    %v2730 = vadd.f32 %v2674, %v2722
    %v2731 = vadd.f32 %v2675, %v2723
    %v2732 = vadd.f32 %v2676, %v2724
    %v2733 = vadd.f32 %v2677, %v2725
    %v2734 = vadd.f32 %v2678, %v2726
    %2735 = vrot.lane.b32.xlu0 %v2651, 16
    %v2736 = vpop.permute.xlu0 %2735
    %2737 = vrot.lane.b32.xlu0 %v2655, 16
    %v2738 = vpop.permute.xlu0 %2737
    %2739 = vrot.lane.b32.xlu0 %v2652, 16
    %v2740 = vpop.permute.xlu0 %2739
    %2741 = vrot.lane.b32.xlu0 %v2656, 16
    %v2742 = vpop.permute.xlu0 %2741
    %2743 = vrot.lane.b32.xlu0 %v2653, 16
    %v2744 = vpop.permute.xlu0 %2743
    %2745 = vrot.lane.b32.xlu0 %v2657, 16
    %v2746 = vpop.permute.xlu0 %2745
    %2747 = vrot.lane.b32.xlu0 %v2654, 16
    %v2748 = vpop.permute.xlu0 %2747
    %2749 = vrot.lane.b32.xlu0 %v2658, 16
    %v2750 = vpop.permute.xlu0 %2749
    %v2751 = vsel %vm671, %v2744, %v2748
    %v2752 = vsel %vm671, %v2746, %v2750
    %v2753 = vsel %vm671, %v2740, %v2744
    %v2754 = vsel %vm671, %v2742, %v2746
    %v2755 = vsel %vm671, %v2736, %v2740
    %v2756 = vsel %vm671, %v2738, %v2742
    %v2757 = vsel %vm671, %v2748, %v2736
    %v2758 = vsel %vm671, %v2750, %v2738
    %v2759 = vmul.f32 %v2757, %v2114
    %v2760 = vmul.f32 %v2755, %v2118
    %v2761 = vmul.f32 %v2753, %v2122
    %v2762 = vmul.f32 %v2751, %v2126
    %v2763 = vmul.f32 %v2758, %v2114
    %v2764 = vmul.f32 %v2756, %v2118
    %v2765 = vmul.f32 %v2754, %v2122
    %v2766 = vmul.f32 %v2752, %v2126
    %2767 = vset.pattern.permute.xlu0 1
    %2768 = vperm.xlu0 %2767, %v2659
    %v2769 = vpop.permute.xlu0 %2768
    %2771 = vset.pattern.permute.xlu0 1
    %2772 = vperm.xlu0 %2771, %v2660
    %v2773 = vpop.permute.xlu0 %2772
    %v2775 = vmul.f32 %v2759, %v2769
    %v2776 = vmul.f32 %v2760, %v2769
    %v2777 = vmul.f32 %v2761, %v2769
    %v2778 = vmul.f32 %v2762, %v2769
    %v2779 = vmul.f32 %v2763, %v2773
    %v2780 = vmul.f32 %v2764, %v2773
    %v2781 = vmul.f32 %v2765, %v2773
    %v2782 = vmul.f32 %v2766, %v2773
    %v2783 = vadd.f32 %v2727, %v2775
    %v2784 = vadd.f32 %v2728, %v2776
    %v2785 = vadd.f32 %v2729, %v2777
    %v2786 = vadd.f32 %v2730, %v2778
    %v2787 = vadd.f32 %v2731, %v2779
    %v2788 = vadd.f32 %v2732, %v2780
    %v2789 = vadd.f32 %v2733, %v2781
    %v2790 = vadd.f32 %v2734, %v2782
    %2791 = vrot.lane.b32.xlu0 %v2651, 15
    %v2792 = vpop.permute.xlu0 %2791
    %2793 = vrot.lane.b32.xlu0 %v2655, 15
    %v2794 = vpop.permute.xlu0 %2793
    %2795 = vrot.lane.b32.xlu0 %v2652, 15
    %v2796 = vpop.permute.xlu0 %2795
    %2797 = vrot.lane.b32.xlu0 %v2656, 15
    %v2798 = vpop.permute.xlu0 %2797
    %2799 = vrot.lane.b32.xlu0 %v2653, 15
    %v2800 = vpop.permute.xlu0 %2799
    %2801 = vrot.lane.b32.xlu0 %v2657, 15
    %v2802 = vpop.permute.xlu0 %2801
    %2803 = vrot.lane.b32.xlu0 %v2654, 15
    %v2804 = vpop.permute.xlu0 %2803
    %2805 = vrot.lane.b32.xlu0 %v2658, 15
    %v2806 = vpop.permute.xlu0 %2805
    %v2807 = vsel %vm751, %v2800, %v2804
    %v2808 = vsel %vm751, %v2802, %v2806
    %v2809 = vsel %vm751, %v2796, %v2800
    %v2810 = vsel %vm751, %v2798, %v2802
    %v2811 = vsel %vm751, %v2792, %v2796
    %v2812 = vsel %vm751, %v2794, %v2798
    %v2813 = vsel %vm751, %v2804, %v2792
    %v2814 = vsel %vm751, %v2806, %v2794
    %v2815 = vmul.f32 %v2813, %v2192
    %v2816 = vmul.f32 %v2811, %v2196
    %v2817 = vmul.f32 %v2809, %v2200
    %v2818 = vmul.f32 %v2807, %v2204
    %v2819 = vmul.f32 %v2814, %v2192
    %v2820 = vmul.f32 %v2812, %v2196
    %v2821 = vmul.f32 %v2810, %v2200
    %v2822 = vmul.f32 %v2808, %v2204
    %2823 = vset.pattern.permute.xlu0 2
    %2824 = vperm.xlu0 %2823, %v2659
    %v2825 = vpop.permute.xlu0 %2824
    %2827 = vset.pattern.permute.xlu0 2
    %2828 = vperm.xlu0 %2827, %v2660
    %v2829 = vpop.permute.xlu0 %2828
    %v2831 = vmul.f32 %v2815, %v2825
    %v2832 = vmul.f32 %v2816, %v2825
    %v2833 = vmul.f32 %v2817, %v2825
    %v2834 = vmul.f32 %v2818, %v2825
    %v2835 = vmul.f32 %v2819, %v2829
    %v2836 = vmul.f32 %v2820, %v2829
    %v2837 = vmul.f32 %v2821, %v2829
    %v2838 = vmul.f32 %v2822, %v2829
    %v2839 = vadd.f32 %v2783, %v2831
    %v2840 = vadd.f32 %v2784, %v2832
    %v2841 = vadd.f32 %v2785, %v2833
    %v2842 = vadd.f32 %v2786, %v2834
    %v2843 = vadd.f32 %v2787, %v2835
    %v2844 = vadd.f32 %v2788, %v2836
    %v2845 = vadd.f32 %v2789, %v2837
    %v2846 = vadd.f32 %v2790, %v2838
    %2847 = vrot.lane.b32.xlu0 %v2651, 1
    %v2848 = vpop.permute.xlu0 %2847
    %2849 = vrot.lane.b32.xlu0 %v2655, 1
    %v2850 = vpop.permute.xlu0 %2849
    %2851 = vrot.lane.b32.xlu0 %v2652, 1
    %v2852 = vpop.permute.xlu0 %2851
    %2853 = vrot.lane.b32.xlu0 %v2656, 1
    %v2854 = vpop.permute.xlu0 %2853
    %2855 = vrot.lane.b32.xlu0 %v2653, 1
    %v2856 = vpop.permute.xlu0 %2855
    %2857 = vrot.lane.b32.xlu0 %v2657, 1
    %v2858 = vpop.permute.xlu0 %2857
    %2859 = vrot.lane.b32.xlu0 %v2654, 1
    %v2860 = vpop.permute.xlu0 %2859
    %2861 = vrot.lane.b32.xlu0 %v2658, 1
    %v2862 = vpop.permute.xlu0 %2861
    %v2863 = vsel %vm831, %v2856, %v2860
    %v2864 = vsel %vm831, %v2858, %v2862
    %v2865 = vsel %vm831, %v2852, %v2856
    %v2866 = vsel %vm831, %v2854, %v2858
    %v2867 = vsel %vm831, %v2848, %v2852
    %v2868 = vsel %vm831, %v2850, %v2854
    %v2869 = vsel %vm831, %v2860, %v2848
    %v2870 = vsel %vm831, %v2862, %v2850
    %v2871 = vmul.f32 %v2869, %v2270
    %v2872 = vmul.f32 %v2867, %v2274
    %v2873 = vmul.f32 %v2865, %v2278
    %v2874 = vmul.f32 %v2863, %v2282
    %v2875 = vmul.f32 %v2870, %v2270
    %v2876 = vmul.f32 %v2868, %v2274
    %v2877 = vmul.f32 %v2866, %v2278
    %v2878 = vmul.f32 %v2864, %v2282
    %2879 = vset.pattern.permute.xlu0 3
    %2880 = vperm.xlu0 %2879, %v2659
    %v2881 = vpop.permute.xlu0 %2880
    %2883 = vset.pattern.permute.xlu0 3
    %2884 = vperm.xlu0 %2883, %v2660
    %v2885 = vpop.permute.xlu0 %2884
    %v2887 = vmul.f32 %v2871, %v2881
    %v2888 = vmul.f32 %v2872, %v2881
    %v2889 = vmul.f32 %v2873, %v2881
    %v2890 = vmul.f32 %v2874, %v2881
    %v2891 = vmul.f32 %v2875, %v2885
    %v2892 = vmul.f32 %v2876, %v2885
    %v2893 = vmul.f32 %v2877, %v2885
    %v2894 = vmul.f32 %v2878, %v2885
    %v2895 = vadd.f32 %v2839, %v2887
    %v2896 = vadd.f32 %v2840, %v2888
    %v2897 = vadd.f32 %v2841, %v2889
    %v2898 = vadd.f32 %v2842, %v2890
    %v2899 = vadd.f32 %v2843, %v2891
    %v2900 = vadd.f32 %v2844, %v2892
    %v2901 = vadd.f32 %v2845, %v2893
    %v2902 = vadd.f32 %v2846, %v2894
    %2903 = vrot.lane.b32.xlu0 %v2651, 127
    %v2904 = vpop.permute.xlu0 %2903
    %2905 = vrot.lane.b32.xlu0 %v2655, 127
    %v2906 = vpop.permute.xlu0 %2905
    %2907 = vrot.lane.b32.xlu0 %v2652, 127
    %v2908 = vpop.permute.xlu0 %2907
    %2909 = vrot.lane.b32.xlu0 %v2656, 127
    %v2910 = vpop.permute.xlu0 %2909
    %2911 = vrot.lane.b32.xlu0 %v2653, 127
    %v2912 = vpop.permute.xlu0 %2911
    %2913 = vrot.lane.b32.xlu0 %v2657, 127
    %v2914 = vpop.permute.xlu0 %2913
    %2915 = vrot.lane.b32.xlu0 %v2654, 127
    %v2916 = vpop.permute.xlu0 %2915
    %2917 = vrot.lane.b32.xlu0 %v2658, 127
    %v2918 = vpop.permute.xlu0 %2917
    %v2919 = vsel %vm911, %v2912, %v2916
    %v2920 = vsel %vm911, %v2914, %v2918
    %v2921 = vsel %vm911, %v2908, %v2912
    %v2922 = vsel %vm911, %v2910, %v2914
    %v2923 = vsel %vm911, %v2904, %v2908
    %v2924 = vsel %vm911, %v2906, %v2910
    %v2925 = vsel %vm911, %v2916, %v2904
    %v2926 = vsel %vm911, %v2918, %v2906
    %v2927 = vmul.f32 %v2923, %v2348
    %v2928 = vmul.f32 %v2921, %v2352
    %v2929 = vmul.f32 %v2919, %v2356
    %v2930 = vmul.f32 %v2925, %v2360
    %v2931 = vmul.f32 %v2924, %v2348
    %v2932 = vmul.f32 %v2922, %v2352
    %v2933 = vmul.f32 %v2920, %v2356
    %v2934 = vmul.f32 %v2926, %v2360
    %2935 = vset.pattern.permute.xlu0 5
    %2936 = vperm.xlu0 %2935, %v2659
    %v2937 = vpop.permute.xlu0 %2936
    %2939 = vset.pattern.permute.xlu0 5
    %2940 = vperm.xlu0 %2939, %v2660
    %v2941 = vpop.permute.xlu0 %2940
    %v2943 = vmul.f32 %v2927, %v2937
    %v2944 = vmul.f32 %v2928, %v2937
    %v2945 = vmul.f32 %v2929, %v2937
    %v2946 = vmul.f32 %v2930, %v2937
    %v2947 = vmul.f32 %v2931, %v2941
    %v2948 = vmul.f32 %v2932, %v2941
    %v2949 = vmul.f32 %v2933, %v2941
    %v2950 = vmul.f32 %v2934, %v2941
    %v2951 = vadd.f32 %v2895, %v2943
    %v2952 = vadd.f32 %v2896, %v2944
    %v2953 = vadd.f32 %v2897, %v2945
    %v2954 = vadd.f32 %v2898, %v2946
    %v2955 = vadd.f32 %v2899, %v2947
    %v2956 = vadd.f32 %v2900, %v2948
    %v2957 = vadd.f32 %v2901, %v2949
    %v2958 = vadd.f32 %v2902, %v2950
    %2959 = vrot.lane.b32.xlu0 %v2651, 113
    %v2960 = vpop.permute.xlu0 %2959
    %2961 = vrot.lane.b32.xlu0 %v2655, 113
    %v2962 = vpop.permute.xlu0 %2961
    %2963 = vrot.lane.b32.xlu0 %v2652, 113
    %v2964 = vpop.permute.xlu0 %2963
    %2965 = vrot.lane.b32.xlu0 %v2656, 113
    %v2966 = vpop.permute.xlu0 %2965
    %2967 = vrot.lane.b32.xlu0 %v2653, 113
    %v2968 = vpop.permute.xlu0 %2967
    %2969 = vrot.lane.b32.xlu0 %v2657, 113
    %v2970 = vpop.permute.xlu0 %2969
    %2971 = vrot.lane.b32.xlu0 %v2654, 113
    %v2972 = vpop.permute.xlu0 %2971
    %2973 = vrot.lane.b32.xlu0 %v2658, 113
    %v2974 = vpop.permute.xlu0 %2973
    %v2975 = vsel %vm991, %v2968, %v2972
    %v2976 = vsel %vm991, %v2970, %v2974
    %v2977 = vsel %vm991, %v2964, %v2968
    %v2978 = vsel %vm991, %v2966, %v2970
    %v2979 = vsel %vm991, %v2960, %v2964
    %v2980 = vsel %vm991, %v2962, %v2966
    %v2981 = vsel %vm991, %v2972, %v2960
    %v2982 = vsel %vm991, %v2974, %v2962
    %v2983 = vmul.f32 %v2979, %v2426
    %v2984 = vmul.f32 %v2977, %v2430
    %v2985 = vmul.f32 %v2975, %v2434
    %v2986 = vmul.f32 %v2981, %v2438
    %v2987 = vmul.f32 %v2980, %v2426
    %v2988 = vmul.f32 %v2978, %v2430
    %v2989 = vmul.f32 %v2976, %v2434
    %v2990 = vmul.f32 %v2982, %v2438
    %2991 = vset.pattern.permute.xlu0 6
    %2992 = vperm.xlu0 %2991, %v2659
    %v2993 = vpop.permute.xlu0 %2992
    %2995 = vset.pattern.permute.xlu0 6
    %2996 = vperm.xlu0 %2995, %v2660
    %v2997 = vpop.permute.xlu0 %2996
    %v2999 = vmul.f32 %v2983, %v2993
    %v3000 = vmul.f32 %v2984, %v2993
    %v3001 = vmul.f32 %v2985, %v2993
    %v3002 = vmul.f32 %v2986, %v2993
    %v3003 = vmul.f32 %v2987, %v2997
    %v3004 = vmul.f32 %v2988, %v2997
    %v3005 = vmul.f32 %v2989, %v2997
    %v3006 = vmul.f32 %v2990, %v2997
    %v3007 = vadd.f32 %v2951, %v2999
    %v3008 = vadd.f32 %v2952, %v3000
    %v3009 = vadd.f32 %v2953, %v3001
    %v3010 = vadd.f32 %v2954, %v3002
    %v3011 = vadd.f32 %v2955, %v3003
    %v3012 = vadd.f32 %v2956, %v3004
    %v3013 = vadd.f32 %v2957, %v3005
    %v3014 = vadd.f32 %v2958, %v3006
    %3015 = vrot.lane.b32.xlu0 %v2651, 112
    %v3016 = vpop.permute.xlu0 %3015
    %3017 = vrot.lane.b32.xlu0 %v2655, 112
    %v3018 = vpop.permute.xlu0 %3017
    %3019 = vrot.lane.b32.xlu0 %v2652, 112
    %v3020 = vpop.permute.xlu0 %3019
    %3021 = vrot.lane.b32.xlu0 %v2656, 112
    %v3022 = vpop.permute.xlu0 %3021
    %3023 = vrot.lane.b32.xlu0 %v2653, 112
    %v3024 = vpop.permute.xlu0 %3023
    %3025 = vrot.lane.b32.xlu0 %v2657, 112
    %v3026 = vpop.permute.xlu0 %3025
    %3027 = vrot.lane.b32.xlu0 %v2654, 112
    %v3028 = vpop.permute.xlu0 %3027
    %3029 = vrot.lane.b32.xlu0 %v2658, 112
    %v3030 = vpop.permute.xlu0 %3029
    %v3031 = vsel %vm1071, %v3024, %v3028
    %v3032 = vsel %vm1071, %v3026, %v3030
    %v3033 = vsel %vm1071, %v3020, %v3024
    %v3034 = vsel %vm1071, %v3022, %v3026
    %v3035 = vsel %vm1071, %v3016, %v3020
    %v3036 = vsel %vm1071, %v3018, %v3022
    %v3037 = vsel %vm1071, %v3028, %v3016
    %v3038 = vsel %vm1071, %v3030, %v3018
    %v3039 = vmul.f32 %v3035, %v2504
    %v3040 = vmul.f32 %v3033, %v2508
    %v3041 = vmul.f32 %v3031, %v2512
    %v3042 = vmul.f32 %v3037, %v2516
    %v3043 = vmul.f32 %v3036, %v2504
    %v3044 = vmul.f32 %v3034, %v2508
    %v3045 = vmul.f32 %v3032, %v2512
    %v3046 = vmul.f32 %v3038, %v2516
    %3047 = vset.pattern.permute.xlu0 7
    %3048 = vperm.xlu0 %3047, %v2659
    %v3049 = vpop.permute.xlu0 %3048
    %3051 = vset.pattern.permute.xlu0 7
    %3052 = vperm.xlu0 %3051, %v2660
    %v3053 = vpop.permute.xlu0 %3052
    %v3055 = vmul.f32 %v3039, %v3049
    %v3056 = vmul.f32 %v3040, %v3049
    %v3057 = vmul.f32 %v3041, %v3049
    %v3058 = vmul.f32 %v3042, %v3049
    %v3059 = vmul.f32 %v3043, %v3053
    %v3060 = vmul.f32 %v3044, %v3053
    %v3061 = vmul.f32 %v3045, %v3053
    %v3062 = vmul.f32 %v3046, %v3053
    %v3063 = vadd.f32 %v3007, %v3055
    %v3064 = vadd.f32 %v3008, %v3056
    %v3065 = vadd.f32 %v3009, %v3057
    %v3066 = vadd.f32 %v3010, %v3058
    %v3067 = vadd.f32 %v3011, %v3059
    %v3068 = vadd.f32 %v3012, %v3060
    %v3069 = vadd.f32 %v3013, %v3061
    %v3070 = vadd.f32 %v3014, %v3062
    %3071 = vrot.lane.b32.xlu0 %v2651, 111
    %v3072 = vpop.permute.xlu0 %3071
    %3073 = vrot.lane.b32.xlu0 %v2655, 111
    %v3074 = vpop.permute.xlu0 %3073
    %3075 = vrot.lane.b32.xlu0 %v2652, 111
    %v3076 = vpop.permute.xlu0 %3075
    %3077 = vrot.lane.b32.xlu0 %v2656, 111
    %v3078 = vpop.permute.xlu0 %3077
    %3079 = vrot.lane.b32.xlu0 %v2653, 111
    %v3080 = vpop.permute.xlu0 %3079
    %3081 = vrot.lane.b32.xlu0 %v2657, 111
    %v3082 = vpop.permute.xlu0 %3081
    %3083 = vrot.lane.b32.xlu0 %v2654, 111
    %v3084 = vpop.permute.xlu0 %3083
    %3085 = vrot.lane.b32.xlu0 %v2658, 111
    %v3086 = vpop.permute.xlu0 %3085
    %v3087 = vsel %vm1151, %v3080, %v3084
    %v3088 = vsel %vm1151, %v3082, %v3086
    %v3089 = vsel %vm1151, %v3076, %v3080
    %v3090 = vsel %vm1151, %v3078, %v3082
    %v3091 = vsel %vm1151, %v3072, %v3076
    %v3092 = vsel %vm1151, %v3074, %v3078
    %v3093 = vsel %vm1151, %v3084, %v3072
    %v3094 = vsel %vm1151, %v3086, %v3074
    %v3095 = vmul.f32 %v3091, %v2582
    %v3096 = vmul.f32 %v3089, %v2586
    %v3097 = vmul.f32 %v3087, %v2590
    %v3098 = vmul.f32 %v3093, %v2594
    %v3099 = vmul.f32 %v3092, %v2582
    %v3100 = vmul.f32 %v3090, %v2586
    %v3101 = vmul.f32 %v3088, %v2590
    %v3102 = vmul.f32 %v3094, %v2594
    %3103 = vset.pattern.permute.xlu0 8
    %3104 = vperm.xlu0 %3103, %v2659
    %v3105 = vpop.permute.xlu0 %3104
    %3107 = vset.pattern.permute.xlu0 8
    %3108 = vperm.xlu0 %3107, %v2660
    %v3109 = vpop.permute.xlu0 %3108
    %v3111 = vmul.f32 %v3095, %v3105
    %v3112 = vmul.f32 %v3096, %v3105
    %v3113 = vmul.f32 %v3097, %v3105
    %v3114 = vmul.f32 %v3098, %v3105
    %v3115 = vmul.f32 %v3099, %v3109
    %v3116 = vmul.f32 %v3100, %v3109
    %v3117 = vmul.f32 %v3101, %v3109
    %v3118 = vmul.f32 %v3102, %v3109
    %v3119 = vadd.f32 %v3063, %v3111
    %v3120 = vadd.f32 %v3064, %v3112
    %v3121 = vadd.f32 %v3065, %v3113
    %v3122 = vadd.f32 %v3066, %v3114
    %v3123 = vadd.f32 %v3067, %v3115
    %v3124 = vadd.f32 %v3068, %v3116
    %v3125 = vadd.f32 %v3069, %v3117
    %v3126 = vadd.f32 %v3070, %v3118
    %v3127 = vld [vmem:[%s4 + $0x50] sm:$0xff]
    %v3128 = vld [vmem:[%s4 + $0x58] sm:$0xff]
    %3130 = vset.pattern.permute.xlu0 0
    %3131 = vperm.xlu0 %3130, %v3127
    %v3132 = vpop.permute.xlu0 %3131
    %3135 = vset.pattern.permute.xlu0 0
    %3136 = vperm.xlu0 %3135, %v3128
    %v3137 = vpop.permute.xlu0 %3136
    %v3139 = vadd.f32 %v3119, %v3132
    %v3140 = vadd.f32 %v3120, %v3132
    %v3141 = vadd.f32 %v3121, %v3132
    %v3142 = vadd.f32 %v3122, %v3132
    %v3143 = vadd.f32 %v3123, %v3137
    %v3144 = vadd.f32 %v3124, %v3137
    %v3145 = vadd.f32 %v3125, %v3137
    %v3146 = vadd.f32 %v3126, %v3137
    %v3147 = vmul.f32 %v2643, 0.5
    %v3148 = vmul.f32 %v2644, 0.5
    %v3149 = vmul.f32 %v2645, 0.5
    %v3150 = vmul.f32 %v2646, 0.5
    %v3151 = vmul.f32 %v2647, 0.5
    %v3152 = vmul.f32 %v2648, 0.5
    %v3153 = vmul.f32 %v2649, 0.5
    %v3154 = vmul.f32 %v2650, 0.5
    %v3155 = vmul.f32 %v2643, 0.70710677
    %v3156 = vmul.f32 %v2644, 0.70710677
    %v3157 = vmul.f32 %v2645, 0.70710677
    %v3158 = vmul.f32 %v2646, 0.70710677
    %v3159 = vmul.f32 %v2647, 0.70710677
    %v3160 = vmul.f32 %v2648, 0.70710677
    %v3161 = vmul.f32 %v2649, 0.70710677
    %v3162 = vmul.f32 %v2650, 0.70710677
    %v3163 = vand.u32 2147483647, %v3155
    %v3164 = vand.u32 2147483647, %v3156
    %v3165 = vand.u32 2147483647, %v3157
    %v3166 = vand.u32 2147483647, %v3158
    %v3167 = vand.u32 2147483647, %v3159
    %v3168 = vand.u32 2147483647, %v3160
    %v3169 = vand.u32 2147483647, %v3161
    %v3170 = vand.u32 2147483647, %v3162
    %v3171 = vmul.f32 %v3163, 0.3275911
    %v3172 = vmul.f32 %v3164, 0.3275911
    %v3173 = vmul.f32 %v3165, 0.3275911
    %v3174 = vmul.f32 %v3166, 0.3275911
    %v3175 = vmul.f32 %v3167, 0.3275911
    %v3176 = vmul.f32 %v3168, 0.3275911
    %v3177 = vmul.f32 %v3169, 0.3275911
    %v3178 = vmul.f32 %v3170, 0.3275911
    %v3179 = vadd.f32 %v3171, 1.0
    %v3180 = vadd.f32 %v3172, 1.0
    %v3181 = vadd.f32 %v3173, 1.0
    %v3182 = vadd.f32 %v3174, 1.0
    %v3183 = vadd.f32 %v3175, 1.0
    %v3184 = vadd.f32 %v3176, 1.0
    %v3185 = vadd.f32 %v3177, 1.0
    %v3186 = vadd.f32 %v3178, 1.0
    %v3187 = vrcp.pop %v3179
    %v3188 = vrcp.pop %v3180
    %v3189 = vrcp.pop %v3181
    %v3190 = vrcp.pop %v3182
    %v3191 = vrcp.pop %v3183
    %v3192 = vrcp.pop %v3184
    %v3193 = vrcp.pop %v3185
    %v3194 = vrcp.pop %v3186
    %v3195 = vmul.f32 %v3179, %v3187
    %v3196 = vmul.f32 %v3180, %v3188
    %v3197 = vmul.f32 %v3181, %v3189
    %v3198 = vmul.f32 %v3182, %v3190
    %v3199 = vmul.f32 %v3183, %v3191
    %v3200 = vmul.f32 %v3184, %v3192
    %v3201 = vmul.f32 %v3185, %v3193
    %v3202 = vmul.f32 %v3186, %v3194
    %v3203 = vsub.f32 2.0, %v3195
    %v3204 = vsub.f32 2.0, %v3196
    %v3205 = vsub.f32 2.0, %v3197
    %v3206 = vsub.f32 2.0, %v3198
    %v3207 = vsub.f32 2.0, %v3199
    %v3208 = vsub.f32 2.0, %v3200
    %v3209 = vsub.f32 2.0, %v3201
    %v3210 = vsub.f32 2.0, %v3202
    %v3211 = vmul.f32 %v3187, %v3203
    %v3212 = vmul.f32 %v3188, %v3204
    %v3213 = vmul.f32 %v3189, %v3205
    %v3214 = vmul.f32 %v3190, %v3206
    %v3215 = vmul.f32 %v3191, %v3207
    %v3216 = vmul.f32 %v3192, %v3208
    %v3217 = vmul.f32 %v3193, %v3209
    %v3218 = vmul.f32 %v3194, %v3210
    %v3219 = vmul.f32 %v3211, 1.0614054
    %v3220 = vmul.f32 %v3212, 1.0614054
    %v3221 = vmul.f32 %v3213, 1.0614054
    %v3222 = vmul.f32 %v3214, 1.0614054
    %v3223 = vmul.f32 %v3215, 1.0614054
    %v3224 = vmul.f32 %v3216, 1.0614054
    %v3225 = vmul.f32 %v3217, 1.0614054
    %v3226 = vmul.f32 %v3218, 1.0614054
    %v3227 = vadd.f32 %v3219, -1.4531521
    %v3228 = vadd.f32 %v3220, -1.4531521
    %v3229 = vadd.f32 %v3221, -1.4531521
    %v3230 = vadd.f32 %v3222, -1.4531521
    %v3231 = vadd.f32 %v3223, -1.4531521
    %v3232 = vadd.f32 %v3224, -1.4531521
    %v3233 = vadd.f32 %v3225, -1.4531521
    %v3234 = vadd.f32 %v3226, -1.4531521
    %v3235 = vmul.f32 %v3227, %v3211
    %v3236 = vmul.f32 %v3228, %v3212
    %v3237 = vmul.f32 %v3229, %v3213
    %v3238 = vmul.f32 %v3230, %v3214
    %v3239 = vmul.f32 %v3231, %v3215
    %v3240 = vmul.f32 %v3232, %v3216
    %v3241 = vmul.f32 %v3233, %v3217
    %v3242 = vmul.f32 %v3234, %v3218
    %v3243 = vadd.f32 %v3235, 1.4214138
    %v3244 = vadd.f32 %v3236, 1.4214138
    %v3245 = vadd.f32 %v3237, 1.4214138
    %v3246 = vadd.f32 %v3238, 1.4214138
    %v3247 = vadd.f32 %v3239, 1.4214138
    %v3248 = vadd.f32 %v3240, 1.4214138
    %v3249 = vadd.f32 %v3241, 1.4214138
    %v3250 = vadd.f32 %v3242, 1.4214138
    %v3251 = vmul.f32 %v3243, %v3211
    %v3252 = vmul.f32 %v3244, %v3212
    %v3253 = vmul.f32 %v3245, %v3213
    %v3254 = vmul.f32 %v3246, %v3214
    %v3255 = vmul.f32 %v3247, %v3215
    %v3256 = vmul.f32 %v3248, %v3216
    %v3257 = vmul.f32 %v3249, %v3217
    %v3258 = vmul.f32 %v3250, %v3218
    %v3259 = vadd.f32 %v3251, -0.28449672
    %v3260 = vadd.f32 %v3252, -0.28449672
    %v3261 = vadd.f32 %v3253, -0.28449672
    %v3262 = vadd.f32 %v3254, -0.28449672
    %v3263 = vadd.f32 %v3255, -0.28449672
    %v3264 = vadd.f32 %v3256, -0.28449672
    %v3265 = vadd.f32 %v3257, -0.28449672
    %v3266 = vadd.f32 %v3258, -0.28449672
    %v3267 = vmul.f32 %v3259, %v3211
    %v3268 = vmul.f32 %v3260, %v3212
    %v3269 = vmul.f32 %v3261, %v3213
    %v3270 = vmul.f32 %v3262, %v3214
    %v3271 = vmul.f32 %v3263, %v3215
    %v3272 = vmul.f32 %v3264, %v3216
    %v3273 = vmul.f32 %v3265, %v3217
    %v3274 = vmul.f32 %v3266, %v3218
    %v3275 = vadd.f32 %v3267, 0.2548296
    %v3276 = vadd.f32 %v3268, 0.2548296
    %v3277 = vadd.f32 %v3269, 0.2548296
    %v3278 = vadd.f32 %v3270, 0.2548296
    %v3279 = vadd.f32 %v3271, 0.2548296
    %v3280 = vadd.f32 %v3272, 0.2548296
    %v3281 = vadd.f32 %v3273, 0.2548296
    %v3282 = vadd.f32 %v3274, 0.2548296
    %v3283 = vmul.f32 %v3275, %v3211
    %v3284 = vmul.f32 %v3276, %v3212
    %v3285 = vmul.f32 %v3277, %v3213
    %v3286 = vmul.f32 %v3278, %v3214
    %v3287 = vmul.f32 %v3279, %v3215
    %v3288 = vmul.f32 %v3280, %v3216
    %v3289 = vmul.f32 %v3281, %v3217
    %v3290 = vmul.f32 %v3282, %v3218
    %v3291 = vsub.f32 0.0, %v3163
    %v3292 = vsub.f32 0.0, %v3164
    %v3293 = vsub.f32 0.0, %v3165
    %v3294 = vsub.f32 0.0, %v3166
    %v3295 = vsub.f32 0.0, %v3167
    %v3296 = vsub.f32 0.0, %v3168
    %v3297 = vsub.f32 0.0, %v3169
    %v3298 = vsub.f32 0.0, %v3170
    %v3299 = vmul.f32 %v3291, %v3163
    %v3300 = vmul.f32 %v3292, %v3164
    %v3301 = vmul.f32 %v3293, %v3165
    %v3302 = vmul.f32 %v3294, %v3166
    %v3303 = vmul.f32 %v3295, %v3167
    %v3304 = vmul.f32 %v3296, %v3168
    %v3305 = vmul.f32 %v3297, %v3169
    %v3306 = vmul.f32 %v3298, %v3170
    %v3307 = vmul.f32 %v3299, 1.442695
    %v3308 = vpow.pop %v3307
    %v3309 = vmul.f32 %v3300, 1.442695
    %v3310 = vpow.pop %v3309
    %v3311 = vmul.f32 %v3301, 1.442695
    %v3312 = vpow.pop %v3311
    %v3313 = vmul.f32 %v3302, 1.442695
    %v3314 = vpow.pop %v3313
    %v3315 = vmul.f32 %v3303, 1.442695
    %v3316 = vpow.pop %v3315
    %v3317 = vmul.f32 %v3304, 1.442695
    %v3318 = vpow.pop %v3317
    %v3319 = vmul.f32 %v3305, 1.442695
    %v3320 = vpow.pop %v3319
    %v3321 = vmul.f32 %v3306, 1.442695
    %v3322 = vpow.pop %v3321
    %v3323 = vmul.f32 %v3283, %v3308
    %v3324 = vmul.f32 %v3284, %v3310
    %v3325 = vmul.f32 %v3285, %v3312
    %v3326 = vmul.f32 %v3286, %v3314
    %v3327 = vmul.f32 %v3287, %v3316
    %v3328 = vmul.f32 %v3288, %v3318
    %v3329 = vmul.f32 %v3289, %v3320
    %v3330 = vmul.f32 %v3290, %v3322
    %v3331 = vsub.f32 1.0, %v3323
    %v3332 = vsub.f32 1.0, %v3324
    %v3333 = vsub.f32 1.0, %v3325
    %v3334 = vsub.f32 1.0, %v3326
    %v3335 = vsub.f32 1.0, %v3327
    %v3336 = vsub.f32 1.0, %v3328
    %v3337 = vsub.f32 1.0, %v3329
    %v3338 = vsub.f32 1.0, %v3330
    %vm3339 = vcmp.ge.f32.partialorder %v3155, 0.0
    %vm3340 = vcmp.ge.f32.partialorder %v3156, 0.0
    %vm3341 = vcmp.ge.f32.partialorder %v3157, 0.0
    %vm3342 = vcmp.ge.f32.partialorder %v3158, 0.0
    %vm3343 = vcmp.ge.f32.partialorder %v3159, 0.0
    %vm3344 = vcmp.ge.f32.partialorder %v3160, 0.0
    %vm3345 = vcmp.ge.f32.partialorder %v3161, 0.0
    %vm3346 = vcmp.ge.f32.partialorder %v3162, 0.0
    %v3347 = vsub.f32 0.0, %v3331
    %v3348 = vsub.f32 0.0, %v3332
    %v3349 = vsub.f32 0.0, %v3333
    %v3350 = vsub.f32 0.0, %v3334
    %v3351 = vsub.f32 0.0, %v3335
    %v3352 = vsub.f32 0.0, %v3336
    %v3353 = vsub.f32 0.0, %v3337
    %v3354 = vsub.f32 0.0, %v3338
    %v3355 = vsel %vm3339, %v3331, %v3347
    %v3356 = vsel %vm3340, %v3332, %v3348
    %v3357 = vsel %vm3341, %v3333, %v3349
    %v3358 = vsel %vm3342, %v3334, %v3350
    %v3359 = vsel %vm3343, %v3335, %v3351
    %v3360 = vsel %vm3344, %v3336, %v3352
    %v3361 = vsel %vm3345, %v3337, %v3353
    %v3362 = vsel %vm3346, %v3338, %v3354
    %v3363 = vadd.f32 %v3355, 1.0
    %v3364 = vadd.f32 %v3356, 1.0
    %v3365 = vadd.f32 %v3357, 1.0
    %v3366 = vadd.f32 %v3358, 1.0
    %v3367 = vadd.f32 %v3359, 1.0
    %v3368 = vadd.f32 %v3360, 1.0
    %v3369 = vadd.f32 %v3361, 1.0
    %v3370 = vadd.f32 %v3362, 1.0
    %v3371 = vmul.f32 %v3147, %v3363
    %v3372 = vmul.f32 %v3148, %v3364
    %v3373 = vmul.f32 %v3149, %v3365
    %v3374 = vmul.f32 %v3150, %v3366
    %v3375 = vmul.f32 %v3151, %v3367
    %v3376 = vmul.f32 %v3152, %v3368
    %v3377 = vmul.f32 %v3153, %v3369
    %v3378 = vmul.f32 %v3154, %v3370
    %v3379 = vmul.f32 %v3371, %v3139
    %v3380 = vmul.f32 %v3372, %v3140
    %v3381 = vmul.f32 %v3373, %v3141
    %v3382 = vmul.f32 %v3374, %v3142
    %v3383 = vmul.f32 %v3375, %v3143
    %v3384 = vmul.f32 %v3376, %v3144
    %v3385 = vmul.f32 %v3377, %v3145
    %v3386 = vmul.f32 %v3378, %v3146
    %v3387 = vpack.c.bf16 %v3383, %v3379
    %v3388 = vpack.c.bf16 %v3384, %v3380
    %v3389 = vpack.c.bf16 %v3385, %v3381
    %v3390 = vpack.c.bf16 %v3386, %v3382
    %3391 = vst [vmem:[#allocation3 + $0x20] sm:$0xff] %v3387
    %3392 = vst [vmem:[#allocation3 + $0x28] sm:$0xff] %v3388
    %3393 = vst [vmem:[#allocation3 + $0x30] sm:$0xff] %v3389
    %3394 = vst [vmem:[#allocation3 + $0x38] sm:$0xff] %v3390
    %v3395 = vld [vmem:[#allocation2 + $0x80] sm:$0xff]
    %v3396 = vld [vmem:[#allocation2 + $0x88] sm:$0xff]
    %v3397 = vld [vmem:[#allocation2 + $0x90] sm:$0xff]
    %v3398 = vld [vmem:[#allocation2 + $0x98] sm:$0xff]
    %v3399 = vld [vmem:[#allocation2 + $0xa0] sm:$0xff]
    %v3400 = vld [vmem:[#allocation2 + $0xa8] sm:$0xff]
    %v3401 = vld [vmem:[#allocation2 + $0xb0] sm:$0xff]
    %v3402 = vld [vmem:[#allocation2 + $0xb8] sm:$0xff]
    %v3403 = vld [vmem:[%s3 + $0x20] sm:$0xff]
    %v3404 = vld [vmem:[%s3 + $0x28] sm:$0xff]
    %3406 = vset.pattern.permute.xlu0 4
    %3407 = vperm.xlu0 %3406, %v3403
    %v3408 = vpop.permute.xlu0 %3407
    %3411 = vset.pattern.permute.xlu0 4
    %3412 = vperm.xlu0 %3411, %v3404
    %v3413 = vpop.permute.xlu0 %3412
    %v3415 = vmul.f32 %v3395, %v3408
    %v3416 = vmul.f32 %v3396, %v3408
    %v3417 = vmul.f32 %v3397, %v3408
    %v3418 = vmul.f32 %v3398, %v3408
    %v3419 = vmul.f32 %v3399, %v3413
    %v3420 = vmul.f32 %v3400, %v3413
    %v3421 = vmul.f32 %v3401, %v3413
    %v3422 = vmul.f32 %v3402, %v3413
    %3423 = vrot.lane.b32.xlu0 %v3395, 17
    %v3424 = vpop.permute.xlu0 %3423
    %3425 = vrot.lane.b32.xlu0 %v3399, 17
    %v3426 = vpop.permute.xlu0 %3425
    %3427 = vrot.lane.b32.xlu0 %v3396, 17
    %v3428 = vpop.permute.xlu0 %3427
    %3429 = vrot.lane.b32.xlu0 %v3400, 17
    %v3430 = vpop.permute.xlu0 %3429
    %3431 = vrot.lane.b32.xlu0 %v3397, 17
    %v3432 = vpop.permute.xlu0 %3431
    %3433 = vrot.lane.b32.xlu0 %v3401, 17
    %v3434 = vpop.permute.xlu0 %3433
    %3435 = vrot.lane.b32.xlu0 %v3398, 17
    %v3436 = vpop.permute.xlu0 %3435
    %3437 = vrot.lane.b32.xlu0 %v3402, 17
    %v3438 = vpop.permute.xlu0 %3437
    %v3439 = vsel %vm592, %v3432, %v3436
    %v3440 = vsel %vm592, %v3434, %v3438
    %v3441 = vsel %vm592, %v3428, %v3432
    %v3442 = vsel %vm592, %v3430, %v3434
    %v3443 = vsel %vm592, %v3424, %v3428
    %v3444 = vsel %vm592, %v3426, %v3430
    %v3445 = vsel %vm592, %v3436, %v3424
    %v3446 = vsel %vm592, %v3438, %v3426
    %v3447 = vld [vmem:[%s5] ss:$8 sm:$0xf]
    %v3449 = vlaneseq
    %v3450 = vshrl.u32 %v3449, 7
    %v3451 = vsub.s32 0, %v3450
    %v3452 = vrot.slane %v3447, %v3451
    %v3453 = vlaneseq
    %v3454 = vshrl.u32 %v3453, 7
    %v3455 = vsub.s32 1, %v3454
    %v3456 = vrot.slane %v3447, %v3455
    %v3457 = vlaneseq
    %v3458 = vshrl.u32 %v3457, 7
    %v3459 = vsub.s32 2, %v3458
    %v3460 = vrot.slane %v3447, %v3459
    %v3461 = vlaneseq
    %v3462 = vshrl.u32 %v3461, 7
    %v3463 = vsub.s32 3, %v3462
    %v3464 = vrot.slane %v3447, %v3463
    %v3469 = vmul.f32 %v3445, %v3452
    %v3470 = vmul.f32 %v3443, %v3456
    %v3471 = vmul.f32 %v3441, %v3460
    %v3472 = vmul.f32 %v3439, %v3464
    %v3473 = vmul.f32 %v3446, %v3452
    %v3474 = vmul.f32 %v3444, %v3456
    %v3475 = vmul.f32 %v3442, %v3460
    %v3476 = vmul.f32 %v3440, %v3464
    %3477 = vset.pattern.permute.xlu0 0
    %3478 = vperm.xlu0 %3477, %v3403
    %v3479 = vpop.permute.xlu0 %3478
    %3481 = vset.pattern.permute.xlu0 0
    %3482 = vperm.xlu0 %3481, %v3404
    %v3483 = vpop.permute.xlu0 %3482
    %v3485 = vmul.f32 %v3469, %v3479
    %v3486 = vmul.f32 %v3470, %v3479
    %v3487 = vmul.f32 %v3471, %v3479
    %v3488 = vmul.f32 %v3472, %v3479
    %v3489 = vmul.f32 %v3473, %v3483
    %v3490 = vmul.f32 %v3474, %v3483
    %v3491 = vmul.f32 %v3475, %v3483
    %v3492 = vmul.f32 %v3476, %v3483
    %v3493 = vadd.f32 %v3415, %v3485
    %v3494 = vadd.f32 %v3416, %v3486
    %v3495 = vadd.f32 %v3417, %v3487
    %v3496 = vadd.f32 %v3418, %v3488
    %v3497 = vadd.f32 %v3419, %v3489
    %v3498 = vadd.f32 %v3420, %v3490
    %v3499 = vadd.f32 %v3421, %v3491
    %v3500 = vadd.f32 %v3422, %v3492
    %3501 = vrot.lane.b32.xlu0 %v3395, 16
    %v3502 = vpop.permute.xlu0 %3501
    %3503 = vrot.lane.b32.xlu0 %v3399, 16
    %v3504 = vpop.permute.xlu0 %3503
    %3505 = vrot.lane.b32.xlu0 %v3396, 16
    %v3506 = vpop.permute.xlu0 %3505
    %3507 = vrot.lane.b32.xlu0 %v3400, 16
    %v3508 = vpop.permute.xlu0 %3507
    %3509 = vrot.lane.b32.xlu0 %v3397, 16
    %v3510 = vpop.permute.xlu0 %3509
    %3511 = vrot.lane.b32.xlu0 %v3401, 16
    %v3512 = vpop.permute.xlu0 %3511
    %3513 = vrot.lane.b32.xlu0 %v3398, 16
    %v3514 = vpop.permute.xlu0 %3513
    %3515 = vrot.lane.b32.xlu0 %v3402, 16
    %v3516 = vpop.permute.xlu0 %3515
    %v3517 = vsel %vm671, %v3510, %v3514
    %v3518 = vsel %vm671, %v3512, %v3516
    %v3519 = vsel %vm671, %v3506, %v3510
    %v3520 = vsel %vm671, %v3508, %v3512
    %v3521 = vsel %vm671, %v3502, %v3506
    %v3522 = vsel %vm671, %v3504, %v3508
    %v3523 = vsel %vm671, %v3514, %v3502
    %v3524 = vsel %vm671, %v3516, %v3504
    %v3525 = vld [vmem:[%s680] ss:$8 sm:$0xf]
    %v3527 = vlaneseq
    %v3528 = vshrl.u32 %v3527, 7
    %v3529 = vsub.s32 0, %v3528
    %v3530 = vrot.slane %v3525, %v3529
    %v3531 = vlaneseq
    %v3532 = vshrl.u32 %v3531, 7
    %v3533 = vsub.s32 1, %v3532
    %v3534 = vrot.slane %v3525, %v3533
    %v3535 = vlaneseq
    %v3536 = vshrl.u32 %v3535, 7
    %v3537 = vsub.s32 2, %v3536
    %v3538 = vrot.slane %v3525, %v3537
    %v3539 = vlaneseq
    %v3540 = vshrl.u32 %v3539, 7
    %v3541 = vsub.s32 3, %v3540
    %v3542 = vrot.slane %v3525, %v3541
    %v3547 = vmul.f32 %v3523, %v3530
    %v3548 = vmul.f32 %v3521, %v3534
    %v3549 = vmul.f32 %v3519, %v3538
    %v3550 = vmul.f32 %v3517, %v3542
    %v3551 = vmul.f32 %v3524, %v3530
    %v3552 = vmul.f32 %v3522, %v3534
    %v3553 = vmul.f32 %v3520, %v3538
    %v3554 = vmul.f32 %v3518, %v3542
    %3555 = vset.pattern.permute.xlu0 1
    %3556 = vperm.xlu0 %3555, %v3403
    %v3557 = vpop.permute.xlu0 %3556
    %3559 = vset.pattern.permute.xlu0 1
    %3560 = vperm.xlu0 %3559, %v3404
    %v3561 = vpop.permute.xlu0 %3560
    %v3563 = vmul.f32 %v3547, %v3557
    %v3564 = vmul.f32 %v3548, %v3557
    %v3565 = vmul.f32 %v3549, %v3557
    %v3566 = vmul.f32 %v3550, %v3557
    %v3567 = vmul.f32 %v3551, %v3561
    %v3568 = vmul.f32 %v3552, %v3561
    %v3569 = vmul.f32 %v3553, %v3561
    %v3570 = vmul.f32 %v3554, %v3561
    %v3571 = vadd.f32 %v3493, %v3563
    %v3572 = vadd.f32 %v3494, %v3564
    %v3573 = vadd.f32 %v3495, %v3565
    %v3574 = vadd.f32 %v3496, %v3566
    %v3575 = vadd.f32 %v3497, %v3567
    %v3576 = vadd.f32 %v3498, %v3568
    %v3577 = vadd.f32 %v3499, %v3569
    %v3578 = vadd.f32 %v3500, %v3570
    %3579 = vrot.lane.b32.xlu0 %v3395, 15
    %v3580 = vpop.permute.xlu0 %3579
    %3581 = vrot.lane.b32.xlu0 %v3399, 15
    %v3582 = vpop.permute.xlu0 %3581
    %3583 = vrot.lane.b32.xlu0 %v3396, 15
    %v3584 = vpop.permute.xlu0 %3583
    %3585 = vrot.lane.b32.xlu0 %v3400, 15
    %v3586 = vpop.permute.xlu0 %3585
    %3587 = vrot.lane.b32.xlu0 %v3397, 15
    %v3588 = vpop.permute.xlu0 %3587
    %3589 = vrot.lane.b32.xlu0 %v3401, 15
    %v3590 = vpop.permute.xlu0 %3589
    %3591 = vrot.lane.b32.xlu0 %v3398, 15
    %v3592 = vpop.permute.xlu0 %3591
    %3593 = vrot.lane.b32.xlu0 %v3402, 15
    %v3594 = vpop.permute.xlu0 %3593
    %v3595 = vsel %vm751, %v3588, %v3592
    %v3596 = vsel %vm751, %v3590, %v3594
    %v3597 = vsel %vm751, %v3584, %v3588
    %v3598 = vsel %vm751, %v3586, %v3590
    %v3599 = vsel %vm751, %v3580, %v3584
    %v3600 = vsel %vm751, %v3582, %v3586
    %v3601 = vsel %vm751, %v3592, %v3580
    %v3602 = vsel %vm751, %v3594, %v3582
    %v3603 = vld [vmem:[%s760] ss:$8 sm:$0xf]
    %v3605 = vlaneseq
    %v3606 = vshrl.u32 %v3605, 7
    %v3607 = vsub.s32 0, %v3606
    %v3608 = vrot.slane %v3603, %v3607
    %v3609 = vlaneseq
    %v3610 = vshrl.u32 %v3609, 7
    %v3611 = vsub.s32 1, %v3610
    %v3612 = vrot.slane %v3603, %v3611
    %v3613 = vlaneseq
    %v3614 = vshrl.u32 %v3613, 7
    %v3615 = vsub.s32 2, %v3614
    %v3616 = vrot.slane %v3603, %v3615
    %v3617 = vlaneseq
    %v3618 = vshrl.u32 %v3617, 7
    %v3619 = vsub.s32 3, %v3618
    %v3620 = vrot.slane %v3603, %v3619
    %v3625 = vmul.f32 %v3601, %v3608
    %v3626 = vmul.f32 %v3599, %v3612
    %v3627 = vmul.f32 %v3597, %v3616
    %v3628 = vmul.f32 %v3595, %v3620
    %v3629 = vmul.f32 %v3602, %v3608
    %v3630 = vmul.f32 %v3600, %v3612
    %v3631 = vmul.f32 %v3598, %v3616
    %v3632 = vmul.f32 %v3596, %v3620
    %3633 = vset.pattern.permute.xlu0 2
    %3634 = vperm.xlu0 %3633, %v3403
    %v3635 = vpop.permute.xlu0 %3634
    %3637 = vset.pattern.permute.xlu0 2
    %3638 = vperm.xlu0 %3637, %v3404
    %v3639 = vpop.permute.xlu0 %3638
    %v3641 = vmul.f32 %v3625, %v3635
    %v3642 = vmul.f32 %v3626, %v3635
    %v3643 = vmul.f32 %v3627, %v3635
    %v3644 = vmul.f32 %v3628, %v3635
    %v3645 = vmul.f32 %v3629, %v3639
    %v3646 = vmul.f32 %v3630, %v3639
    %v3647 = vmul.f32 %v3631, %v3639
    %v3648 = vmul.f32 %v3632, %v3639
    %v3649 = vadd.f32 %v3571, %v3641
    %v3650 = vadd.f32 %v3572, %v3642
    %v3651 = vadd.f32 %v3573, %v3643
    %v3652 = vadd.f32 %v3574, %v3644
    %v3653 = vadd.f32 %v3575, %v3645
    %v3654 = vadd.f32 %v3576, %v3646
    %v3655 = vadd.f32 %v3577, %v3647
    %v3656 = vadd.f32 %v3578, %v3648
    %3657 = vrot.lane.b32.xlu0 %v3395, 1
    %v3658 = vpop.permute.xlu0 %3657
    %3659 = vrot.lane.b32.xlu0 %v3399, 1
    %v3660 = vpop.permute.xlu0 %3659
    %3661 = vrot.lane.b32.xlu0 %v3396, 1
    %v3662 = vpop.permute.xlu0 %3661
    %3663 = vrot.lane.b32.xlu0 %v3400, 1
    %v3664 = vpop.permute.xlu0 %3663
    %3665 = vrot.lane.b32.xlu0 %v3397, 1
    %v3666 = vpop.permute.xlu0 %3665
    %3667 = vrot.lane.b32.xlu0 %v3401, 1
    %v3668 = vpop.permute.xlu0 %3667
    %3669 = vrot.lane.b32.xlu0 %v3398, 1
    %v3670 = vpop.permute.xlu0 %3669
    %3671 = vrot.lane.b32.xlu0 %v3402, 1
    %v3672 = vpop.permute.xlu0 %3671
    %v3673 = vsel %vm831, %v3666, %v3670
    %v3674 = vsel %vm831, %v3668, %v3672
    %v3675 = vsel %vm831, %v3662, %v3666
    %v3676 = vsel %vm831, %v3664, %v3668
    %v3677 = vsel %vm831, %v3658, %v3662
    %v3678 = vsel %vm831, %v3660, %v3664
    %v3679 = vsel %vm831, %v3670, %v3658
    %v3680 = vsel %vm831, %v3672, %v3660
    %v3681 = vld [vmem:[%s840] ss:$8 sm:$0xf]
    %v3683 = vlaneseq
    %v3684 = vshrl.u32 %v3683, 7
    %v3685 = vsub.s32 0, %v3684
    %v3686 = vrot.slane %v3681, %v3685
    %v3687 = vlaneseq
    %v3688 = vshrl.u32 %v3687, 7
    %v3689 = vsub.s32 1, %v3688
    %v3690 = vrot.slane %v3681, %v3689
    %v3691 = vlaneseq
    %v3692 = vshrl.u32 %v3691, 7
    %v3693 = vsub.s32 2, %v3692
    %v3694 = vrot.slane %v3681, %v3693
    %v3695 = vlaneseq
    %v3696 = vshrl.u32 %v3695, 7
    %v3697 = vsub.s32 3, %v3696
    %v3698 = vrot.slane %v3681, %v3697
    %v3703 = vmul.f32 %v3679, %v3686
    %v3704 = vmul.f32 %v3677, %v3690
    %v3705 = vmul.f32 %v3675, %v3694
    %v3706 = vmul.f32 %v3673, %v3698
    %v3707 = vmul.f32 %v3680, %v3686
    %v3708 = vmul.f32 %v3678, %v3690
    %v3709 = vmul.f32 %v3676, %v3694
    %v3710 = vmul.f32 %v3674, %v3698
    %3711 = vset.pattern.permute.xlu0 3
    %3712 = vperm.xlu0 %3711, %v3403
    %v3713 = vpop.permute.xlu0 %3712
    %3715 = vset.pattern.permute.xlu0 3
    %3716 = vperm.xlu0 %3715, %v3404
    %v3717 = vpop.permute.xlu0 %3716
    %v3719 = vmul.f32 %v3703, %v3713
    %v3720 = vmul.f32 %v3704, %v3713
    %v3721 = vmul.f32 %v3705, %v3713
    %v3722 = vmul.f32 %v3706, %v3713
    %v3723 = vmul.f32 %v3707, %v3717
    %v3724 = vmul.f32 %v3708, %v3717
    %v3725 = vmul.f32 %v3709, %v3717
    %v3726 = vmul.f32 %v3710, %v3717
    %v3727 = vadd.f32 %v3649, %v3719
    %v3728 = vadd.f32 %v3650, %v3720
    %v3729 = vadd.f32 %v3651, %v3721
    %v3730 = vadd.f32 %v3652, %v3722
    %v3731 = vadd.f32 %v3653, %v3723
    %v3732 = vadd.f32 %v3654, %v3724
    %v3733 = vadd.f32 %v3655, %v3725
    %v3734 = vadd.f32 %v3656, %v3726
    %3735 = vrot.lane.b32.xlu0 %v3395, 127
    %v3736 = vpop.permute.xlu0 %3735
    %3737 = vrot.lane.b32.xlu0 %v3399, 127
    %v3738 = vpop.permute.xlu0 %3737
    %3739 = vrot.lane.b32.xlu0 %v3396, 127
    %v3740 = vpop.permute.xlu0 %3739
    %3741 = vrot.lane.b32.xlu0 %v3400, 127
    %v3742 = vpop.permute.xlu0 %3741
    %3743 = vrot.lane.b32.xlu0 %v3397, 127
    %v3744 = vpop.permute.xlu0 %3743
    %3745 = vrot.lane.b32.xlu0 %v3401, 127
    %v3746 = vpop.permute.xlu0 %3745
    %3747 = vrot.lane.b32.xlu0 %v3398, 127
    %v3748 = vpop.permute.xlu0 %3747
    %3749 = vrot.lane.b32.xlu0 %v3402, 127
    %v3750 = vpop.permute.xlu0 %3749
    %v3751 = vsel %vm911, %v3744, %v3748
    %v3752 = vsel %vm911, %v3746, %v3750
    %v3753 = vsel %vm911, %v3740, %v3744
    %v3754 = vsel %vm911, %v3742, %v3746
    %v3755 = vsel %vm911, %v3736, %v3740
    %v3756 = vsel %vm911, %v3738, %v3742
    %v3757 = vsel %vm911, %v3748, %v3736
    %v3758 = vsel %vm911, %v3750, %v3738
    %v3759 = vld [vmem:[%s920] ss:$8 sm:$0xf]
    %v3761 = vlaneseq
    %v3762 = vshrl.u32 %v3761, 7
    %v3763 = vsub.s32 0, %v3762
    %v3764 = vrot.slane %v3759, %v3763
    %v3765 = vlaneseq
    %v3766 = vshrl.u32 %v3765, 7
    %v3767 = vsub.s32 1, %v3766
    %v3768 = vrot.slane %v3759, %v3767
    %v3769 = vlaneseq
    %v3770 = vshrl.u32 %v3769, 7
    %v3771 = vsub.s32 2, %v3770
    %v3772 = vrot.slane %v3759, %v3771
    %v3773 = vlaneseq
    %v3774 = vshrl.u32 %v3773, 7
    %v3775 = vsub.s32 3, %v3774
    %v3776 = vrot.slane %v3759, %v3775
    %v3781 = vmul.f32 %v3755, %v3764
    %v3782 = vmul.f32 %v3753, %v3768
    %v3783 = vmul.f32 %v3751, %v3772
    %v3784 = vmul.f32 %v3757, %v3776
    %v3785 = vmul.f32 %v3756, %v3764
    %v3786 = vmul.f32 %v3754, %v3768
    %v3787 = vmul.f32 %v3752, %v3772
    %v3788 = vmul.f32 %v3758, %v3776
    %3789 = vset.pattern.permute.xlu0 5
    %3790 = vperm.xlu0 %3789, %v3403
    %v3791 = vpop.permute.xlu0 %3790
    %3793 = vset.pattern.permute.xlu0 5
    %3794 = vperm.xlu0 %3793, %v3404
    %v3795 = vpop.permute.xlu0 %3794
    %v3797 = vmul.f32 %v3781, %v3791
    %v3798 = vmul.f32 %v3782, %v3791
    %v3799 = vmul.f32 %v3783, %v3791
    %v3800 = vmul.f32 %v3784, %v3791
    %v3801 = vmul.f32 %v3785, %v3795
    %v3802 = vmul.f32 %v3786, %v3795
    %v3803 = vmul.f32 %v3787, %v3795
    %v3804 = vmul.f32 %v3788, %v3795
    %v3805 = vadd.f32 %v3727, %v3797
    %v3806 = vadd.f32 %v3728, %v3798
    %v3807 = vadd.f32 %v3729, %v3799
    %v3808 = vadd.f32 %v3730, %v3800
    %v3809 = vadd.f32 %v3731, %v3801
    %v3810 = vadd.f32 %v3732, %v3802
    %v3811 = vadd.f32 %v3733, %v3803
    %v3812 = vadd.f32 %v3734, %v3804
    %3813 = vrot.lane.b32.xlu0 %v3395, 113
    %v3814 = vpop.permute.xlu0 %3813
    %3815 = vrot.lane.b32.xlu0 %v3399, 113
    %v3816 = vpop.permute.xlu0 %3815
    %3817 = vrot.lane.b32.xlu0 %v3396, 113
    %v3818 = vpop.permute.xlu0 %3817
    %3819 = vrot.lane.b32.xlu0 %v3400, 113
    %v3820 = vpop.permute.xlu0 %3819
    %3821 = vrot.lane.b32.xlu0 %v3397, 113
    %v3822 = vpop.permute.xlu0 %3821
    %3823 = vrot.lane.b32.xlu0 %v3401, 113
    %v3824 = vpop.permute.xlu0 %3823
    %3825 = vrot.lane.b32.xlu0 %v3398, 113
    %v3826 = vpop.permute.xlu0 %3825
    %3827 = vrot.lane.b32.xlu0 %v3402, 113
    %v3828 = vpop.permute.xlu0 %3827
    %v3829 = vsel %vm991, %v3822, %v3826
    %v3830 = vsel %vm991, %v3824, %v3828
    %v3831 = vsel %vm991, %v3818, %v3822
    %v3832 = vsel %vm991, %v3820, %v3824
    %v3833 = vsel %vm991, %v3814, %v3818
    %v3834 = vsel %vm991, %v3816, %v3820
    %v3835 = vsel %vm991, %v3826, %v3814
    %v3836 = vsel %vm991, %v3828, %v3816
    %v3837 = vld [vmem:[%s1000] ss:$8 sm:$0xf]
    %v3839 = vlaneseq
    %v3840 = vshrl.u32 %v3839, 7
    %v3841 = vsub.s32 0, %v3840
    %v3842 = vrot.slane %v3837, %v3841
    %v3843 = vlaneseq
    %v3844 = vshrl.u32 %v3843, 7
    %v3845 = vsub.s32 1, %v3844
    %v3846 = vrot.slane %v3837, %v3845
    %v3847 = vlaneseq
    %v3848 = vshrl.u32 %v3847, 7
    %v3849 = vsub.s32 2, %v3848
    %v3850 = vrot.slane %v3837, %v3849
    %v3851 = vlaneseq
    %v3852 = vshrl.u32 %v3851, 7
    %v3853 = vsub.s32 3, %v3852
    %v3854 = vrot.slane %v3837, %v3853
    %v3859 = vmul.f32 %v3833, %v3842
    %v3860 = vmul.f32 %v3831, %v3846
    %v3861 = vmul.f32 %v3829, %v3850
    %v3862 = vmul.f32 %v3835, %v3854
    %v3863 = vmul.f32 %v3834, %v3842
    %v3864 = vmul.f32 %v3832, %v3846
    %v3865 = vmul.f32 %v3830, %v3850
    %v3866 = vmul.f32 %v3836, %v3854
    %3867 = vset.pattern.permute.xlu0 6
    %3868 = vperm.xlu0 %3867, %v3403
    %v3869 = vpop.permute.xlu0 %3868
    %3871 = vset.pattern.permute.xlu0 6
    %3872 = vperm.xlu0 %3871, %v3404
    %v3873 = vpop.permute.xlu0 %3872
    %v3875 = vmul.f32 %v3859, %v3869
    %v3876 = vmul.f32 %v3860, %v3869
    %v3877 = vmul.f32 %v3861, %v3869
    %v3878 = vmul.f32 %v3862, %v3869
    %v3879 = vmul.f32 %v3863, %v3873
    %v3880 = vmul.f32 %v3864, %v3873
    %v3881 = vmul.f32 %v3865, %v3873
    %v3882 = vmul.f32 %v3866, %v3873
    %v3883 = vadd.f32 %v3805, %v3875
    %v3884 = vadd.f32 %v3806, %v3876
    %v3885 = vadd.f32 %v3807, %v3877
    %v3886 = vadd.f32 %v3808, %v3878
    %v3887 = vadd.f32 %v3809, %v3879
    %v3888 = vadd.f32 %v3810, %v3880
    %v3889 = vadd.f32 %v3811, %v3881
    %v3890 = vadd.f32 %v3812, %v3882
    %3891 = vrot.lane.b32.xlu0 %v3395, 112
    %v3892 = vpop.permute.xlu0 %3891
    %3893 = vrot.lane.b32.xlu0 %v3399, 112
    %v3894 = vpop.permute.xlu0 %3893
    %3895 = vrot.lane.b32.xlu0 %v3396, 112
    %v3896 = vpop.permute.xlu0 %3895
    %3897 = vrot.lane.b32.xlu0 %v3400, 112
    %v3898 = vpop.permute.xlu0 %3897
    %3899 = vrot.lane.b32.xlu0 %v3397, 112
    %v3900 = vpop.permute.xlu0 %3899
    %3901 = vrot.lane.b32.xlu0 %v3401, 112
    %v3902 = vpop.permute.xlu0 %3901
    %3903 = vrot.lane.b32.xlu0 %v3398, 112
    %v3904 = vpop.permute.xlu0 %3903
    %3905 = vrot.lane.b32.xlu0 %v3402, 112
    %v3906 = vpop.permute.xlu0 %3905
    %v3907 = vsel %vm1071, %v3900, %v3904
    %v3908 = vsel %vm1071, %v3902, %v3906
    %v3909 = vsel %vm1071, %v3896, %v3900
    %v3910 = vsel %vm1071, %v3898, %v3902
    %v3911 = vsel %vm1071, %v3892, %v3896
    %v3912 = vsel %vm1071, %v3894, %v3898
    %v3913 = vsel %vm1071, %v3904, %v3892
    %v3914 = vsel %vm1071, %v3906, %v3894
    %v3915 = vld [vmem:[%s1080] ss:$8 sm:$0xf]
    %v3917 = vlaneseq
    %v3918 = vshrl.u32 %v3917, 7
    %v3919 = vsub.s32 0, %v3918
    %v3920 = vrot.slane %v3915, %v3919
    %v3921 = vlaneseq
    %v3922 = vshrl.u32 %v3921, 7
    %v3923 = vsub.s32 1, %v3922
    %v3924 = vrot.slane %v3915, %v3923
    %v3925 = vlaneseq
    %v3926 = vshrl.u32 %v3925, 7
    %v3927 = vsub.s32 2, %v3926
    %v3928 = vrot.slane %v3915, %v3927
    %v3929 = vlaneseq
    %v3930 = vshrl.u32 %v3929, 7
    %v3931 = vsub.s32 3, %v3930
    %v3932 = vrot.slane %v3915, %v3931
    %v3937 = vmul.f32 %v3911, %v3920
    %v3938 = vmul.f32 %v3909, %v3924
    %v3939 = vmul.f32 %v3907, %v3928
    %v3940 = vmul.f32 %v3913, %v3932
    %v3941 = vmul.f32 %v3912, %v3920
    %v3942 = vmul.f32 %v3910, %v3924
    %v3943 = vmul.f32 %v3908, %v3928
    %v3944 = vmul.f32 %v3914, %v3932
    %3945 = vset.pattern.permute.xlu0 7
    %3946 = vperm.xlu0 %3945, %v3403
    %v3947 = vpop.permute.xlu0 %3946
    %3949 = vset.pattern.permute.xlu0 7
    %3950 = vperm.xlu0 %3949, %v3404
    %v3951 = vpop.permute.xlu0 %3950
    %v3953 = vmul.f32 %v3937, %v3947
    %v3954 = vmul.f32 %v3938, %v3947
    %v3955 = vmul.f32 %v3939, %v3947
    %v3956 = vmul.f32 %v3940, %v3947
    %v3957 = vmul.f32 %v3941, %v3951
    %v3958 = vmul.f32 %v3942, %v3951
    %v3959 = vmul.f32 %v3943, %v3951
    %v3960 = vmul.f32 %v3944, %v3951
    %v3961 = vadd.f32 %v3883, %v3953
    %v3962 = vadd.f32 %v3884, %v3954
    %v3963 = vadd.f32 %v3885, %v3955
    %v3964 = vadd.f32 %v3886, %v3956
    %v3965 = vadd.f32 %v3887, %v3957
    %v3966 = vadd.f32 %v3888, %v3958
    %v3967 = vadd.f32 %v3889, %v3959
    %v3968 = vadd.f32 %v3890, %v3960
    %3969 = vrot.lane.b32.xlu0 %v3395, 111
    %v3970 = vpop.permute.xlu0 %3969
    %3971 = vrot.lane.b32.xlu0 %v3399, 111
    %v3972 = vpop.permute.xlu0 %3971
    %3973 = vrot.lane.b32.xlu0 %v3396, 111
    %v3974 = vpop.permute.xlu0 %3973
    %3975 = vrot.lane.b32.xlu0 %v3400, 111
    %v3976 = vpop.permute.xlu0 %3975
    %3977 = vrot.lane.b32.xlu0 %v3397, 111
    %v3978 = vpop.permute.xlu0 %3977
    %3979 = vrot.lane.b32.xlu0 %v3401, 111
    %v3980 = vpop.permute.xlu0 %3979
    %3981 = vrot.lane.b32.xlu0 %v3398, 111
    %v3982 = vpop.permute.xlu0 %3981
    %3983 = vrot.lane.b32.xlu0 %v3402, 111
    %v3984 = vpop.permute.xlu0 %3983
    %v3985 = vsel %vm1151, %v3978, %v3982
    %v3986 = vsel %vm1151, %v3980, %v3984
    %v3987 = vsel %vm1151, %v3974, %v3978
    %v3988 = vsel %vm1151, %v3976, %v3980
    %v3989 = vsel %vm1151, %v3970, %v3974
    %v3990 = vsel %vm1151, %v3972, %v3976
    %v3991 = vsel %vm1151, %v3982, %v3970
    %v3992 = vsel %vm1151, %v3984, %v3972
    %v3993 = vld [vmem:[%s1160] ss:$8 sm:$0xf]
    %v3995 = vlaneseq
    %v3996 = vshrl.u32 %v3995, 7
    %v3997 = vsub.s32 0, %v3996
    %v3998 = vrot.slane %v3993, %v3997
    %v3999 = vlaneseq
    %v4000 = vshrl.u32 %v3999, 7
    %v4001 = vsub.s32 1, %v4000
    %v4002 = vrot.slane %v3993, %v4001
    %v4003 = vlaneseq
    %v4004 = vshrl.u32 %v4003, 7
    %v4005 = vsub.s32 2, %v4004
    %v4006 = vrot.slane %v3993, %v4005
    %v4007 = vlaneseq
    %v4008 = vshrl.u32 %v4007, 7
    %v4009 = vsub.s32 3, %v4008
    %v4010 = vrot.slane %v3993, %v4009
    %v4015 = vmul.f32 %v3989, %v3998
    %v4016 = vmul.f32 %v3987, %v4002
    %v4017 = vmul.f32 %v3985, %v4006
    %v4018 = vmul.f32 %v3991, %v4010
    %v4019 = vmul.f32 %v3990, %v3998
    %v4020 = vmul.f32 %v3988, %v4002
    %v4021 = vmul.f32 %v3986, %v4006
    %v4022 = vmul.f32 %v3992, %v4010
    %4023 = vset.pattern.permute.xlu0 8
    %4024 = vperm.xlu0 %4023, %v3403
    %v4025 = vpop.permute.xlu0 %4024
    %4027 = vset.pattern.permute.xlu0 8
    %4028 = vperm.xlu0 %4027, %v3404
    %v4029 = vpop.permute.xlu0 %4028
    %v4031 = vmul.f32 %v4015, %v4025
    %v4032 = vmul.f32 %v4016, %v4025
    %v4033 = vmul.f32 %v4017, %v4025
    %v4034 = vmul.f32 %v4018, %v4025
    %v4035 = vmul.f32 %v4019, %v4029
    %v4036 = vmul.f32 %v4020, %v4029
    %v4037 = vmul.f32 %v4021, %v4029
    %v4038 = vmul.f32 %v4022, %v4029
    %v4039 = vadd.f32 %v3961, %v4031
    %v4040 = vadd.f32 %v3962, %v4032
    %v4041 = vadd.f32 %v3963, %v4033
    %v4042 = vadd.f32 %v3964, %v4034
    %v4043 = vadd.f32 %v3965, %v4035
    %v4044 = vadd.f32 %v3966, %v4036
    %v4045 = vadd.f32 %v3967, %v4037
    %v4046 = vadd.f32 %v3968, %v4038
    %v4047 = vld [vmem:[%s4 + $0x20] sm:$0xff]
    %v4048 = vld [vmem:[%s4 + $0x28] sm:$0xff]
    %4050 = vset.pattern.permute.xlu0 0
    %4051 = vperm.xlu0 %4050, %v4047
    %v4052 = vpop.permute.xlu0 %4051
    %4055 = vset.pattern.permute.xlu0 0
    %4056 = vperm.xlu0 %4055, %v4048
    %v4057 = vpop.permute.xlu0 %4056
    %v4059 = vadd.f32 %v4039, %v4052
    %v4060 = vadd.f32 %v4040, %v4052
    %v4061 = vadd.f32 %v4041, %v4052
    %v4062 = vadd.f32 %v4042, %v4052
    %v4063 = vadd.f32 %v4043, %v4057
    %v4064 = vadd.f32 %v4044, %v4057
    %v4065 = vadd.f32 %v4045, %v4057
    %v4066 = vadd.f32 %v4046, %v4057
    %v4067 = vld [vmem:[#allocation2 + $0x180] sm:$0xff]
    %v4068 = vld [vmem:[#allocation2 + $0x188] sm:$0xff]
    %v4069 = vld [vmem:[#allocation2 + $0x190] sm:$0xff]
    %v4070 = vld [vmem:[#allocation2 + $0x198] sm:$0xff]
    %v4071 = vld [vmem:[#allocation2 + $0x1a0] sm:$0xff]
    %v4072 = vld [vmem:[#allocation2 + $0x1a8] sm:$0xff]
    %v4073 = vld [vmem:[#allocation2 + $0x1b0] sm:$0xff]
    %v4074 = vld [vmem:[#allocation2 + $0x1b8] sm:$0xff]
    %v4075 = vld [vmem:[%s3 + $0x60] sm:$0xff]
    %v4076 = vld [vmem:[%s3 + $0x68] sm:$0xff]
    %4078 = vset.pattern.permute.xlu0 4
    %4079 = vperm.xlu0 %4078, %v4075
    %v4080 = vpop.permute.xlu0 %4079
    %4083 = vset.pattern.permute.xlu0 4
    %4084 = vperm.xlu0 %4083, %v4076
    %v4085 = vpop.permute.xlu0 %4084
    %v4087 = vmul.f32 %v4067, %v4080
    %v4088 = vmul.f32 %v4068, %v4080
    %v4089 = vmul.f32 %v4069, %v4080
    %v4090 = vmul.f32 %v4070, %v4080
    %v4091 = vmul.f32 %v4071, %v4085
    %v4092 = vmul.f32 %v4072, %v4085
    %v4093 = vmul.f32 %v4073, %v4085
    %v4094 = vmul.f32 %v4074, %v4085
    %4095 = vrot.lane.b32.xlu0 %v4067, 17
    %v4096 = vpop.permute.xlu0 %4095
    %4097 = vrot.lane.b32.xlu0 %v4071, 17
    %v4098 = vpop.permute.xlu0 %4097
    %4099 = vrot.lane.b32.xlu0 %v4068, 17
    %v4100 = vpop.permute.xlu0 %4099
    %4101 = vrot.lane.b32.xlu0 %v4072, 17
    %v4102 = vpop.permute.xlu0 %4101
    %4103 = vrot.lane.b32.xlu0 %v4069, 17
    %v4104 = vpop.permute.xlu0 %4103
    %4105 = vrot.lane.b32.xlu0 %v4073, 17
    %v4106 = vpop.permute.xlu0 %4105
    %4107 = vrot.lane.b32.xlu0 %v4070, 17
    %v4108 = vpop.permute.xlu0 %4107
    %4109 = vrot.lane.b32.xlu0 %v4074, 17
    %v4110 = vpop.permute.xlu0 %4109
    %v4111 = vsel %vm592, %v4104, %v4108
    %v4112 = vsel %vm592, %v4106, %v4110
    %v4113 = vsel %vm592, %v4100, %v4104
    %v4114 = vsel %vm592, %v4102, %v4106
    %v4115 = vsel %vm592, %v4096, %v4100
    %v4116 = vsel %vm592, %v4098, %v4102
    %v4117 = vsel %vm592, %v4108, %v4096
    %v4118 = vsel %vm592, %v4110, %v4098
    %v4119 = vmul.f32 %v4117, %v3452
    %v4120 = vmul.f32 %v4115, %v3456
    %v4121 = vmul.f32 %v4113, %v3460
    %v4122 = vmul.f32 %v4111, %v3464
    %v4123 = vmul.f32 %v4118, %v3452
    %v4124 = vmul.f32 %v4116, %v3456
    %v4125 = vmul.f32 %v4114, %v3460
    %v4126 = vmul.f32 %v4112, %v3464
    %4127 = vset.pattern.permute.xlu0 0
    %4128 = vperm.xlu0 %4127, %v4075
    %v4129 = vpop.permute.xlu0 %4128
    %4131 = vset.pattern.permute.xlu0 0
    %4132 = vperm.xlu0 %4131, %v4076
    %v4133 = vpop.permute.xlu0 %4132
    %v4135 = vmul.f32 %v4119, %v4129
    %v4136 = vmul.f32 %v4120, %v4129
    %v4137 = vmul.f32 %v4121, %v4129
    %v4138 = vmul.f32 %v4122, %v4129
    %v4139 = vmul.f32 %v4123, %v4133
    %v4140 = vmul.f32 %v4124, %v4133
    %v4141 = vmul.f32 %v4125, %v4133
    %v4142 = vmul.f32 %v4126, %v4133
    %v4143 = vadd.f32 %v4087, %v4135
    %v4144 = vadd.f32 %v4088, %v4136
    %v4145 = vadd.f32 %v4089, %v4137
    %v4146 = vadd.f32 %v4090, %v4138
    %v4147 = vadd.f32 %v4091, %v4139
    %v4148 = vadd.f32 %v4092, %v4140
    %v4149 = vadd.f32 %v4093, %v4141
    %v4150 = vadd.f32 %v4094, %v4142
    %4151 = vrot.lane.b32.xlu0 %v4067, 16
    %v4152 = vpop.permute.xlu0 %4151
    %4153 = vrot.lane.b32.xlu0 %v4071, 16
    %v4154 = vpop.permute.xlu0 %4153
    %4155 = vrot.lane.b32.xlu0 %v4068, 16
    %v4156 = vpop.permute.xlu0 %4155
    %4157 = vrot.lane.b32.xlu0 %v4072, 16
    %v4158 = vpop.permute.xlu0 %4157
    %4159 = vrot.lane.b32.xlu0 %v4069, 16
    %v4160 = vpop.permute.xlu0 %4159
    %4161 = vrot.lane.b32.xlu0 %v4073, 16
    %v4162 = vpop.permute.xlu0 %4161
    %4163 = vrot.lane.b32.xlu0 %v4070, 16
    %v4164 = vpop.permute.xlu0 %4163
    %4165 = vrot.lane.b32.xlu0 %v4074, 16
    %v4166 = vpop.permute.xlu0 %4165
    %v4167 = vsel %vm671, %v4160, %v4164
    %v4168 = vsel %vm671, %v4162, %v4166
    %v4169 = vsel %vm671, %v4156, %v4160
    %v4170 = vsel %vm671, %v4158, %v4162
    %v4171 = vsel %vm671, %v4152, %v4156
    %v4172 = vsel %vm671, %v4154, %v4158
    %v4173 = vsel %vm671, %v4164, %v4152
    %v4174 = vsel %vm671, %v4166, %v4154
    %v4175 = vmul.f32 %v4173, %v3530
    %v4176 = vmul.f32 %v4171, %v3534
    %v4177 = vmul.f32 %v4169, %v3538
    %v4178 = vmul.f32 %v4167, %v3542
    %v4179 = vmul.f32 %v4174, %v3530
    %v4180 = vmul.f32 %v4172, %v3534
    %v4181 = vmul.f32 %v4170, %v3538
    %v4182 = vmul.f32 %v4168, %v3542
    %4183 = vset.pattern.permute.xlu0 1
    %4184 = vperm.xlu0 %4183, %v4075
    %v4185 = vpop.permute.xlu0 %4184
    %4187 = vset.pattern.permute.xlu0 1
    %4188 = vperm.xlu0 %4187, %v4076
    %v4189 = vpop.permute.xlu0 %4188
    %v4191 = vmul.f32 %v4175, %v4185
    %v4192 = vmul.f32 %v4176, %v4185
    %v4193 = vmul.f32 %v4177, %v4185
    %v4194 = vmul.f32 %v4178, %v4185
    %v4195 = vmul.f32 %v4179, %v4189
    %v4196 = vmul.f32 %v4180, %v4189
    %v4197 = vmul.f32 %v4181, %v4189
    %v4198 = vmul.f32 %v4182, %v4189
    %v4199 = vadd.f32 %v4143, %v4191
    %v4200 = vadd.f32 %v4144, %v4192
    %v4201 = vadd.f32 %v4145, %v4193
    %v4202 = vadd.f32 %v4146, %v4194
    %v4203 = vadd.f32 %v4147, %v4195
    %v4204 = vadd.f32 %v4148, %v4196
    %v4205 = vadd.f32 %v4149, %v4197
    %v4206 = vadd.f32 %v4150, %v4198
    %4207 = vrot.lane.b32.xlu0 %v4067, 15
    %v4208 = vpop.permute.xlu0 %4207
    %4209 = vrot.lane.b32.xlu0 %v4071, 15
    %v4210 = vpop.permute.xlu0 %4209
    %4211 = vrot.lane.b32.xlu0 %v4068, 15
    %v4212 = vpop.permute.xlu0 %4211
    %4213 = vrot.lane.b32.xlu0 %v4072, 15
    %v4214 = vpop.permute.xlu0 %4213
    %4215 = vrot.lane.b32.xlu0 %v4069, 15
    %v4216 = vpop.permute.xlu0 %4215
    %4217 = vrot.lane.b32.xlu0 %v4073, 15
    %v4218 = vpop.permute.xlu0 %4217
    %4219 = vrot.lane.b32.xlu0 %v4070, 15
    %v4220 = vpop.permute.xlu0 %4219
    %4221 = vrot.lane.b32.xlu0 %v4074, 15
    %v4222 = vpop.permute.xlu0 %4221
    %v4223 = vsel %vm751, %v4216, %v4220
    %v4224 = vsel %vm751, %v4218, %v4222
    %v4225 = vsel %vm751, %v4212, %v4216
    %v4226 = vsel %vm751, %v4214, %v4218
    %v4227 = vsel %vm751, %v4208, %v4212
    %v4228 = vsel %vm751, %v4210, %v4214
    %v4229 = vsel %vm751, %v4220, %v4208
    %v4230 = vsel %vm751, %v4222, %v4210
    %v4231 = vmul.f32 %v4229, %v3608
    %v4232 = vmul.f32 %v4227, %v3612
    %v4233 = vmul.f32 %v4225, %v3616
    %v4234 = vmul.f32 %v4223, %v3620
    %v4235 = vmul.f32 %v4230, %v3608
    %v4236 = vmul.f32 %v4228, %v3612
    %v4237 = vmul.f32 %v4226, %v3616
    %v4238 = vmul.f32 %v4224, %v3620
    %4239 = vset.pattern.permute.xlu0 2
    %4240 = vperm.xlu0 %4239, %v4075
    %v4241 = vpop.permute.xlu0 %4240
    %4243 = vset.pattern.permute.xlu0 2
    %4244 = vperm.xlu0 %4243, %v4076
    %v4245 = vpop.permute.xlu0 %4244
    %v4247 = vmul.f32 %v4231, %v4241
    %v4248 = vmul.f32 %v4232, %v4241
    %v4249 = vmul.f32 %v4233, %v4241
    %v4250 = vmul.f32 %v4234, %v4241
    %v4251 = vmul.f32 %v4235, %v4245
    %v4252 = vmul.f32 %v4236, %v4245
    %v4253 = vmul.f32 %v4237, %v4245
    %v4254 = vmul.f32 %v4238, %v4245
    %v4255 = vadd.f32 %v4199, %v4247
    %v4256 = vadd.f32 %v4200, %v4248
    %v4257 = vadd.f32 %v4201, %v4249
    %v4258 = vadd.f32 %v4202, %v4250
    %v4259 = vadd.f32 %v4203, %v4251
    %v4260 = vadd.f32 %v4204, %v4252
    %v4261 = vadd.f32 %v4205, %v4253
    %v4262 = vadd.f32 %v4206, %v4254
    %4263 = vrot.lane.b32.xlu0 %v4067, 1
    %v4264 = vpop.permute.xlu0 %4263
    %4265 = vrot.lane.b32.xlu0 %v4071, 1
    %v4266 = vpop.permute.xlu0 %4265
    %4267 = vrot.lane.b32.xlu0 %v4068, 1
    %v4268 = vpop.permute.xlu0 %4267
    %4269 = vrot.lane.b32.xlu0 %v4072, 1
    %v4270 = vpop.permute.xlu0 %4269
    %4271 = vrot.lane.b32.xlu0 %v4069, 1
    %v4272 = vpop.permute.xlu0 %4271
    %4273 = vrot.lane.b32.xlu0 %v4073, 1
    %v4274 = vpop.permute.xlu0 %4273
    %4275 = vrot.lane.b32.xlu0 %v4070, 1
    %v4276 = vpop.permute.xlu0 %4275
    %4277 = vrot.lane.b32.xlu0 %v4074, 1
    %v4278 = vpop.permute.xlu0 %4277
    %v4279 = vsel %vm831, %v4272, %v4276
    %v4280 = vsel %vm831, %v4274, %v4278
    %v4281 = vsel %vm831, %v4268, %v4272
    %v4282 = vsel %vm831, %v4270, %v4274
    %v4283 = vsel %vm831, %v4264, %v4268
    %v4284 = vsel %vm831, %v4266, %v4270
    %v4285 = vsel %vm831, %v4276, %v4264
    %v4286 = vsel %vm831, %v4278, %v4266
    %v4287 = vmul.f32 %v4285, %v3686
    %v4288 = vmul.f32 %v4283, %v3690
    %v4289 = vmul.f32 %v4281, %v3694
    %v4290 = vmul.f32 %v4279, %v3698
    %v4291 = vmul.f32 %v4286, %v3686
    %v4292 = vmul.f32 %v4284, %v3690
    %v4293 = vmul.f32 %v4282, %v3694
    %v4294 = vmul.f32 %v4280, %v3698
    %4295 = vset.pattern.permute.xlu0 3
    %4296 = vperm.xlu0 %4295, %v4075
    %v4297 = vpop.permute.xlu0 %4296
    %4299 = vset.pattern.permute.xlu0 3
    %4300 = vperm.xlu0 %4299, %v4076
    %v4301 = vpop.permute.xlu0 %4300
    %v4303 = vmul.f32 %v4287, %v4297
    %v4304 = vmul.f32 %v4288, %v4297
    %v4305 = vmul.f32 %v4289, %v4297
    %v4306 = vmul.f32 %v4290, %v4297
    %v4307 = vmul.f32 %v4291, %v4301
    %v4308 = vmul.f32 %v4292, %v4301
    %v4309 = vmul.f32 %v4293, %v4301
    %v4310 = vmul.f32 %v4294, %v4301
    %v4311 = vadd.f32 %v4255, %v4303
    %v4312 = vadd.f32 %v4256, %v4304
    %v4313 = vadd.f32 %v4257, %v4305
    %v4314 = vadd.f32 %v4258, %v4306
    %v4315 = vadd.f32 %v4259, %v4307
    %v4316 = vadd.f32 %v4260, %v4308
    %v4317 = vadd.f32 %v4261, %v4309
    %v4318 = vadd.f32 %v4262, %v4310
    %4319 = vrot.lane.b32.xlu0 %v4067, 127
    %v4320 = vpop.permute.xlu0 %4319
    %4321 = vrot.lane.b32.xlu0 %v4071, 127
    %v4322 = vpop.permute.xlu0 %4321
    %4323 = vrot.lane.b32.xlu0 %v4068, 127
    %v4324 = vpop.permute.xlu0 %4323
    %4325 = vrot.lane.b32.xlu0 %v4072, 127
    %v4326 = vpop.permute.xlu0 %4325
    %4327 = vrot.lane.b32.xlu0 %v4069, 127
    %v4328 = vpop.permute.xlu0 %4327
    %4329 = vrot.lane.b32.xlu0 %v4073, 127
    %v4330 = vpop.permute.xlu0 %4329
    %4331 = vrot.lane.b32.xlu0 %v4070, 127
    %v4332 = vpop.permute.xlu0 %4331
    %4333 = vrot.lane.b32.xlu0 %v4074, 127
    %v4334 = vpop.permute.xlu0 %4333
    %v4335 = vsel %vm911, %v4328, %v4332
    %v4336 = vsel %vm911, %v4330, %v4334
    %v4337 = vsel %vm911, %v4324, %v4328
    %v4338 = vsel %vm911, %v4326, %v4330
    %v4339 = vsel %vm911, %v4320, %v4324
    %v4340 = vsel %vm911, %v4322, %v4326
    %v4341 = vsel %vm911, %v4332, %v4320
    %v4342 = vsel %vm911, %v4334, %v4322
    %v4343 = vmul.f32 %v4339, %v3764
    %v4344 = vmul.f32 %v4337, %v3768
    %v4345 = vmul.f32 %v4335, %v3772
    %v4346 = vmul.f32 %v4341, %v3776
    %v4347 = vmul.f32 %v4340, %v3764
    %v4348 = vmul.f32 %v4338, %v3768
    %v4349 = vmul.f32 %v4336, %v3772
    %v4350 = vmul.f32 %v4342, %v3776
    %4351 = vset.pattern.permute.xlu0 5
    %4352 = vperm.xlu0 %4351, %v4075
    %v4353 = vpop.permute.xlu0 %4352
    %4355 = vset.pattern.permute.xlu0 5
    %4356 = vperm.xlu0 %4355, %v4076
    %v4357 = vpop.permute.xlu0 %4356
    %v4359 = vmul.f32 %v4343, %v4353
    %v4360 = vmul.f32 %v4344, %v4353
    %v4361 = vmul.f32 %v4345, %v4353
    %v4362 = vmul.f32 %v4346, %v4353
    %v4363 = vmul.f32 %v4347, %v4357
    %v4364 = vmul.f32 %v4348, %v4357
    %v4365 = vmul.f32 %v4349, %v4357
    %v4366 = vmul.f32 %v4350, %v4357
    %v4367 = vadd.f32 %v4311, %v4359
    %v4368 = vadd.f32 %v4312, %v4360
    %v4369 = vadd.f32 %v4313, %v4361
    %v4370 = vadd.f32 %v4314, %v4362
    %v4371 = vadd.f32 %v4315, %v4363
    %v4372 = vadd.f32 %v4316, %v4364
    %v4373 = vadd.f32 %v4317, %v4365
    %v4374 = vadd.f32 %v4318, %v4366
    %4375 = vrot.lane.b32.xlu0 %v4067, 113
    %v4376 = vpop.permute.xlu0 %4375
    %4377 = vrot.lane.b32.xlu0 %v4071, 113
    %v4378 = vpop.permute.xlu0 %4377
    %4379 = vrot.lane.b32.xlu0 %v4068, 113
    %v4380 = vpop.permute.xlu0 %4379
    %4381 = vrot.lane.b32.xlu0 %v4072, 113
    %v4382 = vpop.permute.xlu0 %4381
    %4383 = vrot.lane.b32.xlu0 %v4069, 113
    %v4384 = vpop.permute.xlu0 %4383
    %4385 = vrot.lane.b32.xlu0 %v4073, 113
    %v4386 = vpop.permute.xlu0 %4385
    %4387 = vrot.lane.b32.xlu0 %v4070, 113
    %v4388 = vpop.permute.xlu0 %4387
    %4389 = vrot.lane.b32.xlu0 %v4074, 113
    %v4390 = vpop.permute.xlu0 %4389
    %v4391 = vsel %vm991, %v4384, %v4388
    %v4392 = vsel %vm991, %v4386, %v4390
    %v4393 = vsel %vm991, %v4380, %v4384
    %v4394 = vsel %vm991, %v4382, %v4386
    %v4395 = vsel %vm991, %v4376, %v4380
    %v4396 = vsel %vm991, %v4378, %v4382
    %v4397 = vsel %vm991, %v4388, %v4376
    %v4398 = vsel %vm991, %v4390, %v4378
    %v4399 = vmul.f32 %v4395, %v3842
    %v4400 = vmul.f32 %v4393, %v3846
    %v4401 = vmul.f32 %v4391, %v3850
    %v4402 = vmul.f32 %v4397, %v3854
    %v4403 = vmul.f32 %v4396, %v3842
    %v4404 = vmul.f32 %v4394, %v3846
    %v4405 = vmul.f32 %v4392, %v3850
    %v4406 = vmul.f32 %v4398, %v3854
    %4407 = vset.pattern.permute.xlu0 6
    %4408 = vperm.xlu0 %4407, %v4075
    %v4409 = vpop.permute.xlu0 %4408
    %4411 = vset.pattern.permute.xlu0 6
    %4412 = vperm.xlu0 %4411, %v4076
    %v4413 = vpop.permute.xlu0 %4412
    %v4415 = vmul.f32 %v4399, %v4409
    %v4416 = vmul.f32 %v4400, %v4409
    %v4417 = vmul.f32 %v4401, %v4409
    %v4418 = vmul.f32 %v4402, %v4409
    %v4419 = vmul.f32 %v4403, %v4413
    %v4420 = vmul.f32 %v4404, %v4413
    %v4421 = vmul.f32 %v4405, %v4413
    %v4422 = vmul.f32 %v4406, %v4413
    %v4423 = vadd.f32 %v4367, %v4415
    %v4424 = vadd.f32 %v4368, %v4416
    %v4425 = vadd.f32 %v4369, %v4417
    %v4426 = vadd.f32 %v4370, %v4418
    %v4427 = vadd.f32 %v4371, %v4419
    %v4428 = vadd.f32 %v4372, %v4420
    %v4429 = vadd.f32 %v4373, %v4421
    %v4430 = vadd.f32 %v4374, %v4422
    %4431 = vrot.lane.b32.xlu0 %v4067, 112
    %v4432 = vpop.permute.xlu0 %4431
    %4433 = vrot.lane.b32.xlu0 %v4071, 112
    %v4434 = vpop.permute.xlu0 %4433
    %4435 = vrot.lane.b32.xlu0 %v4068, 112
    %v4436 = vpop.permute.xlu0 %4435
    %4437 = vrot.lane.b32.xlu0 %v4072, 112
    %v4438 = vpop.permute.xlu0 %4437
    %4439 = vrot.lane.b32.xlu0 %v4069, 112
    %v4440 = vpop.permute.xlu0 %4439
    %4441 = vrot.lane.b32.xlu0 %v4073, 112
    %v4442 = vpop.permute.xlu0 %4441
    %4443 = vrot.lane.b32.xlu0 %v4070, 112
    %v4444 = vpop.permute.xlu0 %4443
    %4445 = vrot.lane.b32.xlu0 %v4074, 112
    %v4446 = vpop.permute.xlu0 %4445
    %v4447 = vsel %vm1071, %v4440, %v4444
    %v4448 = vsel %vm1071, %v4442, %v4446
    %v4449 = vsel %vm1071, %v4436, %v4440
    %v4450 = vsel %vm1071, %v4438, %v4442
    %v4451 = vsel %vm1071, %v4432, %v4436
    %v4452 = vsel %vm1071, %v4434, %v4438
    %v4453 = vsel %vm1071, %v4444, %v4432
    %v4454 = vsel %vm1071, %v4446, %v4434
    %v4455 = vmul.f32 %v4451, %v3920
    %v4456 = vmul.f32 %v4449, %v3924
    %v4457 = vmul.f32 %v4447, %v3928
    %v4458 = vmul.f32 %v4453, %v3932
    %v4459 = vmul.f32 %v4452, %v3920
    %v4460 = vmul.f32 %v4450, %v3924
    %v4461 = vmul.f32 %v4448, %v3928
    %v4462 = vmul.f32 %v4454, %v3932
    %4463 = vset.pattern.permute.xlu0 7
    %4464 = vperm.xlu0 %4463, %v4075
    %v4465 = vpop.permute.xlu0 %4464
    %4467 = vset.pattern.permute.xlu0 7
    %4468 = vperm.xlu0 %4467, %v4076
    %v4469 = vpop.permute.xlu0 %4468
    %v4471 = vmul.f32 %v4455, %v4465
    %v4472 = vmul.f32 %v4456, %v4465
    %v4473 = vmul.f32 %v4457, %v4465
    %v4474 = vmul.f32 %v4458, %v4465
    %v4475 = vmul.f32 %v4459, %v4469
    %v4476 = vmul.f32 %v4460, %v4469
    %v4477 = vmul.f32 %v4461, %v4469
    %v4478 = vmul.f32 %v4462, %v4469
    %v4479 = vadd.f32 %v4423, %v4471
    %v4480 = vadd.f32 %v4424, %v4472
    %v4481 = vadd.f32 %v4425, %v4473
    %v4482 = vadd.f32 %v4426, %v4474
    %v4483 = vadd.f32 %v4427, %v4475
    %v4484 = vadd.f32 %v4428, %v4476
    %v4485 = vadd.f32 %v4429, %v4477
    %v4486 = vadd.f32 %v4430, %v4478
    %4487 = vrot.lane.b32.xlu0 %v4067, 111
    %v4488 = vpop.permute.xlu0 %4487
    %4489 = vrot.lane.b32.xlu0 %v4071, 111
    %v4490 = vpop.permute.xlu0 %4489
    %4491 = vrot.lane.b32.xlu0 %v4068, 111
    %v4492 = vpop.permute.xlu0 %4491
    %4493 = vrot.lane.b32.xlu0 %v4072, 111
    %v4494 = vpop.permute.xlu0 %4493
    %4495 = vrot.lane.b32.xlu0 %v4069, 111
    %v4496 = vpop.permute.xlu0 %4495
    %4497 = vrot.lane.b32.xlu0 %v4073, 111
    %v4498 = vpop.permute.xlu0 %4497
    %4499 = vrot.lane.b32.xlu0 %v4070, 111
    %v4500 = vpop.permute.xlu0 %4499
    %4501 = vrot.lane.b32.xlu0 %v4074, 111
    %v4502 = vpop.permute.xlu0 %4501
    %v4503 = vsel %vm1151, %v4496, %v4500
    %v4504 = vsel %vm1151, %v4498, %v4502
    %v4505 = vsel %vm1151, %v4492, %v4496
    %v4506 = vsel %vm1151, %v4494, %v4498
    %v4507 = vsel %vm1151, %v4488, %v4492
    %v4508 = vsel %vm1151, %v4490, %v4494
    %v4509 = vsel %vm1151, %v4500, %v4488
    %v4510 = vsel %vm1151, %v4502, %v4490
    %v4511 = vmul.f32 %v4507, %v3998
    %v4512 = vmul.f32 %v4505, %v4002
    %v4513 = vmul.f32 %v4503, %v4006
    %v4514 = vmul.f32 %v4509, %v4010
    %v4515 = vmul.f32 %v4508, %v3998
    %v4516 = vmul.f32 %v4506, %v4002
    %v4517 = vmul.f32 %v4504, %v4006
    %v4518 = vmul.f32 %v4510, %v4010
    %4519 = vset.pattern.permute.xlu0 8
    %4520 = vperm.xlu0 %4519, %v4075
    %v4521 = vpop.permute.xlu0 %4520
    %4523 = vset.pattern.permute.xlu0 8
    %4524 = vperm.xlu0 %4523, %v4076
    %v4525 = vpop.permute.xlu0 %4524
    %v4527 = vmul.f32 %v4511, %v4521
    %v4528 = vmul.f32 %v4512, %v4521
    %v4529 = vmul.f32 %v4513, %v4521
    %v4530 = vmul.f32 %v4514, %v4521
    %v4531 = vmul.f32 %v4515, %v4525
    %v4532 = vmul.f32 %v4516, %v4525
    %v4533 = vmul.f32 %v4517, %v4525
    %v4534 = vmul.f32 %v4518, %v4525
    %v4535 = vadd.f32 %v4479, %v4527
    %v4536 = vadd.f32 %v4480, %v4528
    %v4537 = vadd.f32 %v4481, %v4529
    %v4538 = vadd.f32 %v4482, %v4530
    %v4539 = vadd.f32 %v4483, %v4531
    %v4540 = vadd.f32 %v4484, %v4532
    %v4541 = vadd.f32 %v4485, %v4533
    %v4542 = vadd.f32 %v4486, %v4534
    %v4543 = vld [vmem:[%s4 + $0x60] sm:$0xff]
    %v4544 = vld [vmem:[%s4 + $0x68] sm:$0xff]
    %4546 = vset.pattern.permute.xlu0 0
    %4547 = vperm.xlu0 %4546, %v4543
    %v4548 = vpop.permute.xlu0 %4547
    %4551 = vset.pattern.permute.xlu0 0
    %4552 = vperm.xlu0 %4551, %v4544
    %v4553 = vpop.permute.xlu0 %4552
    %v4555 = vadd.f32 %v4535, %v4548
    %v4556 = vadd.f32 %v4536, %v4548
    %v4557 = vadd.f32 %v4537, %v4548
    %v4558 = vadd.f32 %v4538, %v4548
    %v4559 = vadd.f32 %v4539, %v4553
    %v4560 = vadd.f32 %v4540, %v4553
    %v4561 = vadd.f32 %v4541, %v4553
    %v4562 = vadd.f32 %v4542, %v4553
    %v4563 = vmul.f32 %v4059, 0.5
    %v4564 = vmul.f32 %v4060, 0.5
    %v4565 = vmul.f32 %v4061, 0.5
    %v4566 = vmul.f32 %v4062, 0.5
    %v4567 = vmul.f32 %v4063, 0.5
    %v4568 = vmul.f32 %v4064, 0.5
    %v4569 = vmul.f32 %v4065, 0.5
    %v4570 = vmul.f32 %v4066, 0.5
    %v4571 = vmul.f32 %v4059, 0.70710677
    %v4572 = vmul.f32 %v4060, 0.70710677
    %v4573 = vmul.f32 %v4061, 0.70710677
    %v4574 = vmul.f32 %v4062, 0.70710677
    %v4575 = vmul.f32 %v4063, 0.70710677
    %v4576 = vmul.f32 %v4064, 0.70710677
    %v4577 = vmul.f32 %v4065, 0.70710677
    %v4578 = vmul.f32 %v4066, 0.70710677
    %v4579 = vand.u32 2147483647, %v4571
    %v4580 = vand.u32 2147483647, %v4572
    %v4581 = vand.u32 2147483647, %v4573
    %v4582 = vand.u32 2147483647, %v4574
    %v4583 = vand.u32 2147483647, %v4575
    %v4584 = vand.u32 2147483647, %v4576
    %v4585 = vand.u32 2147483647, %v4577
    %v4586 = vand.u32 2147483647, %v4578
    %v4587 = vmul.f32 %v4579, 0.3275911
    %v4588 = vmul.f32 %v4580, 0.3275911
    %v4589 = vmul.f32 %v4581, 0.3275911
    %v4590 = vmul.f32 %v4582, 0.3275911
    %v4591 = vmul.f32 %v4583, 0.3275911
    %v4592 = vmul.f32 %v4584, 0.3275911
    %v4593 = vmul.f32 %v4585, 0.3275911
    %v4594 = vmul.f32 %v4586, 0.3275911
    %v4595 = vadd.f32 %v4587, 1.0
    %v4596 = vadd.f32 %v4588, 1.0
    %v4597 = vadd.f32 %v4589, 1.0
    %v4598 = vadd.f32 %v4590, 1.0
    %v4599 = vadd.f32 %v4591, 1.0
    %v4600 = vadd.f32 %v4592, 1.0
    %v4601 = vadd.f32 %v4593, 1.0
    %v4602 = vadd.f32 %v4594, 1.0
    %v4603 = vrcp.pop %v4595
    %v4604 = vrcp.pop %v4596
    %v4605 = vrcp.pop %v4597
    %v4606 = vrcp.pop %v4598
    %v4607 = vrcp.pop %v4599
    %v4608 = vrcp.pop %v4600
    %v4609 = vrcp.pop %v4601
    %v4610 = vrcp.pop %v4602
    %v4611 = vmul.f32 %v4595, %v4603
    %v4612 = vmul.f32 %v4596, %v4604
    %v4613 = vmul.f32 %v4597, %v4605
    %v4614 = vmul.f32 %v4598, %v4606
    %v4615 = vmul.f32 %v4599, %v4607
    %v4616 = vmul.f32 %v4600, %v4608
    %v4617 = vmul.f32 %v4601, %v4609
    %v4618 = vmul.f32 %v4602, %v4610
    %v4619 = vsub.f32 2.0, %v4611
    %v4620 = vsub.f32 2.0, %v4612
    %v4621 = vsub.f32 2.0, %v4613
    %v4622 = vsub.f32 2.0, %v4614
    %v4623 = vsub.f32 2.0, %v4615
    %v4624 = vsub.f32 2.0, %v4616
    %v4625 = vsub.f32 2.0, %v4617
    %v4626 = vsub.f32 2.0, %v4618
    %v4627 = vmul.f32 %v4603, %v4619
    %v4628 = vmul.f32 %v4604, %v4620
    %v4629 = vmul.f32 %v4605, %v4621
    %v4630 = vmul.f32 %v4606, %v4622
    %v4631 = vmul.f32 %v4607, %v4623
    %v4632 = vmul.f32 %v4608, %v4624
    %v4633 = vmul.f32 %v4609, %v4625
    %v4634 = vmul.f32 %v4610, %v4626
    %v4635 = vmul.f32 %v4627, 1.0614054
    %v4636 = vmul.f32 %v4628, 1.0614054
    %v4637 = vmul.f32 %v4629, 1.0614054
    %v4638 = vmul.f32 %v4630, 1.0614054
    %v4639 = vmul.f32 %v4631, 1.0614054
    %v4640 = vmul.f32 %v4632, 1.0614054
    %v4641 = vmul.f32 %v4633, 1.0614054
    %v4642 = vmul.f32 %v4634, 1.0614054
    %v4643 = vadd.f32 %v4635, -1.4531521
    %v4644 = vadd.f32 %v4636, -1.4531521
    %v4645 = vadd.f32 %v4637, -1.4531521
    %v4646 = vadd.f32 %v4638, -1.4531521
    %v4647 = vadd.f32 %v4639, -1.4531521
    %v4648 = vadd.f32 %v4640, -1.4531521
    %v4649 = vadd.f32 %v4641, -1.4531521
    %v4650 = vadd.f32 %v4642, -1.4531521
    %v4651 = vmul.f32 %v4643, %v4627
    %v4652 = vmul.f32 %v4644, %v4628
    %v4653 = vmul.f32 %v4645, %v4629
    %v4654 = vmul.f32 %v4646, %v4630
    %v4655 = vmul.f32 %v4647, %v4631
    %v4656 = vmul.f32 %v4648, %v4632
    %v4657 = vmul.f32 %v4649, %v4633
    %v4658 = vmul.f32 %v4650, %v4634
    %v4659 = vadd.f32 %v4651, 1.4214138
    %v4660 = vadd.f32 %v4652, 1.4214138
    %v4661 = vadd.f32 %v4653, 1.4214138
    %v4662 = vadd.f32 %v4654, 1.4214138
    %v4663 = vadd.f32 %v4655, 1.4214138
    %v4664 = vadd.f32 %v4656, 1.4214138
    %v4665 = vadd.f32 %v4657, 1.4214138
    %v4666 = vadd.f32 %v4658, 1.4214138
    %v4667 = vmul.f32 %v4659, %v4627
    %v4668 = vmul.f32 %v4660, %v4628
    %v4669 = vmul.f32 %v4661, %v4629
    %v4670 = vmul.f32 %v4662, %v4630
    %v4671 = vmul.f32 %v4663, %v4631
    %v4672 = vmul.f32 %v4664, %v4632
    %v4673 = vmul.f32 %v4665, %v4633
    %v4674 = vmul.f32 %v4666, %v4634
    %v4675 = vadd.f32 %v4667, -0.28449672
    %v4676 = vadd.f32 %v4668, -0.28449672
    %v4677 = vadd.f32 %v4669, -0.28449672
    %v4678 = vadd.f32 %v4670, -0.28449672
    %v4679 = vadd.f32 %v4671, -0.28449672
    %v4680 = vadd.f32 %v4672, -0.28449672
    %v4681 = vadd.f32 %v4673, -0.28449672
    %v4682 = vadd.f32 %v4674, -0.28449672
    %v4683 = vmul.f32 %v4675, %v4627
    %v4684 = vmul.f32 %v4676, %v4628
    %v4685 = vmul.f32 %v4677, %v4629
    %v4686 = vmul.f32 %v4678, %v4630
    %v4687 = vmul.f32 %v4679, %v4631
    %v4688 = vmul.f32 %v4680, %v4632
    %v4689 = vmul.f32 %v4681, %v4633
    %v4690 = vmul.f32 %v4682, %v4634
    %v4691 = vadd.f32 %v4683, 0.2548296
    %v4692 = vadd.f32 %v4684, 0.2548296
    %v4693 = vadd.f32 %v4685, 0.2548296
    %v4694 = vadd.f32 %v4686, 0.2548296
    %v4695 = vadd.f32 %v4687, 0.2548296
    %v4696 = vadd.f32 %v4688, 0.2548296
    %v4697 = vadd.f32 %v4689, 0.2548296
    %v4698 = vadd.f32 %v4690, 0.2548296
    %v4699 = vmul.f32 %v4691, %v4627
    %v4700 = vmul.f32 %v4692, %v4628
    %v4701 = vmul.f32 %v4693, %v4629
    %v4702 = vmul.f32 %v4694, %v4630
    %v4703 = vmul.f32 %v4695, %v4631
    %v4704 = vmul.f32 %v4696, %v4632
    %v4705 = vmul.f32 %v4697, %v4633
    %v4706 = vmul.f32 %v4698, %v4634
    %v4707 = vsub.f32 0.0, %v4579
    %v4708 = vsub.f32 0.0, %v4580
    %v4709 = vsub.f32 0.0, %v4581
    %v4710 = vsub.f32 0.0, %v4582
    %v4711 = vsub.f32 0.0, %v4583
    %v4712 = vsub.f32 0.0, %v4584
    %v4713 = vsub.f32 0.0, %v4585
    %v4714 = vsub.f32 0.0, %v4586
    %v4715 = vmul.f32 %v4707, %v4579
    %v4716 = vmul.f32 %v4708, %v4580
    %v4717 = vmul.f32 %v4709, %v4581
    %v4718 = vmul.f32 %v4710, %v4582
    %v4719 = vmul.f32 %v4711, %v4583
    %v4720 = vmul.f32 %v4712, %v4584
    %v4721 = vmul.f32 %v4713, %v4585
    %v4722 = vmul.f32 %v4714, %v4586
    %v4723 = vmul.f32 %v4715, 1.442695
    %v4724 = vpow.pop %v4723
    %v4725 = vmul.f32 %v4716, 1.442695
    %v4726 = vpow.pop %v4725
    %v4727 = vmul.f32 %v4717, 1.442695
    %v4728 = vpow.pop %v4727
    %v4729 = vmul.f32 %v4718, 1.442695
    %v4730 = vpow.pop %v4729
    %v4731 = vmul.f32 %v4719, 1.442695
    %v4732 = vpow.pop %v4731
    %v4733 = vmul.f32 %v4720, 1.442695
    %v4734 = vpow.pop %v4733
    %v4735 = vmul.f32 %v4721, 1.442695
    %v4736 = vpow.pop %v4735
    %v4737 = vmul.f32 %v4722, 1.442695
    %v4738 = vpow.pop %v4737
    %v4739 = vmul.f32 %v4699, %v4724
    %v4740 = vmul.f32 %v4700, %v4726
    %v4741 = vmul.f32 %v4701, %v4728
    %v4742 = vmul.f32 %v4702, %v4730
    %v4743 = vmul.f32 %v4703, %v4732
    %v4744 = vmul.f32 %v4704, %v4734
    %v4745 = vmul.f32 %v4705, %v4736
    %v4746 = vmul.f32 %v4706, %v4738
    %v4747 = vsub.f32 1.0, %v4739
    %v4748 = vsub.f32 1.0, %v4740
    %v4749 = vsub.f32 1.0, %v4741
    %v4750 = vsub.f32 1.0, %v4742
    %v4751 = vsub.f32 1.0, %v4743
    %v4752 = vsub.f32 1.0, %v4744
    %v4753 = vsub.f32 1.0, %v4745
    %v4754 = vsub.f32 1.0, %v4746
    %vm4755 = vcmp.ge.f32.partialorder %v4571, 0.0
    %vm4756 = vcmp.ge.f32.partialorder %v4572, 0.0
    %vm4757 = vcmp.ge.f32.partialorder %v4573, 0.0
    %vm4758 = vcmp.ge.f32.partialorder %v4574, 0.0
    %vm4759 = vcmp.ge.f32.partialorder %v4575, 0.0
    %vm4760 = vcmp.ge.f32.partialorder %v4576, 0.0
    %vm4761 = vcmp.ge.f32.partialorder %v4577, 0.0
    %vm4762 = vcmp.ge.f32.partialorder %v4578, 0.0
    %v4763 = vsub.f32 0.0, %v4747
    %v4764 = vsub.f32 0.0, %v4748
    %v4765 = vsub.f32 0.0, %v4749
    %v4766 = vsub.f32 0.0, %v4750
    %v4767 = vsub.f32 0.0, %v4751
    %v4768 = vsub.f32 0.0, %v4752
    %v4769 = vsub.f32 0.0, %v4753
    %v4770 = vsub.f32 0.0, %v4754
    %v4771 = vsel %vm4755, %v4747, %v4763
    %v4772 = vsel %vm4756, %v4748, %v4764
    %v4773 = vsel %vm4757, %v4749, %v4765
    %v4774 = vsel %vm4758, %v4750, %v4766
    %v4775 = vsel %vm4759, %v4751, %v4767
    %v4776 = vsel %vm4760, %v4752, %v4768
    %v4777 = vsel %vm4761, %v4753, %v4769
    %v4778 = vsel %vm4762, %v4754, %v4770
    %v4779 = vadd.f32 %v4771, 1.0
    %v4780 = vadd.f32 %v4772, 1.0
    %v4781 = vadd.f32 %v4773, 1.0
    %v4782 = vadd.f32 %v4774, 1.0
    %v4783 = vadd.f32 %v4775, 1.0
    %v4784 = vadd.f32 %v4776, 1.0
    %v4785 = vadd.f32 %v4777, 1.0
    %v4786 = vadd.f32 %v4778, 1.0
    %v4787 = vmul.f32 %v4563, %v4779
    %v4788 = vmul.f32 %v4564, %v4780
    %v4789 = vmul.f32 %v4565, %v4781
    %v4790 = vmul.f32 %v4566, %v4782
    %v4791 = vmul.f32 %v4567, %v4783
    %v4792 = vmul.f32 %v4568, %v4784
    %v4793 = vmul.f32 %v4569, %v4785
    %v4794 = vmul.f32 %v4570, %v4786
    %v4795 = vmul.f32 %v4787, %v4555
    %v4796 = vmul.f32 %v4788, %v4556
    %v4797 = vmul.f32 %v4789, %v4557
    %v4798 = vmul.f32 %v4790, %v4558
    %v4799 = vmul.f32 %v4791, %v4559
    %v4800 = vmul.f32 %v4792, %v4560
    %v4801 = vmul.f32 %v4793, %v4561
    %v4802 = vmul.f32 %v4794, %v4562
    %v4803 = vpack.c.bf16 %v4799, %v4795
    %v4804 = vpack.c.bf16 %v4800, %v4796
    %v4805 = vpack.c.bf16 %v4801, %v4797
    %v4806 = vpack.c.bf16 %v4802, %v4798
    %4807 = vst [vmem:[#allocation3 + $0x40] sm:$0xff] %v4803
    %4808 = vst [vmem:[#allocation3 + $0x48] sm:$0xff] %v4804
    %4809 = vst [vmem:[#allocation3 + $0x50] sm:$0xff] %v4805
    %4810 = vst [vmem:[#allocation3 + $0x58] sm:$0xff] %v4806
    %v4811 = vld [vmem:[#allocation2 + $0xc0] sm:$0xff]
    %v4812 = vld [vmem:[#allocation2 + $0xc8] sm:$0xff]
    %v4813 = vld [vmem:[#allocation2 + $0xd0] sm:$0xff]
    %v4814 = vld [vmem:[#allocation2 + $0xd8] sm:$0xff]
    %v4815 = vld [vmem:[#allocation2 + $0xe0] sm:$0xff]
    %v4816 = vld [vmem:[#allocation2 + $0xe8] sm:$0xff]
    %v4817 = vld [vmem:[#allocation2 + $0xf0] sm:$0xff]
    %v4818 = vld [vmem:[#allocation2 + $0xf8] sm:$0xff]
    %v4819 = vld [vmem:[%s3 + $0x30] sm:$0xff]
    %v4820 = vld [vmem:[%s3 + $0x38] sm:$0xff]
    %4822 = vset.pattern.permute.xlu0 4
    %4823 = vperm.xlu0 %4822, %v4819
    %v4824 = vpop.permute.xlu0 %4823
    %4827 = vset.pattern.permute.xlu0 4
    %4828 = vperm.xlu0 %4827, %v4820
    %v4829 = vpop.permute.xlu0 %4828
    %v4831 = vmul.f32 %v4811, %v4824
    %v4832 = vmul.f32 %v4812, %v4824
    %v4833 = vmul.f32 %v4813, %v4824
    %v4834 = vmul.f32 %v4814, %v4824
    %v4835 = vmul.f32 %v4815, %v4829
    %v4836 = vmul.f32 %v4816, %v4829
    %v4837 = vmul.f32 %v4817, %v4829
    %v4838 = vmul.f32 %v4818, %v4829
    %4839 = vrot.lane.b32.xlu0 %v4811, 17
    %v4840 = vpop.permute.xlu0 %4839
    %4841 = vrot.lane.b32.xlu0 %v4815, 17
    %v4842 = vpop.permute.xlu0 %4841
    %4843 = vrot.lane.b32.xlu0 %v4812, 17
    %v4844 = vpop.permute.xlu0 %4843
    %4845 = vrot.lane.b32.xlu0 %v4816, 17
    %v4846 = vpop.permute.xlu0 %4845
    %4847 = vrot.lane.b32.xlu0 %v4813, 17
    %v4848 = vpop.permute.xlu0 %4847
    %4849 = vrot.lane.b32.xlu0 %v4817, 17
    %v4850 = vpop.permute.xlu0 %4849
    %4851 = vrot.lane.b32.xlu0 %v4814, 17
    %v4852 = vpop.permute.xlu0 %4851
    %4853 = vrot.lane.b32.xlu0 %v4818, 17
    %v4854 = vpop.permute.xlu0 %4853
    %v4855 = vsel %vm592, %v4848, %v4852
    %v4856 = vsel %vm592, %v4850, %v4854
    %v4857 = vsel %vm592, %v4844, %v4848
    %v4858 = vsel %vm592, %v4846, %v4850
    %v4859 = vsel %vm592, %v4840, %v4844
    %v4860 = vsel %vm592, %v4842, %v4846
    %v4861 = vsel %vm592, %v4852, %v4840
    %v4862 = vsel %vm592, %v4854, %v4842
    %v4863 = vld [vmem:[%s5] ss:$8 sm:$0xf]
    %v4865 = vlaneseq
    %v4866 = vshrl.u32 %v4865, 7
    %v4867 = vsub.s32 0, %v4866
    %v4868 = vrot.slane %v4863, %v4867
    %v4869 = vlaneseq
    %v4870 = vshrl.u32 %v4869, 7
    %v4871 = vsub.s32 1, %v4870
    %v4872 = vrot.slane %v4863, %v4871
    %v4873 = vlaneseq
    %v4874 = vshrl.u32 %v4873, 7
    %v4875 = vsub.s32 2, %v4874
    %v4876 = vrot.slane %v4863, %v4875
    %v4877 = vlaneseq
    %v4878 = vshrl.u32 %v4877, 7
    %v4879 = vsub.s32 3, %v4878
    %v4880 = vrot.slane %v4863, %v4879
    %v4885 = vmul.f32 %v4861, %v4868
    %v4886 = vmul.f32 %v4859, %v4872
    %v4887 = vmul.f32 %v4857, %v4876
    %v4888 = vmul.f32 %v4855, %v4880
    %v4889 = vmul.f32 %v4862, %v4868
    %v4890 = vmul.f32 %v4860, %v4872
    %v4891 = vmul.f32 %v4858, %v4876
    %v4892 = vmul.f32 %v4856, %v4880
    %4893 = vset.pattern.permute.xlu0 0
    %4894 = vperm.xlu0 %4893, %v4819
    %v4895 = vpop.permute.xlu0 %4894
    %4897 = vset.pattern.permute.xlu0 0
    %4898 = vperm.xlu0 %4897, %v4820
    %v4899 = vpop.permute.xlu0 %4898
    %v4901 = vmul.f32 %v4885, %v4895
    %v4902 = vmul.f32 %v4886, %v4895
    %v4903 = vmul.f32 %v4887, %v4895
    %v4904 = vmul.f32 %v4888, %v4895
    %v4905 = vmul.f32 %v4889, %v4899
    %v4906 = vmul.f32 %v4890, %v4899
    %v4907 = vmul.f32 %v4891, %v4899
    %v4908 = vmul.f32 %v4892, %v4899
    %v4909 = vadd.f32 %v4831, %v4901
    %v4910 = vadd.f32 %v4832, %v4902
    %v4911 = vadd.f32 %v4833, %v4903
    %v4912 = vadd.f32 %v4834, %v4904
    %v4913 = vadd.f32 %v4835, %v4905
    %v4914 = vadd.f32 %v4836, %v4906
    %v4915 = vadd.f32 %v4837, %v4907
    %v4916 = vadd.f32 %v4838, %v4908
    %4917 = vrot.lane.b32.xlu0 %v4811, 16
    %v4918 = vpop.permute.xlu0 %4917
    %4919 = vrot.lane.b32.xlu0 %v4815, 16
    %v4920 = vpop.permute.xlu0 %4919
    %4921 = vrot.lane.b32.xlu0 %v4812, 16
    %v4922 = vpop.permute.xlu0 %4921
    %4923 = vrot.lane.b32.xlu0 %v4816, 16
    %v4924 = vpop.permute.xlu0 %4923
    %4925 = vrot.lane.b32.xlu0 %v4813, 16
    %v4926 = vpop.permute.xlu0 %4925
    %4927 = vrot.lane.b32.xlu0 %v4817, 16
    %v4928 = vpop.permute.xlu0 %4927
    %4929 = vrot.lane.b32.xlu0 %v4814, 16
    %v4930 = vpop.permute.xlu0 %4929
    %4931 = vrot.lane.b32.xlu0 %v4818, 16
    %v4932 = vpop.permute.xlu0 %4931
    %v4933 = vsel %vm671, %v4926, %v4930
    %v4934 = vsel %vm671, %v4928, %v4932
    %v4935 = vsel %vm671, %v4922, %v4926
    %v4936 = vsel %vm671, %v4924, %v4928
    %v4937 = vsel %vm671, %v4918, %v4922
    %v4938 = vsel %vm671, %v4920, %v4924
    %v4939 = vsel %vm671, %v4930, %v4918
    %v4940 = vsel %vm671, %v4932, %v4920
    %v4941 = vld [vmem:[%s680] ss:$8 sm:$0xf]
    %v4943 = vlaneseq
    %v4944 = vshrl.u32 %v4943, 7
    %v4945 = vsub.s32 0, %v4944
    %v4946 = vrot.slane %v4941, %v4945
    %v4947 = vlaneseq
    %v4948 = vshrl.u32 %v4947, 7
    %v4949 = vsub.s32 1, %v4948
    %v4950 = vrot.slane %v4941, %v4949
    %v4951 = vlaneseq
    %v4952 = vshrl.u32 %v4951, 7
    %v4953 = vsub.s32 2, %v4952
    %v4954 = vrot.slane %v4941, %v4953
    %v4955 = vlaneseq
    %v4956 = vshrl.u32 %v4955, 7
    %v4957 = vsub.s32 3, %v4956
    %v4958 = vrot.slane %v4941, %v4957
    %v4963 = vmul.f32 %v4939, %v4946
    %v4964 = vmul.f32 %v4937, %v4950
    %v4965 = vmul.f32 %v4935, %v4954
    %v4966 = vmul.f32 %v4933, %v4958
    %v4967 = vmul.f32 %v4940, %v4946
    %v4968 = vmul.f32 %v4938, %v4950
    %v4969 = vmul.f32 %v4936, %v4954
    %v4970 = vmul.f32 %v4934, %v4958
    %4971 = vset.pattern.permute.xlu0 1
    %4972 = vperm.xlu0 %4971, %v4819
    %v4973 = vpop.permute.xlu0 %4972
    %4975 = vset.pattern.permute.xlu0 1
    %4976 = vperm.xlu0 %4975, %v4820
    %v4977 = vpop.permute.xlu0 %4976
    %v4979 = vmul.f32 %v4963, %v4973
    %v4980 = vmul.f32 %v4964, %v4973
    %v4981 = vmul.f32 %v4965, %v4973
    %v4982 = vmul.f32 %v4966, %v4973
    %v4983 = vmul.f32 %v4967, %v4977
    %v4984 = vmul.f32 %v4968, %v4977
    %v4985 = vmul.f32 %v4969, %v4977
    %v4986 = vmul.f32 %v4970, %v4977
    %v4987 = vadd.f32 %v4909, %v4979
    %v4988 = vadd.f32 %v4910, %v4980
    %v4989 = vadd.f32 %v4911, %v4981
    %v4990 = vadd.f32 %v4912, %v4982
    %v4991 = vadd.f32 %v4913, %v4983
    %v4992 = vadd.f32 %v4914, %v4984
    %v4993 = vadd.f32 %v4915, %v4985
    %v4994 = vadd.f32 %v4916, %v4986
    %4995 = vrot.lane.b32.xlu0 %v4811, 15
    %v4996 = vpop.permute.xlu0 %4995
    %4997 = vrot.lane.b32.xlu0 %v4815, 15
    %v4998 = vpop.permute.xlu0 %4997
    %4999 = vrot.lane.b32.xlu0 %v4812, 15
    %v5000 = vpop.permute.xlu0 %4999
    %5001 = vrot.lane.b32.xlu0 %v4816, 15
    %v5002 = vpop.permute.xlu0 %5001
    %5003 = vrot.lane.b32.xlu0 %v4813, 15
    %v5004 = vpop.permute.xlu0 %5003
    %5005 = vrot.lane.b32.xlu0 %v4817, 15
    %v5006 = vpop.permute.xlu0 %5005
    %5007 = vrot.lane.b32.xlu0 %v4814, 15
    %v5008 = vpop.permute.xlu0 %5007
    %5009 = vrot.lane.b32.xlu0 %v4818, 15
    %v5010 = vpop.permute.xlu0 %5009
    %v5011 = vsel %vm751, %v5004, %v5008
    %v5012 = vsel %vm751, %v5006, %v5010
    %v5013 = vsel %vm751, %v5000, %v5004
    %v5014 = vsel %vm751, %v5002, %v5006
    %v5015 = vsel %vm751, %v4996, %v5000
    %v5016 = vsel %vm751, %v4998, %v5002
    %v5017 = vsel %vm751, %v5008, %v4996
    %v5018 = vsel %vm751, %v5010, %v4998
    %v5019 = vld [vmem:[%s760] ss:$8 sm:$0xf]
    %v5021 = vlaneseq
    %v5022 = vshrl.u32 %v5021, 7
    %v5023 = vsub.s32 0, %v5022
    %v5024 = vrot.slane %v5019, %v5023
    %v5025 = vlaneseq
    %v5026 = vshrl.u32 %v5025, 7
    %v5027 = vsub.s32 1, %v5026
    %v5028 = vrot.slane %v5019, %v5027
    %v5029 = vlaneseq
    %v5030 = vshrl.u32 %v5029, 7
    %v5031 = vsub.s32 2, %v5030
    %v5032 = vrot.slane %v5019, %v5031
    %v5033 = vlaneseq
    %v5034 = vshrl.u32 %v5033, 7
    %v5035 = vsub.s32 3, %v5034
    %v5036 = vrot.slane %v5019, %v5035
    %v5041 = vmul.f32 %v5017, %v5024
    %v5042 = vmul.f32 %v5015, %v5028
    %v5043 = vmul.f32 %v5013, %v5032
    %v5044 = vmul.f32 %v5011, %v5036
    %v5045 = vmul.f32 %v5018, %v5024
    %v5046 = vmul.f32 %v5016, %v5028
    %v5047 = vmul.f32 %v5014, %v5032
    %v5048 = vmul.f32 %v5012, %v5036
    %5049 = vset.pattern.permute.xlu0 2
    %5050 = vperm.xlu0 %5049, %v4819
    %v5051 = vpop.permute.xlu0 %5050
    %5053 = vset.pattern.permute.xlu0 2
    %5054 = vperm.xlu0 %5053, %v4820
    %v5055 = vpop.permute.xlu0 %5054
    %v5057 = vmul.f32 %v5041, %v5051
    %v5058 = vmul.f32 %v5042, %v5051
    %v5059 = vmul.f32 %v5043, %v5051
    %v5060 = vmul.f32 %v5044, %v5051
    %v5061 = vmul.f32 %v5045, %v5055
    %v5062 = vmul.f32 %v5046, %v5055
    %v5063 = vmul.f32 %v5047, %v5055
    %v5064 = vmul.f32 %v5048, %v5055
    %v5065 = vadd.f32 %v4987, %v5057
    %v5066 = vadd.f32 %v4988, %v5058
    %v5067 = vadd.f32 %v4989, %v5059
    %v5068 = vadd.f32 %v4990, %v5060
    %v5069 = vadd.f32 %v4991, %v5061
    %v5070 = vadd.f32 %v4992, %v5062
    %v5071 = vadd.f32 %v4993, %v5063
    %v5072 = vadd.f32 %v4994, %v5064
    %5073 = vrot.lane.b32.xlu0 %v4811, 1
    %v5074 = vpop.permute.xlu0 %5073
    %5075 = vrot.lane.b32.xlu0 %v4815, 1
    %v5076 = vpop.permute.xlu0 %5075
    %5077 = vrot.lane.b32.xlu0 %v4812, 1
    %v5078 = vpop.permute.xlu0 %5077
    %5079 = vrot.lane.b32.xlu0 %v4816, 1
    %v5080 = vpop.permute.xlu0 %5079
    %5081 = vrot.lane.b32.xlu0 %v4813, 1
    %v5082 = vpop.permute.xlu0 %5081
    %5083 = vrot.lane.b32.xlu0 %v4817, 1
    %v5084 = vpop.permute.xlu0 %5083
    %5085 = vrot.lane.b32.xlu0 %v4814, 1
    %v5086 = vpop.permute.xlu0 %5085
    %5087 = vrot.lane.b32.xlu0 %v4818, 1
    %v5088 = vpop.permute.xlu0 %5087
    %v5089 = vsel %vm831, %v5082, %v5086
    %v5090 = vsel %vm831, %v5084, %v5088
    %v5091 = vsel %vm831, %v5078, %v5082
    %v5092 = vsel %vm831, %v5080, %v5084
    %v5093 = vsel %vm831, %v5074, %v5078
    %v5094 = vsel %vm831, %v5076, %v5080
    %v5095 = vsel %vm831, %v5086, %v5074
    %v5096 = vsel %vm831, %v5088, %v5076
    %v5097 = vld [vmem:[%s840] ss:$8 sm:$0xf]
    %v5099 = vlaneseq
    %v5100 = vshrl.u32 %v5099, 7
    %v5101 = vsub.s32 0, %v5100
    %v5102 = vrot.slane %v5097, %v5101
    %v5103 = vlaneseq
    %v5104 = vshrl.u32 %v5103, 7
    %v5105 = vsub.s32 1, %v5104
    %v5106 = vrot.slane %v5097, %v5105
    %v5107 = vlaneseq
    %v5108 = vshrl.u32 %v5107, 7
    %v5109 = vsub.s32 2, %v5108
    %v5110 = vrot.slane %v5097, %v5109
    %v5111 = vlaneseq
    %v5112 = vshrl.u32 %v5111, 7
    %v5113 = vsub.s32 3, %v5112
    %v5114 = vrot.slane %v5097, %v5113
    %v5119 = vmul.f32 %v5095, %v5102
    %v5120 = vmul.f32 %v5093, %v5106
    %v5121 = vmul.f32 %v5091, %v5110
    %v5122 = vmul.f32 %v5089, %v5114
    %v5123 = vmul.f32 %v5096, %v5102
    %v5124 = vmul.f32 %v5094, %v5106
    %v5125 = vmul.f32 %v5092, %v5110
    %v5126 = vmul.f32 %v5090, %v5114
    %5127 = vset.pattern.permute.xlu0 3
    %5128 = vperm.xlu0 %5127, %v4819
    %v5129 = vpop.permute.xlu0 %5128
    %5131 = vset.pattern.permute.xlu0 3
    %5132 = vperm.xlu0 %5131, %v4820
    %v5133 = vpop.permute.xlu0 %5132
    %v5135 = vmul.f32 %v5119, %v5129
    %v5136 = vmul.f32 %v5120, %v5129
    %v5137 = vmul.f32 %v5121, %v5129
    %v5138 = vmul.f32 %v5122, %v5129
    %v5139 = vmul.f32 %v5123, %v5133
    %v5140 = vmul.f32 %v5124, %v5133
    %v5141 = vmul.f32 %v5125, %v5133
    %v5142 = vmul.f32 %v5126, %v5133
    %v5143 = vadd.f32 %v5065, %v5135
    %v5144 = vadd.f32 %v5066, %v5136
    %v5145 = vadd.f32 %v5067, %v5137
    %v5146 = vadd.f32 %v5068, %v5138
    %v5147 = vadd.f32 %v5069, %v5139
    %v5148 = vadd.f32 %v5070, %v5140
    %v5149 = vadd.f32 %v5071, %v5141
    %v5150 = vadd.f32 %v5072, %v5142
    %5151 = vrot.lane.b32.xlu0 %v4811, 127
    %v5152 = vpop.permute.xlu0 %5151
    %5153 = vrot.lane.b32.xlu0 %v4815, 127
    %v5154 = vpop.permute.xlu0 %5153
    %5155 = vrot.lane.b32.xlu0 %v4812, 127
    %v5156 = vpop.permute.xlu0 %5155
    %5157 = vrot.lane.b32.xlu0 %v4816, 127
    %v5158 = vpop.permute.xlu0 %5157
    %5159 = vrot.lane.b32.xlu0 %v4813, 127
    %v5160 = vpop.permute.xlu0 %5159
    %5161 = vrot.lane.b32.xlu0 %v4817, 127
    %v5162 = vpop.permute.xlu0 %5161
    %5163 = vrot.lane.b32.xlu0 %v4814, 127
    %v5164 = vpop.permute.xlu0 %5163
    %5165 = vrot.lane.b32.xlu0 %v4818, 127
    %v5166 = vpop.permute.xlu0 %5165
    %v5167 = vsel %vm911, %v5160, %v5164
    %v5168 = vsel %vm911, %v5162, %v5166
    %v5169 = vsel %vm911, %v5156, %v5160
    %v5170 = vsel %vm911, %v5158, %v5162
    %v5171 = vsel %vm911, %v5152, %v5156
    %v5172 = vsel %vm911, %v5154, %v5158
    %v5173 = vsel %vm911, %v5164, %v5152
    %v5174 = vsel %vm911, %v5166, %v5154
    %v5175 = vld [vmem:[%s920] ss:$8 sm:$0xf]
    %v5177 = vlaneseq
    %v5178 = vshrl.u32 %v5177, 7
    %v5179 = vsub.s32 0, %v5178
    %v5180 = vrot.slane %v5175, %v5179
    %v5181 = vlaneseq
    %v5182 = vshrl.u32 %v5181, 7
    %v5183 = vsub.s32 1, %v5182
    %v5184 = vrot.slane %v5175, %v5183
    %v5185 = vlaneseq
    %v5186 = vshrl.u32 %v5185, 7
    %v5187 = vsub.s32 2, %v5186
    %v5188 = vrot.slane %v5175, %v5187
    %v5189 = vlaneseq
    %v5190 = vshrl.u32 %v5189, 7
    %v5191 = vsub.s32 3, %v5190
    %v5192 = vrot.slane %v5175, %v5191
    %v5197 = vmul.f32 %v5171, %v5180
    %v5198 = vmul.f32 %v5169, %v5184
    %v5199 = vmul.f32 %v5167, %v5188
    %v5200 = vmul.f32 %v5173, %v5192
    %v5201 = vmul.f32 %v5172, %v5180
    %v5202 = vmul.f32 %v5170, %v5184
    %v5203 = vmul.f32 %v5168, %v5188
    %v5204 = vmul.f32 %v5174, %v5192
    %5205 = vset.pattern.permute.xlu0 5
    %5206 = vperm.xlu0 %5205, %v4819
    %v5207 = vpop.permute.xlu0 %5206
    %5209 = vset.pattern.permute.xlu0 5
    %5210 = vperm.xlu0 %5209, %v4820
    %v5211 = vpop.permute.xlu0 %5210
    %v5213 = vmul.f32 %v5197, %v5207
    %v5214 = vmul.f32 %v5198, %v5207
    %v5215 = vmul.f32 %v5199, %v5207
    %v5216 = vmul.f32 %v5200, %v5207
    %v5217 = vmul.f32 %v5201, %v5211
    %v5218 = vmul.f32 %v5202, %v5211
    %v5219 = vmul.f32 %v5203, %v5211
    %v5220 = vmul.f32 %v5204, %v5211
    %v5221 = vadd.f32 %v5143, %v5213
    %v5222 = vadd.f32 %v5144, %v5214
    %v5223 = vadd.f32 %v5145, %v5215
    %v5224 = vadd.f32 %v5146, %v5216
    %v5225 = vadd.f32 %v5147, %v5217
    %v5226 = vadd.f32 %v5148, %v5218
    %v5227 = vadd.f32 %v5149, %v5219
    %v5228 = vadd.f32 %v5150, %v5220
    %5229 = vrot.lane.b32.xlu0 %v4811, 113
    %v5230 = vpop.permute.xlu0 %5229
    %5231 = vrot.lane.b32.xlu0 %v4815, 113
    %v5232 = vpop.permute.xlu0 %5231
    %5233 = vrot.lane.b32.xlu0 %v4812, 113
    %v5234 = vpop.permute.xlu0 %5233
    %5235 = vrot.lane.b32.xlu0 %v4816, 113
    %v5236 = vpop.permute.xlu0 %5235
    %5237 = vrot.lane.b32.xlu0 %v4813, 113
    %v5238 = vpop.permute.xlu0 %5237
    %5239 = vrot.lane.b32.xlu0 %v4817, 113
    %v5240 = vpop.permute.xlu0 %5239
    %5241 = vrot.lane.b32.xlu0 %v4814, 113
    %v5242 = vpop.permute.xlu0 %5241
    %5243 = vrot.lane.b32.xlu0 %v4818, 113
    %v5244 = vpop.permute.xlu0 %5243
    %v5245 = vsel %vm991, %v5238, %v5242
    %v5246 = vsel %vm991, %v5240, %v5244
    %v5247 = vsel %vm991, %v5234, %v5238
    %v5248 = vsel %vm991, %v5236, %v5240
    %v5249 = vsel %vm991, %v5230, %v5234
    %v5250 = vsel %vm991, %v5232, %v5236
    %v5251 = vsel %vm991, %v5242, %v5230
    %v5252 = vsel %vm991, %v5244, %v5232
    %v5253 = vld [vmem:[%s1000] ss:$8 sm:$0xf]
    %v5255 = vlaneseq
    %v5256 = vshrl.u32 %v5255, 7
    %v5257 = vsub.s32 0, %v5256
    %v5258 = vrot.slane %v5253, %v5257
    %v5259 = vlaneseq
    %v5260 = vshrl.u32 %v5259, 7
    %v5261 = vsub.s32 1, %v5260
    %v5262 = vrot.slane %v5253, %v5261
    %v5263 = vlaneseq
    %v5264 = vshrl.u32 %v5263, 7
    %v5265 = vsub.s32 2, %v5264
    %v5266 = vrot.slane %v5253, %v5265
    %v5267 = vlaneseq
    %v5268 = vshrl.u32 %v5267, 7
    %v5269 = vsub.s32 3, %v5268
    %v5270 = vrot.slane %v5253, %v5269
    %v5275 = vmul.f32 %v5249, %v5258
    %v5276 = vmul.f32 %v5247, %v5262
    %v5277 = vmul.f32 %v5245, %v5266
    %v5278 = vmul.f32 %v5251, %v5270
    %v5279 = vmul.f32 %v5250, %v5258
    %v5280 = vmul.f32 %v5248, %v5262
    %v5281 = vmul.f32 %v5246, %v5266
    %v5282 = vmul.f32 %v5252, %v5270
    %5283 = vset.pattern.permute.xlu0 6
    %5284 = vperm.xlu0 %5283, %v4819
    %v5285 = vpop.permute.xlu0 %5284
    %5287 = vset.pattern.permute.xlu0 6
    %5288 = vperm.xlu0 %5287, %v4820
    %v5289 = vpop.permute.xlu0 %5288
    %v5291 = vmul.f32 %v5275, %v5285
    %v5292 = vmul.f32 %v5276, %v5285
    %v5293 = vmul.f32 %v5277, %v5285
    %v5294 = vmul.f32 %v5278, %v5285
    %v5295 = vmul.f32 %v5279, %v5289
    %v5296 = vmul.f32 %v5280, %v5289
    %v5297 = vmul.f32 %v5281, %v5289
    %v5298 = vmul.f32 %v5282, %v5289
    %v5299 = vadd.f32 %v5221, %v5291
    %v5300 = vadd.f32 %v5222, %v5292
    %v5301 = vadd.f32 %v5223, %v5293
    %v5302 = vadd.f32 %v5224, %v5294
    %v5303 = vadd.f32 %v5225, %v5295
    %v5304 = vadd.f32 %v5226, %v5296
    %v5305 = vadd.f32 %v5227, %v5297
    %v5306 = vadd.f32 %v5228, %v5298
    %5307 = vrot.lane.b32.xlu0 %v4811, 112
    %v5308 = vpop.permute.xlu0 %5307
    %5309 = vrot.lane.b32.xlu0 %v4815, 112
    %v5310 = vpop.permute.xlu0 %5309
    %5311 = vrot.lane.b32.xlu0 %v4812, 112
    %v5312 = vpop.permute.xlu0 %5311
    %5313 = vrot.lane.b32.xlu0 %v4816, 112
    %v5314 = vpop.permute.xlu0 %5313
    %5315 = vrot.lane.b32.xlu0 %v4813, 112
    %v5316 = vpop.permute.xlu0 %5315
    %5317 = vrot.lane.b32.xlu0 %v4817, 112
    %v5318 = vpop.permute.xlu0 %5317
    %5319 = vrot.lane.b32.xlu0 %v4814, 112
    %v5320 = vpop.permute.xlu0 %5319
    %5321 = vrot.lane.b32.xlu0 %v4818, 112
    %v5322 = vpop.permute.xlu0 %5321
    %v5323 = vsel %vm1071, %v5316, %v5320
    %v5324 = vsel %vm1071, %v5318, %v5322
    %v5325 = vsel %vm1071, %v5312, %v5316
    %v5326 = vsel %vm1071, %v5314, %v5318
    %v5327 = vsel %vm1071, %v5308, %v5312
    %v5328 = vsel %vm1071, %v5310, %v5314
    %v5329 = vsel %vm1071, %v5320, %v5308
    %v5330 = vsel %vm1071, %v5322, %v5310
    %v5331 = vld [vmem:[%s1080] ss:$8 sm:$0xf]
    %v5333 = vlaneseq
    %v5334 = vshrl.u32 %v5333, 7
    %v5335 = vsub.s32 0, %v5334
    %v5336 = vrot.slane %v5331, %v5335
    %v5337 = vlaneseq
    %v5338 = vshrl.u32 %v5337, 7
    %v5339 = vsub.s32 1, %v5338
    %v5340 = vrot.slane %v5331, %v5339
    %v5341 = vlaneseq
    %v5342 = vshrl.u32 %v5341, 7
    %v5343 = vsub.s32 2, %v5342
    %v5344 = vrot.slane %v5331, %v5343
    %v5345 = vlaneseq
    %v5346 = vshrl.u32 %v5345, 7
    %v5347 = vsub.s32 3, %v5346
    %v5348 = vrot.slane %v5331, %v5347
    %v5353 = vmul.f32 %v5327, %v5336
    %v5354 = vmul.f32 %v5325, %v5340
    %v5355 = vmul.f32 %v5323, %v5344
    %v5356 = vmul.f32 %v5329, %v5348
    %v5357 = vmul.f32 %v5328, %v5336
    %v5358 = vmul.f32 %v5326, %v5340
    %v5359 = vmul.f32 %v5324, %v5344
    %v5360 = vmul.f32 %v5330, %v5348
    %5361 = vset.pattern.permute.xlu0 7
    %5362 = vperm.xlu0 %5361, %v4819
    %v5363 = vpop.permute.xlu0 %5362
    %5365 = vset.pattern.permute.xlu0 7
    %5366 = vperm.xlu0 %5365, %v4820
    %v5367 = vpop.permute.xlu0 %5366
    %v5369 = vmul.f32 %v5353, %v5363
    %v5370 = vmul.f32 %v5354, %v5363
    %v5371 = vmul.f32 %v5355, %v5363
    %v5372 = vmul.f32 %v5356, %v5363
    %v5373 = vmul.f32 %v5357, %v5367
    %v5374 = vmul.f32 %v5358, %v5367
    %v5375 = vmul.f32 %v5359, %v5367
    %v5376 = vmul.f32 %v5360, %v5367
    %v5377 = vadd.f32 %v5299, %v5369
    %v5378 = vadd.f32 %v5300, %v5370
    %v5379 = vadd.f32 %v5301, %v5371
    %v5380 = vadd.f32 %v5302, %v5372
    %v5381 = vadd.f32 %v5303, %v5373
    %v5382 = vadd.f32 %v5304, %v5374
    %v5383 = vadd.f32 %v5305, %v5375
    %v5384 = vadd.f32 %v5306, %v5376
    %5385 = vrot.lane.b32.xlu0 %v4811, 111
    %v5386 = vpop.permute.xlu0 %5385
    %5387 = vrot.lane.b32.xlu0 %v4815, 111
    %v5388 = vpop.permute.xlu0 %5387
    %5389 = vrot.lane.b32.xlu0 %v4812, 111
    %v5390 = vpop.permute.xlu0 %5389
    %5391 = vrot.lane.b32.xlu0 %v4816, 111
    %v5392 = vpop.permute.xlu0 %5391
    %5393 = vrot.lane.b32.xlu0 %v4813, 111
    %v5394 = vpop.permute.xlu0 %5393
    %5395 = vrot.lane.b32.xlu0 %v4817, 111
    %v5396 = vpop.permute.xlu0 %5395
    %5397 = vrot.lane.b32.xlu0 %v4814, 111
    %v5398 = vpop.permute.xlu0 %5397
    %5399 = vrot.lane.b32.xlu0 %v4818, 111
    %v5400 = vpop.permute.xlu0 %5399
    %v5401 = vsel %vm1151, %v5394, %v5398
    %v5402 = vsel %vm1151, %v5396, %v5400
    %v5403 = vsel %vm1151, %v5390, %v5394
    %v5404 = vsel %vm1151, %v5392, %v5396
    %v5405 = vsel %vm1151, %v5386, %v5390
    %v5406 = vsel %vm1151, %v5388, %v5392
    %v5407 = vsel %vm1151, %v5398, %v5386
    %v5408 = vsel %vm1151, %v5400, %v5388
    %v5409 = vld [vmem:[%s1160] ss:$8 sm:$0xf]
    %v5411 = vlaneseq
    %v5412 = vshrl.u32 %v5411, 7
    %v5413 = vsub.s32 0, %v5412
    %v5414 = vrot.slane %v5409, %v5413
    %v5415 = vlaneseq
    %v5416 = vshrl.u32 %v5415, 7
    %v5417 = vsub.s32 1, %v5416
    %v5418 = vrot.slane %v5409, %v5417
    %v5419 = vlaneseq
    %v5420 = vshrl.u32 %v5419, 7
    %v5421 = vsub.s32 2, %v5420
    %v5422 = vrot.slane %v5409, %v5421
    %v5423 = vlaneseq
    %v5424 = vshrl.u32 %v5423, 7
    %v5425 = vsub.s32 3, %v5424
    %v5426 = vrot.slane %v5409, %v5425
    %v5431 = vmul.f32 %v5405, %v5414
    %v5432 = vmul.f32 %v5403, %v5418
    %v5433 = vmul.f32 %v5401, %v5422
    %v5434 = vmul.f32 %v5407, %v5426
    %v5435 = vmul.f32 %v5406, %v5414
    %v5436 = vmul.f32 %v5404, %v5418
    %v5437 = vmul.f32 %v5402, %v5422
    %v5438 = vmul.f32 %v5408, %v5426
    %5439 = vset.pattern.permute.xlu0 8
    %5440 = vperm.xlu0 %5439, %v4819
    %v5441 = vpop.permute.xlu0 %5440
    %5443 = vset.pattern.permute.xlu0 8
    %5444 = vperm.xlu0 %5443, %v4820
    %v5445 = vpop.permute.xlu0 %5444
    %v5447 = vmul.f32 %v5431, %v5441
    %v5448 = vmul.f32 %v5432, %v5441
    %v5449 = vmul.f32 %v5433, %v5441
    %v5450 = vmul.f32 %v5434, %v5441
    %v5451 = vmul.f32 %v5435, %v5445
    %v5452 = vmul.f32 %v5436, %v5445
    %v5453 = vmul.f32 %v5437, %v5445
    %v5454 = vmul.f32 %v5438, %v5445
    %v5455 = vadd.f32 %v5377, %v5447
    %v5456 = vadd.f32 %v5378, %v5448
    %v5457 = vadd.f32 %v5379, %v5449
    %v5458 = vadd.f32 %v5380, %v5450
    %v5459 = vadd.f32 %v5381, %v5451
    %v5460 = vadd.f32 %v5382, %v5452
    %v5461 = vadd.f32 %v5383, %v5453
    %v5462 = vadd.f32 %v5384, %v5454
    %v5463 = vld [vmem:[%s4 + $0x30] sm:$0xff]
    %v5464 = vld [vmem:[%s4 + $0x38] sm:$0xff]
    %5466 = vset.pattern.permute.xlu0 0
    %5467 = vperm.xlu0 %5466, %v5463
    %v5468 = vpop.permute.xlu0 %5467
    %5471 = vset.pattern.permute.xlu0 0
    %5472 = vperm.xlu0 %5471, %v5464
    %v5473 = vpop.permute.xlu0 %5472
    %v5475 = vadd.f32 %v5455, %v5468
    %v5476 = vadd.f32 %v5456, %v5468
    %v5477 = vadd.f32 %v5457, %v5468
    %v5478 = vadd.f32 %v5458, %v5468
    %v5479 = vadd.f32 %v5459, %v5473
    %v5480 = vadd.f32 %v5460, %v5473
    %v5481 = vadd.f32 %v5461, %v5473
    %v5482 = vadd.f32 %v5462, %v5473
    %v5483 = vld [vmem:[#allocation2 + $0x1c0] sm:$0xff]
    %v5484 = vld [vmem:[#allocation2 + $0x1c8] sm:$0xff]
    %v5485 = vld [vmem:[#allocation2 + $0x1d0] sm:$0xff]
    %v5486 = vld [vmem:[#allocation2 + $0x1d8] sm:$0xff]
    %v5487 = vld [vmem:[#allocation2 + $0x1e0] sm:$0xff]
    %v5488 = vld [vmem:[#allocation2 + $0x1e8] sm:$0xff]
    %v5489 = vld [vmem:[#allocation2 + $0x1f0] sm:$0xff]
    %v5490 = vld [vmem:[#allocation2 + $0x1f8] sm:$0xff]
    %v5491 = vld [vmem:[%s3 + $0x70] sm:$0xff]
    %v5492 = vld [vmem:[%s3 + $0x78] sm:$0xff]
    %5494 = vset.pattern.permute.xlu0 4
    %5495 = vperm.xlu0 %5494, %v5491
    %v5496 = vpop.permute.xlu0 %5495
    %5499 = vset.pattern.permute.xlu0 4
    %5500 = vperm.xlu0 %5499, %v5492
    %v5501 = vpop.permute.xlu0 %5500
    %v5503 = vmul.f32 %v5483, %v5496
    %v5504 = vmul.f32 %v5484, %v5496
    %v5505 = vmul.f32 %v5485, %v5496
    %v5506 = vmul.f32 %v5486, %v5496
    %v5507 = vmul.f32 %v5487, %v5501
    %v5508 = vmul.f32 %v5488, %v5501
    %v5509 = vmul.f32 %v5489, %v5501
    %v5510 = vmul.f32 %v5490, %v5501
    %5511 = vrot.lane.b32.xlu0 %v5483, 17
    %v5512 = vpop.permute.xlu0 %5511
    %5513 = vrot.lane.b32.xlu0 %v5487, 17
    %v5514 = vpop.permute.xlu0 %5513
    %5515 = vrot.lane.b32.xlu0 %v5484, 17
    %v5516 = vpop.permute.xlu0 %5515
    %5517 = vrot.lane.b32.xlu0 %v5488, 17
    %v5518 = vpop.permute.xlu0 %5517
    %5519 = vrot.lane.b32.xlu0 %v5485, 17
    %v5520 = vpop.permute.xlu0 %5519
    %5521 = vrot.lane.b32.xlu0 %v5489, 17
    %v5522 = vpop.permute.xlu0 %5521
    %5523 = vrot.lane.b32.xlu0 %v5486, 17
    %v5524 = vpop.permute.xlu0 %5523
    %5525 = vrot.lane.b32.xlu0 %v5490, 17
    %v5526 = vpop.permute.xlu0 %5525
    %v5527 = vsel %vm592, %v5520, %v5524
    %v5528 = vsel %vm592, %v5522, %v5526
    %v5529 = vsel %vm592, %v5516, %v5520
    %v5530 = vsel %vm592, %v5518, %v5522
    %v5531 = vsel %vm592, %v5512, %v5516
    %v5532 = vsel %vm592, %v5514, %v5518
    %v5533 = vsel %vm592, %v5524, %v5512
    %v5534 = vsel %vm592, %v5526, %v5514
    %v5535 = vmul.f32 %v5533, %v4868
    %v5536 = vmul.f32 %v5531, %v4872
    %v5537 = vmul.f32 %v5529, %v4876
    %v5538 = vmul.f32 %v5527, %v4880
    %v5539 = vmul.f32 %v5534, %v4868
    %v5540 = vmul.f32 %v5532, %v4872
    %v5541 = vmul.f32 %v5530, %v4876
    %v5542 = vmul.f32 %v5528, %v4880
    %5543 = vset.pattern.permute.xlu0 0
    %5544 = vperm.xlu0 %5543, %v5491
    %v5545 = vpop.permute.xlu0 %5544
    %5547 = vset.pattern.permute.xlu0 0
    %5548 = vperm.xlu0 %5547, %v5492
    %v5549 = vpop.permute.xlu0 %5548
    %v5551 = vmul.f32 %v5535, %v5545
    %v5552 = vmul.f32 %v5536, %v5545
    %v5553 = vmul.f32 %v5537, %v5545
    %v5554 = vmul.f32 %v5538, %v5545
    %v5555 = vmul.f32 %v5539, %v5549
    %v5556 = vmul.f32 %v5540, %v5549
    %v5557 = vmul.f32 %v5541, %v5549
    %v5558 = vmul.f32 %v5542, %v5549
    %v5559 = vadd.f32 %v5503, %v5551
    %v5560 = vadd.f32 %v5504, %v5552
    %v5561 = vadd.f32 %v5505, %v5553
    %v5562 = vadd.f32 %v5506, %v5554
    %v5563 = vadd.f32 %v5507, %v5555
    %v5564 = vadd.f32 %v5508, %v5556
    %v5565 = vadd.f32 %v5509, %v5557
    %v5566 = vadd.f32 %v5510, %v5558
    %5567 = vrot.lane.b32.xlu0 %v5483, 16
    %v5568 = vpop.permute.xlu0 %5567
    %5569 = vrot.lane.b32.xlu0 %v5487, 16
    %v5570 = vpop.permute.xlu0 %5569
    %5571 = vrot.lane.b32.xlu0 %v5484, 16
    %v5572 = vpop.permute.xlu0 %5571
    %5573 = vrot.lane.b32.xlu0 %v5488, 16
    %v5574 = vpop.permute.xlu0 %5573
    %5575 = vrot.lane.b32.xlu0 %v5485, 16
    %v5576 = vpop.permute.xlu0 %5575
    %5577 = vrot.lane.b32.xlu0 %v5489, 16
    %v5578 = vpop.permute.xlu0 %5577
    %5579 = vrot.lane.b32.xlu0 %v5486, 16
    %v5580 = vpop.permute.xlu0 %5579
    %5581 = vrot.lane.b32.xlu0 %v5490, 16
    %v5582 = vpop.permute.xlu0 %5581
    %v5583 = vsel %vm671, %v5576, %v5580
    %v5584 = vsel %vm671, %v5578, %v5582
    %v5585 = vsel %vm671, %v5572, %v5576
    %v5586 = vsel %vm671, %v5574, %v5578
    %v5587 = vsel %vm671, %v5568, %v5572
    %v5588 = vsel %vm671, %v5570, %v5574
    %v5589 = vsel %vm671, %v5580, %v5568
    %v5590 = vsel %vm671, %v5582, %v5570
    %v5591 = vmul.f32 %v5589, %v4946
    %v5592 = vmul.f32 %v5587, %v4950
    %v5593 = vmul.f32 %v5585, %v4954
    %v5594 = vmul.f32 %v5583, %v4958
    %v5595 = vmul.f32 %v5590, %v4946
    %v5596 = vmul.f32 %v5588, %v4950
    %v5597 = vmul.f32 %v5586, %v4954
    %v5598 = vmul.f32 %v5584, %v4958
    %5599 = vset.pattern.permute.xlu0 1
    %5600 = vperm.xlu0 %5599, %v5491
    %v5601 = vpop.permute.xlu0 %5600
    %5603 = vset.pattern.permute.xlu0 1
    %5604 = vperm.xlu0 %5603, %v5492
    %v5605 = vpop.permute.xlu0 %5604
    %v5607 = vmul.f32 %v5591, %v5601
    %v5608 = vmul.f32 %v5592, %v5601
    %v5609 = vmul.f32 %v5593, %v5601
    %v5610 = vmul.f32 %v5594, %v5601
    %v5611 = vmul.f32 %v5595, %v5605
    %v5612 = vmul.f32 %v5596, %v5605
    %v5613 = vmul.f32 %v5597, %v5605
    %v5614 = vmul.f32 %v5598, %v5605
    %v5615 = vadd.f32 %v5559, %v5607
    %v5616 = vadd.f32 %v5560, %v5608
    %v5617 = vadd.f32 %v5561, %v5609
    %v5618 = vadd.f32 %v5562, %v5610
    %v5619 = vadd.f32 %v5563, %v5611
    %v5620 = vadd.f32 %v5564, %v5612
    %v5621 = vadd.f32 %v5565, %v5613
    %v5622 = vadd.f32 %v5566, %v5614
    %5623 = vrot.lane.b32.xlu0 %v5483, 15
    %v5624 = vpop.permute.xlu0 %5623
    %5625 = vrot.lane.b32.xlu0 %v5487, 15
    %v5626 = vpop.permute.xlu0 %5625
    %5627 = vrot.lane.b32.xlu0 %v5484, 15
    %v5628 = vpop.permute.xlu0 %5627
    %5629 = vrot.lane.b32.xlu0 %v5488, 15
    %v5630 = vpop.permute.xlu0 %5629
    %5631 = vrot.lane.b32.xlu0 %v5485, 15
    %v5632 = vpop.permute.xlu0 %5631
    %5633 = vrot.lane.b32.xlu0 %v5489, 15
    %v5634 = vpop.permute.xlu0 %5633
    %5635 = vrot.lane.b32.xlu0 %v5486, 15
    %v5636 = vpop.permute.xlu0 %5635
    %5637 = vrot.lane.b32.xlu0 %v5490, 15
    %v5638 = vpop.permute.xlu0 %5637
    %v5639 = vsel %vm751, %v5632, %v5636
    %v5640 = vsel %vm751, %v5634, %v5638
    %v5641 = vsel %vm751, %v5628, %v5632
    %v5642 = vsel %vm751, %v5630, %v5634
    %v5643 = vsel %vm751, %v5624, %v5628
    %v5644 = vsel %vm751, %v5626, %v5630
    %v5645 = vsel %vm751, %v5636, %v5624
    %v5646 = vsel %vm751, %v5638, %v5626
    %v5647 = vmul.f32 %v5645, %v5024
    %v5648 = vmul.f32 %v5643, %v5028
    %v5649 = vmul.f32 %v5641, %v5032
    %v5650 = vmul.f32 %v5639, %v5036
    %v5651 = vmul.f32 %v5646, %v5024
    %v5652 = vmul.f32 %v5644, %v5028
    %v5653 = vmul.f32 %v5642, %v5032
    %v5654 = vmul.f32 %v5640, %v5036
    %5655 = vset.pattern.permute.xlu0 2
    %5656 = vperm.xlu0 %5655, %v5491
    %v5657 = vpop.permute.xlu0 %5656
    %5659 = vset.pattern.permute.xlu0 2
    %5660 = vperm.xlu0 %5659, %v5492
    %v5661 = vpop.permute.xlu0 %5660
    %v5663 = vmul.f32 %v5647, %v5657
    %v5664 = vmul.f32 %v5648, %v5657
    %v5665 = vmul.f32 %v5649, %v5657
    %v5666 = vmul.f32 %v5650, %v5657
    %v5667 = vmul.f32 %v5651, %v5661
    %v5668 = vmul.f32 %v5652, %v5661
    %v5669 = vmul.f32 %v5653, %v5661
    %v5670 = vmul.f32 %v5654, %v5661
    %v5671 = vadd.f32 %v5615, %v5663
    %v5672 = vadd.f32 %v5616, %v5664
    %v5673 = vadd.f32 %v5617, %v5665
    %v5674 = vadd.f32 %v5618, %v5666
    %v5675 = vadd.f32 %v5619, %v5667
    %v5676 = vadd.f32 %v5620, %v5668
    %v5677 = vadd.f32 %v5621, %v5669
    %v5678 = vadd.f32 %v5622, %v5670
    %5679 = vrot.lane.b32.xlu0 %v5483, 1
    %v5680 = vpop.permute.xlu0 %5679
    %5681 = vrot.lane.b32.xlu0 %v5487, 1
    %v5682 = vpop.permute.xlu0 %5681
    %5683 = vrot.lane.b32.xlu0 %v5484, 1
    %v5684 = vpop.permute.xlu0 %5683
    %5685 = vrot.lane.b32.xlu0 %v5488, 1
    %v5686 = vpop.permute.xlu0 %5685
    %5687 = vrot.lane.b32.xlu0 %v5485, 1
    %v5688 = vpop.permute.xlu0 %5687
    %5689 = vrot.lane.b32.xlu0 %v5489, 1
    %v5690 = vpop.permute.xlu0 %5689
    %5691 = vrot.lane.b32.xlu0 %v5486, 1
    %v5692 = vpop.permute.xlu0 %5691
    %5693 = vrot.lane.b32.xlu0 %v5490, 1
    %v5694 = vpop.permute.xlu0 %5693
    %v5695 = vsel %vm831, %v5688, %v5692
    %v5696 = vsel %vm831, %v5690, %v5694
    %v5697 = vsel %vm831, %v5684, %v5688
    %v5698 = vsel %vm831, %v5686, %v5690
    %v5699 = vsel %vm831, %v5680, %v5684
    %v5700 = vsel %vm831, %v5682, %v5686
    %v5701 = vsel %vm831, %v5692, %v5680
    %v5702 = vsel %vm831, %v5694, %v5682
    %v5703 = vmul.f32 %v5701, %v5102
    %v5704 = vmul.f32 %v5699, %v5106
    %v5705 = vmul.f32 %v5697, %v5110
    %v5706 = vmul.f32 %v5695, %v5114
    %v5707 = vmul.f32 %v5702, %v5102
    %v5708 = vmul.f32 %v5700, %v5106
    %v5709 = vmul.f32 %v5698, %v5110
    %v5710 = vmul.f32 %v5696, %v5114
    %5711 = vset.pattern.permute.xlu0 3
    %5712 = vperm.xlu0 %5711, %v5491
    %v5713 = vpop.permute.xlu0 %5712
    %5715 = vset.pattern.permute.xlu0 3
    %5716 = vperm.xlu0 %5715, %v5492
    %v5717 = vpop.permute.xlu0 %5716
    %v5719 = vmul.f32 %v5703, %v5713
    %v5720 = vmul.f32 %v5704, %v5713
    %v5721 = vmul.f32 %v5705, %v5713
    %v5722 = vmul.f32 %v5706, %v5713
    %v5723 = vmul.f32 %v5707, %v5717
    %v5724 = vmul.f32 %v5708, %v5717
    %v5725 = vmul.f32 %v5709, %v5717
    %v5726 = vmul.f32 %v5710, %v5717
    %v5727 = vadd.f32 %v5671, %v5719
    %v5728 = vadd.f32 %v5672, %v5720
    %v5729 = vadd.f32 %v5673, %v5721
    %v5730 = vadd.f32 %v5674, %v5722
    %v5731 = vadd.f32 %v5675, %v5723
    %v5732 = vadd.f32 %v5676, %v5724
    %v5733 = vadd.f32 %v5677, %v5725
    %v5734 = vadd.f32 %v5678, %v5726
    %5735 = vrot.lane.b32.xlu0 %v5483, 127
    %v5736 = vpop.permute.xlu0 %5735
    %5737 = vrot.lane.b32.xlu0 %v5487, 127
    %v5738 = vpop.permute.xlu0 %5737
    %5739 = vrot.lane.b32.xlu0 %v5484, 127
    %v5740 = vpop.permute.xlu0 %5739
    %5741 = vrot.lane.b32.xlu0 %v5488, 127
    %v5742 = vpop.permute.xlu0 %5741
    %5743 = vrot.lane.b32.xlu0 %v5485, 127
    %v5744 = vpop.permute.xlu0 %5743
    %5745 = vrot.lane.b32.xlu0 %v5489, 127
    %v5746 = vpop.permute.xlu0 %5745
    %5747 = vrot.lane.b32.xlu0 %v5486, 127
    %v5748 = vpop.permute.xlu0 %5747
    %5749 = vrot.lane.b32.xlu0 %v5490, 127
    %v5750 = vpop.permute.xlu0 %5749
    %v5751 = vsel %vm911, %v5744, %v5748
    %v5752 = vsel %vm911, %v5746, %v5750
    %v5753 = vsel %vm911, %v5740, %v5744
    %v5754 = vsel %vm911, %v5742, %v5746
    %v5755 = vsel %vm911, %v5736, %v5740
    %v5756 = vsel %vm911, %v5738, %v5742
    %v5757 = vsel %vm911, %v5748, %v5736
    %v5758 = vsel %vm911, %v5750, %v5738
    %v5759 = vmul.f32 %v5755, %v5180
    %v5760 = vmul.f32 %v5753, %v5184
    %v5761 = vmul.f32 %v5751, %v5188
    %v5762 = vmul.f32 %v5757, %v5192
    %v5763 = vmul.f32 %v5756, %v5180
    %v5764 = vmul.f32 %v5754, %v5184
    %v5765 = vmul.f32 %v5752, %v5188
    %v5766 = vmul.f32 %v5758, %v5192
    %5767 = vset.pattern.permute.xlu0 5
    %5768 = vperm.xlu0 %5767, %v5491
    %v5769 = vpop.permute.xlu0 %5768
    %5771 = vset.pattern.permute.xlu0 5
    %5772 = vperm.xlu0 %5771, %v5492
    %v5773 = vpop.permute.xlu0 %5772
    %v5775 = vmul.f32 %v5759, %v5769
    %v5776 = vmul.f32 %v5760, %v5769
    %v5777 = vmul.f32 %v5761, %v5769
    %v5778 = vmul.f32 %v5762, %v5769
    %v5779 = vmul.f32 %v5763, %v5773
    %v5780 = vmul.f32 %v5764, %v5773
    %v5781 = vmul.f32 %v5765, %v5773
    %v5782 = vmul.f32 %v5766, %v5773
    %v5783 = vadd.f32 %v5727, %v5775
    %v5784 = vadd.f32 %v5728, %v5776
    %v5785 = vadd.f32 %v5729, %v5777
    %v5786 = vadd.f32 %v5730, %v5778
    %v5787 = vadd.f32 %v5731, %v5779
    %v5788 = vadd.f32 %v5732, %v5780
    %v5789 = vadd.f32 %v5733, %v5781
    %v5790 = vadd.f32 %v5734, %v5782
    %5791 = vrot.lane.b32.xlu0 %v5483, 113
    %v5792 = vpop.permute.xlu0 %5791
    %5793 = vrot.lane.b32.xlu0 %v5487, 113
    %v5794 = vpop.permute.xlu0 %5793
    %5795 = vrot.lane.b32.xlu0 %v5484, 113
    %v5796 = vpop.permute.xlu0 %5795
    %5797 = vrot.lane.b32.xlu0 %v5488, 113
    %v5798 = vpop.permute.xlu0 %5797
    %5799 = vrot.lane.b32.xlu0 %v5485, 113
    %v5800 = vpop.permute.xlu0 %5799
    %5801 = vrot.lane.b32.xlu0 %v5489, 113
    %v5802 = vpop.permute.xlu0 %5801
    %5803 = vrot.lane.b32.xlu0 %v5486, 113
    %v5804 = vpop.permute.xlu0 %5803
    %5805 = vrot.lane.b32.xlu0 %v5490, 113
    %v5806 = vpop.permute.xlu0 %5805
    %v5807 = vsel %vm991, %v5800, %v5804
    %v5808 = vsel %vm991, %v5802, %v5806
    %v5809 = vsel %vm991, %v5796, %v5800
    %v5810 = vsel %vm991, %v5798, %v5802
    %v5811 = vsel %vm991, %v5792, %v5796
    %v5812 = vsel %vm991, %v5794, %v5798
    %v5813 = vsel %vm991, %v5804, %v5792
    %v5814 = vsel %vm991, %v5806, %v5794
    %v5815 = vmul.f32 %v5811, %v5258
    %v5816 = vmul.f32 %v5809, %v5262
    %v5817 = vmul.f32 %v5807, %v5266
    %v5818 = vmul.f32 %v5813, %v5270
    %v5819 = vmul.f32 %v5812, %v5258
    %v5820 = vmul.f32 %v5810, %v5262
    %v5821 = vmul.f32 %v5808, %v5266
    %v5822 = vmul.f32 %v5814, %v5270
    %5823 = vset.pattern.permute.xlu0 6
    %5824 = vperm.xlu0 %5823, %v5491
    %v5825 = vpop.permute.xlu0 %5824
    %5827 = vset.pattern.permute.xlu0 6
    %5828 = vperm.xlu0 %5827, %v5492
    %v5829 = vpop.permute.xlu0 %5828
    %v5831 = vmul.f32 %v5815, %v5825
    %v5832 = vmul.f32 %v5816, %v5825
    %v5833 = vmul.f32 %v5817, %v5825
    %v5834 = vmul.f32 %v5818, %v5825
    %v5835 = vmul.f32 %v5819, %v5829
    %v5836 = vmul.f32 %v5820, %v5829
    %v5837 = vmul.f32 %v5821, %v5829
    %v5838 = vmul.f32 %v5822, %v5829
    %v5839 = vadd.f32 %v5783, %v5831
    %v5840 = vadd.f32 %v5784, %v5832
    %v5841 = vadd.f32 %v5785, %v5833
    %v5842 = vadd.f32 %v5786, %v5834
    %v5843 = vadd.f32 %v5787, %v5835
    %v5844 = vadd.f32 %v5788, %v5836
    %v5845 = vadd.f32 %v5789, %v5837
    %v5846 = vadd.f32 %v5790, %v5838
    %5847 = vrot.lane.b32.xlu0 %v5483, 112
    %v5848 = vpop.permute.xlu0 %5847
    %5849 = vrot.lane.b32.xlu0 %v5487, 112
    %v5850 = vpop.permute.xlu0 %5849
    %5851 = vrot.lane.b32.xlu0 %v5484, 112
    %v5852 = vpop.permute.xlu0 %5851
    %5853 = vrot.lane.b32.xlu0 %v5488, 112
    %v5854 = vpop.permute.xlu0 %5853
    %5855 = vrot.lane.b32.xlu0 %v5485, 112
    %v5856 = vpop.permute.xlu0 %5855
    %5857 = vrot.lane.b32.xlu0 %v5489, 112
    %v5858 = vpop.permute.xlu0 %5857
    %5859 = vrot.lane.b32.xlu0 %v5486, 112
    %v5860 = vpop.permute.xlu0 %5859
    %5861 = vrot.lane.b32.xlu0 %v5490, 112
    %v5862 = vpop.permute.xlu0 %5861
    %v5863 = vsel %vm1071, %v5856, %v5860
    %v5864 = vsel %vm1071, %v5858, %v5862
    %v5865 = vsel %vm1071, %v5852, %v5856
    %v5866 = vsel %vm1071, %v5854, %v5858
    %v5867 = vsel %vm1071, %v5848, %v5852
    %v5868 = vsel %vm1071, %v5850, %v5854
    %v5869 = vsel %vm1071, %v5860, %v5848
    %v5870 = vsel %vm1071, %v5862, %v5850
    %v5871 = vmul.f32 %v5867, %v5336
    %v5872 = vmul.f32 %v5865, %v5340
    %v5873 = vmul.f32 %v5863, %v5344
    %v5874 = vmul.f32 %v5869, %v5348
    %v5875 = vmul.f32 %v5868, %v5336
    %v5876 = vmul.f32 %v5866, %v5340
    %v5877 = vmul.f32 %v5864, %v5344
    %v5878 = vmul.f32 %v5870, %v5348
    %5879 = vset.pattern.permute.xlu0 7
    %5880 = vperm.xlu0 %5879, %v5491
    %v5881 = vpop.permute.xlu0 %5880
    %5883 = vset.pattern.permute.xlu0 7
    %5884 = vperm.xlu0 %5883, %v5492
    %v5885 = vpop.permute.xlu0 %5884
    %v5887 = vmul.f32 %v5871, %v5881
    %v5888 = vmul.f32 %v5872, %v5881
    %v5889 = vmul.f32 %v5873, %v5881
    %v5890 = vmul.f32 %v5874, %v5881
    %v5891 = vmul.f32 %v5875, %v5885
    %v5892 = vmul.f32 %v5876, %v5885
    %v5893 = vmul.f32 %v5877, %v5885
    %v5894 = vmul.f32 %v5878, %v5885
    %v5895 = vadd.f32 %v5839, %v5887
    %v5896 = vadd.f32 %v5840, %v5888
    %v5897 = vadd.f32 %v5841, %v5889
    %v5898 = vadd.f32 %v5842, %v5890
    %v5899 = vadd.f32 %v5843, %v5891
    %v5900 = vadd.f32 %v5844, %v5892
    %v5901 = vadd.f32 %v5845, %v5893
    %v5902 = vadd.f32 %v5846, %v5894
    %5903 = vrot.lane.b32.xlu0 %v5483, 111
    %v5904 = vpop.permute.xlu0 %5903
    %5905 = vrot.lane.b32.xlu0 %v5487, 111
    %v5906 = vpop.permute.xlu0 %5905
    %5907 = vrot.lane.b32.xlu0 %v5484, 111
    %v5908 = vpop.permute.xlu0 %5907
    %5909 = vrot.lane.b32.xlu0 %v5488, 111
    %v5910 = vpop.permute.xlu0 %5909
    %5911 = vrot.lane.b32.xlu0 %v5485, 111
    %v5912 = vpop.permute.xlu0 %5911
    %5913 = vrot.lane.b32.xlu0 %v5489, 111
    %v5914 = vpop.permute.xlu0 %5913
    %5915 = vrot.lane.b32.xlu0 %v5486, 111
    %v5916 = vpop.permute.xlu0 %5915
    %5917 = vrot.lane.b32.xlu0 %v5490, 111
    %v5918 = vpop.permute.xlu0 %5917
    %v5919 = vsel %vm1151, %v5912, %v5916
    %v5920 = vsel %vm1151, %v5914, %v5918
    %v5921 = vsel %vm1151, %v5908, %v5912
    %v5922 = vsel %vm1151, %v5910, %v5914
    %v5923 = vsel %vm1151, %v5904, %v5908
    %v5924 = vsel %vm1151, %v5906, %v5910
    %v5925 = vsel %vm1151, %v5916, %v5904
    %v5926 = vsel %vm1151, %v5918, %v5906
    %v5927 = vmul.f32 %v5923, %v5414
    %v5928 = vmul.f32 %v5921, %v5418
    %v5929 = vmul.f32 %v5919, %v5422
    %v5930 = vmul.f32 %v5925, %v5426
    %v5931 = vmul.f32 %v5924, %v5414
    %v5932 = vmul.f32 %v5922, %v5418
    %v5933 = vmul.f32 %v5920, %v5422
    %v5934 = vmul.f32 %v5926, %v5426
    %5935 = vset.pattern.permute.xlu0 8
    %5936 = vperm.xlu0 %5935, %v5491
    %v5937 = vpop.permute.xlu0 %5936
    %5939 = vset.pattern.permute.xlu0 8
    %5940 = vperm.xlu0 %5939, %v5492
    %v5941 = vpop.permute.xlu0 %5940
    %v5943 = vmul.f32 %v5927, %v5937
    %v5944 = vmul.f32 %v5928, %v5937
    %v5945 = vmul.f32 %v5929, %v5937
    %v5946 = vmul.f32 %v5930, %v5937
    %v5947 = vmul.f32 %v5931, %v5941
    %v5948 = vmul.f32 %v5932, %v5941
    %v5949 = vmul.f32 %v5933, %v5941
    %v5950 = vmul.f32 %v5934, %v5941
    %v5951 = vadd.f32 %v5895, %v5943
    %v5952 = vadd.f32 %v5896, %v5944
    %v5953 = vadd.f32 %v5897, %v5945
    %v5954 = vadd.f32 %v5898, %v5946
    %v5955 = vadd.f32 %v5899, %v5947
    %v5956 = vadd.f32 %v5900, %v5948
    %v5957 = vadd.f32 %v5901, %v5949
    %v5958 = vadd.f32 %v5902, %v5950
    %v5959 = vld [vmem:[%s4 + $0x70] sm:$0xff]
    %v5960 = vld [vmem:[%s4 + $0x78] sm:$0xff]
    %5962 = vset.pattern.permute.xlu0 0
    %5963 = vperm.xlu0 %5962, %v5959
    %v5964 = vpop.permute.xlu0 %5963
    %5967 = vset.pattern.permute.xlu0 0
    %5968 = vperm.xlu0 %5967, %v5960
    %v5969 = vpop.permute.xlu0 %5968
    %v5971 = vadd.f32 %v5951, %v5964
    %v5972 = vadd.f32 %v5952, %v5964
    %v5973 = vadd.f32 %v5953, %v5964
    %v5974 = vadd.f32 %v5954, %v5964
    %v5975 = vadd.f32 %v5955, %v5969
    %v5976 = vadd.f32 %v5956, %v5969
    %v5977 = vadd.f32 %v5957, %v5969
    %v5978 = vadd.f32 %v5958, %v5969
    %v5979 = vmul.f32 %v5475, 0.5
    %v5980 = vmul.f32 %v5476, 0.5
    %v5981 = vmul.f32 %v5477, 0.5
    %v5982 = vmul.f32 %v5478, 0.5
    %v5983 = vmul.f32 %v5479, 0.5
    %v5984 = vmul.f32 %v5480, 0.5
    %v5985 = vmul.f32 %v5481, 0.5
    %v5986 = vmul.f32 %v5482, 0.5
    %v5987 = vmul.f32 %v5475, 0.70710677
    %v5988 = vmul.f32 %v5476, 0.70710677
    %v5989 = vmul.f32 %v5477, 0.70710677
    %v5990 = vmul.f32 %v5478, 0.70710677
    %v5991 = vmul.f32 %v5479, 0.70710677
    %v5992 = vmul.f32 %v5480, 0.70710677
    %v5993 = vmul.f32 %v5481, 0.70710677
    %v5994 = vmul.f32 %v5482, 0.70710677
    %v5995 = vand.u32 2147483647, %v5987
    %v5996 = vand.u32 2147483647, %v5988
    %v5997 = vand.u32 2147483647, %v5989
    %v5998 = vand.u32 2147483647, %v5990
    %v5999 = vand.u32 2147483647, %v5991
    %v6000 = vand.u32 2147483647, %v5992
    %v6001 = vand.u32 2147483647, %v5993
    %v6002 = vand.u32 2147483647, %v5994
    %v6003 = vmul.f32 %v5995, 0.3275911
    %v6004 = vmul.f32 %v5996, 0.3275911
    %v6005 = vmul.f32 %v5997, 0.3275911
    %v6006 = vmul.f32 %v5998, 0.3275911
    %v6007 = vmul.f32 %v5999, 0.3275911
    %v6008 = vmul.f32 %v6000, 0.3275911
    %v6009 = vmul.f32 %v6001, 0.3275911
    %v6010 = vmul.f32 %v6002, 0.3275911
    %v6011 = vadd.f32 %v6003, 1.0
    %v6012 = vadd.f32 %v6004, 1.0
    %v6013 = vadd.f32 %v6005, 1.0
    %v6014 = vadd.f32 %v6006, 1.0
    %v6015 = vadd.f32 %v6007, 1.0
    %v6016 = vadd.f32 %v6008, 1.0
    %v6017 = vadd.f32 %v6009, 1.0
    %v6018 = vadd.f32 %v6010, 1.0
    %v6019 = vrcp.pop %v6011
    %v6020 = vrcp.pop %v6012
    %v6021 = vrcp.pop %v6013
    %v6022 = vrcp.pop %v6014
    %v6023 = vrcp.pop %v6015
    %v6024 = vrcp.pop %v6016
    %v6025 = vrcp.pop %v6017
    %v6026 = vrcp.pop %v6018
    %v6027 = vmul.f32 %v6011, %v6019
    %v6028 = vmul.f32 %v6012, %v6020
    %v6029 = vmul.f32 %v6013, %v6021
    %v6030 = vmul.f32 %v6014, %v6022
    %v6031 = vmul.f32 %v6015, %v6023
    %v6032 = vmul.f32 %v6016, %v6024
    %v6033 = vmul.f32 %v6017, %v6025
    %v6034 = vmul.f32 %v6018, %v6026
    %v6035 = vsub.f32 2.0, %v6027
    %v6036 = vsub.f32 2.0, %v6028
    %v6037 = vsub.f32 2.0, %v6029
    %v6038 = vsub.f32 2.0, %v6030
    %v6039 = vsub.f32 2.0, %v6031
    %v6040 = vsub.f32 2.0, %v6032
    %v6041 = vsub.f32 2.0, %v6033
    %v6042 = vsub.f32 2.0, %v6034
    %v6043 = vmul.f32 %v6019, %v6035
    %v6044 = vmul.f32 %v6020, %v6036
    %v6045 = vmul.f32 %v6021, %v6037
    %v6046 = vmul.f32 %v6022, %v6038
    %v6047 = vmul.f32 %v6023, %v6039
    %v6048 = vmul.f32 %v6024, %v6040
    %v6049 = vmul.f32 %v6025, %v6041
    %v6050 = vmul.f32 %v6026, %v6042
    %v6051 = vmul.f32 %v6043, 1.0614054
    %v6052 = vmul.f32 %v6044, 1.0614054
    %v6053 = vmul.f32 %v6045, 1.0614054
    %v6054 = vmul.f32 %v6046, 1.0614054
    %v6055 = vmul.f32 %v6047, 1.0614054
    %v6056 = vmul.f32 %v6048, 1.0614054
    %v6057 = vmul.f32 %v6049, 1.0614054
    %v6058 = vmul.f32 %v6050, 1.0614054
    %v6059 = vadd.f32 %v6051, -1.4531521
    %v6060 = vadd.f32 %v6052, -1.4531521
    %v6061 = vadd.f32 %v6053, -1.4531521
    %v6062 = vadd.f32 %v6054, -1.4531521
    %v6063 = vadd.f32 %v6055, -1.4531521
    %v6064 = vadd.f32 %v6056, -1.4531521
    %v6065 = vadd.f32 %v6057, -1.4531521
    %v6066 = vadd.f32 %v6058, -1.4531521
    %v6067 = vmul.f32 %v6059, %v6043
    %v6068 = vmul.f32 %v6060, %v6044
    %v6069 = vmul.f32 %v6061, %v6045
    %v6070 = vmul.f32 %v6062, %v6046
    %v6071 = vmul.f32 %v6063, %v6047
    %v6072 = vmul.f32 %v6064, %v6048
    %v6073 = vmul.f32 %v6065, %v6049
    %v6074 = vmul.f32 %v6066, %v6050
    %v6075 = vadd.f32 %v6067, 1.4214138
    %v6076 = vadd.f32 %v6068, 1.4214138
    %v6077 = vadd.f32 %v6069, 1.4214138
    %v6078 = vadd.f32 %v6070, 1.4214138
    %v6079 = vadd.f32 %v6071, 1.4214138
    %v6080 = vadd.f32 %v6072, 1.4214138
    %v6081 = vadd.f32 %v6073, 1.4214138
    %v6082 = vadd.f32 %v6074, 1.4214138
    %v6083 = vmul.f32 %v6075, %v6043
    %v6084 = vmul.f32 %v6076, %v6044
    %v6085 = vmul.f32 %v6077, %v6045
    %v6086 = vmul.f32 %v6078, %v6046
    %v6087 = vmul.f32 %v6079, %v6047
    %v6088 = vmul.f32 %v6080, %v6048
    %v6089 = vmul.f32 %v6081, %v6049
    %v6090 = vmul.f32 %v6082, %v6050
    %v6091 = vadd.f32 %v6083, -0.28449672
    %v6092 = vadd.f32 %v6084, -0.28449672
    %v6093 = vadd.f32 %v6085, -0.28449672
    %v6094 = vadd.f32 %v6086, -0.28449672
    %v6095 = vadd.f32 %v6087, -0.28449672
    %v6096 = vadd.f32 %v6088, -0.28449672
    %v6097 = vadd.f32 %v6089, -0.28449672
    %v6098 = vadd.f32 %v6090, -0.28449672
    %v6099 = vmul.f32 %v6091, %v6043
    %v6100 = vmul.f32 %v6092, %v6044
    %v6101 = vmul.f32 %v6093, %v6045
    %v6102 = vmul.f32 %v6094, %v6046
    %v6103 = vmul.f32 %v6095, %v6047
    %v6104 = vmul.f32 %v6096, %v6048
    %v6105 = vmul.f32 %v6097, %v6049
    %v6106 = vmul.f32 %v6098, %v6050
    %v6107 = vadd.f32 %v6099, 0.2548296
    %v6108 = vadd.f32 %v6100, 0.2548296
    %v6109 = vadd.f32 %v6101, 0.2548296
    %v6110 = vadd.f32 %v6102, 0.2548296
    %v6111 = vadd.f32 %v6103, 0.2548296
    %v6112 = vadd.f32 %v6104, 0.2548296
    %v6113 = vadd.f32 %v6105, 0.2548296
    %v6114 = vadd.f32 %v6106, 0.2548296
    %v6115 = vmul.f32 %v6107, %v6043
    %v6116 = vmul.f32 %v6108, %v6044
    %v6117 = vmul.f32 %v6109, %v6045
    %v6118 = vmul.f32 %v6110, %v6046
    %v6119 = vmul.f32 %v6111, %v6047
    %v6120 = vmul.f32 %v6112, %v6048
    %v6121 = vmul.f32 %v6113, %v6049
    %v6122 = vmul.f32 %v6114, %v6050
    %v6123 = vsub.f32 0.0, %v5995
    %v6124 = vsub.f32 0.0, %v5996
    %v6125 = vsub.f32 0.0, %v5997
    %v6126 = vsub.f32 0.0, %v5998
    %v6127 = vsub.f32 0.0, %v5999
    %v6128 = vsub.f32 0.0, %v6000
    %v6129 = vsub.f32 0.0, %v6001
    %v6130 = vsub.f32 0.0, %v6002
    %v6131 = vmul.f32 %v6123, %v5995
    %v6132 = vmul.f32 %v6124, %v5996
    %v6133 = vmul.f32 %v6125, %v5997
    %v6134 = vmul.f32 %v6126, %v5998
    %v6135 = vmul.f32 %v6127, %v5999
    %v6136 = vmul.f32 %v6128, %v6000
    %v6137 = vmul.f32 %v6129, %v6001
    %v6138 = vmul.f32 %v6130, %v6002
    %v6139 = vmul.f32 %v6131, 1.442695
    %v6140 = vpow.pop %v6139
    %v6141 = vmul.f32 %v6132, 1.442695
    %v6142 = vpow.pop %v6141
    %v6143 = vmul.f32 %v6133, 1.442695
    %v6144 = vpow.pop %v6143
    %v6145 = vmul.f32 %v6134, 1.442695
    %v6146 = vpow.pop %v6145
    %v6147 = vmul.f32 %v6135, 1.442695
    %v6148 = vpow.pop %v6147
    %v6149 = vmul.f32 %v6136, 1.442695
    %v6150 = vpow.pop %v6149
    %v6151 = vmul.f32 %v6137, 1.442695
    %v6152 = vpow.pop %v6151
    %v6153 = vmul.f32 %v6138, 1.442695
    %v6154 = vpow.pop %v6153
    %v6155 = vmul.f32 %v6115, %v6140
    %v6156 = vmul.f32 %v6116, %v6142
    %v6157 = vmul.f32 %v6117, %v6144
    %v6158 = vmul.f32 %v6118, %v6146
    %v6159 = vmul.f32 %v6119, %v6148
    %v6160 = vmul.f32 %v6120, %v6150
    %v6161 = vmul.f32 %v6121, %v6152
    %v6162 = vmul.f32 %v6122, %v6154
    %v6163 = vsub.f32 1.0, %v6155
    %v6164 = vsub.f32 1.0, %v6156
    %v6165 = vsub.f32 1.0, %v6157
    %v6166 = vsub.f32 1.0, %v6158
    %v6167 = vsub.f32 1.0, %v6159
    %v6168 = vsub.f32 1.0, %v6160
    %v6169 = vsub.f32 1.0, %v6161
    %v6170 = vsub.f32 1.0, %v6162
    %vm6171 = vcmp.ge.f32.partialorder %v5987, 0.0
    %vm6172 = vcmp.ge.f32.partialorder %v5988, 0.0
    %vm6173 = vcmp.ge.f32.partialorder %v5989, 0.0
    %vm6174 = vcmp.ge.f32.partialorder %v5990, 0.0
    %vm6175 = vcmp.ge.f32.partialorder %v5991, 0.0
    %vm6176 = vcmp.ge.f32.partialorder %v5992, 0.0
    %vm6177 = vcmp.ge.f32.partialorder %v5993, 0.0
    %vm6178 = vcmp.ge.f32.partialorder %v5994, 0.0
    %v6179 = vsub.f32 0.0, %v6163
    %v6180 = vsub.f32 0.0, %v6164
    %v6181 = vsub.f32 0.0, %v6165
    %v6182 = vsub.f32 0.0, %v6166
    %v6183 = vsub.f32 0.0, %v6167
    %v6184 = vsub.f32 0.0, %v6168
    %v6185 = vsub.f32 0.0, %v6169
    %v6186 = vsub.f32 0.0, %v6170
    %v6187 = vsel %vm6171, %v6163, %v6179
    %v6188 = vsel %vm6172, %v6164, %v6180
    %v6189 = vsel %vm6173, %v6165, %v6181
    %v6190 = vsel %vm6174, %v6166, %v6182
    %v6191 = vsel %vm6175, %v6167, %v6183
    %v6192 = vsel %vm6176, %v6168, %v6184
    %v6193 = vsel %vm6177, %v6169, %v6185
    %v6194 = vsel %vm6178, %v6170, %v6186
    %v6195 = vadd.f32 %v6187, 1.0
    %v6196 = vadd.f32 %v6188, 1.0
    %v6197 = vadd.f32 %v6189, 1.0
    %v6198 = vadd.f32 %v6190, 1.0
    %v6199 = vadd.f32 %v6191, 1.0
    %v6200 = vadd.f32 %v6192, 1.0
    %v6201 = vadd.f32 %v6193, 1.0
    %v6202 = vadd.f32 %v6194, 1.0
    %v6203 = vmul.f32 %v5979, %v6195
    %v6204 = vmul.f32 %v5980, %v6196
    %v6205 = vmul.f32 %v5981, %v6197
    %v6206 = vmul.f32 %v5982, %v6198
    %v6207 = vmul.f32 %v5983, %v6199
    %v6208 = vmul.f32 %v5984, %v6200
    %v6209 = vmul.f32 %v5985, %v6201
    %v6210 = vmul.f32 %v5986, %v6202
    %v6211 = vmul.f32 %v6203, %v5971
    %v6212 = vmul.f32 %v6204, %v5972
    %v6213 = vmul.f32 %v6205, %v5973
    %v6214 = vmul.f32 %v6206, %v5974
    %v6215 = vmul.f32 %v6207, %v5975
    %v6216 = vmul.f32 %v6208, %v5976
    %v6217 = vmul.f32 %v6209, %v5977
    %v6218 = vmul.f32 %v6210, %v5978
    %v6219 = vpack.c.bf16 %v6215, %v6211
    %v6220 = vpack.c.bf16 %v6216, %v6212
    %v6221 = vpack.c.bf16 %v6217, %v6213
    %v6222 = vpack.c.bf16 %v6218, %v6214
    %6223 = vst [vmem:[#allocation3 + $0x60] sm:$0xff] %v6219
    %6224 = vst [vmem:[#allocation3 + $0x68] sm:$0xff] %v6220
    %6225 = vst [vmem:[#allocation3 + $0x70] sm:$0xff] %v6221
    %6226 = vst [vmem:[#allocation3 + $0x78] sm:$0xff] %v6222
    %v6227 = vld [vmem:[%s6] sm:$0xf]
    %v6228 = vld [vmem:[%s6 + $0x4] sm:$0xf]
    %v6229 = vld [vmem:[%s6 + $0x8] sm:$0xf]
    %v6230 = vld [vmem:[%s6 + $0xc] sm:$0xf]
    %v6231 = vld [vmem:[#allocation3] sm:$0xff]
    %v6232 = vld [vmem:[#allocation3 + $0x8] sm:$0xff]
    %v6233 = vld [vmem:[#allocation3 + $0x10] sm:$0xff]
    %v6234 = vld [vmem:[#allocation3 + $0x18] sm:$0xff]
    %v6235 = vld [vmem:[#allocation3 + $0x20] sm:$0xff]
    %v6236 = vld [vmem:[#allocation3 + $0x28] sm:$0xff]
    %v6237 = vld [vmem:[#allocation3 + $0x30] sm:$0xff]
    %v6238 = vld [vmem:[#allocation3 + $0x38] sm:$0xff]
    %v6239 = vld [vmem:[#allocation3 + $0x40] sm:$0xff]
    %v6240 = vld [vmem:[#allocation3 + $0x48] sm:$0xff]
    %v6241 = vld [vmem:[#allocation3 + $0x50] sm:$0xff]
    %v6242 = vld [vmem:[#allocation3 + $0x58] sm:$0xff]
    %v6243 = vld [vmem:[#allocation3 + $0x60] sm:$0xff]
    %v6244 = vld [vmem:[#allocation3 + $0x68] sm:$0xff]
    %v6245 = vld [vmem:[#allocation3 + $0x70] sm:$0xff]
    %v6246 = vld [vmem:[#allocation3 + $0x78] sm:$0xff]
    %v6247 = vld [vmem:[%s7] sm:$0xff]
    %v6248 = vld [vmem:[%s7 + $0x8] sm:$0xff]
    %v6249 = vld [vmem:[%s7 + $0x10] sm:$0xff]
    %v6250 = vld [vmem:[%s7 + $0x18] sm:$0xff]
    %6252 = vset.pattern.permute.xlu0 0
    %6253 = vperm.xlu0 %6252, %v6247
    %v6254 = vpop.permute.xlu0 %6253
    %6257 = vset.pattern.permute.xlu0 0
    %6258 = vperm.xlu0 %6257, %v6248
    %v6259 = vpop.permute.xlu0 %6258
    %6262 = vset.pattern.permute.xlu0 0
    %6263 = vperm.xlu0 %6262, %v6249
    %v6264 = vpop.permute.xlu0 %6263
    %6267 = vset.pattern.permute.xlu0 0
    %6268 = vperm.xlu0 %6267, %v6250
    %v6269 = vpop.permute.xlu0 %6268
    %v6275 = vunpack.c.l.b16 %v6227
    %v6276 = vunpack.c.l.b16 %v6228
    %v6277 = vunpack.c.l.b16 %v6229
    %v6278 = vunpack.c.l.b16 %v6230
    %v6279 = vpack.c.b16 %v6276, %v6275
    %v6280 = vpack.c.b16 %v6278, %v6277
    %vm6281 = vcmask 523264
    %v6283 = vsel %vm6281, %v6279, 0
    %v6286 = vsel %vm6281, %v6280, 0
    %6288 = vmatprep.subr.bf16.mxu0 %v6232
    %6289 = vmatpush1.bf16.msra.mxu0 %v6231
    %6290 = vmatprep.subr.bf16.mxu0 %v6236
    %6291 = vmatpush1.bf16.msra.mxu0 %v6235
    %6292 = vmatprep.subr.bf16.mxu0 %v6240
    %6293 = vmatpush1.bf16.msra.mxu0 %v6239
    %6294 = vmatprep.subr.bf16.mxu0 %v6244
    %6295 = vmatpush1.bf16.msra.mxu0 %v6243
    %6296 = vmatprep.subr.bf16.mxu0 0
    %6297 = vmatpush1.bf16.msra.mxu0 0
    %6298 = vmatprep.subr.bf16.mxu0 0
    %6299 = vmatpush1.bf16.msra.mxu0 0
    %6300 = vmatprep.subr.bf16.mxu0 0
    %6301 = vmatpush1.bf16.msra.mxu0 0
    %6302 = vmatprep.subr.bf16.mxu0 0
    %6303 = vmatpush1.bf16.msra.mxu0 0
    %6304 = vmatprep.subr.bf16.mxu0 0
    %6305 = vmatpush1.bf16.msra.mxu0 0
    %6306 = vmatprep.subr.bf16.mxu0 0
    %6307 = vmatpush1.bf16.msra.mxu0 0
    %6308 = vmatprep.subr.bf16.mxu0 0
    %6309 = vmatpush1.bf16.msra.mxu0 0
    %6310 = vmatprep.subr.bf16.mxu0 0
    %6311 = vmatpush1.bf16.msra.mxu0 0
    %6312 = vmatprep.subr.bf16.mxu0 0
    %6313 = vmatpush1.bf16.msra.mxu0 0
    %6314 = vmatprep.subr.bf16.mxu0 0
    %6315 = vmatpush1.bf16.msra.mxu0 0
    %6316 = vmatprep.subr.bf16.mxu0 0
    %6317 = vmatpush1.bf16.msra.mxu0 0
    %6318 = vmatprep.subr.bf16.mxu0 0
    %6319 = vmatpush1.bf16.msra.mxu0 0
    %6320 = vmatprep.mubr.bf16.mxu0 0
    %6321 = vmatmul.mubr.bf16.gmra.mrb[0].mxu0 %v6283
    %v6322 = vpop.f32.mrb[0].mxu0
    %v6323 = vadd.f32 %v6254, %v6322
    %v6324 = vpop.f32.mrb[0].mxu0
    %v6325 = vadd.f32 %v6254, %v6324
    %v6326 = vpop.f32.mrb[0].mxu0
    %v6327 = vadd.f32 %v6259, %v6326
    %v6328 = vpop.f32.mrb[0].mxu0
    %v6329 = vadd.f32 %v6259, %v6328
    %6330 = vmatprep.mubr.bf16.mxu0 0
    %6331 = vmatmul.mubr.bf16.gmra.mrb[0].mxu0 %v6286
    %v6332 = vpop.f32.mrb[0].mxu0
    %v6333 = vadd.f32 %v6264, %v6332
    %v6334 = vpop.f32.mrb[0].mxu0
    %v6335 = vadd.f32 %v6264, %v6334
    %v6336 = vpop.f32.mrb[0].mxu0
    %v6337 = vadd.f32 %v6269, %v6336
    %v6338 = vpop.f32.mrb[0].mxu0
    %v6339 = vadd.f32 %v6269, %v6338
    %6340 = vdwg.mxu0
    %6341 = vmatprep.subr.bf16.mxu0 %v6234
    %6342 = vmatpush1.bf16.msra.mxu0 %v6233
    %6343 = vmatprep.subr.bf16.mxu0 %v6238
    %6344 = vmatpush1.bf16.msra.mxu0 %v6237
    %6345 = vmatprep.subr.bf16.mxu0 %v6242
    %6346 = vmatpush1.bf16.msra.mxu0 %v6241
    %6347 = vmatprep.subr.bf16.mxu0 %v6246
    %6348 = vmatpush1.bf16.msra.mxu0 %v6245
    %6349 = vmatprep.subr.bf16.mxu0 0
    %6350 = vmatpush1.bf16.msra.mxu0 0
    %6351 = vmatprep.subr.bf16.mxu0 0
    %6352 = vmatpush1.bf16.msra.mxu0 0
    %6353 = vmatprep.subr.bf16.mxu0 0
    %6354 = vmatpush1.bf16.msra.mxu0 0
    %6355 = vmatprep.subr.bf16.mxu0 0
    %6356 = vmatpush1.bf16.msra.mxu0 0
    %6357 = vmatprep.subr.bf16.mxu0 0
    %6358 = vmatpush1.bf16.msra.mxu0 0
    %6359 = vmatprep.subr.bf16.mxu0 0
    %6360 = vmatpush1.bf16.msra.mxu0 0
    %6361 = vmatprep.subr.bf16.mxu0 0
    %6362 = vmatpush1.bf16.msra.mxu0 0
    %6363 = vmatprep.subr.bf16.mxu0 0
    %6364 = vmatpush1.bf16.msra.mxu0 0
    %6365 = vmatprep.subr.bf16.mxu0 0
    %6366 = vmatpush1.bf16.msra.mxu0 0
    %6367 = vmatprep.subr.bf16.mxu0 0
    %6368 = vmatpush1.bf16.msra.mxu0 0
    %6369 = vmatprep.subr.bf16.mxu0 0
    %6370 = vmatpush1.bf16.msra.mxu0 0
    %6371 = vmatprep.subr.bf16.mxu0 0
    %6372 = vmatpush1.bf16.msra.mxu0 0
    %6373 = vmatprep.mubr.bf16.mxu0 0
    %6374 = vmatmul.mubr.bf16.gmra.mrb[0].mxu0 %v6283
    %v6375 = vpop.f32.mrb[0].mxu0
    %v6376 = vadd.f32 %v6254, %v6375
    %v6377 = vpop.f32.mrb[0].mxu0
    %v6378 = vadd.f32 %v6254, %v6377
    %v6379 = vpop.f32.mrb[0].mxu0
    %v6380 = vadd.f32 %v6259, %v6379
    %v6381 = vpop.f32.mrb[0].mxu0
    %v6382 = vadd.f32 %v6259, %v6381
    %6383 = vmatprep.mubr.bf16.mxu0 0
    %6384 = vmatmul.mubr.bf16.gmra.mrb[0].mxu0 %v6286
    %v6385 = vpop.f32.mrb[0].mxu0
    %v6386 = vadd.f32 %v6264, %v6385
    %v6387 = vpop.f32.mrb[0].mxu0
    %v6388 = vadd.f32 %v6264, %v6387
    %v6389 = vpop.f32.mrb[0].mxu0
    %v6390 = vadd.f32 %v6269, %v6389
    %v6391 = vpop.f32.mrb[0].mxu0
    %v6392 = vadd.f32 %v6269, %v6391
    %6393 = vdwg.mxu0
    %6394 = vst [vmem:[#allocation4] sm:$0xff] %v6323
    %6395 = vst [vmem:[#allocation4 + $0x8] sm:$0xff] %v6325
    %6396 = vst [vmem:[#allocation4 + $0x10] sm:$0xff] %v6376
    %6397 = vst [vmem:[#allocation4 + $0x18] sm:$0xff] %v6378
    %6398 = vst [vmem:[#allocation4 + $0x20] sm:$0xff] %v6327
    %6399 = vst [vmem:[#allocation4 + $0x28] sm:$0xff] %v6329
    %6400 = vst [vmem:[#allocation4 + $0x30] sm:$0xff] %v6380
    %6401 = vst [vmem:[#allocation4 + $0x38] sm:$0xff] %v6382
    %6402 = vst [vmem:[#allocation4 + $0x40] sm:$0xff] %v6333
    %6403 = vst [vmem:[#allocation4 + $0x48] sm:$0xff] %v6335
    %6404 = vst [vmem:[#allocation4 + $0x50] sm:$0xff] %v6386
    %6405 = vst [vmem:[#allocation4 + $0x58] sm:$0xff] %v6388
    %6406 = vst [vmem:[#allocation4 + $0x60] sm:$0xff] %v6337
    %6407 = vst [vmem:[#allocation4 + $0x68] sm:$0xff] %v6339
    %6408 = vst [vmem:[#allocation4 + $0x70] sm:$0xff] %v6390
    %6409 = vst [vmem:[#allocation4 + $0x78] sm:$0xff] %v6392
    // Predicated region
    $region34: #{tpu_custom_call.1} parent=1 // pred_check
      _
    $region35: #{tpu_custom_call.1} parent=1 // pred_check_branch
      %6411 = sbr.rel (0) target = $region37
    $region36: #{tpu_custom_call.1} parent=1 // pred_region
      %s6413 = ssub.s32 2048, 2048
      %6414 = vsyncadd [#allocation5], %s6413
      %s6415 = sshll.u32 [#allocation4], 4
      %s6416 = int_to_ptr.vmem [resolvable:$true] %s6415
      %6421 = dma.vmem_to_hbm [thread:$0]  %s6416, 2048, %s8, [#allocation5], 512, 512, 32
    $region37: #{tpu_custom_call.1} parent=1 // pred_fallthru
      _
    // Predicated region
    $region38: #{tpu_custom_call.1} parent=1 // pred_check
      _
    $region39: #{tpu_custom_call.1} parent=1 // pred_check_branch
      %6423 = sbr.rel (0) target = $region41
    $region40: #{tpu_custom_call.1} parent=1 // pred_region
      %6424 = dma.done [#allocation5], 2048
    $region41: #{tpu_custom_call.1} parent=1 // pred_fallthru
      _
    %6425 = vsyncpa [#allocation5], 1

</llo_original>
